<compile_context>
chip_gen: v7x
topology: tpu7x:2x2x1
jax: 0.10.0
libtpu: 0.0.40
codegen_flags: <defaults>
</compile_context>

<pallas_src>
import jax
import jax.numpy as jnp
from jax import lax
from jax.experimental import pallas as pl
from jax.experimental.pallas import tpu as pltpu

SEQ = 8        # seq_len
BATCH = 2      # batch_size
N = SEQ * BATCH
VOCAB = 256    # vocab_size
EMB = 32       # embedding_dim
HID = 32       # hidden_dim
NLAYERS = 3
H1, H2 = 512, 2048
assert EMB == HID  # lets us stack the per-layer W_ih weights into one (3, H, 4H) tensor


def poetry_kernel(ids_ref, emb_ref, wih_ref, whh_ref, blstm_ref,
                  w1_ref, b1_ref, b2_ref, b3_ref, w2_hbm, w3_hbm,
                  logits_ref, hn_ref, cn_ref,
                  w2_vmem, w3_vmem, dma_sem):
    # ---- start the big classifier-weight DMAs immediately; they hide under the LSTM ----
    cp2 = pltpu.make_async_copy(w2_hbm, w2_vmem, dma_sem.at[0])
    cp3 = pltpu.make_async_copy(w3_hbm, w3_vmem, dma_sem.at[1])
    cp2.start()
    cp3.start()

    # ---- embedding lookup: flat 2D one-hot (16, V) @ table (keeps the gather on the MXU) ----
    ids = ids_ref[...]                                               # (N, 1) int32
    vocab_iota = lax.broadcasted_iota(jnp.int32, (N, VOCAB), 1)
    onehot = (vocab_iota == ids).astype(jnp.float32)                 # (N, V)
    x = jnp.dot(onehot, emb_ref[...],
                preferred_element_type=jnp.float32)                  # (N, E)

    # ---- 3-layer LSTM (hidden == None path: h_0 = c_0 = 0) ----
    # Input projection hoisted out of the time loop; h/c carried as values (vregs).
    for layer in range(NLAYERS):
        whh = whh_ref[layer]                                         # (H, 4H)
        gates_x = (jnp.dot(x, wih_ref[layer],
                           preferred_element_type=jnp.float32)
                   + blstm_ref[layer])                               # (N, 4H)
        h_l = jnp.zeros((BATCH, HID), jnp.float32)
        c_l = jnp.zeros((BATCH, HID), jnp.float32)
        outs = []
        for t in range(SEQ):
            g = (gates_x[t * BATCH:(t + 1) * BATCH, :]
                 + jnp.dot(h_l, whh, preferred_element_type=jnp.float32))  # (B, 4H)
            sig = jax.nn.sigmoid(g)                                  # full-width EUP push
            th = jnp.tanh(g)                                         # full-width EUP push
            i_g = sig[:, 0 * HID:1 * HID]
            f_g = sig[:, 1 * HID:2 * HID]
            o_g = sig[:, 3 * HID:4 * HID]
            g_g = th[:, 2 * HID:3 * HID]
            c_l = f_g * c_l + i_g * g_g
            h_l = o_g * jnp.tanh(c_l)
            outs.append(h_l)
        x = jnp.concatenate(outs, axis=0)                            # (N, H): next layer's input
        hn_ref[layer] = h_l
        cn_ref[layer] = c_l

    # ---- classifier: Linear(H,512) -> ReLU -> Linear(512,2048) -> ReLU -> Linear(2048,V) ----
    y1 = jnp.maximum(
        jnp.dot(x, w1_ref[...], preferred_element_type=jnp.float32) + b1_ref[...], 0.0)
    cp2.wait()
    y2 = jnp.maximum(
        jnp.dot(y1.astype(jnp.bfloat16), w2_vmem[...],
                preferred_element_type=jnp.float32) + b2_ref[...], 0.0)
    cp3.wait()
    logits_ref[...] = (jnp.dot(y2.astype(jnp.bfloat16), w3_vmem[...],
                               preferred_element_type=jnp.float32) + b3_ref[...])


@jax.jit
def poetry_forward(ids, params):
    ids_flat = ids.reshape(N, 1).astype(jnp.int32)
    logits, hn, cn = pl.pallas_call(
        poetry_kernel,
        out_shape=(
            jax.ShapeDtypeStruct((N, VOCAB), jnp.float32),
            jax.ShapeDtypeStruct((NLAYERS, BATCH, HID), jnp.float32),
            jax.ShapeDtypeStruct((NLAYERS, BATCH, HID), jnp.float32),
        ),
        in_specs=(
            [pl.BlockSpec(memory_space=pltpu.MemorySpace.VMEM)] * 9   # small tensors: auto-DMA
            + [pl.BlockSpec(memory_space=pl.ANY)] * 2                 # w2, w3: manual overlapped DMA
        ),
        out_specs=(pl.BlockSpec(memory_space=pltpu.MemorySpace.VMEM),) * 3,
        scratch_shapes=[
            pltpu.VMEM((H1, H2), jnp.bfloat16),      # w2 landing buffer
            pltpu.VMEM((H2, VOCAB), jnp.bfloat16),   # w3 landing buffer
            pltpu.SemaphoreType.DMA((2,)),
        ],
        compiler_params=pltpu.CompilerParams(vmem_limit_bytes=32 * 1024 * 1024),
    )(ids_flat, params["emb"], params["wih"], params["whh"], params["blstm"],
      params["w1"], params["b1"], params["b2"], params["b3"],
      params["w2"], params["w3"])
    # already (seq_len * batch_size, vocab) — no reshape/relayout needed
    return logits, (hn, cn)


def make_params(key):
    ks = jax.random.split(key, 12)
    s = 0.05
    # PyTorch shapes: emb (V,E); LSTM W_ih (4H,in), W_hh (4H,H), b_ih/b_hh (4H,);
    # Linear W (out,in), b (out,).  We store the transposed layouts described above.
    emb = jax.random.normal(ks[0], (VOCAB, EMB), jnp.float32) * s
    wih = jax.random.normal(ks[1], (NLAYERS, HID, 4 * HID), jnp.float32) * s
    whh = jax.random.normal(ks[2], (NLAYERS, HID, 4 * HID), jnp.float32) * s
    b_ih = jax.random.normal(ks[3], (NLAYERS, 4 * HID), jnp.float32) * s
    b_hh = jax.random.normal(ks[4], (NLAYERS, 4 * HID), jnp.float32) * s
    w1 = jax.random.normal(ks[5], (HID, H1), jnp.float32) * s
    b1 = jax.random.normal(ks[6], (1, H1), jnp.float32) * s
    w2 = (jax.random.normal(ks[7], (H1, H2), jnp.float32) * s).astype(jnp.bfloat16)
    b2 = jax.random.normal(ks[8], (1, H2), jnp.float32) * s
    w3 = (jax.random.normal(ks[9], (H2, VOCAB), jnp.float32) * s).astype(jnp.bfloat16)
    b3 = jax.random.normal(ks[10], (1, VOCAB), jnp.float32) * s
    return dict(emb=emb, wih=wih, whh=whh, blstm=b_ih + b_hh,
                w1=w1, b1=b1, w2=w2, b2=b2, w3=w3, b3=b3)


def reference_forward(ids, p):
    """Pure-JAX reference with identical semantics (for a sanity check)."""
    x = p["emb"][ids]                                  # (S, B, E)
    hs_out, cs_out = [], []
    for l in range(NLAYERS):
        h_l = jnp.zeros((BATCH, HID), jnp.float32)
        c_l = jnp.zeros((BATCH, HID), jnp.float32)
        outs = []
        for t in range(SEQ):
            g = x[t] @ p["wih"][l] + h_l @ p["whh"][l] + p["blstm"][l]
            i_g = jax.nn.sigmoid(g[:, 0 * HID:1 * HID])
            f_g = jax.nn.sigmoid(g[:, 1 * HID:2 * HID])
            g_g = jnp.tanh(g[:, 2 * HID:3 * HID])
            o_g = jax.nn.sigmoid(g[:, 3 * HID:4 * HID])
            c_l = f_g * c_l + i_g * g_g
            h_l = o_g * jnp.tanh(c_l)
            outs.append(h_l)
        x = jnp.stack(outs)
        hs_out.append(h_l)
        cs_out.append(c_l)
    flat = x.reshape(SEQ * BATCH, HID)
    w2 = p["w2"].astype(jnp.float32)
    w3 = p["w3"].astype(jnp.float32)
    y1 = jnp.maximum(flat @ p["w1"] + p["b1"][0], 0.0)
    y2 = jnp.maximum(y1 @ w2 + p["b2"][0], 0.0)
    logits = y2 @ w3 + p["b3"][0]
    return logits, (jnp.stack(hs_out), jnp.stack(cs_out))


if __name__ == "__main__":
    key = jax.random.PRNGKey(0)
    k_ids, k_par = jax.random.split(key)
    ids = jax.random.randint(k_ids, (SEQ, BATCH), 0, VOCAB, dtype=jnp.int32)
    params = make_params(k_par)

    logits, (hn, cn) = poetry_forward(ids, params)
    jax.block_until_ready((logits, hn, cn))

    ref_logits, (ref_hn, ref_cn) = reference_forward(ids, params)
    assert logits.shape == (SEQ * BATCH, VOCAB)
    assert hn.shape == (NLAYERS, BATCH, HID) and cn.shape == (NLAYERS, BATCH, HID)
    assert jnp.allclose(logits, ref_logits, rtol=5e-2, atol=5e-2)
    assert jnp.allclose(hn, ref_hn, rtol=5e-2, atol=5e-2)
    assert jnp.allclose(cn, ref_cn, rtol=5e-2, atol=5e-2)

    print("KERNEL_OK")
</pallas_src>

<mosaic_0001>
module attributes {stable_mosaic.version = 11 : i64} {
  func.func @poetry_kernel(%arg0: memref<16x1xi32, #tpu.memory_space<vmem>>, %arg1: memref<256x32xf32, #tpu.memory_space<vmem>>, %arg2: memref<3x32x128xf32, #tpu.memory_space<vmem>>, %arg3: memref<3x32x128xf32, #tpu.memory_space<vmem>>, %arg4: memref<3x128xf32, #tpu.memory_space<vmem>>, %arg5: memref<32x512xf32, #tpu.memory_space<vmem>>, %arg6: memref<1x512xf32, #tpu.memory_space<vmem>>, %arg7: memref<1x2048xf32, #tpu.memory_space<vmem>>, %arg8: memref<1x256xf32, #tpu.memory_space<vmem>>, %arg9: memref<512x2048xbf16, #tpu.memory_space<any>>, %arg10: memref<2048x256xbf16, #tpu.memory_space<any>>, %arg11: memref<16x256xf32, #tpu.memory_space<vmem>>, %arg12: memref<3x2x32xf32, #tpu.memory_space<vmem>>, %arg13: memref<3x2x32xf32, #tpu.memory_space<vmem>>, %arg14: memref<512x2048xbf16, #tpu.memory_space<vmem>>, %arg15: memref<2048x256xbf16, #tpu.memory_space<vmem>>, %arg16: memref<2x!tpu.dma_semaphore, #tpu.memory_space<semaphore_mem>>) attributes {dimension_semantics = [], scalar_prefetch = 0 : i64, scratch_operands = 3 : i64, tpu.core_type = #tpu.core_type<tc>} {
    %c0_i32 = arith.constant 0 : i32
    %0 = tpu.memref_slice %arg16[%c0_i32] : memref<2x!tpu.dma_semaphore, #tpu.memory_space<semaphore_mem>> -> memref<1x!tpu.dma_semaphore, #tpu.memory_space<semaphore_mem>>
    %1 = tpu.memref_squeeze %0 : memref<1x!tpu.dma_semaphore, #tpu.memory_space<semaphore_mem>> -> memref<!tpu.dma_semaphore, #tpu.memory_space<semaphore_mem>>
    tpu.enqueue_dma source(%arg9 : memref<512x2048xbf16, #tpu.memory_space<any>>) target(%arg14 : memref<512x2048xbf16, #tpu.memory_space<vmem>>) target_semaphore(%1 : memref<!tpu.dma_semaphore, #tpu.memory_space<semaphore_mem>>)
    %c1_i32 = arith.constant 1 : i32
    %2 = tpu.memref_slice %arg16[%c1_i32] : memref<2x!tpu.dma_semaphore, #tpu.memory_space<semaphore_mem>> -> memref<1x!tpu.dma_semaphore, #tpu.memory_space<semaphore_mem>>
    %3 = tpu.memref_squeeze %2 : memref<1x!tpu.dma_semaphore, #tpu.memory_space<semaphore_mem>> -> memref<!tpu.dma_semaphore, #tpu.memory_space<semaphore_mem>>
    tpu.enqueue_dma source(%arg10 : memref<2048x256xbf16, #tpu.memory_space<any>>) target(%arg15 : memref<2048x256xbf16, #tpu.memory_space<vmem>>) target_semaphore(%3 : memref<!tpu.dma_semaphore, #tpu.memory_space<semaphore_mem>>)
    %c0 = arith.constant 0 : index
    %c0_0 = arith.constant 0 : index
    %4 = vector.load %arg0[%c0, %c0_0] : memref<16x1xi32, #tpu.memory_space<vmem>>, vector<16x1xi32>
    %5 = tpu.iota {dimensions = array<i32: 1>} : vector<16x256xi32>
    %6 = vector.broadcast %4 : vector<16x1xi32> to vector<16x256xi32>
    %7 = arith.cmpi eq, %5, %6 : vector<16x256xi32>
    %8 = arith.extui %7 : vector<16x256xi1> to vector<16x256xi32>
    %9 = arith.sitofp %8 : vector<16x256xi32> to vector<16x256xf32>
    %c0_1 = arith.constant 0 : index
    %c0_2 = arith.constant 0 : index
    %10 = vector.load %arg1[%c0_1, %c0_2] : memref<256x32xf32, #tpu.memory_space<vmem>>, vector<256x32xf32>
    %cst = arith.constant dense<0.000000e+00> : vector<16x32xf32>
    %11 = tpu.matmul %9, %10, %cst {dimension_numbers = #tpu.dot_dimension_numbers<[1], [0], [0], [1], [0, 0, 1, 1], [], []>} : vector<16x256xf32>, vector<256x32xf32>, vector<16x32xf32> -> vector<16x32xf32>
    %c0_3 = arith.constant 0 : index
    %c0_4 = arith.constant 0 : index
    %c0_5 = arith.constant 0 : index
    %12 = vector.load %arg3[%c0_3, %c0_4, %c0_5] : memref<3x32x128xf32, #tpu.memory_space<vmem>>, vector<1x32x128xf32>
    %13 = vector.shape_cast %12 : vector<1x32x128xf32> to vector<32x128xf32>
    %c0_6 = arith.constant 0 : index
    %c0_7 = arith.constant 0 : index
    %c0_8 = arith.constant 0 : index
    %14 = vector.load %arg2[%c0_6, %c0_7, %c0_8] : memref<3x32x128xf32, #tpu.memory_space<vmem>>, vector<1x32x128xf32>
    %15 = vector.shape_cast %14 : vector<1x32x128xf32> to vector<32x128xf32>
    %cst_9 = arith.constant dense<0.000000e+00> : vector<16x128xf32>
    %16 = tpu.matmul %11, %15, %cst_9 {dimension_numbers = #tpu.dot_dimension_numbers<[1], [0], [0], [1], [0, 0, 1, 1], [], []>} : vector<16x32xf32>, vector<32x128xf32>, vector<16x128xf32> -> vector<16x128xf32>
    %c0_10 = arith.constant 0 : index
    %c0_11 = arith.constant 0 : index
    %17 = vector.load %arg4[%c0_10, %c0_11] : memref<3x128xf32, #tpu.memory_space<vmem>>, vector<1x128xf32>
    %18 = vector.shape_cast %17 : vector<1x128xf32> to vector<128xf32>
    %19 = vector.shape_cast %18 : vector<128xf32> to vector<1x128xf32>
    %20 = vector.broadcast %19 : vector<1x128xf32> to vector<16x128xf32>
    %21 = arith.addf %16, %20 : vector<16x128xf32>
    %cst_12 = arith.constant 0.000000e+00 : f32
    %22 = vector.broadcast %cst_12 : f32 to vector<2x32xf32>
    %cst_13 = arith.constant 0.000000e+00 : f32
    %23 = vector.broadcast %cst_13 : f32 to vector<2x32xf32>
    %24 = vector.extract_strided_slice %21 {offsets = [0, 0], sizes = [2, 128], strides = [1, 1]} : vector<16x128xf32> to vector<2x128xf32>
    %cst_14 = arith.constant dense<0.000000e+00> : vector<2x128xf32>
    %25 = tpu.matmul %22, %13, %cst_14 {dimension_numbers = #tpu.dot_dimension_numbers<[1], [0], [0], [1], [0, 0, 1, 1], [], []>} : vector<2x32xf32>, vector<32x128xf32>, vector<2x128xf32> -> vector<2x128xf32>
    %26 = arith.addf %24, %25 : vector<2x128xf32>
    %27 = arith.negf %26 : vector<2x128xf32>
    %28 = math.exp %27 : vector<2x128xf32>
    %cst_15 = arith.constant 1.000000e+00 : f32
    %29 = vector.broadcast %cst_15 : f32 to vector<2x128xf32>
    %30 = arith.addf %29, %28 : vector<2x128xf32>
    %31 = arith.divf %29, %30 : vector<2x128xf32>
    %32 = math.tanh %26 : vector<2x128xf32>
    %33 = vector.extract_strided_slice %31 {offsets = [0, 0], sizes = [2, 32], strides = [1, 1]} : vector<2x128xf32> to vector<2x32xf32>
    %34 = vector.extract_strided_slice %31 {offsets = [0, 32], sizes = [2, 32], strides = [1, 1]} : vector<2x128xf32> to vector<2x32xf32>
    %35 = vector.extract_strided_slice %31 {offsets = [0, 96], sizes = [2, 32], strides = [1, 1]} : vector<2x128xf32> to vector<2x32xf32>
    %36 = vector.extract_strided_slice %32 {offsets = [0, 64], sizes = [2, 32], strides = [1, 1]} : vector<2x128xf32> to vector<2x32xf32>
    %37 = arith.mulf %34, %23 : vector<2x32xf32>
    %38 = arith.mulf %33, %36 : vector<2x32xf32>
    %39 = arith.addf %37, %38 : vector<2x32xf32>
    %40 = math.tanh %39 : vector<2x32xf32>
    %41 = arith.mulf %35, %40 : vector<2x32xf32>
    %42 = vector.extract_strided_slice %21 {offsets = [2, 0], sizes = [2, 128], strides = [1, 1]} : vector<16x128xf32> to vector<2x128xf32>
    %cst_16 = arith.constant dense<0.000000e+00> : vector<2x128xf32>
    %43 = tpu.matmul %41, %13, %cst_16 {dimension_numbers = #tpu.dot_dimension_numbers<[1], [0], [0], [1], [0, 0, 1, 1], [], []>} : vector<2x32xf32>, vector<32x128xf32>, vector<2x128xf32> -> vector<2x128xf32>
    %44 = arith.addf %42, %43 : vector<2x128xf32>
    %45 = arith.negf %44 : vector<2x128xf32>
    %46 = math.exp %45 : vector<2x128xf32>
    %cst_17 = arith.constant 1.000000e+00 : f32
    %47 = vector.broadcast %cst_17 : f32 to vector<2x128xf32>
    %48 = arith.addf %47, %46 : vector<2x128xf32>
    %49 = arith.divf %47, %48 : vector<2x128xf32>
    %50 = math.tanh %44 : vector<2x128xf32>
    %51 = vector.extract_strided_slice %49 {offsets = [0, 0], sizes = [2, 32], strides = [1, 1]} : vector<2x128xf32> to vector<2x32xf32>
    %52 = vector.extract_strided_slice %49 {offsets = [0, 32], sizes = [2, 32], strides = [1, 1]} : vector<2x128xf32> to vector<2x32xf32>
    %53 = vector.extract_strided_slice %49 {offsets = [0, 96], sizes = [2, 32], strides = [1, 1]} : vector<2x128xf32> to vector<2x32xf32>
    %54 = vector.extract_strided_slice %50 {offsets = [0, 64], sizes = [2, 32], strides = [1, 1]} : vector<2x128xf32> to vector<2x32xf32>
    %55 = arith.mulf %52, %39 : vector<2x32xf32>
    %56 = arith.mulf %51, %54 : vector<2x32xf32>
    %57 = arith.addf %55, %56 : vector<2x32xf32>
    %58 = math.tanh %57 : vector<2x32xf32>
    %59 = arith.mulf %53, %58 : vector<2x32xf32>
    %60 = vector.extract_strided_slice %21 {offsets = [4, 0], sizes = [2, 128], strides = [1, 1]} : vector<16x128xf32> to vector<2x128xf32>
    %cst_18 = arith.constant dense<0.000000e+00> : vector<2x128xf32>
    %61 = tpu.matmul %59, %13, %cst_18 {dimension_numbers = #tpu.dot_dimension_numbers<[1], [0], [0], [1], [0, 0, 1, 1], [], []>} : vector<2x32xf32>, vector<32x128xf32>, vector<2x128xf32> -> vector<2x128xf32>
    %62 = arith.addf %60, %61 : vector<2x128xf32>
    %63 = arith.negf %62 : vector<2x128xf32>
    %64 = math.exp %63 : vector<2x128xf32>
    %cst_19 = arith.constant 1.000000e+00 : f32
    %65 = vector.broadcast %cst_19 : f32 to vector<2x128xf32>
    %66 = arith.addf %65, %64 : vector<2x128xf32>
    %67 = arith.divf %65, %66 : vector<2x128xf32>
    %68 = math.tanh %62 : vector<2x128xf32>
    %69 = vector.extract_strided_slice %67 {offsets = [0, 0], sizes = [2, 32], strides = [1, 1]} : vector<2x128xf32> to vector<2x32xf32>
    %70 = vector.extract_strided_slice %67 {offsets = [0, 32], sizes = [2, 32], strides = [1, 1]} : vector<2x128xf32> to vector<2x32xf32>
    %71 = vector.extract_strided_slice %67 {offsets = [0, 96], sizes = [2, 32], strides = [1, 1]} : vector<2x128xf32> to vector<2x32xf32>
    %72 = vector.extract_strided_slice %68 {offsets = [0, 64], sizes = [2, 32], strides = [1, 1]} : vector<2x128xf32> to vector<2x32xf32>
    %73 = arith.mulf %70, %57 : vector<2x32xf32>
    %74 = arith.mulf %69, %72 : vector<2x32xf32>
    %75 = arith.addf %73, %74 : vector<2x32xf32>
    %76 = math.tanh %75 : vector<2x32xf32>
    %77 = arith.mulf %71, %76 : vector<2x32xf32>
    %78 = vector.extract_strided_slice %21 {offsets = [6, 0], sizes = [2, 128], strides = [1, 1]} : vector<16x128xf32> to vector<2x128xf32>
    %cst_20 = arith.constant dense<0.000000e+00> : vector<2x128xf32>
    %79 = tpu.matmul %77, %13, %cst_20 {dimension_numbers = #tpu.dot_dimension_numbers<[1], [0], [0], [1], [0, 0, 1, 1], [], []>} : vector<2x32xf32>, vector<32x128xf32>, vector<2x128xf32> -> vector<2x128xf32>
    %80 = arith.addf %78, %79 : vector<2x128xf32>
    %81 = arith.negf %80 : vector<2x128xf32>
    %82 = math.exp %81 : vector<2x128xf32>
    %cst_21 = arith.constant 1.000000e+00 : f32
    %83 = vector.broadcast %cst_21 : f32 to vector<2x128xf32>
    %84 = arith.addf %83, %82 : vector<2x128xf32>
    %85 = arith.divf %83, %84 : vector<2x128xf32>
    %86 = math.tanh %80 : vector<2x128xf32>
    %87 = vector.extract_strided_slice %85 {offsets = [0, 0], sizes = [2, 32], strides = [1, 1]} : vector<2x128xf32> to vector<2x32xf32>
    %88 = vector.extract_strided_slice %85 {offsets = [0, 32], sizes = [2, 32], strides = [1, 1]} : vector<2x128xf32> to vector<2x32xf32>
    %89 = vector.extract_strided_slice %85 {offsets = [0, 96], sizes = [2, 32], strides = [1, 1]} : vector<2x128xf32> to vector<2x32xf32>
    %90 = vector.extract_strided_slice %86 {offsets = [0, 64], sizes = [2, 32], strides = [1, 1]} : vector<2x128xf32> to vector<2x32xf32>
    %91 = arith.mulf %88, %75 : vector<2x32xf32>
    %92 = arith.mulf %87, %90 : vector<2x32xf32>
    %93 = arith.addf %91, %92 : vector<2x32xf32>
    %94 = math.tanh %93 : vector<2x32xf32>
    %95 = arith.mulf %89, %94 : vector<2x32xf32>
    %96 = vector.extract_strided_slice %21 {offsets = [8, 0], sizes = [2, 128], strides = [1, 1]} : vector<16x128xf32> to vector<2x128xf32>
    %cst_22 = arith.constant dense<0.000000e+00> : vector<2x128xf32>
    %97 = tpu.matmul %95, %13, %cst_22 {dimension_numbers = #tpu.dot_dimension_numbers<[1], [0], [0], [1], [0, 0, 1, 1], [], []>} : vector<2x32xf32>, vector<32x128xf32>, vector<2x128xf32> -> vector<2x128xf32>
    %98 = arith.addf %96, %97 : vector<2x128xf32>
    %99 = arith.negf %98 : vector<2x128xf32>
    %100 = math.exp %99 : vector<2x128xf32>
    %cst_23 = arith.constant 1.000000e+00 : f32
    %101 = vector.broadcast %cst_23 : f32 to vector<2x128xf32>
    %102 = arith.addf %101, %100 : vector<2x128xf32>
    %103 = arith.divf %101, %102 : vector<2x128xf32>
    %104 = math.tanh %98 : vector<2x128xf32>
    %105 = vector.extract_strided_slice %103 {offsets = [0, 0], sizes = [2, 32], strides = [1, 1]} : vector<2x128xf32> to vector<2x32xf32>
    %106 = vector.extract_strided_slice %103 {offsets = [0, 32], sizes = [2, 32], strides = [1, 1]} : vector<2x128xf32> to vector<2x32xf32>
    %107 = vector.extract_strided_slice %103 {offsets = [0, 96], sizes = [2, 32], strides = [1, 1]} : vector<2x128xf32> to vector<2x32xf32>
    %108 = vector.extract_strided_slice %104 {offsets = [0, 64], sizes = [2, 32], strides = [1, 1]} : vector<2x128xf32> to vector<2x32xf32>
    %109 = arith.mulf %106, %93 : vector<2x32xf32>
    %110 = arith.mulf %105, %108 : vector<2x32xf32>
    %111 = arith.addf %109, %110 : vector<2x32xf32>
    %112 = math.tanh %111 : vector<2x32xf32>
    %113 = arith.mulf %107, %112 : vector<2x32xf32>
    %114 = vector.extract_strided_slice %21 {offsets = [10, 0], sizes = [2, 128], strides = [1, 1]} : vector<16x128xf32> to vector<2x128xf32>
    %cst_24 = arith.constant dense<0.000000e+00> : vector<2x128xf32>
    %115 = tpu.matmul %113, %13, %cst_24 {dimension_numbers = #tpu.dot_dimension_numbers<[1], [0], [0], [1], [0, 0, 1, 1], [], []>} : vector<2x32xf32>, vector<32x128xf32>, vector<2x128xf32> -> vector<2x128xf32>
    %116 = arith.addf %114, %115 : vector<2x128xf32>
    %117 = arith.negf %116 : vector<2x128xf32>
    %118 = math.exp %117 : vector<2x128xf32>
    %cst_25 = arith.constant 1.000000e+00 : f32
    %119 = vector.broadcast %cst_25 : f32 to vector<2x128xf32>
    %120 = arith.addf %119, %118 : vector<2x128xf32>
    %121 = arith.divf %119, %120 : vector<2x128xf32>
    %122 = math.tanh %116 : vector<2x128xf32>
    %123 = vector.extract_strided_slice %121 {offsets = [0, 0], sizes = [2, 32], strides = [1, 1]} : vector<2x128xf32> to vector<2x32xf32>
    %124 = vector.extract_strided_slice %121 {offsets = [0, 32], sizes = [2, 32], strides = [1, 1]} : vector<2x128xf32> to vector<2x32xf32>
    %125 = vector.extract_strided_slice %121 {offsets = [0, 96], sizes = [2, 32], strides = [1, 1]} : vector<2x128xf32> to vector<2x32xf32>
    %126 = vector.extract_strided_slice %122 {offsets = [0, 64], sizes = [2, 32], strides = [1, 1]} : vector<2x128xf32> to vector<2x32xf32>
    %127 = arith.mulf %124, %111 : vector<2x32xf32>
    %128 = arith.mulf %123, %126 : vector<2x32xf32>
    %129 = arith.addf %127, %128 : vector<2x32xf32>
    %130 = math.tanh %129 : vector<2x32xf32>
    %131 = arith.mulf %125, %130 : vector<2x32xf32>
    %132 = vector.extract_strided_slice %21 {offsets = [12, 0], sizes = [2, 128], strides = [1, 1]} : vector<16x128xf32> to vector<2x128xf32>
    %cst_26 = arith.constant dense<0.000000e+00> : vector<2x128xf32>
    %133 = tpu.matmul %131, %13, %cst_26 {dimension_numbers = #tpu.dot_dimension_numbers<[1], [0], [0], [1], [0, 0, 1, 1], [], []>} : vector<2x32xf32>, vector<32x128xf32>, vector<2x128xf32> -> vector<2x128xf32>
    %134 = arith.addf %132, %133 : vector<2x128xf32>
    %135 = arith.negf %134 : vector<2x128xf32>
    %136 = math.exp %135 : vector<2x128xf32>
    %cst_27 = arith.constant 1.000000e+00 : f32
    %137 = vector.broadcast %cst_27 : f32 to vector<2x128xf32>
    %138 = arith.addf %137, %136 : vector<2x128xf32>
    %139 = arith.divf %137, %138 : vector<2x128xf32>
    %140 = math.tanh %134 : vector<2x128xf32>
    %141 = vector.extract_strided_slice %139 {offsets = [0, 0], sizes = [2, 32], strides = [1, 1]} : vector<2x128xf32> to vector<2x32xf32>
    %142 = vector.extract_strided_slice %139 {offsets = [0, 32], sizes = [2, 32], strides = [1, 1]} : vector<2x128xf32> to vector<2x32xf32>
    %143 = vector.extract_strided_slice %139 {offsets = [0, 96], sizes = [2, 32], strides = [1, 1]} : vector<2x128xf32> to vector<2x32xf32>
    %144 = vector.extract_strided_slice %140 {offsets = [0, 64], sizes = [2, 32], strides = [1, 1]} : vector<2x128xf32> to vector<2x32xf32>
    %145 = arith.mulf %142, %129 : vector<2x32xf32>
    %146 = arith.mulf %141, %144 : vector<2x32xf32>
    %147 = arith.addf %145, %146 : vector<2x32xf32>
    %148 = math.tanh %147 : vector<2x32xf32>
    %149 = arith.mulf %143, %148 : vector<2x32xf32>
    %150 = vector.extract_strided_slice %21 {offsets = [14, 0], sizes = [2, 128], strides = [1, 1]} : vector<16x128xf32> to vector<2x128xf32>
    %cst_28 = arith.constant dense<0.000000e+00> : vector<2x128xf32>
    %151 = tpu.matmul %149, %13, %cst_28 {dimension_numbers = #tpu.dot_dimension_numbers<[1], [0], [0], [1], [0, 0, 1, 1], [], []>} : vector<2x32xf32>, vector<32x128xf32>, vector<2x128xf32> -> vector<2x128xf32>
    %152 = arith.addf %150, %151 : vector<2x128xf32>
    %153 = arith.negf %152 : vector<2x128xf32>
    %154 = math.exp %153 : vector<2x128xf32>
    %cst_29 = arith.constant 1.000000e+00 : f32
    %155 = vector.broadcast %cst_29 : f32 to vector<2x128xf32>
    %156 = arith.addf %155, %154 : vector<2x128xf32>
    %157 = arith.divf %155, %156 : vector<2x128xf32>
    %158 = math.tanh %152 : vector<2x128xf32>
    %159 = vector.extract_strided_slice %157 {offsets = [0, 0], sizes = [2, 32], strides = [1, 1]} : vector<2x128xf32> to vector<2x32xf32>
    %160 = vector.extract_strided_slice %157 {offsets = [0, 32], sizes = [2, 32], strides = [1, 1]} : vector<2x128xf32> to vector<2x32xf32>
    %161 = vector.extract_strided_slice %157 {offsets = [0, 96], sizes = [2, 32], strides = [1, 1]} : vector<2x128xf32> to vector<2x32xf32>
    %162 = vector.extract_strided_slice %158 {offsets = [0, 64], sizes = [2, 32], strides = [1, 1]} : vector<2x128xf32> to vector<2x32xf32>
    %163 = arith.mulf %160, %147 : vector<2x32xf32>
    %164 = arith.mulf %159, %162 : vector<2x32xf32>
    %165 = arith.addf %163, %164 : vector<2x32xf32>
    %166 = math.tanh %165 : vector<2x32xf32>
    %167 = arith.mulf %161, %166 : vector<2x32xf32>
    %168 = tpu.concatenate %41, %59, %77, %95, %113, %131, %149, %167 in 0 : vector<2x32xf32>, vector<2x32xf32>, vector<2x32xf32>, vector<2x32xf32>, vector<2x32xf32>, vector<2x32xf32>, vector<2x32xf32>, vector<2x32xf32> -> vector<16x32xf32>
    %c0_30 = arith.constant 0 : index
    %c0_31 = arith.constant 0 : index
    %c0_32 = arith.constant 0 : index
    %169 = vector.load %arg12[%c0_30, %c0_31, %c0_32] : memref<3x2x32xf32, #tpu.memory_space<vmem>>, vector<1x2x32xf32>
    %170 = vector.shape_cast %169 : vector<1x2x32xf32> to vector<2x32xf32>
    %171 = vector.shape_cast %167 : vector<2x32xf32> to vector<1x2x32xf32>
    tpu.vector_store %arg12[%c0_30, %c0_31, %c0_32], %171 {strides = array<i32>} : memref<3x2x32xf32, #tpu.memory_space<vmem>>, vector<1x2x32xf32>,
    %c0_33 = arith.constant 0 : index
    %c0_34 = arith.constant 0 : index
    %c0_35 = arith.constant 0 : index
    %172 = vector.load %arg13[%c0_33, %c0_34, %c0_35] : memref<3x2x32xf32, #tpu.memory_space<vmem>>, vector<1x2x32xf32>
    %173 = vector.shape_cast %172 : vector<1x2x32xf32> to vector<2x32xf32>
    %174 = vector.shape_cast %165 : vector<2x32xf32> to vector<1x2x32xf32>
    tpu.vector_store %arg13[%c0_33, %c0_34, %c0_35], %174 {strides = array<i32>} : memref<3x2x32xf32, #tpu.memory_space<vmem>>, vector<1x2x32xf32>,
    %c1 = arith.constant 1 : index
    %c0_36 = arith.constant 0 : index
    %c0_37 = arith.constant 0 : index
    %175 = vector.load %arg3[%c1, %c0_36, %c0_37] : memref<3x32x128xf32, #tpu.memory_space<vmem>>, vector<1x32x128xf32>
    %176 = vector.shape_cast %175 : vector<1x32x128xf32> to vector<32x128xf32>
    %c1_38 = arith.constant 1 : index
    %c0_39 = arith.constant 0 : index
    %c0_40 = arith.constant 0 : index
    %177 = vector.load %arg2[%c1_38, %c0_39, %c0_40] : memref<3x32x128xf32, #tpu.memory_space<vmem>>, vector<1x32x128xf32>
    %178 = vector.shape_cast %177 : vector<1x32x128xf32> to vector<32x128xf32>
    %cst_41 = arith.constant dense<0.000000e+00> : vector<16x128xf32>
    %179 = tpu.matmul %168, %178, %cst_41 {dimension_numbers = #tpu.dot_dimension_numbers<[1], [0], [0], [1], [0, 0, 1, 1], [], []>} : vector<16x32xf32>, vector<32x128xf32>, vector<16x128xf32> -> vector<16x128xf32>
    %c1_42 = arith.constant 1 : index
    %c0_43 = arith.constant 0 : index
    %180 = vector.load %arg4[%c1_42, %c0_43] : memref<3x128xf32, #tpu.memory_space<vmem>>, vector<1x128xf32>
    %181 = vector.shape_cast %180 : vector<1x128xf32> to vector<128xf32>
    %182 = vector.shape_cast %181 : vector<128xf32> to vector<1x128xf32>
    %183 = vector.broadcast %182 : vector<1x128xf32> to vector<16x128xf32>
    %184 = arith.addf %179, %183 : vector<16x128xf32>
    %cst_44 = arith.constant 0.000000e+00 : f32
    %185 = vector.broadcast %cst_44 : f32 to vector<2x32xf32>
    %cst_45 = arith.constant 0.000000e+00 : f32
    %186 = vector.broadcast %cst_45 : f32 to vector<2x32xf32>
    %187 = vector.extract_strided_slice %184 {offsets = [0, 0], sizes = [2, 128], strides = [1, 1]} : vector<16x128xf32> to vector<2x128xf32>
    %cst_46 = arith.constant dense<0.000000e+00> : vector<2x128xf32>
    %188 = tpu.matmul %185, %176, %cst_46 {dimension_numbers = #tpu.dot_dimension_numbers<[1], [0], [0], [1], [0, 0, 1, 1], [], []>} : vector<2x32xf32>, vector<32x128xf32>, vector<2x128xf32> -> vector<2x128xf32>
    %189 = arith.addf %187, %188 : vector<2x128xf32>
    %190 = arith.negf %189 : vector<2x128xf32>
    %191 = math.exp %190 : vector<2x128xf32>
    %cst_47 = arith.constant 1.000000e+00 : f32
    %192 = vector.broadcast %cst_47 : f32 to vector<2x128xf32>
    %193 = arith.addf %192, %191 : vector<2x128xf32>
    %194 = arith.divf %192, %193 : vector<2x128xf32>
    %195 = math.tanh %189 : vector<2x128xf32>
    %196 = vector.extract_strided_slice %194 {offsets = [0, 0], sizes = [2, 32], strides = [1, 1]} : vector<2x128xf32> to vector<2x32xf32>
    %197 = vector.extract_strided_slice %194 {offsets = [0, 32], sizes = [2, 32], strides = [1, 1]} : vector<2x128xf32> to vector<2x32xf32>
    %198 = vector.extract_strided_slice %194 {offsets = [0, 96], sizes = [2, 32], strides = [1, 1]} : vector<2x128xf32> to vector<2x32xf32>
    %199 = vector.extract_strided_slice %195 {offsets = [0, 64], sizes = [2, 32], strides = [1, 1]} : vector<2x128xf32> to vector<2x32xf32>
    %200 = arith.mulf %197, %186 : vector<2x32xf32>
    %201 = arith.mulf %196, %199 : vector<2x32xf32>
    %202 = arith.addf %200, %201 : vector<2x32xf32>
    %203 = math.tanh %202 : vector<2x32xf32>
    %204 = arith.mulf %198, %203 : vector<2x32xf32>
    %205 = vector.extract_strided_slice %184 {offsets = [2, 0], sizes = [2, 128], strides = [1, 1]} : vector<16x128xf32> to vector<2x128xf32>
    %cst_48 = arith.constant dense<0.000000e+00> : vector<2x128xf32>
    %206 = tpu.matmul %204, %176, %cst_48 {dimension_numbers = #tpu.dot_dimension_numbers<[1], [0], [0], [1], [0, 0, 1, 1], [], []>} : vector<2x32xf32>, vector<32x128xf32>, vector<2x128xf32> -> vector<2x128xf32>
    %207 = arith.addf %205, %206 : vector<2x128xf32>
    %208 = arith.negf %207 : vector<2x128xf32>
    %209 = math.exp %208 : vector<2x128xf32>
    %cst_49 = arith.constant 1.000000e+00 : f32
    %210 = vector.broadcast %cst_49 : f32 to vector<2x128xf32>
    %211 = arith.addf %210, %209 : vector<2x128xf32>
    %212 = arith.divf %210, %211 : vector<2x128xf32>
    %213 = math.tanh %207 : vector<2x128xf32>
    %214 = vector.extract_strided_slice %212 {offsets = [0, 0], sizes = [2, 32], strides = [1, 1]} : vector<2x128xf32> to vector<2x32xf32>
    %215 = vector.extract_strided_slice %212 {offsets = [0, 32], sizes = [2, 32], strides = [1, 1]} : vector<2x128xf32> to vector<2x32xf32>
    %216 = vector.extract_strided_slice %212 {offsets = [0, 96], sizes = [2, 32], strides = [1, 1]} : vector<2x128xf32> to vector<2x32xf32>
    %217 = vector.extract_strided_slice %213 {offsets = [0, 64], sizes = [2, 32], strides = [1, 1]} : vector<2x128xf32> to vector<2x32xf32>
    %218 = arith.mulf %215, %202 : vector<2x32xf32>
    %219 = arith.mulf %214, %217 : vector<2x32xf32>
    %220 = arith.addf %218, %219 : vector<2x32xf32>
    %221 = math.tanh %220 : vector<2x32xf32>
    %222 = arith.mulf %216, %221 : vector<2x32xf32>
    %223 = vector.extract_strided_slice %184 {offsets = [4, 0], sizes = [2, 128], strides = [1, 1]} : vector<16x128xf32> to vector<2x128xf32>
    %cst_50 = arith.constant dense<0.000000e+00> : vector<2x128xf32>
    %224 = tpu.matmul %222, %176, %cst_50 {dimension_numbers = #tpu.dot_dimension_numbers<[1], [0], [0], [1], [0, 0, 1, 1], [], []>} : vector<2x32xf32>, vector<32x128xf32>, vector<2x128xf32> -> vector<2x128xf32>
    %225 = arith.addf %223, %224 : vector<2x128xf32>
    %226 = arith.negf %225 : vector<2x128xf32>
    %227 = math.exp %226 : vector<2x128xf32>
    %cst_51 = arith.constant 1.000000e+00 : f32
    %228 = vector.broadcast %cst_51 : f32 to vector<2x128xf32>
    %229 = arith.addf %228, %227 : vector<2x128xf32>
    %230 = arith.divf %228, %229 : vector<2x128xf32>
    %231 = math.tanh %225 : vector<2x128xf32>
    %232 = vector.extract_strided_slice %230 {offsets = [0, 0], sizes = [2, 32], strides = [1, 1]} : vector<2x128xf32> to vector<2x32xf32>
    %233 = vector.extract_strided_slice %230 {offsets = [0, 32], sizes = [2, 32], strides = [1, 1]} : vector<2x128xf32> to vector<2x32xf32>
    %234 = vector.extract_strided_slice %230 {offsets = [0, 96], sizes = [2, 32], strides = [1, 1]} : vector<2x128xf32> to vector<2x32xf32>
    %235 = vector.extract_strided_slice %231 {offsets = [0, 64], sizes = [2, 32], strides = [1, 1]} : vector<2x128xf32> to vector<2x32xf32>
    %236 = arith.mulf %233, %220 : vector<2x32xf32>
    %237 = arith.mulf %232, %235 : vector<2x32xf32>
    %238 = arith.addf %236, %237 : vector<2x32xf32>
    %239 = math.tanh %238 : vector<2x32xf32>
    %240 = arith.mulf %234, %239 : vector<2x32xf32>
    %241 = vector.extract_strided_slice %184 {offsets = [6, 0], sizes = [2, 128], strides = [1, 1]} : vector<16x128xf32> to vector<2x128xf32>
    %cst_52 = arith.constant dense<0.000000e+00> : vector<2x128xf32>
    %242 = tpu.matmul %240, %176, %cst_52 {dimension_numbers = #tpu.dot_dimension_numbers<[1], [0], [0], [1], [0, 0, 1, 1], [], []>} : vector<2x32xf32>, vector<32x128xf32>, vector<2x128xf32> -> vector<2x128xf32>
    %243 = arith.addf %241, %242 : vector<2x128xf32>
    %244 = arith.negf %243 : vector<2x128xf32>
    %245 = math.exp %244 : vector<2x128xf32>
    %cst_53 = arith.constant 1.000000e+00 : f32
    %246 = vector.broadcast %cst_53 : f32 to vector<2x128xf32>
    %247 = arith.addf %246, %245 : vector<2x128xf32>
    %248 = arith.divf %246, %247 : vector<2x128xf32>
    %249 = math.tanh %243 : vector<2x128xf32>
    %250 = vector.extract_strided_slice %248 {offsets = [0, 0], sizes = [2, 32], strides = [1, 1]} : vector<2x128xf32> to vector<2x32xf32>
    %251 = vector.extract_strided_slice %248 {offsets = [0, 32], sizes = [2, 32], strides = [1, 1]} : vector<2x128xf32> to vector<2x32xf32>
    %252 = vector.extract_strided_slice %248 {offsets = [0, 96], sizes = [2, 32], strides = [1, 1]} : vector<2x128xf32> to vector<2x32xf32>
    %253 = vector.extract_strided_slice %249 {offsets = [0, 64], sizes = [2, 32], strides = [1, 1]} : vector<2x128xf32> to vector<2x32xf32>
    %254 = arith.mulf %251, %238 : vector<2x32xf32>
    %255 = arith.mulf %250, %253 : vector<2x32xf32>
    %256 = arith.addf %254, %255 : vector<2x32xf32>
    %257 = math.tanh %256 : vector<2x32xf32>
    %258 = arith.mulf %252, %257 : vector<2x32xf32>
    %259 = vector.extract_strided_slice %184 {offsets = [8, 0], sizes = [2, 128], strides = [1, 1]} : vector<16x128xf32> to vector<2x128xf32>
    %cst_54 = arith.constant dense<0.000000e+00> : vector<2x128xf32>
    %260 = tpu.matmul %258, %176, %cst_54 {dimension_numbers = #tpu.dot_dimension_numbers<[1], [0], [0], [1], [0, 0, 1, 1], [], []>} : vector<2x32xf32>, vector<32x128xf32>, vector<2x128xf32> -> vector<2x128xf32>
    %261 = arith.addf %259, %260 : vector<2x128xf32>
    %262 = arith.negf %261 : vector<2x128xf32>
    %263 = math.exp %262 : vector<2x128xf32>
    %cst_55 = arith.constant 1.000000e+00 : f32
    %264 = vector.broadcast %cst_55 : f32 to vector<2x128xf32>
    %265 = arith.addf %264, %263 : vector<2x128xf32>
    %266 = arith.divf %264, %265 : vector<2x128xf32>
    %267 = math.tanh %261 : vector<2x128xf32>
    %268 = vector.extract_strided_slice %266 {offsets = [0, 0], sizes = [2, 32], strides = [1, 1]} : vector<2x128xf32> to vector<2x32xf32>
    %269 = vector.extract_strided_slice %266 {offsets = [0, 32], sizes = [2, 32], strides = [1, 1]} : vector<2x128xf32> to vector<2x32xf32>
    %270 = vector.extract_strided_slice %266 {offsets = [0, 96], sizes = [2, 32], strides = [1, 1]} : vector<2x128xf32> to vector<2x32xf32>
    %271 = vector.extract_strided_slice %267 {offsets = [0, 64], sizes = [2, 32], strides = [1, 1]} : vector<2x128xf32> to vector<2x32xf32>
    %272 = arith.mulf %269, %256 : vector<2x32xf32>
    %273 = arith.mulf %268, %271 : vector<2x32xf32>
    %274 = arith.addf %272, %273 : vector<2x32xf32>
    %275 = math.tanh %274 : vector<2x32xf32>
    %276 = arith.mulf %270, %275 : vector<2x32xf32>
    %277 = vector.extract_strided_slice %184 {offsets = [10, 0], sizes = [2, 128], strides = [1, 1]} : vector<16x128xf32> to vector<2x128xf32>
    %cst_56 = arith.constant dense<0.000000e+00> : vector<2x128xf32>
    %278 = tpu.matmul %276, %176, %cst_56 {dimension_numbers = #tpu.dot_dimension_numbers<[1], [0], [0], [1], [0, 0, 1, 1], [], []>} : vector<2x32xf32>, vector<32x128xf32>, vector<2x128xf32> -> vector<2x128xf32>
    %279 = arith.addf %277, %278 : vector<2x128xf32>
    %280 = arith.negf %279 : vector<2x128xf32>
    %281 = math.exp %280 : vector<2x128xf32>
    %cst_57 = arith.constant 1.000000e+00 : f32
    %282 = vector.broadcast %cst_57 : f32 to vector<2x128xf32>
    %283 = arith.addf %282, %281 : vector<2x128xf32>
    %284 = arith.divf %282, %283 : vector<2x128xf32>
    %285 = math.tanh %279 : vector<2x128xf32>
    %286 = vector.extract_strided_slice %284 {offsets = [0, 0], sizes = [2, 32], strides = [1, 1]} : vector<2x128xf32> to vector<2x32xf32>
    %287 = vector.extract_strided_slice %284 {offsets = [0, 32], sizes = [2, 32], strides = [1, 1]} : vector<2x128xf32> to vector<2x32xf32>
    %288 = vector.extract_strided_slice %284 {offsets = [0, 96], sizes = [2, 32], strides = [1, 1]} : vector<2x128xf32> to vector<2x32xf32>
    %289 = vector.extract_strided_slice %285 {offsets = [0, 64], sizes = [2, 32], strides = [1, 1]} : vector<2x128xf32> to vector<2x32xf32>
    %290 = arith.mulf %287, %274 : vector<2x32xf32>
    %291 = arith.mulf %286, %289 : vector<2x32xf32>
    %292 = arith.addf %290, %291 : vector<2x32xf32>
    %293 = math.tanh %292 : vector<2x32xf32>
    %294 = arith.mulf %288, %293 : vector<2x32xf32>
    %295 = vector.extract_strided_slice %184 {offsets = [12, 0], sizes = [2, 128], strides = [1, 1]} : vector<16x128xf32> to vector<2x128xf32>
    %cst_58 = arith.constant dense<0.000000e+00> : vector<2x128xf32>
    %296 = tpu.matmul %294, %176, %cst_58 {dimension_numbers = #tpu.dot_dimension_numbers<[1], [0], [0], [1], [0, 0, 1, 1], [], []>} : vector<2x32xf32>, vector<32x128xf32>, vector<2x128xf32> -> vector<2x128xf32>
    %297 = arith.addf %295, %296 : vector<2x128xf32>
    %298 = arith.negf %297 : vector<2x128xf32>
    %299 = math.exp %298 : vector<2x128xf32>
    %cst_59 = arith.constant 1.000000e+00 : f32
    %300 = vector.broadcast %cst_59 : f32 to vector<2x128xf32>
    %301 = arith.addf %300, %299 : vector<2x128xf32>
    %302 = arith.divf %300, %301 : vector<2x128xf32>
    %303 = math.tanh %297 : vector<2x128xf32>
    %304 = vector.extract_strided_slice %302 {offsets = [0, 0], sizes = [2, 32], strides = [1, 1]} : vector<2x128xf32> to vector<2x32xf32>
    %305 = vector.extract_strided_slice %302 {offsets = [0, 32], sizes = [2, 32], strides = [1, 1]} : vector<2x128xf32> to vector<2x32xf32>
    %306 = vector.extract_strided_slice %302 {offsets = [0, 96], sizes = [2, 32], strides = [1, 1]} : vector<2x128xf32> to vector<2x32xf32>
    %307 = vector.extract_strided_slice %303 {offsets = [0, 64], sizes = [2, 32], strides = [1, 1]} : vector<2x128xf32> to vector<2x32xf32>
    %308 = arith.mulf %305, %292 : vector<2x32xf32>
    %309 = arith.mulf %304, %307 : vector<2x32xf32>
    %310 = arith.addf %308, %309 : vector<2x32xf32>
    %311 = math.tanh %310 : vector<2x32xf32>
    %312 = arith.mulf %306, %311 : vector<2x32xf32>
    %313 = vector.extract_strided_slice %184 {offsets = [14, 0], sizes = [2, 128], strides = [1, 1]} : vector<16x128xf32> to vector<2x128xf32>
    %cst_60 = arith.constant dense<0.000000e+00> : vector<2x128xf32>
    %314 = tpu.matmul %312, %176, %cst_60 {dimension_numbers = #tpu.dot_dimension_numbers<[1], [0], [0], [1], [0, 0, 1, 1], [], []>} : vector<2x32xf32>, vector<32x128xf32>, vector<2x128xf32> -> vector<2x128xf32>
    %315 = arith.addf %313, %314 : vector<2x128xf32>
    %316 = arith.negf %315 : vector<2x128xf32>
    %317 = math.exp %316 : vector<2x128xf32>
    %cst_61 = arith.constant 1.000000e+00 : f32
    %318 = vector.broadcast %cst_61 : f32 to vector<2x128xf32>
    %319 = arith.addf %318, %317 : vector<2x128xf32>
    %320 = arith.divf %318, %319 : vector<2x128xf32>
    %321 = math.tanh %315 : vector<2x128xf32>
    %322 = vector.extract_strided_slice %320 {offsets = [0, 0], sizes = [2, 32], strides = [1, 1]} : vector<2x128xf32> to vector<2x32xf32>
    %323 = vector.extract_strided_slice %320 {offsets = [0, 32], sizes = [2, 32], strides = [1, 1]} : vector<2x128xf32> to vector<2x32xf32>
    %324 = vector.extract_strided_slice %320 {offsets = [0, 96], sizes = [2, 32], strides = [1, 1]} : vector<2x128xf32> to vector<2x32xf32>
    %325 = vector.extract_strided_slice %321 {offsets = [0, 64], sizes = [2, 32], strides = [1, 1]} : vector<2x128xf32> to vector<2x32xf32>
    %326 = arith.mulf %323, %310 : vector<2x32xf32>
    %327 = arith.mulf %322, %325 : vector<2x32xf32>
    %328 = arith.addf %326, %327 : vector<2x32xf32>
    %329 = math.tanh %328 : vector<2x32xf32>
    %330 = arith.mulf %324, %329 : vector<2x32xf32>
    %331 = tpu.concatenate %204, %222, %240, %258, %276, %294, %312, %330 in 0 : vector<2x32xf32>, vector<2x32xf32>, vector<2x32xf32>, vector<2x32xf32>, vector<2x32xf32>, vector<2x32xf32>, vector<2x32xf32>, vector<2x32xf32> -> vector<16x32xf32>
    %c1_62 = arith.constant 1 : index
    %c0_63 = arith.constant 0 : index
    %c0_64 = arith.constant 0 : index
    %332 = vector.load %arg12[%c1_62, %c0_63, %c0_64] : memref<3x2x32xf32, #tpu.memory_space<vmem>>, vector<1x2x32xf32>
    %333 = vector.shape_cast %332 : vector<1x2x32xf32> to vector<2x32xf32>
    %334 = vector.shape_cast %330 : vector<2x32xf32> to vector<1x2x32xf32>
    tpu.vector_store %arg12[%c1_62, %c0_63, %c0_64], %334 {strides = array<i32>} : memref<3x2x32xf32, #tpu.memory_space<vmem>>, vector<1x2x32xf32>,
    %c1_65 = arith.constant 1 : index
    %c0_66 = arith.constant 0 : index
    %c0_67 = arith.constant 0 : index
    %335 = vector.load %arg13[%c1_65, %c0_66, %c0_67] : memref<3x2x32xf32, #tpu.memory_space<vmem>>, vector<1x2x32xf32>
    %336 = vector.shape_cast %335 : vector<1x2x32xf32> to vector<2x32xf32>
    %337 = vector.shape_cast %328 : vector<2x32xf32> to vector<1x2x32xf32>
    tpu.vector_store %arg13[%c1_65, %c0_66, %c0_67], %337 {strides = array<i32>} : memref<3x2x32xf32, #tpu.memory_space<vmem>>, vector<1x2x32xf32>,
    %c2 = arith.constant 2 : index
    %c0_68 = arith.constant 0 : index
    %c0_69 = arith.constant 0 : index
    %338 = vector.load %arg3[%c2, %c0_68, %c0_69] : memref<3x32x128xf32, #tpu.memory_space<vmem>>, vector<1x32x128xf32>
    %339 = vector.shape_cast %338 : vector<1x32x128xf32> to vector<32x128xf32>
    %c2_70 = arith.constant 2 : index
    %c0_71 = arith.constant 0 : index
    %c0_72 = arith.constant 0 : index
    %340 = vector.load %arg2[%c2_70, %c0_71, %c0_72] : memref<3x32x128xf32, #tpu.memory_space<vmem>>, vector<1x32x128xf32>
    %341 = vector.shape_cast %340 : vector<1x32x128xf32> to vector<32x128xf32>
    %cst_73 = arith.constant dense<0.000000e+00> : vector<16x128xf32>
    %342 = tpu.matmul %331, %341, %cst_73 {dimension_numbers = #tpu.dot_dimension_numbers<[1], [0], [0], [1], [0, 0, 1, 1], [], []>} : vector<16x32xf32>, vector<32x128xf32>, vector<16x128xf32> -> vector<16x128xf32>
    %c2_74 = arith.constant 2 : index
    %c0_75 = arith.constant 0 : index
    %343 = vector.load %arg4[%c2_74, %c0_75] : memref<3x128xf32, #tpu.memory_space<vmem>>, vector<1x128xf32>
    %344 = vector.shape_cast %343 : vector<1x128xf32> to vector<128xf32>
    %345 = vector.shape_cast %344 : vector<128xf32> to vector<1x128xf32>
    %346 = vector.broadcast %345 : vector<1x128xf32> to vector<16x128xf32>
    %347 = arith.addf %342, %346 : vector<16x128xf32>
    %cst_76 = arith.constant 0.000000e+00 : f32
    %348 = vector.broadcast %cst_76 : f32 to vector<2x32xf32>
    %cst_77 = arith.constant 0.000000e+00 : f32
    %349 = vector.broadcast %cst_77 : f32 to vector<2x32xf32>
    %350 = vector.extract_strided_slice %347 {offsets = [0, 0], sizes = [2, 128], strides = [1, 1]} : vector<16x128xf32> to vector<2x128xf32>
    %cst_78 = arith.constant dense<0.000000e+00> : vector<2x128xf32>
    %351 = tpu.matmul %348, %339, %cst_78 {dimension_numbers = #tpu.dot_dimension_numbers<[1], [0], [0], [1], [0, 0, 1, 1], [], []>} : vector<2x32xf32>, vector<32x128xf32>, vector<2x128xf32> -> vector<2x128xf32>
    %352 = arith.addf %350, %351 : vector<2x128xf32>
    %353 = arith.negf %352 : vector<2x128xf32>
    %354 = math.exp %353 : vector<2x128xf32>
    %cst_79 = arith.constant 1.000000e+00 : f32
    %355 = vector.broadcast %cst_79 : f32 to vector<2x128xf32>
    %356 = arith.addf %355, %354 : vector<2x128xf32>
    %357 = arith.divf %355, %356 : vector<2x128xf32>
    %358 = math.tanh %352 : vector<2x128xf32>
    %359 = vector.extract_strided_slice %357 {offsets = [0, 0], sizes = [2, 32], strides = [1, 1]} : vector<2x128xf32> to vector<2x32xf32>
    %360 = vector.extract_strided_slice %357 {offsets = [0, 32], sizes = [2, 32], strides = [1, 1]} : vector<2x128xf32> to vector<2x32xf32>
    %361 = vector.extract_strided_slice %357 {offsets = [0, 96], sizes = [2, 32], strides = [1, 1]} : vector<2x128xf32> to vector<2x32xf32>
    %362 = vector.extract_strided_slice %358 {offsets = [0, 64], sizes = [2, 32], strides = [1, 1]} : vector<2x128xf32> to vector<2x32xf32>
    %363 = arith.mulf %360, %349 : vector<2x32xf32>
    %364 = arith.mulf %359, %362 : vector<2x32xf32>
    %365 = arith.addf %363, %364 : vector<2x32xf32>
    %366 = math.tanh %365 : vector<2x32xf32>
    %367 = arith.mulf %361, %366 : vector<2x32xf32>
    %368 = vector.extract_strided_slice %347 {offsets = [2, 0], sizes = [2, 128], strides = [1, 1]} : vector<16x128xf32> to vector<2x128xf32>
    %cst_80 = arith.constant dense<0.000000e+00> : vector<2x128xf32>
    %369 = tpu.matmul %367, %339, %cst_80 {dimension_numbers = #tpu.dot_dimension_numbers<[1], [0], [0], [1], [0, 0, 1, 1], [], []>} : vector<2x32xf32>, vector<32x128xf32>, vector<2x128xf32> -> vector<2x128xf32>
    %370 = arith.addf %368, %369 : vector<2x128xf32>
    %371 = arith.negf %370 : vector<2x128xf32>
    %372 = math.exp %371 : vector<2x128xf32>
    %cst_81 = arith.constant 1.000000e+00 : f32
    %373 = vector.broadcast %cst_81 : f32 to vector<2x128xf32>
    %374 = arith.addf %373, %372 : vector<2x128xf32>
    %375 = arith.divf %373, %374 : vector<2x128xf32>
    %376 = math.tanh %370 : vector<2x128xf32>
    %377 = vector.extract_strided_slice %375 {offsets = [0, 0], sizes = [2, 32], strides = [1, 1]} : vector<2x128xf32> to vector<2x32xf32>
    %378 = vector.extract_strided_slice %375 {offsets = [0, 32], sizes = [2, 32], strides = [1, 1]} : vector<2x128xf32> to vector<2x32xf32>
    %379 = vector.extract_strided_slice %375 {offsets = [0, 96], sizes = [2, 32], strides = [1, 1]} : vector<2x128xf32> to vector<2x32xf32>
    %380 = vector.extract_strided_slice %376 {offsets = [0, 64], sizes = [2, 32], strides = [1, 1]} : vector<2x128xf32> to vector<2x32xf32>
    %381 = arith.mulf %378, %365 : vector<2x32xf32>
    %382 = arith.mulf %377, %380 : vector<2x32xf32>
    %383 = arith.addf %381, %382 : vector<2x32xf32>
    %384 = math.tanh %383 : vector<2x32xf32>
    %385 = arith.mulf %379, %384 : vector<2x32xf32>
    %386 = vector.extract_strided_slice %347 {offsets = [4, 0], sizes = [2, 128], strides = [1, 1]} : vector<16x128xf32> to vector<2x128xf32>
    %cst_82 = arith.constant dense<0.000000e+00> : vector<2x128xf32>
    %387 = tpu.matmul %385, %339, %cst_82 {dimension_numbers = #tpu.dot_dimension_numbers<[1], [0], [0], [1], [0, 0, 1, 1], [], []>} : vector<2x32xf32>, vector<32x128xf32>, vector<2x128xf32> -> vector<2x128xf32>
    %388 = arith.addf %386, %387 : vector<2x128xf32>
    %389 = arith.negf %388 : vector<2x128xf32>
    %390 = math.exp %389 : vector<2x128xf32>
    %cst_83 = arith.constant 1.000000e+00 : f32
    %391 = vector.broadcast %cst_83 : f32 to vector<2x128xf32>
    %392 = arith.addf %391, %390 : vector<2x128xf32>
    %393 = arith.divf %391, %392 : vector<2x128xf32>
    %394 = math.tanh %388 : vector<2x128xf32>
    %395 = vector.extract_strided_slice %393 {offsets = [0, 0], sizes = [2, 32], strides = [1, 1]} : vector<2x128xf32> to vector<2x32xf32>
    %396 = vector.extract_strided_slice %393 {offsets = [0, 32], sizes = [2, 32], strides = [1, 1]} : vector<2x128xf32> to vector<2x32xf32>
    %397 = vector.extract_strided_slice %393 {offsets = [0, 96], sizes = [2, 32], strides = [1, 1]} : vector<2x128xf32> to vector<2x32xf32>
    %398 = vector.extract_strided_slice %394 {offsets = [0, 64], sizes = [2, 32], strides = [1, 1]} : vector<2x128xf32> to vector<2x32xf32>
    %399 = arith.mulf %396, %383 : vector<2x32xf32>
    %400 = arith.mulf %395, %398 : vector<2x32xf32>
    %401 = arith.addf %399, %400 : vector<2x32xf32>
    %402 = math.tanh %401 : vector<2x32xf32>
    %403 = arith.mulf %397, %402 : vector<2x32xf32>
    %404 = vector.extract_strided_slice %347 {offsets = [6, 0], sizes = [2, 128], strides = [1, 1]} : vector<16x128xf32> to vector<2x128xf32>
    %cst_84 = arith.constant dense<0.000000e+00> : vector<2x128xf32>
    %405 = tpu.matmul %403, %339, %cst_84 {dimension_numbers = #tpu.dot_dimension_numbers<[1], [0], [0], [1], [0, 0, 1, 1], [], []>} : vector<2x32xf32>, vector<32x128xf32>, vector<2x128xf32> -> vector<2x128xf32>
    %406 = arith.addf %404, %405 : vector<2x128xf32>
    %407 = arith.negf %406 : vector<2x128xf32>
    %408 = math.exp %407 : vector<2x128xf32>
    %cst_85 = arith.constant 1.000000e+00 : f32
    %409 = vector.broadcast %cst_85 : f32 to vector<2x128xf32>
    %410 = arith.addf %409, %408 : vector<2x128xf32>
    %411 = arith.divf %409, %410 : vector<2x128xf32>
    %412 = math.tanh %406 : vector<2x128xf32>
    %413 = vector.extract_strided_slice %411 {offsets = [0, 0], sizes = [2, 32], strides = [1, 1]} : vector<2x128xf32> to vector<2x32xf32>
    %414 = vector.extract_strided_slice %411 {offsets = [0, 32], sizes = [2, 32], strides = [1, 1]} : vector<2x128xf32> to vector<2x32xf32>
    %415 = vector.extract_strided_slice %411 {offsets = [0, 96], sizes = [2, 32], strides = [1, 1]} : vector<2x128xf32> to vector<2x32xf32>
    %416 = vector.extract_strided_slice %412 {offsets = [0, 64], sizes = [2, 32], strides = [1, 1]} : vector<2x128xf32> to vector<2x32xf32>
    %417 = arith.mulf %414, %401 : vector<2x32xf32>
    %418 = arith.mulf %413, %416 : vector<2x32xf32>
    %419 = arith.addf %417, %418 : vector<2x32xf32>
    %420 = math.tanh %419 : vector<2x32xf32>
    %421 = arith.mulf %415, %420 : vector<2x32xf32>
    %422 = vector.extract_strided_slice %347 {offsets = [8, 0], sizes = [2, 128], strides = [1, 1]} : vector<16x128xf32> to vector<2x128xf32>
    %cst_86 = arith.constant dense<0.000000e+00> : vector<2x128xf32>
    %423 = tpu.matmul %421, %339, %cst_86 {dimension_numbers = #tpu.dot_dimension_numbers<[1], [0], [0], [1], [0, 0, 1, 1], [], []>} : vector<2x32xf32>, vector<32x128xf32>, vector<2x128xf32> -> vector<2x128xf32>
    %424 = arith.addf %422, %423 : vector<2x128xf32>
    %425 = arith.negf %424 : vector<2x128xf32>
    %426 = math.exp %425 : vector<2x128xf32>
    %cst_87 = arith.constant 1.000000e+00 : f32
    %427 = vector.broadcast %cst_87 : f32 to vector<2x128xf32>
    %428 = arith.addf %427, %426 : vector<2x128xf32>
    %429 = arith.divf %427, %428 : vector<2x128xf32>
    %430 = math.tanh %424 : vector<2x128xf32>
    %431 = vector.extract_strided_slice %429 {offsets = [0, 0], sizes = [2, 32], strides = [1, 1]} : vector<2x128xf32> to vector<2x32xf32>
    %432 = vector.extract_strided_slice %429 {offsets = [0, 32], sizes = [2, 32], strides = [1, 1]} : vector<2x128xf32> to vector<2x32xf32>
    %433 = vector.extract_strided_slice %429 {offsets = [0, 96], sizes = [2, 32], strides = [1, 1]} : vector<2x128xf32> to vector<2x32xf32>
    %434 = vector.extract_strided_slice %430 {offsets = [0, 64], sizes = [2, 32], strides = [1, 1]} : vector<2x128xf32> to vector<2x32xf32>
    %435 = arith.mulf %432, %419 : vector<2x32xf32>
    %436 = arith.mulf %431, %434 : vector<2x32xf32>
    %437 = arith.addf %435, %436 : vector<2x32xf32>
    %438 = math.tanh %437 : vector<2x32xf32>
    %439 = arith.mulf %433, %438 : vector<2x32xf32>
    %440 = vector.extract_strided_slice %347 {offsets = [10, 0], sizes = [2, 128], strides = [1, 1]} : vector<16x128xf32> to vector<2x128xf32>
    %cst_88 = arith.constant dense<0.000000e+00> : vector<2x128xf32>
    %441 = tpu.matmul %439, %339, %cst_88 {dimension_numbers = #tpu.dot_dimension_numbers<[1], [0], [0], [1], [0, 0, 1, 1], [], []>} : vector<2x32xf32>, vector<32x128xf32>, vector<2x128xf32> -> vector<2x128xf32>
    %442 = arith.addf %440, %441 : vector<2x128xf32>
    %443 = arith.negf %442 : vector<2x128xf32>
    %444 = math.exp %443 : vector<2x128xf32>
    %cst_89 = arith.constant 1.000000e+00 : f32
    %445 = vector.broadcast %cst_89 : f32 to vector<2x128xf32>
    %446 = arith.addf %445, %444 : vector<2x128xf32>
    %447 = arith.divf %445, %446 : vector<2x128xf32>
    %448 = math.tanh %442 : vector<2x128xf32>
    %449 = vector.extract_strided_slice %447 {offsets = [0, 0], sizes = [2, 32], strides = [1, 1]} : vector<2x128xf32> to vector<2x32xf32>
    %450 = vector.extract_strided_slice %447 {offsets = [0, 32], sizes = [2, 32], strides = [1, 1]} : vector<2x128xf32> to vector<2x32xf32>
    %451 = vector.extract_strided_slice %447 {offsets = [0, 96], sizes = [2, 32], strides = [1, 1]} : vector<2x128xf32> to vector<2x32xf32>
    %452 = vector.extract_strided_slice %448 {offsets = [0, 64], sizes = [2, 32], strides = [1, 1]} : vector<2x128xf32> to vector<2x32xf32>
    %453 = arith.mulf %450, %437 : vector<2x32xf32>
    %454 = arith.mulf %449, %452 : vector<2x32xf32>
    %455 = arith.addf %453, %454 : vector<2x32xf32>
    %456 = math.tanh %455 : vector<2x32xf32>
    %457 = arith.mulf %451, %456 : vector<2x32xf32>
    %458 = vector.extract_strided_slice %347 {offsets = [12, 0], sizes = [2, 128], strides = [1, 1]} : vector<16x128xf32> to vector<2x128xf32>
    %cst_90 = arith.constant dense<0.000000e+00> : vector<2x128xf32>
    %459 = tpu.matmul %457, %339, %cst_90 {dimension_numbers = #tpu.dot_dimension_numbers<[1], [0], [0], [1], [0, 0, 1, 1], [], []>} : vector<2x32xf32>, vector<32x128xf32>, vector<2x128xf32> -> vector<2x128xf32>
    %460 = arith.addf %458, %459 : vector<2x128xf32>
    %461 = arith.negf %460 : vector<2x128xf32>
    %462 = math.exp %461 : vector<2x128xf32>
    %cst_91 = arith.constant 1.000000e+00 : f32
    %463 = vector.broadcast %cst_91 : f32 to vector<2x128xf32>
    %464 = arith.addf %463, %462 : vector<2x128xf32>
    %465 = arith.divf %463, %464 : vector<2x128xf32>
    %466 = math.tanh %460 : vector<2x128xf32>
    %467 = vector.extract_strided_slice %465 {offsets = [0, 0], sizes = [2, 32], strides = [1, 1]} : vector<2x128xf32> to vector<2x32xf32>
    %468 = vector.extract_strided_slice %465 {offsets = [0, 32], sizes = [2, 32], strides = [1, 1]} : vector<2x128xf32> to vector<2x32xf32>
    %469 = vector.extract_strided_slice %465 {offsets = [0, 96], sizes = [2, 32], strides = [1, 1]} : vector<2x128xf32> to vector<2x32xf32>
    %470 = vector.extract_strided_slice %466 {offsets = [0, 64], sizes = [2, 32], strides = [1, 1]} : vector<2x128xf32> to vector<2x32xf32>
    %471 = arith.mulf %468, %455 : vector<2x32xf32>
    %472 = arith.mulf %467, %470 : vector<2x32xf32>
    %473 = arith.addf %471, %472 : vector<2x32xf32>
    %474 = math.tanh %473 : vector<2x32xf32>
    %475 = arith.mulf %469, %474 : vector<2x32xf32>
    %476 = vector.extract_strided_slice %347 {offsets = [14, 0], sizes = [2, 128], strides = [1, 1]} : vector<16x128xf32> to vector<2x128xf32>
    %cst_92 = arith.constant dense<0.000000e+00> : vector<2x128xf32>
    %477 = tpu.matmul %475, %339, %cst_92 {dimension_numbers = #tpu.dot_dimension_numbers<[1], [0], [0], [1], [0, 0, 1, 1], [], []>} : vector<2x32xf32>, vector<32x128xf32>, vector<2x128xf32> -> vector<2x128xf32>
    %478 = arith.addf %476, %477 : vector<2x128xf32>
    %479 = arith.negf %478 : vector<2x128xf32>
    %480 = math.exp %479 : vector<2x128xf32>
    %cst_93 = arith.constant 1.000000e+00 : f32
    %481 = vector.broadcast %cst_93 : f32 to vector<2x128xf32>
    %482 = arith.addf %481, %480 : vector<2x128xf32>
    %483 = arith.divf %481, %482 : vector<2x128xf32>
    %484 = math.tanh %478 : vector<2x128xf32>
    %485 = vector.extract_strided_slice %483 {offsets = [0, 0], sizes = [2, 32], strides = [1, 1]} : vector<2x128xf32> to vector<2x32xf32>
    %486 = vector.extract_strided_slice %483 {offsets = [0, 32], sizes = [2, 32], strides = [1, 1]} : vector<2x128xf32> to vector<2x32xf32>
    %487 = vector.extract_strided_slice %483 {offsets = [0, 96], sizes = [2, 32], strides = [1, 1]} : vector<2x128xf32> to vector<2x32xf32>
    %488 = vector.extract_strided_slice %484 {offsets = [0, 64], sizes = [2, 32], strides = [1, 1]} : vector<2x128xf32> to vector<2x32xf32>
    %489 = arith.mulf %486, %473 : vector<2x32xf32>
    %490 = arith.mulf %485, %488 : vector<2x32xf32>
    %491 = arith.addf %489, %490 : vector<2x32xf32>
    %492 = math.tanh %491 : vector<2x32xf32>
    %493 = arith.mulf %487, %492 : vector<2x32xf32>
    %494 = tpu.concatenate %367, %385, %403, %421, %439, %457, %475, %493 in 0 : vector<2x32xf32>, vector<2x32xf32>, vector<2x32xf32>, vector<2x32xf32>, vector<2x32xf32>, vector<2x32xf32>, vector<2x32xf32>, vector<2x32xf32> -> vector<16x32xf32>
    %c2_94 = arith.constant 2 : index
    %c0_95 = arith.constant 0 : index
    %c0_96 = arith.constant 0 : index
    %495 = vector.load %arg12[%c2_94, %c0_95, %c0_96] : memref<3x2x32xf32, #tpu.memory_space<vmem>>, vector<1x2x32xf32>
    %496 = vector.shape_cast %495 : vector<1x2x32xf32> to vector<2x32xf32>
    %497 = vector.shape_cast %493 : vector<2x32xf32> to vector<1x2x32xf32>
    tpu.vector_store %arg12[%c2_94, %c0_95, %c0_96], %497 {strides = array<i32>} : memref<3x2x32xf32, #tpu.memory_space<vmem>>, vector<1x2x32xf32>,
    %c2_97 = arith.constant 2 : index
    %c0_98 = arith.constant 0 : index
    %c0_99 = arith.constant 0 : index
    %498 = vector.load %arg13[%c2_97, %c0_98, %c0_99] : memref<3x2x32xf32, #tpu.memory_space<vmem>>, vector<1x2x32xf32>
    %499 = vector.shape_cast %498 : vector<1x2x32xf32> to vector<2x32xf32>
    %500 = vector.shape_cast %491 : vector<2x32xf32> to vector<1x2x32xf32>
    tpu.vector_store %arg13[%c2_97, %c0_98, %c0_99], %500 {strides = array<i32>} : memref<3x2x32xf32, #tpu.memory_space<vmem>>, vector<1x2x32xf32>,
    %c0_100 = arith.constant 0 : index
    %c0_101 = arith.constant 0 : index
    %501 = vector.load %arg5[%c0_100, %c0_101] : memref<32x512xf32, #tpu.memory_space<vmem>>, vector<32x512xf32>
    %cst_102 = arith.constant dense<0.000000e+00> : vector<16x512xf32>
    %502 = tpu.matmul %494, %501, %cst_102 {dimension_numbers = #tpu.dot_dimension_numbers<[1], [0], [0], [1], [0, 0, 1, 1], [], []>} : vector<16x32xf32>, vector<32x512xf32>, vector<16x512xf32> -> vector<16x512xf32>
    %c0_103 = arith.constant 0 : index
    %c0_104 = arith.constant 0 : index
    %503 = vector.load %arg6[%c0_103, %c0_104] : memref<1x512xf32, #tpu.memory_space<vmem>>, vector<1x512xf32>
    %504 = vector.broadcast %503 : vector<1x512xf32> to vector<16x512xf32>
    %505 = arith.addf %502, %504 : vector<16x512xf32>
    %cst_105 = arith.constant 0.000000e+00 : f32
    %506 = vector.broadcast %cst_105 : f32 to vector<16x512xf32>
    %507 = arith.maximumf %505, %506 : vector<16x512xf32>
    %c0_i32_106 = arith.constant 0 : i32
    %508 = tpu.memref_slice %arg16[%c0_i32_106] : memref<2x!tpu.dma_semaphore, #tpu.memory_space<semaphore_mem>> -> memref<1x!tpu.dma_semaphore, #tpu.memory_space<semaphore_mem>>
    %509 = tpu.memref_squeeze %508 : memref<1x!tpu.dma_semaphore, #tpu.memory_space<semaphore_mem>> -> memref<!tpu.dma_semaphore, #tpu.memory_space<semaphore_mem>>
    tpu.wait_dma2 semaphore(%509 : memref<!tpu.dma_semaphore, #tpu.memory_space<semaphore_mem>>) src(%arg9 : memref<512x2048xbf16, #tpu.memory_space<any>>) dst(%arg14 : memref<512x2048xbf16, #tpu.memory_space<vmem>>)
    %510 = arith.truncf %507 : vector<16x512xf32> to vector<16x512xbf16>
    %c0_107 = arith.constant 0 : index
    %c0_108 = arith.constant 0 : index
    %511 = vector.load %arg14[%c0_107, %c0_108] : memref<512x2048xbf16, #tpu.memory_space<vmem>>, vector<512x2048xbf16>
    %cst_109 = arith.constant dense<0.000000e+00> : vector<16x2048xf32>
    %512 = tpu.matmul %510, %511, %cst_109 {dimension_numbers = #tpu.dot_dimension_numbers<[1], [0], [0], [1], [0, 0, 1, 1], [], []>} : vector<16x512xbf16>, vector<512x2048xbf16>, vector<16x2048xf32> -> vector<16x2048xf32>
    %c0_110 = arith.constant 0 : index
    %c0_111 = arith.constant 0 : index
    %513 = vector.load %arg7[%c0_110, %c0_111] : memref<1x2048xf32, #tpu.memory_space<vmem>>, vector<1x2048xf32>
    %514 = vector.broadcast %513 : vector<1x2048xf32> to vector<16x2048xf32>
    %515 = arith.addf %512, %514 : vector<16x2048xf32>
    %cst_112 = arith.constant 0.000000e+00 : f32
    %516 = vector.broadcast %cst_112 : f32 to vector<16x2048xf32>
    %517 = arith.maximumf %515, %516 : vector<16x2048xf32>
    %c1_i32_113 = arith.constant 1 : i32
    %518 = tpu.memref_slice %arg16[%c1_i32_113] : memref<2x!tpu.dma_semaphore, #tpu.memory_space<semaphore_mem>> -> memref<1x!tpu.dma_semaphore, #tpu.memory_space<semaphore_mem>>
    %519 = tpu.memref_squeeze %518 : memref<1x!tpu.dma_semaphore, #tpu.memory_space<semaphore_mem>> -> memref<!tpu.dma_semaphore, #tpu.memory_space<semaphore_mem>>
    tpu.wait_dma2 semaphore(%519 : memref<!tpu.dma_semaphore, #tpu.memory_space<semaphore_mem>>) src(%arg10 : memref<2048x256xbf16, #tpu.memory_space<any>>) dst(%arg15 : memref<2048x256xbf16, #tpu.memory_space<vmem>>)
    %520 = arith.truncf %517 : vector<16x2048xf32> to vector<16x2048xbf16>
    %c0_114 = arith.constant 0 : index
    %c0_115 = arith.constant 0 : index
    %521 = vector.load %arg15[%c0_114, %c0_115] : memref<2048x256xbf16, #tpu.memory_space<vmem>>, vector<2048x256xbf16>
    %cst_116 = arith.constant dense<0.000000e+00> : vector<16x256xf32>
    %522 = tpu.matmul %520, %521, %cst_116 {dimension_numbers = #tpu.dot_dimension_numbers<[1], [0], [0], [1], [0, 0, 1, 1], [], []>} : vector<16x2048xbf16>, vector<2048x256xbf16>, vector<16x256xf32> -> vector<16x256xf32>
    %c0_117 = arith.constant 0 : index
    %c0_118 = arith.constant 0 : index
    %523 = vector.load %arg8[%c0_117, %c0_118] : memref<1x256xf32, #tpu.memory_space<vmem>>, vector<1x256xf32>
    %524 = vector.broadcast %523 : vector<1x256xf32> to vector<16x256xf32>
    %525 = arith.addf %522, %524 : vector<16x256xf32>
    %c0_119 = arith.constant 0 : index
    %c0_120 = arith.constant 0 : index
    %526 = vector.load %arg11[%c0_119, %c0_120] : memref<16x256xf32, #tpu.memory_space<vmem>>, vector<16x256xf32>
    tpu.vector_store %arg11[%c0_119, %c0_120], %525 {strides = array<i32>} : memref<16x256xf32, #tpu.memory_space<vmem>>, vector<16x256xf32>,
    return
  }
}

</mosaic_0001>

<llo_original>
// kernel: poetry_forward.1
$region0: #{poetry_forward.1}
  #allocation0 [shape = 'u32[]', space=smem, size = 0x4, offset = 0x4, fixed_abs, tag = 'smem constant byte address 0x4 - core index']
  #allocation1 [shape = 'u32[144,128]{1,0:T(1,128)}', space=vmem, size = 0x12000, scoped, tag = 'internal scratch']
  #allocation2 [shape = 'bf16[512,2048]{1,0:T(16,128)(2,1)}', space=vmem, size = 0x200000, scoped, tag = 'scratch operand']
  #allocation3 [shape = 'bf16[2048,256]{1,0:T(16,128)(2,1)}', space=vmem, size = 0x100000, scoped, tag = 'scratch operand']
  #allocation4 [shape = 's32[2]{0}', space=sflag, size = 0x8, scoped, tag = 'scratch operand']
  #allocation21 [shape = 's32[]', space=sflag, size = 0x4, offset = 0, fixed_abs, tag = 'sflag constant byte address 0x0 - dummy sync flag']
  #allocation23 [shape = 's32[]', space=sflag, size = 0x4, offset = 0, fixed_abs, tag = 'sflag constant byte address 0x0 - dummy sync flag']
  %s0 = inlined_call_operand.vmem [shape: s32[16,1], index: 0, kind: input, shape index: {}]
  %s1 = inlined_call_operand.vmem [shape: f32[256,32], index: 1, kind: input, shape index: {}]
  %s2 = inlined_call_operand.hbm [shape: f32[3,32,128], index: 2, kind: input, shape index: {}]
  %s3 = inlined_call_operand.hbm [shape: f32[3,32,128], index: 3, kind: input, shape index: {}]
  %s4 = inlined_call_operand.hbm [shape: f32[3,128], index: 4, kind: input, shape index: {}]
  %s5 = inlined_call_operand.hbm [shape: f32[32,512], index: 5, kind: input, shape index: {}]
  %s6 = inlined_call_operand.hbm [shape: f32[1,512], index: 6, kind: input, shape index: {}]
  %s7 = inlined_call_operand.hbm [shape: f32[1,2048], index: 7, kind: input, shape index: {}]
  %s8 = inlined_call_operand.hbm [shape: f32[1,256], index: 8, kind: input, shape index: {}]
  %s9 = inlined_call_operand.hbm [shape: bf16[512,2048], index: 9, kind: input, shape index: {}]
  %s10 = inlined_call_operand.hbm [shape: bf16[2048,256], index: 10, kind: input, shape index: {}]
  %s11 = inlined_call_operand.hbm [shape: f32[16,256], index: 11, kind: output, shape index: {0}]
  %s12 = inlined_call_operand.hbm [shape: f32[3,2,32], index: 12, kind: output, shape index: {1}]
  %s13 = inlined_call_operand.hbm [shape: f32[3,2,32], index: 13, kind: output, shape index: {2}]
  %14 = xla_tuple %s11, %s12, %s13
  %s15 = sld [smem:[#allocation0]]
  $region90: #{poetry_forward.1} parent=0
    _
  %s17 = ssub.s32 1, %s15
  %s18 = scalar_select 0, %s17, %s15
  $region1: #{poetry_forward.1} parent=0
    #allocation5 [shape = 'u8[49152]{0}', space=vmem, size = 0xc000, scoped, tag = 'input window, operand 2, single buffered']
    #allocation6 [shape = 's32[1]{0}', space=sflag, size = 0x4, scoped, tag = 'scoped memory for poetry_forward.1']
    #allocation7 [shape = 's32[1]{0}', space=sflag, size = 0x4, scoped, tag = 'scoped memory for poetry_forward.1']
    #allocation8 [shape = 'u8[49152]{0}', space=vmem, size = 0xc000, scoped, tag = 'input window, operand 3, single buffered']
    #allocation9 [shape = 's32[1]{0}', space=sflag, size = 0x4, scoped, tag = 'scoped memory for poetry_forward.1']
    #allocation10 [shape = 'u8[2048]{0}', space=vmem, size = 0x800, scoped, tag = 'input window, operand 4, single buffered']
    #allocation11 [shape = 'u8[65536]{0}', space=vmem, size = 0x10000, scoped, tag = 'input window, operand 5, single buffered']
    #allocation12 [shape = 's32[1]{0}', space=sflag, size = 0x4, scoped, tag = 'scoped memory for poetry_forward.1']
    #allocation13 [shape = 'u8[2048]{0}', space=vmem, size = 0x800, scoped, tag = 'input window, operand 6, single buffered']
    #allocation14 [shape = 'u8[8192]{0}', space=vmem, size = 0x2000, scoped, tag = 'input window, operand 7, single buffered']
    #allocation15 [shape = 's32[1]{0}', space=sflag, size = 0x4, scoped, tag = 'scoped memory for poetry_forward.1']
    #allocation16 [shape = 'u8[1024]{0}', space=vmem, size = 0x400, scoped, tag = 'input window, operand 8, single buffered']
    #allocation17 [shape = 'u8[16384]{0}', space=vmem, size = 0x4000, scoped, tag = 'output window, operand 0, single buffered']
    #allocation18 [shape = 'u8[3072]{0}', space=vmem, size = 0xc00, scoped, tag = 'output window, operand 1, single buffered']
    #allocation19 [shape = 's32[1]{0}', space=sflag, size = 0x4, scoped, tag = 'scoped memory for poetry_forward.1']
    #allocation20 [shape = 'u8[3072]{0}', space=vmem, size = 0xc00, scoped, tag = 'output window, operand 2, single buffered']
    #allocation22 [shape = 'u32[9]{0}', space=smem, size = 0x24, scoped, tag = 'DMA stride descriptor']
    #allocation24 [shape = 'u32[9]{0}', space=smem, size = 0x24, scoped, tag = 'DMA stride descriptor']
    %19 = vsyncpa [#allocation6], 0
    %20 = vsyncpa [#allocation9], 0
    %21 = vsyncpa [#allocation12], 0
    %22 = vsyncpa [#allocation15], 0
    %23 = vsyncpa [#allocation7], 0
    %24 = vsyncpa [#allocation19], 0
    // Predicated region
    $region2: #{poetry_forward.1} parent=1 // pred_check
      _
    $region3: #{poetry_forward.1} parent=1 // pred_check_branch
      %26 = sbr.rel (0) target = $region5
    $region4: #{poetry_forward.1} parent=1 // pred_region
      _
    $region5: #{poetry_forward.1} parent=1 // pred_fallthru
      _
    // Predicated region
    $region6: #{poetry_forward.1} parent=1 // pred_check
      _
    $region7: #{poetry_forward.1} parent=1 // pred_check_branch
      %28 = sbr.rel (0) target = $region9
    $region8: #{poetry_forward.1} parent=1 // pred_region
      _
    $region9: #{poetry_forward.1} parent=1 // pred_fallthru
      _
    // Predicated region
    $region10: #{poetry_forward.1} parent=1 // pred_check
      _
    $region11: #{poetry_forward.1} parent=1 // pred_check_branch
      %30 = sbr.rel (0) target = $region13
    $region12: #{poetry_forward.1} parent=1 // pred_region
      %s32 = ssub.s32 1536, 1536
      %33 = vsyncadd [#allocation6], %s32
      %s34 = sshll.u32 [#allocation5], 4
      %s35 = int_to_ptr.vmem [resolvable:$true] %s34
      %40 = dma.hbm_to_vmem [thread:$0]  %s2, 1536, %s35, [#allocation6], 128, 128, 8
    $region13: #{poetry_forward.1} parent=1 // pred_fallthru
      _
    // Predicated region
    $region14: #{poetry_forward.1} parent=1 // pred_check
      _
    $region15: #{poetry_forward.1} parent=1 // pred_check_branch
      %42 = sbr.rel (0) target = $region17
    $region16: #{poetry_forward.1} parent=1 // pred_region
      %s44 = ssub.s32 1536, 1536
      %45 = vsyncadd [#allocation9], %s44
      %s46 = sshll.u32 [#allocation8], 4
      %s47 = int_to_ptr.vmem [resolvable:$true] %s46
      %52 = dma.hbm_to_vmem [thread:$0]  %s3, 1536, %s47, [#allocation9], 128, 128, 8
    $region17: #{poetry_forward.1} parent=1 // pred_fallthru
      _
    // Predicated region
    $region18: #{poetry_forward.1} parent=1 // pred_check
      _
    $region19: #{poetry_forward.1} parent=1 // pred_check_branch
      %54 = sbr.rel (0) target = $region21
    $region20: #{poetry_forward.1} parent=1 // pred_region
      %s56 = ssub.s32 64, 64
      %57 = vsyncadd [#allocation9], %s56
      %s59 = sshll.u32 [#allocation10], 4
      %s60 = int_to_ptr.vmem [resolvable:$true] %s59
      %62 = dma.hbm_to_vmem [thread:$0]  %s4, 64, %s60, [#allocation9]
    $region21: #{poetry_forward.1} parent=1 // pred_fallthru
      _
    // Predicated region
    $region22: #{poetry_forward.1} parent=1 // pred_check
      _
    $region23: #{poetry_forward.1} parent=1 // pred_check_branch
      %64 = sbr.rel (0) target = $region25
    $region24: #{poetry_forward.1} parent=1 // pred_region
      %s66 = ssub.s32 2048, 2048
      %67 = vsyncadd [#allocation12], %s66
      %s68 = sshll.u32 [#allocation11], 4
      %s69 = int_to_ptr.vmem [resolvable:$true] %s68
      %74 = dma.hbm_to_vmem [thread:$0]  %s5, 2048, %s69, [#allocation12], 512, 512, 32
    $region25: #{poetry_forward.1} parent=1 // pred_fallthru
      _
    // Predicated region
    $region26: #{poetry_forward.1} parent=1 // pred_check
      _
    $region27: #{poetry_forward.1} parent=1 // pred_check_branch
      %76 = sbr.rel (0) target = $region29
    $region28: #{poetry_forward.1} parent=1 // pred_region
      %s78 = ssub.s32 64, 64
      %79 = vsyncadd [#allocation12], %s78
      %s81 = sshll.u32 [#allocation13], 4
      %s82 = int_to_ptr.vmem [resolvable:$true] %s81
      %84 = dma.hbm_to_vmem [thread:$0]  %s6, 64, %s82, [#allocation12]
    $region29: #{poetry_forward.1} parent=1 // pred_fallthru
      _
    // Predicated region
    $region30: #{poetry_forward.1} parent=1 // pred_check
      _
    $region31: #{poetry_forward.1} parent=1 // pred_check_branch
      %86 = sbr.rel (0) target = $region33
    $region32: #{poetry_forward.1} parent=1 // pred_region
      %s88 = ssub.s32 256, 256
      %89 = vsyncadd [#allocation15], %s88
      %s91 = sshll.u32 [#allocation14], 4
      %s92 = int_to_ptr.vmem [resolvable:$true] %s91
      %94 = dma.hbm_to_vmem [thread:$0]  %s7, 256, %s92, [#allocation15]
    $region33: #{poetry_forward.1} parent=1 // pred_fallthru
      _
    // Predicated region
    $region34: #{poetry_forward.1} parent=1 // pred_check
      _
    $region35: #{poetry_forward.1} parent=1 // pred_check_branch
      %96 = sbr.rel (0) target = $region37
    $region36: #{poetry_forward.1} parent=1 // pred_region
      %s98 = ssub.s32 32, 32
      %99 = vsyncadd [#allocation15], %s98
      %s101 = sshll.u32 [#allocation16], 4
      %s102 = int_to_ptr.vmem [resolvable:$true] %s101
      %104 = dma.hbm_to_vmem [thread:$0]  %s8, 32, %s102, [#allocation15]
    $region37: #{poetry_forward.1} parent=1 // pred_fallthru
      _
    // Predicated region
    $region38: #{poetry_forward.1} parent=1 // pred_check
      _
    $region39: #{poetry_forward.1} parent=1 // pred_check_branch
      %106 = sbr.rel (0) target = $region41
    $region40: #{poetry_forward.1} parent=1 // pred_region
      %107 = dma.done [#allocation6], 1536
    $region41: #{poetry_forward.1} parent=1 // pred_fallthru
      _
    // Predicated region
    $region42: #{poetry_forward.1} parent=1 // pred_check
      _
    $region43: #{poetry_forward.1} parent=1 // pred_check_branch
      %109 = sbr.rel (0) target = $region45
    $region44: #{poetry_forward.1} parent=1 // pred_region
      %110 = dma.done [#allocation9], 1536
    $region45: #{poetry_forward.1} parent=1 // pred_fallthru
      _
    // Predicated region
    $region46: #{poetry_forward.1} parent=1 // pred_check
      _
    $region47: #{poetry_forward.1} parent=1 // pred_check_branch
      %112 = sbr.rel (0) target = $region49
    $region48: #{poetry_forward.1} parent=1 // pred_region
      %113 = dma.done [#allocation9], 64
    $region49: #{poetry_forward.1} parent=1 // pred_fallthru
      _
    // Predicated region
    $region50: #{poetry_forward.1} parent=1 // pred_check
      _
    $region51: #{poetry_forward.1} parent=1 // pred_check_branch
      %115 = sbr.rel (0) target = $region53
    $region52: #{poetry_forward.1} parent=1 // pred_region
      %116 = dma.done [#allocation12], 2048
    $region53: #{poetry_forward.1} parent=1 // pred_fallthru
      _
    // Predicated region
    $region54: #{poetry_forward.1} parent=1 // pred_check
      _
    $region55: #{poetry_forward.1} parent=1 // pred_check_branch
      %118 = sbr.rel (0) target = $region57
    $region56: #{poetry_forward.1} parent=1 // pred_region
      %119 = dma.done [#allocation12], 64
    $region57: #{poetry_forward.1} parent=1 // pred_fallthru
      _
    // Predicated region
    $region58: #{poetry_forward.1} parent=1 // pred_check
      _
    $region59: #{poetry_forward.1} parent=1 // pred_check_branch
      %121 = sbr.rel (0) target = $region61
    $region60: #{poetry_forward.1} parent=1 // pred_region
      %122 = dma.done [#allocation15], 256
    $region61: #{poetry_forward.1} parent=1 // pred_fallthru
      _
    // Predicated region
    $region62: #{poetry_forward.1} parent=1 // pred_check
      _
    $region63: #{poetry_forward.1} parent=1 // pred_check_branch
      %124 = sbr.rel (0) target = $region65
    $region64: #{poetry_forward.1} parent=1 // pred_region
      %125 = dma.done [#allocation15], 32
    $region65: #{poetry_forward.1} parent=1 // pred_fallthru
      _
    %s127 = sshll.u32 1, 14
    %s128 = sxor.u32 4294967295, %s127
    %s130 = sld [smem:[#allocation0]]
    %s131 = sadd.s32 2, %s130
    %s133 = sshll.u32 7, 26
    %s134 = sxor.u32 4294967295, %s133
    %s135 = sand.u32 0, %s134
    %s136 = sshll.u32 %s131, 26
    %s137 = sor.u32 %s135, %s136
    %s138 = sshll.u32 [#allocation2], 4
    %s139 = int_to_ptr.vmem [resolvable:$true] %s138
    %142 = sst [smem:[#allocation22]] 2048
    %s143 = scalar_lea.smem [#allocation22], 1
    %144 = sst [smem:[%s143]] 2048
    %s145 = scalar_lea.smem [#allocation22], 2
    %146 = sst [smem:[%s145]] 16
    %s147 = scalar_lea.smem [#allocation22], 3
    %148 = sst [smem:[%s147]] 64
    %s149 = scalar_lea.smem [#allocation22], 4
    %150 = sst [smem:[%s149]] 128
    %s151 = scalar_lea.smem [#allocation22], 5
    %152 = sst [smem:[%s151]] 2
    %s153 = scalar_lea.smem [#allocation22], 6
    %154 = sst [smem:[%s153]] 1024
    %s155 = scalar_lea.smem [#allocation22], 7
    %156 = sst [smem:[%s155]] 64
    %s157 = scalar_lea.smem [#allocation22], 8
    %158 = sst [smem:[%s157]] 4
    %160 = dma.general %s9, 65536, %s139, [#allocation4], [#allocation21], [#allocation22], %s137, 0
    %s161 = scalar_lea.sflag [#allocation4], 1
    %s163 = sshll.u32 1, 14
    %s164 = sxor.u32 4294967295, %s163
    %s166 = sadd.s32 2, %s130
    %s168 = sshll.u32 7, 26
    %s169 = sxor.u32 4294967295, %s168
    %s170 = sand.u32 0, %s169
    %s171 = sshll.u32 %s166, 26
    %s172 = sor.u32 %s170, %s171
    %s173 = sshll.u32 [#allocation3], 4
    %s174 = int_to_ptr.vmem [resolvable:$true] %s173
    %177 = sst [smem:[#allocation24]] 256
    %s178 = scalar_lea.smem [#allocation24], 1
    %179 = sst [smem:[%s178]] 256
    %s180 = scalar_lea.smem [#allocation24], 2
    %181 = sst [smem:[%s180]] 2
    %s182 = scalar_lea.smem [#allocation24], 3
    %183 = sst [smem:[%s182]] 64
    %s184 = scalar_lea.smem [#allocation24], 4
    %185 = sst [smem:[%s184]] 128
    %s186 = scalar_lea.smem [#allocation24], 5
    %187 = sst [smem:[%s186]] 2
    %s188 = scalar_lea.smem [#allocation24], 6
    %189 = sst [smem:[%s188]] 128
    %s190 = scalar_lea.smem [#allocation24], 7
    %191 = sst [smem:[%s190]] 64
    %s192 = scalar_lea.smem [#allocation24], 8
    %193 = sst [smem:[%s192]] 4
    %195 = dma.general %s10, 32768, %s174, %s161, [#allocation23], [#allocation24], %s172, 0
    %v196 = vld [vmem:[%s0] sm:$0xff]
    %v197 = vld [vmem:[%s0 + $0x8] sm:$0xff]
    %v198 = vlaneseq
    %v199 = vand.u32 %v198, 127
    %v200 = vadd.s32 %v199, 128
    %201 = vset.pattern.permute.xlu0 0
    %202 = vperm.xlu0 %201, %v196
    %v203 = vpop.permute.xlu0 %202
    %204 = vset.pattern.permute.xlu0 0
    %205 = vperm.xlu0 %204, %v197
    %v206 = vpop.permute.xlu0 %205
    %vm207 = vcmp.eq.s32.totalorder %v199, %v203
    %vm208 = vcmp.eq.s32.totalorder %v200, %v203
    %vm209 = vcmp.eq.s32.totalorder %v199, %v206
    %vm210 = vcmp.eq.s32.totalorder %v200, %v206
    %v211 = vsel %vm207, 1, 0
    %v212 = vsel %vm208, 1, 0
    %v213 = vsel %vm209, 1, 0
    %v214 = vsel %vm210, 1, 0
    %v215 = vcvt.s32.f32 %v211
    %v216 = vcvt.s32.f32 %v212
    %v217 = vcvt.s32.f32 %v213
    %v218 = vcvt.s32.f32 %v214
    %v219 = vld [vmem:[%s1] sm:$0xff]
    %v220 = vld [vmem:[%s1 + $0x8] sm:$0xff]
    %v221 = vld [vmem:[%s1 + $0x10] sm:$0xff]
    %v222 = vld [vmem:[%s1 + $0x18] sm:$0xff]
    %v223 = vld [vmem:[%s1 + $0x20] sm:$0xff]
    %v224 = vld [vmem:[%s1 + $0x28] sm:$0xff]
    %v225 = vld [vmem:[%s1 + $0x30] sm:$0xff]
    %v226 = vld [vmem:[%s1 + $0x38] sm:$0xff]
    %v227 = vld [vmem:[%s1 + $0x40] sm:$0xff]
    %v228 = vld [vmem:[%s1 + $0x48] sm:$0xff]
    %v229 = vld [vmem:[%s1 + $0x50] sm:$0xff]
    %v230 = vld [vmem:[%s1 + $0x58] sm:$0xff]
    %v231 = vld [vmem:[%s1 + $0x60] sm:$0xff]
    %v232 = vld [vmem:[%s1 + $0x68] sm:$0xff]
    %v233 = vld [vmem:[%s1 + $0x70] sm:$0xff]
    %v234 = vld [vmem:[%s1 + $0x78] sm:$0xff]
    %v235 = vld [vmem:[%s1 + $0x80] sm:$0xff]
    %v236 = vld [vmem:[%s1 + $0x88] sm:$0xff]
    %v237 = vld [vmem:[%s1 + $0x90] sm:$0xff]
    %v238 = vld [vmem:[%s1 + $0x98] sm:$0xff]
    %v239 = vld [vmem:[%s1 + $0xa0] sm:$0xff]
    %v240 = vld [vmem:[%s1 + $0xa8] sm:$0xff]
    %v241 = vld [vmem:[%s1 + $0xb0] sm:$0xff]
    %v242 = vld [vmem:[%s1 + $0xb8] sm:$0xff]
    %v243 = vld [vmem:[%s1 + $0xc0] sm:$0xff]
    %v244 = vld [vmem:[%s1 + $0xc8] sm:$0xff]
    %v245 = vld [vmem:[%s1 + $0xd0] sm:$0xff]
    %v246 = vld [vmem:[%s1 + $0xd8] sm:$0xff]
    %v247 = vld [vmem:[%s1 + $0xe0] sm:$0xff]
    %v248 = vld [vmem:[%s1 + $0xe8] sm:$0xff]
    %v249 = vld [vmem:[%s1 + $0xf0] sm:$0xff]
    %v250 = vld [vmem:[%s1 + $0xf8] sm:$0xff]
    %251 = vmatprep.subr.mxu0 0.0
    %252 = vmatpush1.msra.mxu0 %v219
    %253 = vmatprep.subr.mxu0 0.0
    %254 = vmatpush1.msra.mxu0 %v220
    %255 = vmatprep.subr.mxu0 0.0
    %256 = vmatpush1.msra.mxu0 %v221
    %257 = vmatprep.subr.mxu0 0.0
    %258 = vmatpush1.msra.mxu0 %v222
    %259 = vmatprep.subr.mxu0 0.0
    %260 = vmatpush1.msra.mxu0 %v223
    %261 = vmatprep.subr.mxu0 0.0
    %262 = vmatpush1.msra.mxu0 %v224
    %263 = vmatprep.subr.mxu0 0.0
    %264 = vmatpush1.msra.mxu0 %v225
    %265 = vmatprep.subr.mxu0 0.0
    %266 = vmatpush1.msra.mxu0 %v226
    %267 = vmatprep.subr.mxu0 0.0
    %268 = vmatpush1.msra.mxu0 %v227
    %269 = vmatprep.subr.mxu0 0.0
    %270 = vmatpush1.msra.mxu0 %v228
    %271 = vmatprep.subr.mxu0 0.0
    %272 = vmatpush1.msra.mxu0 %v229
    %273 = vmatprep.subr.mxu0 0.0
    %274 = vmatpush1.msra.mxu0 %v230
    %275 = vmatprep.subr.mxu0 0.0
    %276 = vmatpush1.msra.mxu0 %v231
    %277 = vmatprep.subr.mxu0 0.0
    %278 = vmatpush1.msra.mxu0 %v232
    %279 = vmatprep.subr.mxu0 0.0
    %280 = vmatpush1.msra.mxu0 %v233
    %281 = vmatprep.subr.mxu0 0.0
    %282 = vmatpush1.msra.mxu0 %v234
    %283 = vmatprep.subr.mxu0 0.0
    %284 = vmatpush1.msra.mxu0 %v235
    %285 = vmatprep.subr.mxu0 0.0
    %286 = vmatpush1.msra.mxu0 %v236
    %287 = vmatprep.subr.mxu0 0.0
    %288 = vmatpush1.msra.mxu0 %v237
    %289 = vmatprep.subr.mxu0 0.0
    %290 = vmatpush1.msra.mxu0 %v238
    %291 = vmatprep.subr.mxu0 0.0
    %292 = vmatpush1.msra.mxu0 %v239
    %293 = vmatprep.subr.mxu0 0.0
    %294 = vmatpush1.msra.mxu0 %v240
    %295 = vmatprep.subr.mxu0 0.0
    %296 = vmatpush1.msra.mxu0 %v241
    %297 = vmatprep.subr.mxu0 0.0
    %298 = vmatpush1.msra.mxu0 %v242
    %299 = vmatprep.subr.mxu0 0.0
    %300 = vmatpush1.msra.mxu0 %v243
    %301 = vmatprep.subr.mxu0 0.0
    %302 = vmatpush1.msra.mxu0 %v244
    %303 = vmatprep.subr.mxu0 0.0
    %304 = vmatpush1.msra.mxu0 %v245
    %305 = vmatprep.subr.mxu0 0.0
    %306 = vmatpush1.msra.mxu0 %v246
    %307 = vmatprep.subr.mxu0 0.0
    %308 = vmatpush1.msra.mxu0 %v247
    %309 = vmatprep.subr.mxu0 0.0
    %310 = vmatpush1.msra.mxu0 %v248
    %311 = vmatprep.subr.mxu0 0.0
    %312 = vmatpush1.msra.mxu0 %v249
    %313 = vmatprep.subr.mxu0 0.0
    %314 = vmatpush1.msra.mxu0 %v250
    %315 = vmatprep.mubr.f32.mxu0 %v216
    %316 = vmatmul.mubr.f32.gmra.mrb[0].mxu0 %v215
    %v317 = vpop.f32.mrb[0].mxu0
    %v318 = vadd.f32 0.0, %v317
    %v319 = vpop.f32.mrb[0].mxu0
    %320 = vmatprep.mubr.f32.mxu0 %v218
    %321 = vmatmul.mubr.f32.gmra.mrb[0].mxu0 %v217
    %v322 = vpop.f32.mrb[0].mxu0
    %v323 = vadd.f32 0.0, %v322
    %v324 = vpop.f32.mrb[0].mxu0
    %325 = vdwg.mxu0
    %v326 = vld [vmem:[#allocation8] sm:$0xff]
    %v327 = vld [vmem:[#allocation8 + $0x8] sm:$0xff]
    %v328 = vld [vmem:[#allocation8 + $0x10] sm:$0xff]
    %v329 = vld [vmem:[#allocation8 + $0x18] sm:$0xff]
    %v330 = vld [vmem:[#allocation5] sm:$0xff]
    %v331 = vld [vmem:[#allocation5 + $0x8] sm:$0xff]
    %v332 = vld [vmem:[#allocation5 + $0x10] sm:$0xff]
    %v333 = vld [vmem:[#allocation5 + $0x18] sm:$0xff]
    %v334 = vld [vmem:[#allocation10] sm:$0x1]
    %v335 = vlaneseq
    %v336 = vshrl.u32 %v335, 7
    %v337 = vsub.s32 0, %v336
    %v338 = vrot.slane %v334, %v337
    %vm339 = vcmask 261120
    %v341 = vsel %vm339, %v318, 0
    %v344 = vsel %vm339, %v323, 0
    %346 = vmatprep.subr.mxu0 0.0
    %347 = vmatpush1.msra.mxu0 %v330
    %348 = vmatprep.subr.mxu0 0.0
    %349 = vmatpush1.msra.mxu0 %v331
    %350 = vmatprep.subr.mxu0 0.0
    %351 = vmatpush1.msra.mxu0 %v332
    %352 = vmatprep.subr.mxu0 0.0
    %353 = vmatpush1.msra.mxu0 %v333
    %354 = vmatprep.subr.mxu0 0.0
    %355 = vmatpush1.msra.mxu0 0.0
    %356 = vmatprep.subr.mxu0 0.0
    %357 = vmatpush1.msra.mxu0 0.0
    %358 = vmatprep.subr.mxu0 0.0
    %359 = vmatpush1.msra.mxu0 0.0
    %360 = vmatprep.subr.mxu0 0.0
    %361 = vmatpush1.msra.mxu0 0.0
    %362 = vmatprep.subr.mxu0 0.0
    %363 = vmatpush1.msra.mxu0 0.0
    %364 = vmatprep.subr.mxu0 0.0
    %365 = vmatpush1.msra.mxu0 0.0
    %366 = vmatprep.subr.mxu0 0.0
    %367 = vmatpush1.msra.mxu0 0.0
    %368 = vmatprep.subr.mxu0 0.0
    %369 = vmatpush1.msra.mxu0 0.0
    %370 = vmatprep.subr.mxu0 0.0
    %371 = vmatpush1.msra.mxu0 0.0
    %372 = vmatprep.subr.mxu0 0.0
    %373 = vmatpush1.msra.mxu0 0.0
    %374 = vmatprep.subr.mxu0 0.0
    %375 = vmatpush1.msra.mxu0 0.0
    %376 = vmatprep.subr.mxu0 0.0
    %377 = vmatpush1.msra.mxu0 0.0
    %378 = vmatprep.subr.mxu0 0.0
    %379 = vmatpush1.msra.mxu0 0.0
    %380 = vmatprep.subr.mxu0 0.0
    %381 = vmatpush1.msra.mxu0 0.0
    %382 = vmatprep.subr.mxu0 0.0
    %383 = vmatpush1.msra.mxu0 0.0
    %384 = vmatprep.subr.mxu0 0.0
    %385 = vmatpush1.msra.mxu0 0.0
    %386 = vmatprep.subr.mxu0 0.0
    %387 = vmatpush1.msra.mxu0 0.0
    %388 = vmatprep.subr.mxu0 0.0
    %389 = vmatpush1.msra.mxu0 0.0
    %390 = vmatprep.subr.mxu0 0.0
    %391 = vmatpush1.msra.mxu0 0.0
    %392 = vmatprep.subr.mxu0 0.0
    %393 = vmatpush1.msra.mxu0 0.0
    %394 = vmatprep.subr.mxu0 0.0
    %395 = vmatpush1.msra.mxu0 0.0
    %396 = vmatprep.subr.mxu0 0.0
    %397 = vmatpush1.msra.mxu0 0.0
    %398 = vmatprep.subr.mxu0 0.0
    %399 = vmatpush1.msra.mxu0 0.0
    %400 = vmatprep.subr.mxu0 0.0
    %401 = vmatpush1.msra.mxu0 0.0
    %402 = vmatprep.subr.mxu0 0.0
    %403 = vmatpush1.msra.mxu0 0.0
    %404 = vmatprep.subr.mxu0 0.0
    %405 = vmatpush1.msra.mxu0 0.0
    %406 = vmatprep.subr.mxu0 0.0
    %407 = vmatpush1.msra.mxu0 0.0
    %408 = vmatprep.subr.mxu0 0.0
    %409 = vmatpush1.msra.mxu0 0.0
    %410 = vmatprep.mubr.f32.mxu0 0.0
    %411 = vmatmul.mubr.f32.gmra.mrb[0].mxu0 %v341
    %v412 = vpop.f32.mrb[0].mxu0
    %v413 = vadd.f32 %v338, %v412
    %v414 = vpop.f32.mrb[0].mxu0
    %415 = vmatprep.mubr.f32.mxu0 0.0
    %416 = vmatmul.mubr.f32.gmra.mrb[0].mxu0 %v344
    %v417 = vpop.f32.mrb[0].mxu0
    %v418 = vadd.f32 %v338, %v417
    %v419 = vpop.f32.mrb[0].mxu0
    %420 = vdwg.mxu0
    %v422 = vsel %vm339, 0.0, 0
    %424 = vmatprep.subr.mxu0 0.0
    %425 = vmatpush1.msra.mxu0 %v326
    %426 = vmatprep.subr.mxu0 0.0
    %427 = vmatpush1.msra.mxu0 %v327
    %428 = vmatprep.subr.mxu0 0.0
    %429 = vmatpush1.msra.mxu0 %v328
    %430 = vmatprep.subr.mxu0 0.0
    %431 = vmatpush1.msra.mxu0 %v329
    %432 = vmatprep.subr.mxu0 0.0
    %433 = vmatpush1.msra.mxu0 0.0
    %434 = vmatprep.subr.mxu0 0.0
    %435 = vmatpush1.msra.mxu0 0.0
    %436 = vmatprep.subr.mxu0 0.0
    %437 = vmatpush1.msra.mxu0 0.0
    %438 = vmatprep.subr.mxu0 0.0
    %439 = vmatpush1.msra.mxu0 0.0
    %440 = vmatprep.subr.mxu0 0.0
    %441 = vmatpush1.msra.mxu0 0.0
    %442 = vmatprep.subr.mxu0 0.0
    %443 = vmatpush1.msra.mxu0 0.0
    %444 = vmatprep.subr.mxu0 0.0
    %445 = vmatpush1.msra.mxu0 0.0
    %446 = vmatprep.subr.mxu0 0.0
    %447 = vmatpush1.msra.mxu0 0.0
    %448 = vmatprep.subr.mxu0 0.0
    %449 = vmatpush1.msra.mxu0 0.0
    %450 = vmatprep.subr.mxu0 0.0
    %451 = vmatpush1.msra.mxu0 0.0
    %452 = vmatprep.subr.mxu0 0.0
    %453 = vmatpush1.msra.mxu0 0.0
    %454 = vmatprep.subr.mxu0 0.0
    %455 = vmatpush1.msra.mxu0 0.0
    %456 = vmatprep.subr.mxu0 0.0
    %457 = vmatpush1.msra.mxu0 0.0
    %458 = vmatprep.subr.mxu0 0.0
    %459 = vmatpush1.msra.mxu0 0.0
    %460 = vmatprep.subr.mxu0 0.0
    %461 = vmatpush1.msra.mxu0 0.0
    %462 = vmatprep.subr.mxu0 0.0
    %463 = vmatpush1.msra.mxu0 0.0
    %464 = vmatprep.subr.mxu0 0.0
    %465 = vmatpush1.msra.mxu0 0.0
    %466 = vmatprep.subr.mxu0 0.0
    %467 = vmatpush1.msra.mxu0 0.0
    %468 = vmatprep.subr.mxu0 0.0
    %469 = vmatpush1.msra.mxu0 0.0
    %470 = vmatprep.subr.mxu0 0.0
    %471 = vmatpush1.msra.mxu0 0.0
    %472 = vmatprep.subr.mxu0 0.0
    %473 = vmatpush1.msra.mxu0 0.0
    %474 = vmatprep.subr.mxu0 0.0
    %475 = vmatpush1.msra.mxu0 0.0
    %476 = vmatprep.subr.mxu0 0.0
    %477 = vmatpush1.msra.mxu0 0.0
    %478 = vmatprep.subr.mxu0 0.0
    %479 = vmatpush1.msra.mxu0 0.0
    %480 = vmatprep.subr.mxu0 0.0
    %481 = vmatpush1.msra.mxu0 0.0
    %482 = vmatprep.subr.mxu0 0.0
    %483 = vmatpush1.msra.mxu0 0.0
    %484 = vmatprep.subr.mxu0 0.0
    %485 = vmatpush1.msra.mxu0 0.0
    %486 = vmatprep.subr.mxu0 0.0
    %487 = vmatpush1.msra.mxu0 0.0
    %488 = vmatprep.mubr.f32.mxu0 0.0
    %489 = vmatmul.mubr.f32.gmra.mrb[0].mxu0 %v422
    %v490 = vpop.f32.mrb[0].mxu0
    %v491 = vadd.f32 0.0, %v490
    %v492 = vpop.f32.mrb[0].mxu0
    %493 = vdwg.mxu0
    %v494 = vadd.f32 %v413, %v491
    %v495 = vxor.u32 %v494, 2147483648
    %v496 = vmul.f32 %v495, 1.442695
    %v497 = vpow.pop %v496
    %v498 = vadd.f32 %v497, 1.0
    %v499 = vrcp.pop %v498
    %v500 = vmul.f32 1.0, %v499
    %v501 = vtanh.pop %v494
    %v502 = vmul.f32 %v500, 0.0
    %504 = vrot.lane.b32.xlu0 %v501, 64
    %v505 = vpop.permute.xlu0 %504
    %v507 = vmul.f32 %v500, %v505
    %509 = vrot.lane.b32.xlu0 %v507, 32
    %v510 = vpop.permute.xlu0 %509
    %v512 = vadd.f32 %v502, %v510
    %v513 = vtanh.pop %v512
    %515 = vrot.lane.b32.xlu0 %v513, 64
    %v516 = vpop.permute.xlu0 %515
    %v518 = vmul.f32 %v500, %v516
    %520 = vrot.lane.b32.xlu0 %v518, 32
    %v521 = vpop.permute.xlu0 %520
    %v522 = vsel %vm339, %v521, 0
    %524 = vmatprep.subr.mxu0 0.0
    %525 = vmatpush1.msra.mxu0 %v326
    %526 = vmatprep.subr.mxu0 0.0
    %527 = vmatpush1.msra.mxu0 %v327
    %528 = vmatprep.subr.mxu0 0.0
    %529 = vmatpush1.msra.mxu0 %v328
    %530 = vmatprep.subr.mxu0 0.0
    %531 = vmatpush1.msra.mxu0 %v329
    %532 = vmatprep.subr.mxu0 0.0
    %533 = vmatpush1.msra.mxu0 0.0
    %534 = vmatprep.subr.mxu0 0.0
    %535 = vmatpush1.msra.mxu0 0.0
    %536 = vmatprep.subr.mxu0 0.0
    %537 = vmatpush1.msra.mxu0 0.0
    %538 = vmatprep.subr.mxu0 0.0
    %539 = vmatpush1.msra.mxu0 0.0
    %540 = vmatprep.subr.mxu0 0.0
    %541 = vmatpush1.msra.mxu0 0.0
    %542 = vmatprep.subr.mxu0 0.0
    %543 = vmatpush1.msra.mxu0 0.0
    %544 = vmatprep.subr.mxu0 0.0
    %545 = vmatpush1.msra.mxu0 0.0
    %546 = vmatprep.subr.mxu0 0.0
    %547 = vmatpush1.msra.mxu0 0.0
    %548 = vmatprep.subr.mxu0 0.0
    %549 = vmatpush1.msra.mxu0 0.0
    %550 = vmatprep.subr.mxu0 0.0
    %551 = vmatpush1.msra.mxu0 0.0
    %552 = vmatprep.subr.mxu0 0.0
    %553 = vmatpush1.msra.mxu0 0.0
    %554 = vmatprep.subr.mxu0 0.0
    %555 = vmatpush1.msra.mxu0 0.0
    %556 = vmatprep.subr.mxu0 0.0
    %557 = vmatpush1.msra.mxu0 0.0
    %558 = vmatprep.subr.mxu0 0.0
    %559 = vmatpush1.msra.mxu0 0.0
    %560 = vmatprep.subr.mxu0 0.0
    %561 = vmatpush1.msra.mxu0 0.0
    %562 = vmatprep.subr.mxu0 0.0
    %563 = vmatpush1.msra.mxu0 0.0
    %564 = vmatprep.subr.mxu0 0.0
    %565 = vmatpush1.msra.mxu0 0.0
    %566 = vmatprep.subr.mxu0 0.0
    %567 = vmatpush1.msra.mxu0 0.0
    %568 = vmatprep.subr.mxu0 0.0
    %569 = vmatpush1.msra.mxu0 0.0
    %570 = vmatprep.subr.mxu0 0.0
    %571 = vmatpush1.msra.mxu0 0.0
    %572 = vmatprep.subr.mxu0 0.0
    %573 = vmatpush1.msra.mxu0 0.0
    %574 = vmatprep.subr.mxu0 0.0
    %575 = vmatpush1.msra.mxu0 0.0
    %576 = vmatprep.subr.mxu0 0.0
    %577 = vmatpush1.msra.mxu0 0.0
    %578 = vmatprep.subr.mxu0 0.0
    %579 = vmatpush1.msra.mxu0 0.0
    %580 = vmatprep.subr.mxu0 0.0
    %581 = vmatpush1.msra.mxu0 0.0
    %582 = vmatprep.subr.mxu0 0.0
    %583 = vmatpush1.msra.mxu0 0.0
    %584 = vmatprep.subr.mxu0 0.0
    %585 = vmatpush1.msra.mxu0 0.0
    %586 = vmatprep.subr.mxu0 0.0
    %587 = vmatpush1.msra.mxu0 0.0
    %588 = vmatprep.mubr.f32.mxu0 0.0
    %589 = vmatmul.mubr.f32.gmra.mrb[0].mxu0 %v522
    %v590 = vpop.f32.mrb[0].mxu0
    %v591 = vadd.f32 0.0, %v590
    %v592 = vpop.f32.mrb[0].mxu0
    %593 = vdwg.mxu0
    %v595 = vrot.slane %v591, 6
    %v597 = vadd.f32 %v413, %v595
    %v598 = vxor.u32 %v597, 2147483648
    %v599 = vmul.f32 %v598, 1.442695
    %v600 = vpow.pop %v599
    %v601 = vadd.f32 %v600, 1.0
    %v602 = vrcp.pop %v601
    %v603 = vmul.f32 1.0, %v602
    %v604 = vtanh.pop %v597
    %v606 = vrot.slane %v512, 6
    %v608 = vmul.f32 %v603, %v606
    %610 = vrot.lane.b32.xlu0 %v604, 64
    %v611 = vpop.permute.xlu0 %610
    %v613 = vmul.f32 %v603, %v611
    %615 = vrot.lane.b32.xlu0 %v613, 32
    %v616 = vpop.permute.xlu0 %615
    %v618 = vadd.f32 %v608, %v616
    %v619 = vtanh.pop %v618
    %621 = vrot.lane.b32.xlu0 %v619, 64
    %v622 = vpop.permute.xlu0 %621
    %v624 = vmul.f32 %v603, %v622
    %v626 = vrot.slane %v624, 2
    %627 = vrot.lane.b32.xlu0 %v626, 32
    %v628 = vpop.permute.xlu0 %627
    %v629 = vsel %vm339, %v628, 0
    %631 = vmatprep.subr.mxu0 0.0
    %632 = vmatpush1.msra.mxu0 %v326
    %633 = vmatprep.subr.mxu0 0.0
    %634 = vmatpush1.msra.mxu0 %v327
    %635 = vmatprep.subr.mxu0 0.0
    %636 = vmatpush1.msra.mxu0 %v328
    %637 = vmatprep.subr.mxu0 0.0
    %638 = vmatpush1.msra.mxu0 %v329
    %639 = vmatprep.subr.mxu0 0.0
    %640 = vmatpush1.msra.mxu0 0.0
    %641 = vmatprep.subr.mxu0 0.0
    %642 = vmatpush1.msra.mxu0 0.0
    %643 = vmatprep.subr.mxu0 0.0
    %644 = vmatpush1.msra.mxu0 0.0
    %645 = vmatprep.subr.mxu0 0.0
    %646 = vmatpush1.msra.mxu0 0.0
    %647 = vmatprep.subr.mxu0 0.0
    %648 = vmatpush1.msra.mxu0 0.0
    %649 = vmatprep.subr.mxu0 0.0
    %650 = vmatpush1.msra.mxu0 0.0
    %651 = vmatprep.subr.mxu0 0.0
    %652 = vmatpush1.msra.mxu0 0.0
    %653 = vmatprep.subr.mxu0 0.0
    %654 = vmatpush1.msra.mxu0 0.0
    %655 = vmatprep.subr.mxu0 0.0
    %656 = vmatpush1.msra.mxu0 0.0
    %657 = vmatprep.subr.mxu0 0.0
    %658 = vmatpush1.msra.mxu0 0.0
    %659 = vmatprep.subr.mxu0 0.0
    %660 = vmatpush1.msra.mxu0 0.0
    %661 = vmatprep.subr.mxu0 0.0
    %662 = vmatpush1.msra.mxu0 0.0
    %663 = vmatprep.subr.mxu0 0.0
    %664 = vmatpush1.msra.mxu0 0.0
    %665 = vmatprep.subr.mxu0 0.0
    %666 = vmatpush1.msra.mxu0 0.0
    %667 = vmatprep.subr.mxu0 0.0
    %668 = vmatpush1.msra.mxu0 0.0
    %669 = vmatprep.subr.mxu0 0.0
    %670 = vmatpush1.msra.mxu0 0.0
    %671 = vmatprep.subr.mxu0 0.0
    %672 = vmatpush1.msra.mxu0 0.0
    %673 = vmatprep.subr.mxu0 0.0
    %674 = vmatpush1.msra.mxu0 0.0
    %675 = vmatprep.subr.mxu0 0.0
    %676 = vmatpush1.msra.mxu0 0.0
    %677 = vmatprep.subr.mxu0 0.0
    %678 = vmatpush1.msra.mxu0 0.0
    %679 = vmatprep.subr.mxu0 0.0
    %680 = vmatpush1.msra.mxu0 0.0
    %681 = vmatprep.subr.mxu0 0.0
    %682 = vmatpush1.msra.mxu0 0.0
    %683 = vmatprep.subr.mxu0 0.0
    %684 = vmatpush1.msra.mxu0 0.0
    %685 = vmatprep.subr.mxu0 0.0
    %686 = vmatpush1.msra.mxu0 0.0
    %687 = vmatprep.subr.mxu0 0.0
    %688 = vmatpush1.msra.mxu0 0.0
    %689 = vmatprep.subr.mxu0 0.0
    %690 = vmatpush1.msra.mxu0 0.0
    %691 = vmatprep.subr.mxu0 0.0
    %692 = vmatpush1.msra.mxu0 0.0
    %693 = vmatprep.subr.mxu0 0.0
    %694 = vmatpush1.msra.mxu0 0.0
    %695 = vmatprep.mubr.f32.mxu0 0.0
    %696 = vmatmul.mubr.f32.gmra.mrb[0].mxu0 %v629
    %v697 = vpop.f32.mrb[0].mxu0
    %v698 = vadd.f32 0.0, %v697
    %v699 = vpop.f32.mrb[0].mxu0
    %700 = vdwg.mxu0
    %v702 = vrot.slane %v698, 4
    %v704 = vadd.f32 %v413, %v702
    %v705 = vxor.u32 %v704, 2147483648
    %v706 = vmul.f32 %v705, 1.442695
    %v707 = vpow.pop %v706
    %v708 = vadd.f32 %v707, 1.0
    %v709 = vrcp.pop %v708
    %v710 = vmul.f32 1.0, %v709
    %v711 = vtanh.pop %v704
    %v713 = vrot.slane %v618, 6
    %v715 = vmul.f32 %v710, %v713
    %717 = vrot.lane.b32.xlu0 %v711, 64
    %v718 = vpop.permute.xlu0 %717
    %v720 = vmul.f32 %v710, %v718
    %722 = vrot.lane.b32.xlu0 %v720, 32
    %v723 = vpop.permute.xlu0 %722
    %v725 = vadd.f32 %v715, %v723
    %v726 = vtanh.pop %v725
    %728 = vrot.lane.b32.xlu0 %v726, 64
    %v729 = vpop.permute.xlu0 %728
    %v731 = vmul.f32 %v710, %v729
    %v733 = vrot.slane %v731, 4
    %734 = vrot.lane.b32.xlu0 %v733, 32
    %v735 = vpop.permute.xlu0 %734
    %v736 = vsel %vm339, %v735, 0
    %738 = vmatprep.subr.mxu0 0.0
    %739 = vmatpush1.msra.mxu0 %v326
    %740 = vmatprep.subr.mxu0 0.0
    %741 = vmatpush1.msra.mxu0 %v327
    %742 = vmatprep.subr.mxu0 0.0
    %743 = vmatpush1.msra.mxu0 %v328
    %744 = vmatprep.subr.mxu0 0.0
    %745 = vmatpush1.msra.mxu0 %v329
    %746 = vmatprep.subr.mxu0 0.0
    %747 = vmatpush1.msra.mxu0 0.0
    %748 = vmatprep.subr.mxu0 0.0
    %749 = vmatpush1.msra.mxu0 0.0
    %750 = vmatprep.subr.mxu0 0.0
    %751 = vmatpush1.msra.mxu0 0.0
    %752 = vmatprep.subr.mxu0 0.0
    %753 = vmatpush1.msra.mxu0 0.0
    %754 = vmatprep.subr.mxu0 0.0
    %755 = vmatpush1.msra.mxu0 0.0
    %756 = vmatprep.subr.mxu0 0.0
    %757 = vmatpush1.msra.mxu0 0.0
    %758 = vmatprep.subr.mxu0 0.0
    %759 = vmatpush1.msra.mxu0 0.0
    %760 = vmatprep.subr.mxu0 0.0
    %761 = vmatpush1.msra.mxu0 0.0
    %762 = vmatprep.subr.mxu0 0.0
    %763 = vmatpush1.msra.mxu0 0.0
    %764 = vmatprep.subr.mxu0 0.0
    %765 = vmatpush1.msra.mxu0 0.0
    %766 = vmatprep.subr.mxu0 0.0
    %767 = vmatpush1.msra.mxu0 0.0
    %768 = vmatprep.subr.mxu0 0.0
    %769 = vmatpush1.msra.mxu0 0.0
    %770 = vmatprep.subr.mxu0 0.0
    %771 = vmatpush1.msra.mxu0 0.0
    %772 = vmatprep.subr.mxu0 0.0
    %773 = vmatpush1.msra.mxu0 0.0
    %774 = vmatprep.subr.mxu0 0.0
    %775 = vmatpush1.msra.mxu0 0.0
    %776 = vmatprep.subr.mxu0 0.0
    %777 = vmatpush1.msra.mxu0 0.0
    %778 = vmatprep.subr.mxu0 0.0
    %779 = vmatpush1.msra.mxu0 0.0
    %780 = vmatprep.subr.mxu0 0.0
    %781 = vmatpush1.msra.mxu0 0.0
    %782 = vmatprep.subr.mxu0 0.0
    %783 = vmatpush1.msra.mxu0 0.0
    %784 = vmatprep.subr.mxu0 0.0
    %785 = vmatpush1.msra.mxu0 0.0
    %786 = vmatprep.subr.mxu0 0.0
    %787 = vmatpush1.msra.mxu0 0.0
    %788 = vmatprep.subr.mxu0 0.0
    %789 = vmatpush1.msra.mxu0 0.0
    %790 = vmatprep.subr.mxu0 0.0
    %791 = vmatpush1.msra.mxu0 0.0
    %792 = vmatprep.subr.mxu0 0.0
    %793 = vmatpush1.msra.mxu0 0.0
    %794 = vmatprep.subr.mxu0 0.0
    %795 = vmatpush1.msra.mxu0 0.0
    %796 = vmatprep.subr.mxu0 0.0
    %797 = vmatpush1.msra.mxu0 0.0
    %798 = vmatprep.subr.mxu0 0.0
    %799 = vmatpush1.msra.mxu0 0.0
    %800 = vmatprep.subr.mxu0 0.0
    %801 = vmatpush1.msra.mxu0 0.0
    %802 = vmatprep.mubr.f32.mxu0 0.0
    %803 = vmatmul.mubr.f32.gmra.mrb[0].mxu0 %v736
    %v804 = vpop.f32.mrb[0].mxu0
    %v805 = vadd.f32 0.0, %v804
    %v806 = vpop.f32.mrb[0].mxu0
    %807 = vdwg.mxu0
    %v809 = vrot.slane %v805, 2
    %v811 = vadd.f32 %v413, %v809
    %v812 = vxor.u32 %v811, 2147483648
    %v813 = vmul.f32 %v812, 1.442695
    %v814 = vpow.pop %v813
    %v815 = vadd.f32 %v814, 1.0
    %v816 = vrcp.pop %v815
    %v817 = vmul.f32 1.0, %v816
    %v818 = vtanh.pop %v811
    %v820 = vrot.slane %v725, 6
    %v822 = vmul.f32 %v817, %v820
    %824 = vrot.lane.b32.xlu0 %v818, 64
    %v825 = vpop.permute.xlu0 %824
    %v827 = vmul.f32 %v817, %v825
    %829 = vrot.lane.b32.xlu0 %v827, 32
    %v830 = vpop.permute.xlu0 %829
    %v832 = vadd.f32 %v822, %v830
    %v833 = vtanh.pop %v832
    %835 = vrot.lane.b32.xlu0 %v833, 64
    %v836 = vpop.permute.xlu0 %835
    %v838 = vmul.f32 %v817, %v836
    %v840 = vrot.slane %v838, 6
    %841 = vrot.lane.b32.xlu0 %v840, 32
    %v842 = vpop.permute.xlu0 %841
    %v843 = vsel %vm339, %v842, 0
    %845 = vmatprep.subr.mxu0 0.0
    %846 = vmatpush1.msra.mxu0 %v326
    %847 = vmatprep.subr.mxu0 0.0
    %848 = vmatpush1.msra.mxu0 %v327
    %849 = vmatprep.subr.mxu0 0.0
    %850 = vmatpush1.msra.mxu0 %v328
    %851 = vmatprep.subr.mxu0 0.0
    %852 = vmatpush1.msra.mxu0 %v329
    %853 = vmatprep.subr.mxu0 0.0
    %854 = vmatpush1.msra.mxu0 0.0
    %855 = vmatprep.subr.mxu0 0.0
    %856 = vmatpush1.msra.mxu0 0.0
    %857 = vmatprep.subr.mxu0 0.0
    %858 = vmatpush1.msra.mxu0 0.0
    %859 = vmatprep.subr.mxu0 0.0
    %860 = vmatpush1.msra.mxu0 0.0
    %861 = vmatprep.subr.mxu0 0.0
    %862 = vmatpush1.msra.mxu0 0.0
    %863 = vmatprep.subr.mxu0 0.0
    %864 = vmatpush1.msra.mxu0 0.0
    %865 = vmatprep.subr.mxu0 0.0
    %866 = vmatpush1.msra.mxu0 0.0
    %867 = vmatprep.subr.mxu0 0.0
    %868 = vmatpush1.msra.mxu0 0.0
    %869 = vmatprep.subr.mxu0 0.0
    %870 = vmatpush1.msra.mxu0 0.0
    %871 = vmatprep.subr.mxu0 0.0
    %872 = vmatpush1.msra.mxu0 0.0
    %873 = vmatprep.subr.mxu0 0.0
    %874 = vmatpush1.msra.mxu0 0.0
    %875 = vmatprep.subr.mxu0 0.0
    %876 = vmatpush1.msra.mxu0 0.0
    %877 = vmatprep.subr.mxu0 0.0
    %878 = vmatpush1.msra.mxu0 0.0
    %879 = vmatprep.subr.mxu0 0.0
    %880 = vmatpush1.msra.mxu0 0.0
    %881 = vmatprep.subr.mxu0 0.0
    %882 = vmatpush1.msra.mxu0 0.0
    %883 = vmatprep.subr.mxu0 0.0
    %884 = vmatpush1.msra.mxu0 0.0
    %885 = vmatprep.subr.mxu0 0.0
    %886 = vmatpush1.msra.mxu0 0.0
    %887 = vmatprep.subr.mxu0 0.0
    %888 = vmatpush1.msra.mxu0 0.0
    %889 = vmatprep.subr.mxu0 0.0
    %890 = vmatpush1.msra.mxu0 0.0
    %891 = vmatprep.subr.mxu0 0.0
    %892 = vmatpush1.msra.mxu0 0.0
    %893 = vmatprep.subr.mxu0 0.0
    %894 = vmatpush1.msra.mxu0 0.0
    %895 = vmatprep.subr.mxu0 0.0
    %896 = vmatpush1.msra.mxu0 0.0
    %897 = vmatprep.subr.mxu0 0.0
    %898 = vmatpush1.msra.mxu0 0.0
    %899 = vmatprep.subr.mxu0 0.0
    %900 = vmatpush1.msra.mxu0 0.0
    %901 = vmatprep.subr.mxu0 0.0
    %902 = vmatpush1.msra.mxu0 0.0
    %903 = vmatprep.subr.mxu0 0.0
    %904 = vmatpush1.msra.mxu0 0.0
    %905 = vmatprep.subr.mxu0 0.0
    %906 = vmatpush1.msra.mxu0 0.0
    %907 = vmatprep.subr.mxu0 0.0
    %908 = vmatpush1.msra.mxu0 0.0
    %909 = vmatprep.mubr.f32.mxu0 0.0
    %910 = vmatmul.mubr.f32.gmra.mrb[0].mxu0 %v843
    %v911 = vpop.f32.mrb[0].mxu0
    %v912 = vadd.f32 0.0, %v911
    %v913 = vpop.f32.mrb[0].mxu0
    %914 = vdwg.mxu0
    %v915 = vadd.f32 %v418, %v912
    %v916 = vxor.u32 %v915, 2147483648
    %v917 = vmul.f32 %v916, 1.442695
    %v918 = vpow.pop %v917
    %v919 = vadd.f32 %v918, 1.0
    %v920 = vrcp.pop %v919
    %v921 = vmul.f32 1.0, %v920
    %v922 = vtanh.pop %v915
    %v924 = vrot.slane %v832, 6
    %v926 = vmul.f32 %v921, %v924
    %928 = vrot.lane.b32.xlu0 %v922, 64
    %v929 = vpop.permute.xlu0 %928
    %v931 = vmul.f32 %v921, %v929
    %933 = vrot.lane.b32.xlu0 %v931, 32
    %v934 = vpop.permute.xlu0 %933
    %v936 = vadd.f32 %v926, %v934
    %v937 = vtanh.pop %v936
    %939 = vrot.lane.b32.xlu0 %v937, 64
    %v940 = vpop.permute.xlu0 %939
    %v942 = vmul.f32 %v921, %v940
    %944 = vrot.lane.b32.xlu0 %v942, 32
    %v945 = vpop.permute.xlu0 %944
    %v946 = vsel %vm339, %v945, 0
    %948 = vmatprep.subr.mxu0 0.0
    %949 = vmatpush1.msra.mxu0 %v326
    %950 = vmatprep.subr.mxu0 0.0
    %951 = vmatpush1.msra.mxu0 %v327
    %952 = vmatprep.subr.mxu0 0.0
    %953 = vmatpush1.msra.mxu0 %v328
    %954 = vmatprep.subr.mxu0 0.0
    %955 = vmatpush1.msra.mxu0 %v329
    %956 = vmatprep.subr.mxu0 0.0
    %957 = vmatpush1.msra.mxu0 0.0
    %958 = vmatprep.subr.mxu0 0.0
    %959 = vmatpush1.msra.mxu0 0.0
    %960 = vmatprep.subr.mxu0 0.0
    %961 = vmatpush1.msra.mxu0 0.0
    %962 = vmatprep.subr.mxu0 0.0
    %963 = vmatpush1.msra.mxu0 0.0
    %964 = vmatprep.subr.mxu0 0.0
    %965 = vmatpush1.msra.mxu0 0.0
    %966 = vmatprep.subr.mxu0 0.0
    %967 = vmatpush1.msra.mxu0 0.0
    %968 = vmatprep.subr.mxu0 0.0
    %969 = vmatpush1.msra.mxu0 0.0
    %970 = vmatprep.subr.mxu0 0.0
    %971 = vmatpush1.msra.mxu0 0.0
    %972 = vmatprep.subr.mxu0 0.0
    %973 = vmatpush1.msra.mxu0 0.0
    %974 = vmatprep.subr.mxu0 0.0
    %975 = vmatpush1.msra.mxu0 0.0
    %976 = vmatprep.subr.mxu0 0.0
    %977 = vmatpush1.msra.mxu0 0.0
    %978 = vmatprep.subr.mxu0 0.0
    %979 = vmatpush1.msra.mxu0 0.0
    %980 = vmatprep.subr.mxu0 0.0
    %981 = vmatpush1.msra.mxu0 0.0
    %982 = vmatprep.subr.mxu0 0.0
    %983 = vmatpush1.msra.mxu0 0.0
    %984 = vmatprep.subr.mxu0 0.0
    %985 = vmatpush1.msra.mxu0 0.0
    %986 = vmatprep.subr.mxu0 0.0
    %987 = vmatpush1.msra.mxu0 0.0
    %988 = vmatprep.subr.mxu0 0.0
    %989 = vmatpush1.msra.mxu0 0.0
    %990 = vmatprep.subr.mxu0 0.0
    %991 = vmatpush1.msra.mxu0 0.0
    %992 = vmatprep.subr.mxu0 0.0
    %993 = vmatpush1.msra.mxu0 0.0
    %994 = vmatprep.subr.mxu0 0.0
    %995 = vmatpush1.msra.mxu0 0.0
    %996 = vmatprep.subr.mxu0 0.0
    %997 = vmatpush1.msra.mxu0 0.0
    %998 = vmatprep.subr.mxu0 0.0
    %999 = vmatpush1.msra.mxu0 0.0
    %1000 = vmatprep.subr.mxu0 0.0
    %1001 = vmatpush1.msra.mxu0 0.0
    %1002 = vmatprep.subr.mxu0 0.0
    %1003 = vmatpush1.msra.mxu0 0.0
    %1004 = vmatprep.subr.mxu0 0.0
    %1005 = vmatpush1.msra.mxu0 0.0
    %1006 = vmatprep.subr.mxu0 0.0
    %1007 = vmatpush1.msra.mxu0 0.0
    %1008 = vmatprep.subr.mxu0 0.0
    %1009 = vmatpush1.msra.mxu0 0.0
    %1010 = vmatprep.subr.mxu0 0.0
    %1011 = vmatpush1.msra.mxu0 0.0
    %1012 = vmatprep.mubr.f32.mxu0 0.0
    %1013 = vmatmul.mubr.f32.gmra.mrb[0].mxu0 %v946
    %v1014 = vpop.f32.mrb[0].mxu0
    %v1015 = vadd.f32 0.0, %v1014
    %v1016 = vpop.f32.mrb[0].mxu0
    %1017 = vdwg.mxu0
    %v1019 = vrot.slane %v1015, 6
    %v1021 = vadd.f32 %v418, %v1019
    %v1022 = vxor.u32 %v1021, 2147483648
    %v1023 = vmul.f32 %v1022, 1.442695
    %v1024 = vpow.pop %v1023
    %v1025 = vadd.f32 %v1024, 1.0
    %v1026 = vrcp.pop %v1025
    %v1027 = vmul.f32 1.0, %v1026
    %v1028 = vtanh.pop %v1021
    %v1030 = vrot.slane %v936, 6
    %v1032 = vmul.f32 %v1027, %v1030
    %1034 = vrot.lane.b32.xlu0 %v1028, 64
    %v1035 = vpop.permute.xlu0 %1034
    %v1037 = vmul.f32 %v1027, %v1035
    %1039 = vrot.lane.b32.xlu0 %v1037, 32
    %v1040 = vpop.permute.xlu0 %1039
    %v1042 = vadd.f32 %v1032, %v1040
    %v1043 = vtanh.pop %v1042
    %1045 = vrot.lane.b32.xlu0 %v1043, 64
    %v1046 = vpop.permute.xlu0 %1045
    %v1048 = vmul.f32 %v1027, %v1046
    %v1050 = vrot.slane %v1048, 2
    %1051 = vrot.lane.b32.xlu0 %v1050, 32
    %v1052 = vpop.permute.xlu0 %1051
    %v1053 = vsel %vm339, %v1052, 0
    %1055 = vmatprep.subr.mxu0 0.0
    %1056 = vmatpush1.msra.mxu0 %v326
    %1057 = vmatprep.subr.mxu0 0.0
    %1058 = vmatpush1.msra.mxu0 %v327
    %1059 = vmatprep.subr.mxu0 0.0
    %1060 = vmatpush1.msra.mxu0 %v328
    %1061 = vmatprep.subr.mxu0 0.0
    %1062 = vmatpush1.msra.mxu0 %v329
    %1063 = vmatprep.subr.mxu0 0.0
    %1064 = vmatpush1.msra.mxu0 0.0
    %1065 = vmatprep.subr.mxu0 0.0
    %1066 = vmatpush1.msra.mxu0 0.0
    %1067 = vmatprep.subr.mxu0 0.0
    %1068 = vmatpush1.msra.mxu0 0.0
    %1069 = vmatprep.subr.mxu0 0.0
    %1070 = vmatpush1.msra.mxu0 0.0
    %1071 = vmatprep.subr.mxu0 0.0
    %1072 = vmatpush1.msra.mxu0 0.0
    %1073 = vmatprep.subr.mxu0 0.0
    %1074 = vmatpush1.msra.mxu0 0.0
    %1075 = vmatprep.subr.mxu0 0.0
    %1076 = vmatpush1.msra.mxu0 0.0
    %1077 = vmatprep.subr.mxu0 0.0
    %1078 = vmatpush1.msra.mxu0 0.0
    %1079 = vmatprep.subr.mxu0 0.0
    %1080 = vmatpush1.msra.mxu0 0.0
    %1081 = vmatprep.subr.mxu0 0.0
    %1082 = vmatpush1.msra.mxu0 0.0
    %1083 = vmatprep.subr.mxu0 0.0
    %1084 = vmatpush1.msra.mxu0 0.0
    %1085 = vmatprep.subr.mxu0 0.0
    %1086 = vmatpush1.msra.mxu0 0.0
    %1087 = vmatprep.subr.mxu0 0.0
    %1088 = vmatpush1.msra.mxu0 0.0
    %1089 = vmatprep.subr.mxu0 0.0
    %1090 = vmatpush1.msra.mxu0 0.0
    %1091 = vmatprep.subr.mxu0 0.0
    %1092 = vmatpush1.msra.mxu0 0.0
    %1093 = vmatprep.subr.mxu0 0.0
    %1094 = vmatpush1.msra.mxu0 0.0
    %1095 = vmatprep.subr.mxu0 0.0
    %1096 = vmatpush1.msra.mxu0 0.0
    %1097 = vmatprep.subr.mxu0 0.0
    %1098 = vmatpush1.msra.mxu0 0.0
    %1099 = vmatprep.subr.mxu0 0.0
    %1100 = vmatpush1.msra.mxu0 0.0
    %1101 = vmatprep.subr.mxu0 0.0
    %1102 = vmatpush1.msra.mxu0 0.0
    %1103 = vmatprep.subr.mxu0 0.0
    %1104 = vmatpush1.msra.mxu0 0.0
    %1105 = vmatprep.subr.mxu0 0.0
    %1106 = vmatpush1.msra.mxu0 0.0
    %1107 = vmatprep.subr.mxu0 0.0
    %1108 = vmatpush1.msra.mxu0 0.0
    %1109 = vmatprep.subr.mxu0 0.0
    %1110 = vmatpush1.msra.mxu0 0.0
    %1111 = vmatprep.subr.mxu0 0.0
    %1112 = vmatpush1.msra.mxu0 0.0
    %1113 = vmatprep.subr.mxu0 0.0
    %1114 = vmatpush1.msra.mxu0 0.0
    %1115 = vmatprep.subr.mxu0 0.0
    %1116 = vmatpush1.msra.mxu0 0.0
    %1117 = vmatprep.subr.mxu0 0.0
    %1118 = vmatpush1.msra.mxu0 0.0
    %1119 = vmatprep.mubr.f32.mxu0 0.0
    %1120 = vmatmul.mubr.f32.gmra.mrb[0].mxu0 %v1053
    %v1121 = vpop.f32.mrb[0].mxu0
    %v1122 = vadd.f32 0.0, %v1121
    %v1123 = vpop.f32.mrb[0].mxu0
    %1124 = vdwg.mxu0
    %v1126 = vrot.slane %v1122, 4
    %v1128 = vadd.f32 %v418, %v1126
    %v1129 = vxor.u32 %v1128, 2147483648
    %v1130 = vmul.f32 %v1129, 1.442695
    %v1131 = vpow.pop %v1130
    %v1132 = vadd.f32 %v1131, 1.0
    %v1133 = vrcp.pop %v1132
    %v1134 = vmul.f32 1.0, %v1133
    %v1135 = vtanh.pop %v1128
    %v1137 = vrot.slane %v1042, 6
    %v1139 = vmul.f32 %v1134, %v1137
    %1141 = vrot.lane.b32.xlu0 %v1135, 64
    %v1142 = vpop.permute.xlu0 %1141
    %v1144 = vmul.f32 %v1134, %v1142
    %1146 = vrot.lane.b32.xlu0 %v1144, 32
    %v1147 = vpop.permute.xlu0 %1146
    %v1149 = vadd.f32 %v1139, %v1147
    %v1150 = vtanh.pop %v1149
    %1152 = vrot.lane.b32.xlu0 %v1150, 64
    %v1153 = vpop.permute.xlu0 %1152
    %v1155 = vmul.f32 %v1134, %v1153
    %v1157 = vrot.slane %v1155, 4
    %1158 = vrot.lane.b32.xlu0 %v1157, 32
    %v1159 = vpop.permute.xlu0 %1158
    %v1160 = vsel %vm339, %v1159, 0
    %1162 = vmatprep.subr.mxu0 0.0
    %1163 = vmatpush1.msra.mxu0 %v326
    %1164 = vmatprep.subr.mxu0 0.0
    %1165 = vmatpush1.msra.mxu0 %v327
    %1166 = vmatprep.subr.mxu0 0.0
    %1167 = vmatpush1.msra.mxu0 %v328
    %1168 = vmatprep.subr.mxu0 0.0
    %1169 = vmatpush1.msra.mxu0 %v329
    %1170 = vmatprep.subr.mxu0 0.0
    %1171 = vmatpush1.msra.mxu0 0.0
    %1172 = vmatprep.subr.mxu0 0.0
    %1173 = vmatpush1.msra.mxu0 0.0
    %1174 = vmatprep.subr.mxu0 0.0
    %1175 = vmatpush1.msra.mxu0 0.0
    %1176 = vmatprep.subr.mxu0 0.0
    %1177 = vmatpush1.msra.mxu0 0.0
    %1178 = vmatprep.subr.mxu0 0.0
    %1179 = vmatpush1.msra.mxu0 0.0
    %1180 = vmatprep.subr.mxu0 0.0
    %1181 = vmatpush1.msra.mxu0 0.0
    %1182 = vmatprep.subr.mxu0 0.0
    %1183 = vmatpush1.msra.mxu0 0.0
    %1184 = vmatprep.subr.mxu0 0.0
    %1185 = vmatpush1.msra.mxu0 0.0
    %1186 = vmatprep.subr.mxu0 0.0
    %1187 = vmatpush1.msra.mxu0 0.0
    %1188 = vmatprep.subr.mxu0 0.0
    %1189 = vmatpush1.msra.mxu0 0.0
    %1190 = vmatprep.subr.mxu0 0.0
    %1191 = vmatpush1.msra.mxu0 0.0
    %1192 = vmatprep.subr.mxu0 0.0
    %1193 = vmatpush1.msra.mxu0 0.0
    %1194 = vmatprep.subr.mxu0 0.0
    %1195 = vmatpush1.msra.mxu0 0.0
    %1196 = vmatprep.subr.mxu0 0.0
    %1197 = vmatpush1.msra.mxu0 0.0
    %1198 = vmatprep.subr.mxu0 0.0
    %1199 = vmatpush1.msra.mxu0 0.0
    %1200 = vmatprep.subr.mxu0 0.0
    %1201 = vmatpush1.msra.mxu0 0.0
    %1202 = vmatprep.subr.mxu0 0.0
    %1203 = vmatpush1.msra.mxu0 0.0
    %1204 = vmatprep.subr.mxu0 0.0
    %1205 = vmatpush1.msra.mxu0 0.0
    %1206 = vmatprep.subr.mxu0 0.0
    %1207 = vmatpush1.msra.mxu0 0.0
    %1208 = vmatprep.subr.mxu0 0.0
    %1209 = vmatpush1.msra.mxu0 0.0
    %1210 = vmatprep.subr.mxu0 0.0
    %1211 = vmatpush1.msra.mxu0 0.0
    %1212 = vmatprep.subr.mxu0 0.0
    %1213 = vmatpush1.msra.mxu0 0.0
    %1214 = vmatprep.subr.mxu0 0.0
    %1215 = vmatpush1.msra.mxu0 0.0
    %1216 = vmatprep.subr.mxu0 0.0
    %1217 = vmatpush1.msra.mxu0 0.0
    %1218 = vmatprep.subr.mxu0 0.0
    %1219 = vmatpush1.msra.mxu0 0.0
    %1220 = vmatprep.subr.mxu0 0.0
    %1221 = vmatpush1.msra.mxu0 0.0
    %1222 = vmatprep.subr.mxu0 0.0
    %1223 = vmatpush1.msra.mxu0 0.0
    %1224 = vmatprep.subr.mxu0 0.0
    %1225 = vmatpush1.msra.mxu0 0.0
    %1226 = vmatprep.mubr.f32.mxu0 0.0
    %1227 = vmatmul.mubr.f32.gmra.mrb[0].mxu0 %v1160
    %v1228 = vpop.f32.mrb[0].mxu0
    %v1229 = vadd.f32 0.0, %v1228
    %v1230 = vpop.f32.mrb[0].mxu0
    %1231 = vdwg.mxu0
    %v1233 = vrot.slane %v1229, 2
    %v1235 = vadd.f32 %v418, %v1233
    %v1236 = vxor.u32 %v1235, 2147483648
    %v1237 = vmul.f32 %v1236, 1.442695
    %v1238 = vpow.pop %v1237
    %v1239 = vadd.f32 %v1238, 1.0
    %v1240 = vrcp.pop %v1239
    %v1241 = vmul.f32 1.0, %v1240
    %v1242 = vtanh.pop %v1235
    %v1244 = vrot.slane %v1149, 6
    %v1246 = vmul.f32 %v1241, %v1244
    %1248 = vrot.lane.b32.xlu0 %v1242, 64
    %v1249 = vpop.permute.xlu0 %1248
    %v1251 = vmul.f32 %v1241, %v1249
    %1253 = vrot.lane.b32.xlu0 %v1251, 32
    %v1254 = vpop.permute.xlu0 %1253
    %v1256 = vadd.f32 %v1246, %v1254
    %v1257 = vtanh.pop %v1256
    %1259 = vrot.lane.b32.xlu0 %v1257, 64
    %v1260 = vpop.permute.xlu0 %1259
    %v1262 = vmul.f32 %v1241, %v1260
    %vm1263 = vcmask 1041408
    %v1264 = vsel %vm1263, %v518, %v624
    %vm1265 = vcmask 1043456
    %v1266 = vsel %vm1265, %v1264, %v731
    %vm1267 = vcmask 1045504
    %v1268 = vsel %vm1267, %v1266, %v838
    %v1269 = vsel %vm1263, %v942, %v1048
    %v1270 = vsel %vm1265, %v1269, %v1155
    %v1271 = vsel %vm1267, %v1270, %v1262
    %1273 = vrot.lane.b32.xlu0 %v1262, 32
    %v1274 = vpop.permute.xlu0 %1273
    %vm1276 = vcmask 261126
    %1277 = vst.msk [vmem:[#allocation18 - $0x6] sm:$0xc0] %vm1276, %v1274
    %1279 = vrot.lane.b32.xlu0 %v1256, 96
    %v1280 = vpop.permute.xlu0 %1279
    %1282 = vst.msk [vmem:[#allocation20 - $0x6] sm:$0xc0] %vm1276, %v1280
    %s1283 = scalar_lea.vmem [#allocation8], 32
    %v1284 = vld [vmem:[%s1283] sm:$0xff]
    %v1285 = vld [vmem:[%s1283 + $0x8] sm:$0xff]
    %v1286 = vld [vmem:[%s1283 + $0x10] sm:$0xff]
    %v1287 = vld [vmem:[%s1283 + $0x18] sm:$0xff]
    %s1288 = scalar_lea.vmem [#allocation5], 32
    %v1289 = vld [vmem:[%s1288] sm:$0xff]
    %v1290 = vld [vmem:[%s1288 + $0x8] sm:$0xff]
    %v1291 = vld [vmem:[%s1288 + $0x10] sm:$0xff]
    %v1292 = vld [vmem:[%s1288 + $0x18] sm:$0xff]
    %v1293 = vld [vmem:[#allocation10 + $0x1] sm:$0x1]
    %v1294 = vlaneseq
    %v1295 = vshrl.u32 %v1294, 7
    %v1296 = vsub.s32 0, %v1295
    %v1297 = vrot.slane %v1293, %v1296
    %1300 = vrot.lane.b32.xlu0 %v1268, 32
    %v1301 = vpop.permute.xlu0 %1300
    %1302 = vrot.lane.b32.xlu0 %v1271, 32
    %v1303 = vpop.permute.xlu0 %1302
    %v1304 = vsel %vm339, %v1301, 0
    %v1306 = vsel %vm339, %v1303, 0
    %1308 = vmatprep.subr.mxu0 0.0
    %1309 = vmatpush1.msra.mxu0 %v1289
    %1310 = vmatprep.subr.mxu0 0.0
    %1311 = vmatpush1.msra.mxu0 %v1290
    %1312 = vmatprep.subr.mxu0 0.0
    %1313 = vmatpush1.msra.mxu0 %v1291
    %1314 = vmatprep.subr.mxu0 0.0
    %1315 = vmatpush1.msra.mxu0 %v1292
    %1316 = vmatprep.subr.mxu0 0.0
    %1317 = vmatpush1.msra.mxu0 0.0
    %1318 = vmatprep.subr.mxu0 0.0
    %1319 = vmatpush1.msra.mxu0 0.0
    %1320 = vmatprep.subr.mxu0 0.0
    %1321 = vmatpush1.msra.mxu0 0.0
    %1322 = vmatprep.subr.mxu0 0.0
    %1323 = vmatpush1.msra.mxu0 0.0
    %1324 = vmatprep.subr.mxu0 0.0
    %1325 = vmatpush1.msra.mxu0 0.0
    %1326 = vmatprep.subr.mxu0 0.0
    %1327 = vmatpush1.msra.mxu0 0.0
    %1328 = vmatprep.subr.mxu0 0.0
    %1329 = vmatpush1.msra.mxu0 0.0
    %1330 = vmatprep.subr.mxu0 0.0
    %1331 = vmatpush1.msra.mxu0 0.0
    %1332 = vmatprep.subr.mxu0 0.0
    %1333 = vmatpush1.msra.mxu0 0.0
    %1334 = vmatprep.subr.mxu0 0.0
    %1335 = vmatpush1.msra.mxu0 0.0
    %1336 = vmatprep.subr.mxu0 0.0
    %1337 = vmatpush1.msra.mxu0 0.0
    %1338 = vmatprep.subr.mxu0 0.0
    %1339 = vmatpush1.msra.mxu0 0.0
    %1340 = vmatprep.subr.mxu0 0.0
    %1341 = vmatpush1.msra.mxu0 0.0
    %1342 = vmatprep.subr.mxu0 0.0
    %1343 = vmatpush1.msra.mxu0 0.0
    %1344 = vmatprep.subr.mxu0 0.0
    %1345 = vmatpush1.msra.mxu0 0.0
    %1346 = vmatprep.subr.mxu0 0.0
    %1347 = vmatpush1.msra.mxu0 0.0
    %1348 = vmatprep.subr.mxu0 0.0
    %1349 = vmatpush1.msra.mxu0 0.0
    %1350 = vmatprep.subr.mxu0 0.0
    %1351 = vmatpush1.msra.mxu0 0.0
    %1352 = vmatprep.subr.mxu0 0.0
    %1353 = vmatpush1.msra.mxu0 0.0
    %1354 = vmatprep.subr.mxu0 0.0
    %1355 = vmatpush1.msra.mxu0 0.0
    %1356 = vmatprep.subr.mxu0 0.0
    %1357 = vmatpush1.msra.mxu0 0.0
    %1358 = vmatprep.subr.mxu0 0.0
    %1359 = vmatpush1.msra.mxu0 0.0
    %1360 = vmatprep.subr.mxu0 0.0
    %1361 = vmatpush1.msra.mxu0 0.0
    %1362 = vmatprep.subr.mxu0 0.0
    %1363 = vmatpush1.msra.mxu0 0.0
    %1364 = vmatprep.subr.mxu0 0.0
    %1365 = vmatpush1.msra.mxu0 0.0
    %1366 = vmatprep.subr.mxu0 0.0
    %1367 = vmatpush1.msra.mxu0 0.0
    %1368 = vmatprep.subr.mxu0 0.0
    %1369 = vmatpush1.msra.mxu0 0.0
    %1370 = vmatprep.subr.mxu0 0.0
    %1371 = vmatpush1.msra.mxu0 0.0
    %1372 = vmatprep.mubr.f32.mxu0 0.0
    %1373 = vmatmul.mubr.f32.gmra.mrb[0].mxu0 %v1304
    %v1374 = vpop.f32.mrb[0].mxu0
    %v1375 = vadd.f32 %v1297, %v1374
    %v1376 = vpop.f32.mrb[0].mxu0
    %1377 = vmatprep.mubr.f32.mxu0 0.0
    %1378 = vmatmul.mubr.f32.gmra.mrb[0].mxu0 %v1306
    %v1379 = vpop.f32.mrb[0].mxu0
    %v1380 = vadd.f32 %v1297, %v1379
    %v1381 = vpop.f32.mrb[0].mxu0
    %1382 = vdwg.mxu0
    %1383 = vmatprep.subr.mxu0 0.0
    %1384 = vmatpush1.msra.mxu0 %v1284
    %1385 = vmatprep.subr.mxu0 0.0
    %1386 = vmatpush1.msra.mxu0 %v1285
    %1387 = vmatprep.subr.mxu0 0.0
    %1388 = vmatpush1.msra.mxu0 %v1286
    %1389 = vmatprep.subr.mxu0 0.0
    %1390 = vmatpush1.msra.mxu0 %v1287
    %1391 = vmatprep.subr.mxu0 0.0
    %1392 = vmatpush1.msra.mxu0 0.0
    %1393 = vmatprep.subr.mxu0 0.0
    %1394 = vmatpush1.msra.mxu0 0.0
    %1395 = vmatprep.subr.mxu0 0.0
    %1396 = vmatpush1.msra.mxu0 0.0
    %1397 = vmatprep.subr.mxu0 0.0
    %1398 = vmatpush1.msra.mxu0 0.0
    %1399 = vmatprep.subr.mxu0 0.0
    %1400 = vmatpush1.msra.mxu0 0.0
    %1401 = vmatprep.subr.mxu0 0.0
    %1402 = vmatpush1.msra.mxu0 0.0
    %1403 = vmatprep.subr.mxu0 0.0
    %1404 = vmatpush1.msra.mxu0 0.0
    %1405 = vmatprep.subr.mxu0 0.0
    %1406 = vmatpush1.msra.mxu0 0.0
    %1407 = vmatprep.subr.mxu0 0.0
    %1408 = vmatpush1.msra.mxu0 0.0
    %1409 = vmatprep.subr.mxu0 0.0
    %1410 = vmatpush1.msra.mxu0 0.0
    %1411 = vmatprep.subr.mxu0 0.0
    %1412 = vmatpush1.msra.mxu0 0.0
    %1413 = vmatprep.subr.mxu0 0.0
    %1414 = vmatpush1.msra.mxu0 0.0
    %1415 = vmatprep.subr.mxu0 0.0
    %1416 = vmatpush1.msra.mxu0 0.0
    %1417 = vmatprep.subr.mxu0 0.0
    %1418 = vmatpush1.msra.mxu0 0.0
    %1419 = vmatprep.subr.mxu0 0.0
    %1420 = vmatpush1.msra.mxu0 0.0
    %1421 = vmatprep.subr.mxu0 0.0
    %1422 = vmatpush1.msra.mxu0 0.0
    %1423 = vmatprep.subr.mxu0 0.0
    %1424 = vmatpush1.msra.mxu0 0.0
    %1425 = vmatprep.subr.mxu0 0.0
    %1426 = vmatpush1.msra.mxu0 0.0
    %1427 = vmatprep.subr.mxu0 0.0
    %1428 = vmatpush1.msra.mxu0 0.0
    %1429 = vmatprep.subr.mxu0 0.0
    %1430 = vmatpush1.msra.mxu0 0.0
    %1431 = vmatprep.subr.mxu0 0.0
    %1432 = vmatpush1.msra.mxu0 0.0
    %1433 = vmatprep.subr.mxu0 0.0
    %1434 = vmatpush1.msra.mxu0 0.0
    %1435 = vmatprep.subr.mxu0 0.0
    %1436 = vmatpush1.msra.mxu0 0.0
    %1437 = vmatprep.subr.mxu0 0.0
    %1438 = vmatpush1.msra.mxu0 0.0
    %1439 = vmatprep.subr.mxu0 0.0
    %1440 = vmatpush1.msra.mxu0 0.0
    %1441 = vmatprep.subr.mxu0 0.0
    %1442 = vmatpush1.msra.mxu0 0.0
    %1443 = vmatprep.subr.mxu0 0.0
    %1444 = vmatpush1.msra.mxu0 0.0
    %1445 = vmatprep.subr.mxu0 0.0
    %1446 = vmatpush1.msra.mxu0 0.0
    %1447 = vmatprep.mubr.f32.mxu0 0.0
    %1448 = vmatmul.mubr.f32.gmra.mrb[0].mxu0 %v422
    %v1449 = vpop.f32.mrb[0].mxu0
    %v1450 = vadd.f32 0.0, %v1449
    %v1451 = vpop.f32.mrb[0].mxu0
    %1452 = vdwg.mxu0
    %v1453 = vadd.f32 %v1375, %v1450
    %v1454 = vxor.u32 %v1453, 2147483648
    %v1455 = vmul.f32 %v1454, 1.442695
    %v1456 = vpow.pop %v1455
    %v1457 = vadd.f32 %v1456, 1.0
    %v1458 = vrcp.pop %v1457
    %v1459 = vmul.f32 1.0, %v1458
    %v1460 = vtanh.pop %v1453
    %v1461 = vmul.f32 %v1459, 0.0
    %1463 = vrot.lane.b32.xlu0 %v1460, 64
    %v1464 = vpop.permute.xlu0 %1463
    %v1466 = vmul.f32 %v1459, %v1464
    %1468 = vrot.lane.b32.xlu0 %v1466, 32
    %v1469 = vpop.permute.xlu0 %1468
    %v1471 = vadd.f32 %v1461, %v1469
    %v1472 = vtanh.pop %v1471
    %1474 = vrot.lane.b32.xlu0 %v1472, 64
    %v1475 = vpop.permute.xlu0 %1474
    %v1477 = vmul.f32 %v1459, %v1475
    %1479 = vrot.lane.b32.xlu0 %v1477, 32
    %v1480 = vpop.permute.xlu0 %1479
    %v1481 = vsel %vm339, %v1480, 0
    %1483 = vmatprep.subr.mxu0 0.0
    %1484 = vmatpush1.msra.mxu0 %v1284
    %1485 = vmatprep.subr.mxu0 0.0
    %1486 = vmatpush1.msra.mxu0 %v1285
    %1487 = vmatprep.subr.mxu0 0.0
    %1488 = vmatpush1.msra.mxu0 %v1286
    %1489 = vmatprep.subr.mxu0 0.0
    %1490 = vmatpush1.msra.mxu0 %v1287
    %1491 = vmatprep.subr.mxu0 0.0
    %1492 = vmatpush1.msra.mxu0 0.0
    %1493 = vmatprep.subr.mxu0 0.0
    %1494 = vmatpush1.msra.mxu0 0.0
    %1495 = vmatprep.subr.mxu0 0.0
    %1496 = vmatpush1.msra.mxu0 0.0
    %1497 = vmatprep.subr.mxu0 0.0
    %1498 = vmatpush1.msra.mxu0 0.0
    %1499 = vmatprep.subr.mxu0 0.0
    %1500 = vmatpush1.msra.mxu0 0.0
    %1501 = vmatprep.subr.mxu0 0.0
    %1502 = vmatpush1.msra.mxu0 0.0
    %1503 = vmatprep.subr.mxu0 0.0
    %1504 = vmatpush1.msra.mxu0 0.0
    %1505 = vmatprep.subr.mxu0 0.0
    %1506 = vmatpush1.msra.mxu0 0.0
    %1507 = vmatprep.subr.mxu0 0.0
    %1508 = vmatpush1.msra.mxu0 0.0
    %1509 = vmatprep.subr.mxu0 0.0
    %1510 = vmatpush1.msra.mxu0 0.0
    %1511 = vmatprep.subr.mxu0 0.0
    %1512 = vmatpush1.msra.mxu0 0.0
    %1513 = vmatprep.subr.mxu0 0.0
    %1514 = vmatpush1.msra.mxu0 0.0
    %1515 = vmatprep.subr.mxu0 0.0
    %1516 = vmatpush1.msra.mxu0 0.0
    %1517 = vmatprep.subr.mxu0 0.0
    %1518 = vmatpush1.msra.mxu0 0.0
    %1519 = vmatprep.subr.mxu0 0.0
    %1520 = vmatpush1.msra.mxu0 0.0
    %1521 = vmatprep.subr.mxu0 0.0
    %1522 = vmatpush1.msra.mxu0 0.0
    %1523 = vmatprep.subr.mxu0 0.0
    %1524 = vmatpush1.msra.mxu0 0.0
    %1525 = vmatprep.subr.mxu0 0.0
    %1526 = vmatpush1.msra.mxu0 0.0
    %1527 = vmatprep.subr.mxu0 0.0
    %1528 = vmatpush1.msra.mxu0 0.0
    %1529 = vmatprep.subr.mxu0 0.0
    %1530 = vmatpush1.msra.mxu0 0.0
    %1531 = vmatprep.subr.mxu0 0.0
    %1532 = vmatpush1.msra.mxu0 0.0
    %1533 = vmatprep.subr.mxu0 0.0
    %1534 = vmatpush1.msra.mxu0 0.0
    %1535 = vmatprep.subr.mxu0 0.0
    %1536 = vmatpush1.msra.mxu0 0.0
    %1537 = vmatprep.subr.mxu0 0.0
    %1538 = vmatpush1.msra.mxu0 0.0
    %1539 = vmatprep.subr.mxu0 0.0
    %1540 = vmatpush1.msra.mxu0 0.0
    %1541 = vmatprep.subr.mxu0 0.0
    %1542 = vmatpush1.msra.mxu0 0.0
    %1543 = vmatprep.subr.mxu0 0.0
    %1544 = vmatpush1.msra.mxu0 0.0
    %1545 = vmatprep.subr.mxu0 0.0
    %1546 = vmatpush1.msra.mxu0 0.0
    %1547 = vmatprep.mubr.f32.mxu0 0.0
    %1548 = vmatmul.mubr.f32.gmra.mrb[0].mxu0 %v1481
    %v1549 = vpop.f32.mrb[0].mxu0
    %v1550 = vadd.f32 0.0, %v1549
    %v1551 = vpop.f32.mrb[0].mxu0
    %1552 = vdwg.mxu0
    %v1554 = vrot.slane %v1550, 6
    %v1556 = vadd.f32 %v1375, %v1554
    %v1557 = vxor.u32 %v1556, 2147483648
    %v1558 = vmul.f32 %v1557, 1.442695
    %v1559 = vpow.pop %v1558
    %v1560 = vadd.f32 %v1559, 1.0
    %v1561 = vrcp.pop %v1560
    %v1562 = vmul.f32 1.0, %v1561
    %v1563 = vtanh.pop %v1556
    %v1565 = vrot.slane %v1471, 6
    %v1567 = vmul.f32 %v1562, %v1565
    %1569 = vrot.lane.b32.xlu0 %v1563, 64
    %v1570 = vpop.permute.xlu0 %1569
    %v1572 = vmul.f32 %v1562, %v1570
    %1574 = vrot.lane.b32.xlu0 %v1572, 32
    %v1575 = vpop.permute.xlu0 %1574
    %v1577 = vadd.f32 %v1567, %v1575
    %v1578 = vtanh.pop %v1577
    %1580 = vrot.lane.b32.xlu0 %v1578, 64
    %v1581 = vpop.permute.xlu0 %1580
    %v1583 = vmul.f32 %v1562, %v1581
    %v1585 = vrot.slane %v1583, 2
    %1586 = vrot.lane.b32.xlu0 %v1585, 32
    %v1587 = vpop.permute.xlu0 %1586
    %v1588 = vsel %vm339, %v1587, 0
    %1590 = vmatprep.subr.mxu0 0.0
    %1591 = vmatpush1.msra.mxu0 %v1284
    %1592 = vmatprep.subr.mxu0 0.0
    %1593 = vmatpush1.msra.mxu0 %v1285
    %1594 = vmatprep.subr.mxu0 0.0
    %1595 = vmatpush1.msra.mxu0 %v1286
    %1596 = vmatprep.subr.mxu0 0.0
    %1597 = vmatpush1.msra.mxu0 %v1287
    %1598 = vmatprep.subr.mxu0 0.0
    %1599 = vmatpush1.msra.mxu0 0.0
    %1600 = vmatprep.subr.mxu0 0.0
    %1601 = vmatpush1.msra.mxu0 0.0
    %1602 = vmatprep.subr.mxu0 0.0
    %1603 = vmatpush1.msra.mxu0 0.0
    %1604 = vmatprep.subr.mxu0 0.0
    %1605 = vmatpush1.msra.mxu0 0.0
    %1606 = vmatprep.subr.mxu0 0.0
    %1607 = vmatpush1.msra.mxu0 0.0
    %1608 = vmatprep.subr.mxu0 0.0
    %1609 = vmatpush1.msra.mxu0 0.0
    %1610 = vmatprep.subr.mxu0 0.0
    %1611 = vmatpush1.msra.mxu0 0.0
    %1612 = vmatprep.subr.mxu0 0.0
    %1613 = vmatpush1.msra.mxu0 0.0
    %1614 = vmatprep.subr.mxu0 0.0
    %1615 = vmatpush1.msra.mxu0 0.0
    %1616 = vmatprep.subr.mxu0 0.0
    %1617 = vmatpush1.msra.mxu0 0.0
    %1618 = vmatprep.subr.mxu0 0.0
    %1619 = vmatpush1.msra.mxu0 0.0
    %1620 = vmatprep.subr.mxu0 0.0
    %1621 = vmatpush1.msra.mxu0 0.0
    %1622 = vmatprep.subr.mxu0 0.0
    %1623 = vmatpush1.msra.mxu0 0.0
    %1624 = vmatprep.subr.mxu0 0.0
    %1625 = vmatpush1.msra.mxu0 0.0
    %1626 = vmatprep.subr.mxu0 0.0
    %1627 = vmatpush1.msra.mxu0 0.0
    %1628 = vmatprep.subr.mxu0 0.0
    %1629 = vmatpush1.msra.mxu0 0.0
    %1630 = vmatprep.subr.mxu0 0.0
    %1631 = vmatpush1.msra.mxu0 0.0
    %1632 = vmatprep.subr.mxu0 0.0
    %1633 = vmatpush1.msra.mxu0 0.0
    %1634 = vmatprep.subr.mxu0 0.0
    %1635 = vmatpush1.msra.mxu0 0.0
    %1636 = vmatprep.subr.mxu0 0.0
    %1637 = vmatpush1.msra.mxu0 0.0
    %1638 = vmatprep.subr.mxu0 0.0
    %1639 = vmatpush1.msra.mxu0 0.0
    %1640 = vmatprep.subr.mxu0 0.0
    %1641 = vmatpush1.msra.mxu0 0.0
    %1642 = vmatprep.subr.mxu0 0.0
    %1643 = vmatpush1.msra.mxu0 0.0
    %1644 = vmatprep.subr.mxu0 0.0
    %1645 = vmatpush1.msra.mxu0 0.0
    %1646 = vmatprep.subr.mxu0 0.0
    %1647 = vmatpush1.msra.mxu0 0.0
    %1648 = vmatprep.subr.mxu0 0.0
    %1649 = vmatpush1.msra.mxu0 0.0
    %1650 = vmatprep.subr.mxu0 0.0
    %1651 = vmatpush1.msra.mxu0 0.0
    %1652 = vmatprep.subr.mxu0 0.0
    %1653 = vmatpush1.msra.mxu0 0.0
    %1654 = vmatprep.mubr.f32.mxu0 0.0
    %1655 = vmatmul.mubr.f32.gmra.mrb[0].mxu0 %v1588
    %v1656 = vpop.f32.mrb[0].mxu0
    %v1657 = vadd.f32 0.0, %v1656
    %v1658 = vpop.f32.mrb[0].mxu0
    %1659 = vdwg.mxu0
    %v1661 = vrot.slane %v1657, 4
    %v1663 = vadd.f32 %v1375, %v1661
    %v1664 = vxor.u32 %v1663, 2147483648
    %v1665 = vmul.f32 %v1664, 1.442695
    %v1666 = vpow.pop %v1665
    %v1667 = vadd.f32 %v1666, 1.0
    %v1668 = vrcp.pop %v1667
    %v1669 = vmul.f32 1.0, %v1668
    %v1670 = vtanh.pop %v1663
    %v1672 = vrot.slane %v1577, 6
    %v1674 = vmul.f32 %v1669, %v1672
    %1676 = vrot.lane.b32.xlu0 %v1670, 64
    %v1677 = vpop.permute.xlu0 %1676
    %v1679 = vmul.f32 %v1669, %v1677
    %1681 = vrot.lane.b32.xlu0 %v1679, 32
    %v1682 = vpop.permute.xlu0 %1681
    %v1684 = vadd.f32 %v1674, %v1682
    %v1685 = vtanh.pop %v1684
    %1687 = vrot.lane.b32.xlu0 %v1685, 64
    %v1688 = vpop.permute.xlu0 %1687
    %v1690 = vmul.f32 %v1669, %v1688
    %v1692 = vrot.slane %v1690, 4
    %1693 = vrot.lane.b32.xlu0 %v1692, 32
    %v1694 = vpop.permute.xlu0 %1693
    %v1695 = vsel %vm339, %v1694, 0
    %1697 = vmatprep.subr.mxu0 0.0
    %1698 = vmatpush1.msra.mxu0 %v1284
    %1699 = vmatprep.subr.mxu0 0.0
    %1700 = vmatpush1.msra.mxu0 %v1285
    %1701 = vmatprep.subr.mxu0 0.0
    %1702 = vmatpush1.msra.mxu0 %v1286
    %1703 = vmatprep.subr.mxu0 0.0
    %1704 = vmatpush1.msra.mxu0 %v1287
    %1705 = vmatprep.subr.mxu0 0.0
    %1706 = vmatpush1.msra.mxu0 0.0
    %1707 = vmatprep.subr.mxu0 0.0
    %1708 = vmatpush1.msra.mxu0 0.0
    %1709 = vmatprep.subr.mxu0 0.0
    %1710 = vmatpush1.msra.mxu0 0.0
    %1711 = vmatprep.subr.mxu0 0.0
    %1712 = vmatpush1.msra.mxu0 0.0
    %1713 = vmatprep.subr.mxu0 0.0
    %1714 = vmatpush1.msra.mxu0 0.0
    %1715 = vmatprep.subr.mxu0 0.0
    %1716 = vmatpush1.msra.mxu0 0.0
    %1717 = vmatprep.subr.mxu0 0.0
    %1718 = vmatpush1.msra.mxu0 0.0
    %1719 = vmatprep.subr.mxu0 0.0
    %1720 = vmatpush1.msra.mxu0 0.0
    %1721 = vmatprep.subr.mxu0 0.0
    %1722 = vmatpush1.msra.mxu0 0.0
    %1723 = vmatprep.subr.mxu0 0.0
    %1724 = vmatpush1.msra.mxu0 0.0
    %1725 = vmatprep.subr.mxu0 0.0
    %1726 = vmatpush1.msra.mxu0 0.0
    %1727 = vmatprep.subr.mxu0 0.0
    %1728 = vmatpush1.msra.mxu0 0.0
    %1729 = vmatprep.subr.mxu0 0.0
    %1730 = vmatpush1.msra.mxu0 0.0
    %1731 = vmatprep.subr.mxu0 0.0
    %1732 = vmatpush1.msra.mxu0 0.0
    %1733 = vmatprep.subr.mxu0 0.0
    %1734 = vmatpush1.msra.mxu0 0.0
    %1735 = vmatprep.subr.mxu0 0.0
    %1736 = vmatpush1.msra.mxu0 0.0
    %1737 = vmatprep.subr.mxu0 0.0
    %1738 = vmatpush1.msra.mxu0 0.0
    %1739 = vmatprep.subr.mxu0 0.0
    %1740 = vmatpush1.msra.mxu0 0.0
    %1741 = vmatprep.subr.mxu0 0.0
    %1742 = vmatpush1.msra.mxu0 0.0
    %1743 = vmatprep.subr.mxu0 0.0
    %1744 = vmatpush1.msra.mxu0 0.0
    %1745 = vmatprep.subr.mxu0 0.0
    %1746 = vmatpush1.msra.mxu0 0.0
    %1747 = vmatprep.subr.mxu0 0.0
    %1748 = vmatpush1.msra.mxu0 0.0
    %1749 = vmatprep.subr.mxu0 0.0
    %1750 = vmatpush1.msra.mxu0 0.0
    %1751 = vmatprep.subr.mxu0 0.0
    %1752 = vmatpush1.msra.mxu0 0.0
    %1753 = vmatprep.subr.mxu0 0.0
    %1754 = vmatpush1.msra.mxu0 0.0
    %1755 = vmatprep.subr.mxu0 0.0
    %1756 = vmatpush1.msra.mxu0 0.0
    %1757 = vmatprep.subr.mxu0 0.0
    %1758 = vmatpush1.msra.mxu0 0.0
    %1759 = vmatprep.subr.mxu0 0.0
    %1760 = vmatpush1.msra.mxu0 0.0
    %1761 = vmatprep.mubr.f32.mxu0 0.0
    %1762 = vmatmul.mubr.f32.gmra.mrb[0].mxu0 %v1695
    %v1763 = vpop.f32.mrb[0].mxu0
    %v1764 = vadd.f32 0.0, %v1763
    %v1765 = vpop.f32.mrb[0].mxu0
    %1766 = vdwg.mxu0
    %v1768 = vrot.slane %v1764, 2
    %v1770 = vadd.f32 %v1375, %v1768
    %v1771 = vxor.u32 %v1770, 2147483648
    %v1772 = vmul.f32 %v1771, 1.442695
    %v1773 = vpow.pop %v1772
    %v1774 = vadd.f32 %v1773, 1.0
    %v1775 = vrcp.pop %v1774
    %v1776 = vmul.f32 1.0, %v1775
    %v1777 = vtanh.pop %v1770
    %v1779 = vrot.slane %v1684, 6
    %v1781 = vmul.f32 %v1776, %v1779
    %1783 = vrot.lane.b32.xlu0 %v1777, 64
    %v1784 = vpop.permute.xlu0 %1783
    %v1786 = vmul.f32 %v1776, %v1784
    %1788 = vrot.lane.b32.xlu0 %v1786, 32
    %v1789 = vpop.permute.xlu0 %1788
    %v1791 = vadd.f32 %v1781, %v1789
    %v1792 = vtanh.pop %v1791
    %1794 = vrot.lane.b32.xlu0 %v1792, 64
    %v1795 = vpop.permute.xlu0 %1794
    %v1797 = vmul.f32 %v1776, %v1795
    %v1799 = vrot.slane %v1797, 6
    %1800 = vrot.lane.b32.xlu0 %v1799, 32
    %v1801 = vpop.permute.xlu0 %1800
    %v1802 = vsel %vm339, %v1801, 0
    %1804 = vmatprep.subr.mxu0 0.0
    %1805 = vmatpush1.msra.mxu0 %v1284
    %1806 = vmatprep.subr.mxu0 0.0
    %1807 = vmatpush1.msra.mxu0 %v1285
    %1808 = vmatprep.subr.mxu0 0.0
    %1809 = vmatpush1.msra.mxu0 %v1286
    %1810 = vmatprep.subr.mxu0 0.0
    %1811 = vmatpush1.msra.mxu0 %v1287
    %1812 = vmatprep.subr.mxu0 0.0
    %1813 = vmatpush1.msra.mxu0 0.0
    %1814 = vmatprep.subr.mxu0 0.0
    %1815 = vmatpush1.msra.mxu0 0.0
    %1816 = vmatprep.subr.mxu0 0.0
    %1817 = vmatpush1.msra.mxu0 0.0
    %1818 = vmatprep.subr.mxu0 0.0
    %1819 = vmatpush1.msra.mxu0 0.0
    %1820 = vmatprep.subr.mxu0 0.0
    %1821 = vmatpush1.msra.mxu0 0.0
    %1822 = vmatprep.subr.mxu0 0.0
    %1823 = vmatpush1.msra.mxu0 0.0
    %1824 = vmatprep.subr.mxu0 0.0
    %1825 = vmatpush1.msra.mxu0 0.0
    %1826 = vmatprep.subr.mxu0 0.0
    %1827 = vmatpush1.msra.mxu0 0.0
    %1828 = vmatprep.subr.mxu0 0.0
    %1829 = vmatpush1.msra.mxu0 0.0
    %1830 = vmatprep.subr.mxu0 0.0
    %1831 = vmatpush1.msra.mxu0 0.0
    %1832 = vmatprep.subr.mxu0 0.0
    %1833 = vmatpush1.msra.mxu0 0.0
    %1834 = vmatprep.subr.mxu0 0.0
    %1835 = vmatpush1.msra.mxu0 0.0
    %1836 = vmatprep.subr.mxu0 0.0
    %1837 = vmatpush1.msra.mxu0 0.0
    %1838 = vmatprep.subr.mxu0 0.0
    %1839 = vmatpush1.msra.mxu0 0.0
    %1840 = vmatprep.subr.mxu0 0.0
    %1841 = vmatpush1.msra.mxu0 0.0
    %1842 = vmatprep.subr.mxu0 0.0
    %1843 = vmatpush1.msra.mxu0 0.0
    %1844 = vmatprep.subr.mxu0 0.0
    %1845 = vmatpush1.msra.mxu0 0.0
    %1846 = vmatprep.subr.mxu0 0.0
    %1847 = vmatpush1.msra.mxu0 0.0
    %1848 = vmatprep.subr.mxu0 0.0
    %1849 = vmatpush1.msra.mxu0 0.0
    %1850 = vmatprep.subr.mxu0 0.0
    %1851 = vmatpush1.msra.mxu0 0.0
    %1852 = vmatprep.subr.mxu0 0.0
    %1853 = vmatpush1.msra.mxu0 0.0
    %1854 = vmatprep.subr.mxu0 0.0
    %1855 = vmatpush1.msra.mxu0 0.0
    %1856 = vmatprep.subr.mxu0 0.0
    %1857 = vmatpush1.msra.mxu0 0.0
    %1858 = vmatprep.subr.mxu0 0.0
    %1859 = vmatpush1.msra.mxu0 0.0
    %1860 = vmatprep.subr.mxu0 0.0
    %1861 = vmatpush1.msra.mxu0 0.0
    %1862 = vmatprep.subr.mxu0 0.0
    %1863 = vmatpush1.msra.mxu0 0.0
    %1864 = vmatprep.subr.mxu0 0.0
    %1865 = vmatpush1.msra.mxu0 0.0
    %1866 = vmatprep.subr.mxu0 0.0
    %1867 = vmatpush1.msra.mxu0 0.0
    %1868 = vmatprep.mubr.f32.mxu0 0.0
    %1869 = vmatmul.mubr.f32.gmra.mrb[0].mxu0 %v1802
    %v1870 = vpop.f32.mrb[0].mxu0
    %v1871 = vadd.f32 0.0, %v1870
    %v1872 = vpop.f32.mrb[0].mxu0
    %1873 = vdwg.mxu0
    %v1874 = vadd.f32 %v1380, %v1871
    %v1875 = vxor.u32 %v1874, 2147483648
    %v1876 = vmul.f32 %v1875, 1.442695
    %v1877 = vpow.pop %v1876
    %v1878 = vadd.f32 %v1877, 1.0
    %v1879 = vrcp.pop %v1878
    %v1880 = vmul.f32 1.0, %v1879
    %v1881 = vtanh.pop %v1874
    %v1883 = vrot.slane %v1791, 6
    %v1885 = vmul.f32 %v1880, %v1883
    %1887 = vrot.lane.b32.xlu0 %v1881, 64
    %v1888 = vpop.permute.xlu0 %1887
    %v1890 = vmul.f32 %v1880, %v1888
    %1892 = vrot.lane.b32.xlu0 %v1890, 32
    %v1893 = vpop.permute.xlu0 %1892
    %v1895 = vadd.f32 %v1885, %v1893
    %v1896 = vtanh.pop %v1895
    %1898 = vrot.lane.b32.xlu0 %v1896, 64
    %v1899 = vpop.permute.xlu0 %1898
    %v1901 = vmul.f32 %v1880, %v1899
    %1903 = vrot.lane.b32.xlu0 %v1901, 32
    %v1904 = vpop.permute.xlu0 %1903
    %v1905 = vsel %vm339, %v1904, 0
    %1907 = vmatprep.subr.mxu0 0.0
    %1908 = vmatpush1.msra.mxu0 %v1284
    %1909 = vmatprep.subr.mxu0 0.0
    %1910 = vmatpush1.msra.mxu0 %v1285
    %1911 = vmatprep.subr.mxu0 0.0
    %1912 = vmatpush1.msra.mxu0 %v1286
    %1913 = vmatprep.subr.mxu0 0.0
    %1914 = vmatpush1.msra.mxu0 %v1287
    %1915 = vmatprep.subr.mxu0 0.0
    %1916 = vmatpush1.msra.mxu0 0.0
    %1917 = vmatprep.subr.mxu0 0.0
    %1918 = vmatpush1.msra.mxu0 0.0
    %1919 = vmatprep.subr.mxu0 0.0
    %1920 = vmatpush1.msra.mxu0 0.0
    %1921 = vmatprep.subr.mxu0 0.0
    %1922 = vmatpush1.msra.mxu0 0.0
    %1923 = vmatprep.subr.mxu0 0.0
    %1924 = vmatpush1.msra.mxu0 0.0
    %1925 = vmatprep.subr.mxu0 0.0
    %1926 = vmatpush1.msra.mxu0 0.0
    %1927 = vmatprep.subr.mxu0 0.0
    %1928 = vmatpush1.msra.mxu0 0.0
    %1929 = vmatprep.subr.mxu0 0.0
    %1930 = vmatpush1.msra.mxu0 0.0
    %1931 = vmatprep.subr.mxu0 0.0
    %1932 = vmatpush1.msra.mxu0 0.0
    %1933 = vmatprep.subr.mxu0 0.0
    %1934 = vmatpush1.msra.mxu0 0.0
    %1935 = vmatprep.subr.mxu0 0.0
    %1936 = vmatpush1.msra.mxu0 0.0
    %1937 = vmatprep.subr.mxu0 0.0
    %1938 = vmatpush1.msra.mxu0 0.0
    %1939 = vmatprep.subr.mxu0 0.0
    %1940 = vmatpush1.msra.mxu0 0.0
    %1941 = vmatprep.subr.mxu0 0.0
    %1942 = vmatpush1.msra.mxu0 0.0
    %1943 = vmatprep.subr.mxu0 0.0
    %1944 = vmatpush1.msra.mxu0 0.0
    %1945 = vmatprep.subr.mxu0 0.0
    %1946 = vmatpush1.msra.mxu0 0.0
    %1947 = vmatprep.subr.mxu0 0.0
    %1948 = vmatpush1.msra.mxu0 0.0
    %1949 = vmatprep.subr.mxu0 0.0
    %1950 = vmatpush1.msra.mxu0 0.0
    %1951 = vmatprep.subr.mxu0 0.0
    %1952 = vmatpush1.msra.mxu0 0.0
    %1953 = vmatprep.subr.mxu0 0.0
    %1954 = vmatpush1.msra.mxu0 0.0
    %1955 = vmatprep.subr.mxu0 0.0
    %1956 = vmatpush1.msra.mxu0 0.0
    %1957 = vmatprep.subr.mxu0 0.0
    %1958 = vmatpush1.msra.mxu0 0.0
    %1959 = vmatprep.subr.mxu0 0.0
    %1960 = vmatpush1.msra.mxu0 0.0
    %1961 = vmatprep.subr.mxu0 0.0
    %1962 = vmatpush1.msra.mxu0 0.0
    %1963 = vmatprep.subr.mxu0 0.0
    %1964 = vmatpush1.msra.mxu0 0.0
    %1965 = vmatprep.subr.mxu0 0.0
    %1966 = vmatpush1.msra.mxu0 0.0
    %1967 = vmatprep.subr.mxu0 0.0
    %1968 = vmatpush1.msra.mxu0 0.0
    %1969 = vmatprep.subr.mxu0 0.0
    %1970 = vmatpush1.msra.mxu0 0.0
    %1971 = vmatprep.mubr.f32.mxu0 0.0
    %1972 = vmatmul.mubr.f32.gmra.mrb[0].mxu0 %v1905
    %v1973 = vpop.f32.mrb[0].mxu0
    %v1974 = vadd.f32 0.0, %v1973
    %v1975 = vpop.f32.mrb[0].mxu0
    %1976 = vdwg.mxu0
    %v1978 = vrot.slane %v1974, 6
    %v1980 = vadd.f32 %v1380, %v1978
    %v1981 = vxor.u32 %v1980, 2147483648
    %v1982 = vmul.f32 %v1981, 1.442695
    %v1983 = vpow.pop %v1982
    %v1984 = vadd.f32 %v1983, 1.0
    %v1985 = vrcp.pop %v1984
    %v1986 = vmul.f32 1.0, %v1985
    %v1987 = vtanh.pop %v1980
    %v1989 = vrot.slane %v1895, 6
    %v1991 = vmul.f32 %v1986, %v1989
    %1993 = vrot.lane.b32.xlu0 %v1987, 64
    %v1994 = vpop.permute.xlu0 %1993
    %v1996 = vmul.f32 %v1986, %v1994
    %1998 = vrot.lane.b32.xlu0 %v1996, 32
    %v1999 = vpop.permute.xlu0 %1998
    %v2001 = vadd.f32 %v1991, %v1999
    %v2002 = vtanh.pop %v2001
    %2004 = vrot.lane.b32.xlu0 %v2002, 64
    %v2005 = vpop.permute.xlu0 %2004
    %v2007 = vmul.f32 %v1986, %v2005
    %v2009 = vrot.slane %v2007, 2
    %2010 = vrot.lane.b32.xlu0 %v2009, 32
    %v2011 = vpop.permute.xlu0 %2010
    %v2012 = vsel %vm339, %v2011, 0
    %2014 = vmatprep.subr.mxu0 0.0
    %2015 = vmatpush1.msra.mxu0 %v1284
    %2016 = vmatprep.subr.mxu0 0.0
    %2017 = vmatpush1.msra.mxu0 %v1285
    %2018 = vmatprep.subr.mxu0 0.0
    %2019 = vmatpush1.msra.mxu0 %v1286
    %2020 = vmatprep.subr.mxu0 0.0
    %2021 = vmatpush1.msra.mxu0 %v1287
    %2022 = vmatprep.subr.mxu0 0.0
    %2023 = vmatpush1.msra.mxu0 0.0
    %2024 = vmatprep.subr.mxu0 0.0
    %2025 = vmatpush1.msra.mxu0 0.0
    %2026 = vmatprep.subr.mxu0 0.0
    %2027 = vmatpush1.msra.mxu0 0.0
    %2028 = vmatprep.subr.mxu0 0.0
    %2029 = vmatpush1.msra.mxu0 0.0
    %2030 = vmatprep.subr.mxu0 0.0
    %2031 = vmatpush1.msra.mxu0 0.0
    %2032 = vmatprep.subr.mxu0 0.0
    %2033 = vmatpush1.msra.mxu0 0.0
    %2034 = vmatprep.subr.mxu0 0.0
    %2035 = vmatpush1.msra.mxu0 0.0
    %2036 = vmatprep.subr.mxu0 0.0
    %2037 = vmatpush1.msra.mxu0 0.0
    %2038 = vmatprep.subr.mxu0 0.0
    %2039 = vmatpush1.msra.mxu0 0.0
    %2040 = vmatprep.subr.mxu0 0.0
    %2041 = vmatpush1.msra.mxu0 0.0
    %2042 = vmatprep.subr.mxu0 0.0
    %2043 = vmatpush1.msra.mxu0 0.0
    %2044 = vmatprep.subr.mxu0 0.0
    %2045 = vmatpush1.msra.mxu0 0.0
    %2046 = vmatprep.subr.mxu0 0.0
    %2047 = vmatpush1.msra.mxu0 0.0
    %2048 = vmatprep.subr.mxu0 0.0
    %2049 = vmatpush1.msra.mxu0 0.0
    %2050 = vmatprep.subr.mxu0 0.0
    %2051 = vmatpush1.msra.mxu0 0.0
    %2052 = vmatprep.subr.mxu0 0.0
    %2053 = vmatpush1.msra.mxu0 0.0
    %2054 = vmatprep.subr.mxu0 0.0
    %2055 = vmatpush1.msra.mxu0 0.0
    %2056 = vmatprep.subr.mxu0 0.0
    %2057 = vmatpush1.msra.mxu0 0.0
    %2058 = vmatprep.subr.mxu0 0.0
    %2059 = vmatpush1.msra.mxu0 0.0
    %2060 = vmatprep.subr.mxu0 0.0
    %2061 = vmatpush1.msra.mxu0 0.0
    %2062 = vmatprep.subr.mxu0 0.0
    %2063 = vmatpush1.msra.mxu0 0.0
    %2064 = vmatprep.subr.mxu0 0.0
    %2065 = vmatpush1.msra.mxu0 0.0
    %2066 = vmatprep.subr.mxu0 0.0
    %2067 = vmatpush1.msra.mxu0 0.0
    %2068 = vmatprep.subr.mxu0 0.0
    %2069 = vmatpush1.msra.mxu0 0.0
    %2070 = vmatprep.subr.mxu0 0.0
    %2071 = vmatpush1.msra.mxu0 0.0
    %2072 = vmatprep.subr.mxu0 0.0
    %2073 = vmatpush1.msra.mxu0 0.0
    %2074 = vmatprep.subr.mxu0 0.0
    %2075 = vmatpush1.msra.mxu0 0.0
    %2076 = vmatprep.subr.mxu0 0.0
    %2077 = vmatpush1.msra.mxu0 0.0
    %2078 = vmatprep.mubr.f32.mxu0 0.0
    %2079 = vmatmul.mubr.f32.gmra.mrb[0].mxu0 %v2012
    %v2080 = vpop.f32.mrb[0].mxu0
    %v2081 = vadd.f32 0.0, %v2080
    %v2082 = vpop.f32.mrb[0].mxu0
    %2083 = vdwg.mxu0
    %v2085 = vrot.slane %v2081, 4
    %v2087 = vadd.f32 %v1380, %v2085
    %v2088 = vxor.u32 %v2087, 2147483648
    %v2089 = vmul.f32 %v2088, 1.442695
    %v2090 = vpow.pop %v2089
    %v2091 = vadd.f32 %v2090, 1.0
    %v2092 = vrcp.pop %v2091
    %v2093 = vmul.f32 1.0, %v2092
    %v2094 = vtanh.pop %v2087
    %v2096 = vrot.slane %v2001, 6
    %v2098 = vmul.f32 %v2093, %v2096
    %2100 = vrot.lane.b32.xlu0 %v2094, 64
    %v2101 = vpop.permute.xlu0 %2100
    %v2103 = vmul.f32 %v2093, %v2101
    %2105 = vrot.lane.b32.xlu0 %v2103, 32
    %v2106 = vpop.permute.xlu0 %2105
    %v2108 = vadd.f32 %v2098, %v2106
    %v2109 = vtanh.pop %v2108
    %2111 = vrot.lane.b32.xlu0 %v2109, 64
    %v2112 = vpop.permute.xlu0 %2111
    %v2114 = vmul.f32 %v2093, %v2112
    %v2116 = vrot.slane %v2114, 4
    %2117 = vrot.lane.b32.xlu0 %v2116, 32
    %v2118 = vpop.permute.xlu0 %2117
    %v2119 = vsel %vm339, %v2118, 0
    %2121 = vmatprep.subr.mxu0 0.0
    %2122 = vmatpush1.msra.mxu0 %v1284
    %2123 = vmatprep.subr.mxu0 0.0
    %2124 = vmatpush1.msra.mxu0 %v1285
    %2125 = vmatprep.subr.mxu0 0.0
    %2126 = vmatpush1.msra.mxu0 %v1286
    %2127 = vmatprep.subr.mxu0 0.0
    %2128 = vmatpush1.msra.mxu0 %v1287
    %2129 = vmatprep.subr.mxu0 0.0
    %2130 = vmatpush1.msra.mxu0 0.0
    %2131 = vmatprep.subr.mxu0 0.0
    %2132 = vmatpush1.msra.mxu0 0.0
    %2133 = vmatprep.subr.mxu0 0.0
    %2134 = vmatpush1.msra.mxu0 0.0
    %2135 = vmatprep.subr.mxu0 0.0
    %2136 = vmatpush1.msra.mxu0 0.0
    %2137 = vmatprep.subr.mxu0 0.0
    %2138 = vmatpush1.msra.mxu0 0.0
    %2139 = vmatprep.subr.mxu0 0.0
    %2140 = vmatpush1.msra.mxu0 0.0
    %2141 = vmatprep.subr.mxu0 0.0
    %2142 = vmatpush1.msra.mxu0 0.0
    %2143 = vmatprep.subr.mxu0 0.0
    %2144 = vmatpush1.msra.mxu0 0.0
    %2145 = vmatprep.subr.mxu0 0.0
    %2146 = vmatpush1.msra.mxu0 0.0
    %2147 = vmatprep.subr.mxu0 0.0
    %2148 = vmatpush1.msra.mxu0 0.0
    %2149 = vmatprep.subr.mxu0 0.0
    %2150 = vmatpush1.msra.mxu0 0.0
    %2151 = vmatprep.subr.mxu0 0.0
    %2152 = vmatpush1.msra.mxu0 0.0
    %2153 = vmatprep.subr.mxu0 0.0
    %2154 = vmatpush1.msra.mxu0 0.0
    %2155 = vmatprep.subr.mxu0 0.0
    %2156 = vmatpush1.msra.mxu0 0.0
    %2157 = vmatprep.subr.mxu0 0.0
    %2158 = vmatpush1.msra.mxu0 0.0
    %2159 = vmatprep.subr.mxu0 0.0
    %2160 = vmatpush1.msra.mxu0 0.0
    %2161 = vmatprep.subr.mxu0 0.0
    %2162 = vmatpush1.msra.mxu0 0.0
    %2163 = vmatprep.subr.mxu0 0.0
    %2164 = vmatpush1.msra.mxu0 0.0
    %2165 = vmatprep.subr.mxu0 0.0
    %2166 = vmatpush1.msra.mxu0 0.0
    %2167 = vmatprep.subr.mxu0 0.0
    %2168 = vmatpush1.msra.mxu0 0.0
    %2169 = vmatprep.subr.mxu0 0.0
    %2170 = vmatpush1.msra.mxu0 0.0
    %2171 = vmatprep.subr.mxu0 0.0
    %2172 = vmatpush1.msra.mxu0 0.0
    %2173 = vmatprep.subr.mxu0 0.0
    %2174 = vmatpush1.msra.mxu0 0.0
    %2175 = vmatprep.subr.mxu0 0.0
    %2176 = vmatpush1.msra.mxu0 0.0
    %2177 = vmatprep.subr.mxu0 0.0
    %2178 = vmatpush1.msra.mxu0 0.0
    %2179 = vmatprep.subr.mxu0 0.0
    %2180 = vmatpush1.msra.mxu0 0.0
    %2181 = vmatprep.subr.mxu0 0.0
    %2182 = vmatpush1.msra.mxu0 0.0
    %2183 = vmatprep.subr.mxu0 0.0
    %2184 = vmatpush1.msra.mxu0 0.0
    %2185 = vmatprep.mubr.f32.mxu0 0.0
    %2186 = vmatmul.mubr.f32.gmra.mrb[0].mxu0 %v2119
    %v2187 = vpop.f32.mrb[0].mxu0
    %v2188 = vadd.f32 0.0, %v2187
    %v2189 = vpop.f32.mrb[0].mxu0
    %2190 = vdwg.mxu0
    %v2192 = vrot.slane %v2188, 2
    %v2194 = vadd.f32 %v1380, %v2192
    %v2195 = vxor.u32 %v2194, 2147483648
    %v2196 = vmul.f32 %v2195, 1.442695
    %v2197 = vpow.pop %v2196
    %v2198 = vadd.f32 %v2197, 1.0
    %v2199 = vrcp.pop %v2198
    %v2200 = vmul.f32 1.0, %v2199
    %v2201 = vtanh.pop %v2194
    %v2203 = vrot.slane %v2108, 6
    %v2205 = vmul.f32 %v2200, %v2203
    %2207 = vrot.lane.b32.xlu0 %v2201, 64
    %v2208 = vpop.permute.xlu0 %2207
    %v2210 = vmul.f32 %v2200, %v2208
    %2212 = vrot.lane.b32.xlu0 %v2210, 32
    %v2213 = vpop.permute.xlu0 %2212
    %v2215 = vadd.f32 %v2205, %v2213
    %v2216 = vtanh.pop %v2215
    %2218 = vrot.lane.b32.xlu0 %v2216, 64
    %v2219 = vpop.permute.xlu0 %2218
    %v2221 = vmul.f32 %v2200, %v2219
    %v2222 = vsel %vm1263, %v1477, %v1583
    %v2223 = vsel %vm1265, %v2222, %v1690
    %v2224 = vsel %vm1267, %v2223, %v1797
    %v2225 = vsel %vm1263, %v1901, %v2007
    %v2226 = vsel %vm1265, %v2225, %v2114
    %v2227 = vsel %vm1267, %v2226, %v2221
    %2229 = vrot.lane.b32.xlu0 %v2221, 32
    %v2230 = vpop.permute.xlu0 %2229
    %s2232 = scalar_lea.vmem [#allocation18], 2
    %2233 = vst.msk [vmem:[%s2232 - $0x6] sm:$0xc0] %vm1276, %v2230
    %2235 = vrot.lane.b32.xlu0 %v2215, 96
    %v2236 = vpop.permute.xlu0 %2235
    %s2238 = scalar_lea.vmem [#allocation20], 2
    %2239 = vst.msk [vmem:[%s2238 - $0x6] sm:$0xc0] %vm1276, %v2236
    %s2240 = scalar_lea.vmem [#allocation8], 64
    %v2241 = vld [vmem:[%s2240] sm:$0xff]
    %v2242 = vld [vmem:[%s2240 + $0x8] sm:$0xff]
    %v2243 = vld [vmem:[%s2240 + $0x10] sm:$0xff]
    %v2244 = vld [vmem:[%s2240 + $0x18] sm:$0xff]
    %s2245 = scalar_lea.vmem [#allocation5], 64
    %v2246 = vld [vmem:[%s2245] sm:$0xff]
    %v2247 = vld [vmem:[%s2245 + $0x8] sm:$0xff]
    %v2248 = vld [vmem:[%s2245 + $0x10] sm:$0xff]
    %v2249 = vld [vmem:[%s2245 + $0x18] sm:$0xff]
    %v2250 = vld [vmem:[#allocation10 + $0x2] sm:$0x1]
    %v2251 = vlaneseq
    %v2252 = vshrl.u32 %v2251, 7
    %v2253 = vsub.s32 0, %v2252
    %v2254 = vrot.slane %v2250, %v2253
    %2257 = vrot.lane.b32.xlu0 %v2224, 32
    %v2258 = vpop.permute.xlu0 %2257
    %2259 = vrot.lane.b32.xlu0 %v2227, 32
    %v2260 = vpop.permute.xlu0 %2259
    %v2261 = vsel %vm339, %v2258, 0
    %v2263 = vsel %vm339, %v2260, 0
    %2265 = vmatprep.subr.mxu0 0.0
    %2266 = vmatpush1.msra.mxu0 %v2246
    %2267 = vmatprep.subr.mxu0 0.0
    %2268 = vmatpush1.msra.mxu0 %v2247
    %2269 = vmatprep.subr.mxu0 0.0
    %2270 = vmatpush1.msra.mxu0 %v2248
    %2271 = vmatprep.subr.mxu0 0.0
    %2272 = vmatpush1.msra.mxu0 %v2249
    %2273 = vmatprep.subr.mxu0 0.0
    %2274 = vmatpush1.msra.mxu0 0.0
    %2275 = vmatprep.subr.mxu0 0.0
    %2276 = vmatpush1.msra.mxu0 0.0
    %2277 = vmatprep.subr.mxu0 0.0
    %2278 = vmatpush1.msra.mxu0 0.0
    %2279 = vmatprep.subr.mxu0 0.0
    %2280 = vmatpush1.msra.mxu0 0.0
    %2281 = vmatprep.subr.mxu0 0.0
    %2282 = vmatpush1.msra.mxu0 0.0
    %2283 = vmatprep.subr.mxu0 0.0
    %2284 = vmatpush1.msra.mxu0 0.0
    %2285 = vmatprep.subr.mxu0 0.0
    %2286 = vmatpush1.msra.mxu0 0.0
    %2287 = vmatprep.subr.mxu0 0.0
    %2288 = vmatpush1.msra.mxu0 0.0
    %2289 = vmatprep.subr.mxu0 0.0
    %2290 = vmatpush1.msra.mxu0 0.0
    %2291 = vmatprep.subr.mxu0 0.0
    %2292 = vmatpush1.msra.mxu0 0.0
    %2293 = vmatprep.subr.mxu0 0.0
    %2294 = vmatpush1.msra.mxu0 0.0
    %2295 = vmatprep.subr.mxu0 0.0
    %2296 = vmatpush1.msra.mxu0 0.0
    %2297 = vmatprep.subr.mxu0 0.0
    %2298 = vmatpush1.msra.mxu0 0.0
    %2299 = vmatprep.subr.mxu0 0.0
    %2300 = vmatpush1.msra.mxu0 0.0
    %2301 = vmatprep.subr.mxu0 0.0
    %2302 = vmatpush1.msra.mxu0 0.0
    %2303 = vmatprep.subr.mxu0 0.0
    %2304 = vmatpush1.msra.mxu0 0.0
    %2305 = vmatprep.subr.mxu0 0.0
    %2306 = vmatpush1.msra.mxu0 0.0
    %2307 = vmatprep.subr.mxu0 0.0
    %2308 = vmatpush1.msra.mxu0 0.0
    %2309 = vmatprep.subr.mxu0 0.0
    %2310 = vmatpush1.msra.mxu0 0.0
    %2311 = vmatprep.subr.mxu0 0.0
    %2312 = vmatpush1.msra.mxu0 0.0
    %2313 = vmatprep.subr.mxu0 0.0
    %2314 = vmatpush1.msra.mxu0 0.0
    %2315 = vmatprep.subr.mxu0 0.0
    %2316 = vmatpush1.msra.mxu0 0.0
    %2317 = vmatprep.subr.mxu0 0.0
    %2318 = vmatpush1.msra.mxu0 0.0
    %2319 = vmatprep.subr.mxu0 0.0
    %2320 = vmatpush1.msra.mxu0 0.0
    %2321 = vmatprep.subr.mxu0 0.0
    %2322 = vmatpush1.msra.mxu0 0.0
    %2323 = vmatprep.subr.mxu0 0.0
    %2324 = vmatpush1.msra.mxu0 0.0
    %2325 = vmatprep.subr.mxu0 0.0
    %2326 = vmatpush1.msra.mxu0 0.0
    %2327 = vmatprep.subr.mxu0 0.0
    %2328 = vmatpush1.msra.mxu0 0.0
    %2329 = vmatprep.mubr.f32.mxu0 0.0
    %2330 = vmatmul.mubr.f32.gmra.mrb[0].mxu0 %v2261
    %v2331 = vpop.f32.mrb[0].mxu0
    %v2332 = vadd.f32 %v2254, %v2331
    %v2333 = vpop.f32.mrb[0].mxu0
    %2334 = vmatprep.mubr.f32.mxu0 0.0
    %2335 = vmatmul.mubr.f32.gmra.mrb[0].mxu0 %v2263
    %v2336 = vpop.f32.mrb[0].mxu0
    %v2337 = vadd.f32 %v2254, %v2336
    %v2338 = vpop.f32.mrb[0].mxu0
    %2339 = vdwg.mxu0
    %2340 = vmatprep.subr.mxu0 0.0
    %2341 = vmatpush1.msra.mxu0 %v2241
    %2342 = vmatprep.subr.mxu0 0.0
    %2343 = vmatpush1.msra.mxu0 %v2242
    %2344 = vmatprep.subr.mxu0 0.0
    %2345 = vmatpush1.msra.mxu0 %v2243
    %2346 = vmatprep.subr.mxu0 0.0
    %2347 = vmatpush1.msra.mxu0 %v2244
    %2348 = vmatprep.subr.mxu0 0.0
    %2349 = vmatpush1.msra.mxu0 0.0
    %2350 = vmatprep.subr.mxu0 0.0
    %2351 = vmatpush1.msra.mxu0 0.0
    %2352 = vmatprep.subr.mxu0 0.0
    %2353 = vmatpush1.msra.mxu0 0.0
    %2354 = vmatprep.subr.mxu0 0.0
    %2355 = vmatpush1.msra.mxu0 0.0
    %2356 = vmatprep.subr.mxu0 0.0
    %2357 = vmatpush1.msra.mxu0 0.0
    %2358 = vmatprep.subr.mxu0 0.0
    %2359 = vmatpush1.msra.mxu0 0.0
    %2360 = vmatprep.subr.mxu0 0.0
    %2361 = vmatpush1.msra.mxu0 0.0
    %2362 = vmatprep.subr.mxu0 0.0
    %2363 = vmatpush1.msra.mxu0 0.0
    %2364 = vmatprep.subr.mxu0 0.0
    %2365 = vmatpush1.msra.mxu0 0.0
    %2366 = vmatprep.subr.mxu0 0.0
    %2367 = vmatpush1.msra.mxu0 0.0
    %2368 = vmatprep.subr.mxu0 0.0
    %2369 = vmatpush1.msra.mxu0 0.0
    %2370 = vmatprep.subr.mxu0 0.0
    %2371 = vmatpush1.msra.mxu0 0.0
    %2372 = vmatprep.subr.mxu0 0.0
    %2373 = vmatpush1.msra.mxu0 0.0
    %2374 = vmatprep.subr.mxu0 0.0
    %2375 = vmatpush1.msra.mxu0 0.0
    %2376 = vmatprep.subr.mxu0 0.0
    %2377 = vmatpush1.msra.mxu0 0.0
    %2378 = vmatprep.subr.mxu0 0.0
    %2379 = vmatpush1.msra.mxu0 0.0
    %2380 = vmatprep.subr.mxu0 0.0
    %2381 = vmatpush1.msra.mxu0 0.0
    %2382 = vmatprep.subr.mxu0 0.0
    %2383 = vmatpush1.msra.mxu0 0.0
    %2384 = vmatprep.subr.mxu0 0.0
    %2385 = vmatpush1.msra.mxu0 0.0
    %2386 = vmatprep.subr.mxu0 0.0
    %2387 = vmatpush1.msra.mxu0 0.0
    %2388 = vmatprep.subr.mxu0 0.0
    %2389 = vmatpush1.msra.mxu0 0.0
    %2390 = vmatprep.subr.mxu0 0.0
    %2391 = vmatpush1.msra.mxu0 0.0
    %2392 = vmatprep.subr.mxu0 0.0
    %2393 = vmatpush1.msra.mxu0 0.0
    %2394 = vmatprep.subr.mxu0 0.0
    %2395 = vmatpush1.msra.mxu0 0.0
    %2396 = vmatprep.subr.mxu0 0.0
    %2397 = vmatpush1.msra.mxu0 0.0
    %2398 = vmatprep.subr.mxu0 0.0
    %2399 = vmatpush1.msra.mxu0 0.0
    %2400 = vmatprep.subr.mxu0 0.0
    %2401 = vmatpush1.msra.mxu0 0.0
    %2402 = vmatprep.subr.mxu0 0.0
    %2403 = vmatpush1.msra.mxu0 0.0
    %2404 = vmatprep.mubr.f32.mxu0 0.0
    %2405 = vmatmul.mubr.f32.gmra.mrb[0].mxu0 %v422
    %v2406 = vpop.f32.mrb[0].mxu0
    %v2407 = vadd.f32 0.0, %v2406
    %v2408 = vpop.f32.mrb[0].mxu0
    %2409 = vdwg.mxu0
    %v2410 = vadd.f32 %v2332, %v2407
    %v2411 = vxor.u32 %v2410, 2147483648
    %v2412 = vmul.f32 %v2411, 1.442695
    %v2413 = vpow.pop %v2412
    %v2414 = vadd.f32 %v2413, 1.0
    %v2415 = vrcp.pop %v2414
    %v2416 = vmul.f32 1.0, %v2415
    %v2417 = vtanh.pop %v2410
    %v2418 = vmul.f32 %v2416, 0.0
    %2420 = vrot.lane.b32.xlu0 %v2417, 64
    %v2421 = vpop.permute.xlu0 %2420
    %v2423 = vmul.f32 %v2416, %v2421
    %2425 = vrot.lane.b32.xlu0 %v2423, 32
    %v2426 = vpop.permute.xlu0 %2425
    %v2428 = vadd.f32 %v2418, %v2426
    %v2429 = vtanh.pop %v2428
    %2431 = vrot.lane.b32.xlu0 %v2429, 64
    %v2432 = vpop.permute.xlu0 %2431
    %v2434 = vmul.f32 %v2416, %v2432
    %2436 = vrot.lane.b32.xlu0 %v2434, 32
    %v2437 = vpop.permute.xlu0 %2436
    %v2438 = vsel %vm339, %v2437, 0
    %2440 = vmatprep.subr.mxu0 0.0
    %2441 = vmatpush1.msra.mxu0 %v2241
    %2442 = vmatprep.subr.mxu0 0.0
    %2443 = vmatpush1.msra.mxu0 %v2242
    %2444 = vmatprep.subr.mxu0 0.0
    %2445 = vmatpush1.msra.mxu0 %v2243
    %2446 = vmatprep.subr.mxu0 0.0
    %2447 = vmatpush1.msra.mxu0 %v2244
    %2448 = vmatprep.subr.mxu0 0.0
    %2449 = vmatpush1.msra.mxu0 0.0
    %2450 = vmatprep.subr.mxu0 0.0
    %2451 = vmatpush1.msra.mxu0 0.0
    %2452 = vmatprep.subr.mxu0 0.0
    %2453 = vmatpush1.msra.mxu0 0.0
    %2454 = vmatprep.subr.mxu0 0.0
    %2455 = vmatpush1.msra.mxu0 0.0
    %2456 = vmatprep.subr.mxu0 0.0
    %2457 = vmatpush1.msra.mxu0 0.0
    %2458 = vmatprep.subr.mxu0 0.0
    %2459 = vmatpush1.msra.mxu0 0.0
    %2460 = vmatprep.subr.mxu0 0.0
    %2461 = vmatpush1.msra.mxu0 0.0
    %2462 = vmatprep.subr.mxu0 0.0
    %2463 = vmatpush1.msra.mxu0 0.0
    %2464 = vmatprep.subr.mxu0 0.0
    %2465 = vmatpush1.msra.mxu0 0.0
    %2466 = vmatprep.subr.mxu0 0.0
    %2467 = vmatpush1.msra.mxu0 0.0
    %2468 = vmatprep.subr.mxu0 0.0
    %2469 = vmatpush1.msra.mxu0 0.0
    %2470 = vmatprep.subr.mxu0 0.0
    %2471 = vmatpush1.msra.mxu0 0.0
    %2472 = vmatprep.subr.mxu0 0.0
    %2473 = vmatpush1.msra.mxu0 0.0
    %2474 = vmatprep.subr.mxu0 0.0
    %2475 = vmatpush1.msra.mxu0 0.0
    %2476 = vmatprep.subr.mxu0 0.0
    %2477 = vmatpush1.msra.mxu0 0.0
    %2478 = vmatprep.subr.mxu0 0.0
    %2479 = vmatpush1.msra.mxu0 0.0
    %2480 = vmatprep.subr.mxu0 0.0
    %2481 = vmatpush1.msra.mxu0 0.0
    %2482 = vmatprep.subr.mxu0 0.0
    %2483 = vmatpush1.msra.mxu0 0.0
    %2484 = vmatprep.subr.mxu0 0.0
    %2485 = vmatpush1.msra.mxu0 0.0
    %2486 = vmatprep.subr.mxu0 0.0
    %2487 = vmatpush1.msra.mxu0 0.0
    %2488 = vmatprep.subr.mxu0 0.0
    %2489 = vmatpush1.msra.mxu0 0.0
    %2490 = vmatprep.subr.mxu0 0.0
    %2491 = vmatpush1.msra.mxu0 0.0
    %2492 = vmatprep.subr.mxu0 0.0
    %2493 = vmatpush1.msra.mxu0 0.0
    %2494 = vmatprep.subr.mxu0 0.0
    %2495 = vmatpush1.msra.mxu0 0.0
    %2496 = vmatprep.subr.mxu0 0.0
    %2497 = vmatpush1.msra.mxu0 0.0
    %2498 = vmatprep.subr.mxu0 0.0
    %2499 = vmatpush1.msra.mxu0 0.0
    %2500 = vmatprep.subr.mxu0 0.0
    %2501 = vmatpush1.msra.mxu0 0.0
    %2502 = vmatprep.subr.mxu0 0.0
    %2503 = vmatpush1.msra.mxu0 0.0
    %2504 = vmatprep.mubr.f32.mxu0 0.0
    %2505 = vmatmul.mubr.f32.gmra.mrb[0].mxu0 %v2438
    %v2506 = vpop.f32.mrb[0].mxu0
    %v2507 = vadd.f32 0.0, %v2506
    %v2508 = vpop.f32.mrb[0].mxu0
    %2509 = vdwg.mxu0
    %v2511 = vrot.slane %v2507, 6
    %v2513 = vadd.f32 %v2332, %v2511
    %v2514 = vxor.u32 %v2513, 2147483648
    %v2515 = vmul.f32 %v2514, 1.442695
    %v2516 = vpow.pop %v2515
    %v2517 = vadd.f32 %v2516, 1.0
    %v2518 = vrcp.pop %v2517
    %v2519 = vmul.f32 1.0, %v2518
    %v2520 = vtanh.pop %v2513
    %v2522 = vrot.slane %v2428, 6
    %v2524 = vmul.f32 %v2519, %v2522
    %2526 = vrot.lane.b32.xlu0 %v2520, 64
    %v2527 = vpop.permute.xlu0 %2526
    %v2529 = vmul.f32 %v2519, %v2527
    %2531 = vrot.lane.b32.xlu0 %v2529, 32
    %v2532 = vpop.permute.xlu0 %2531
    %v2534 = vadd.f32 %v2524, %v2532
    %v2535 = vtanh.pop %v2534
    %2537 = vrot.lane.b32.xlu0 %v2535, 64
    %v2538 = vpop.permute.xlu0 %2537
    %v2540 = vmul.f32 %v2519, %v2538
    %v2542 = vrot.slane %v2540, 2
    %2543 = vrot.lane.b32.xlu0 %v2542, 32
    %v2544 = vpop.permute.xlu0 %2543
    %v2545 = vsel %vm339, %v2544, 0
    %2547 = vmatprep.subr.mxu0 0.0
    %2548 = vmatpush1.msra.mxu0 %v2241
    %2549 = vmatprep.subr.mxu0 0.0
    %2550 = vmatpush1.msra.mxu0 %v2242
    %2551 = vmatprep.subr.mxu0 0.0
    %2552 = vmatpush1.msra.mxu0 %v2243
    %2553 = vmatprep.subr.mxu0 0.0
    %2554 = vmatpush1.msra.mxu0 %v2244
    %2555 = vmatprep.subr.mxu0 0.0
    %2556 = vmatpush1.msra.mxu0 0.0
    %2557 = vmatprep.subr.mxu0 0.0
    %2558 = vmatpush1.msra.mxu0 0.0
    %2559 = vmatprep.subr.mxu0 0.0
    %2560 = vmatpush1.msra.mxu0 0.0
    %2561 = vmatprep.subr.mxu0 0.0
    %2562 = vmatpush1.msra.mxu0 0.0
    %2563 = vmatprep.subr.mxu0 0.0
    %2564 = vmatpush1.msra.mxu0 0.0
    %2565 = vmatprep.subr.mxu0 0.0
    %2566 = vmatpush1.msra.mxu0 0.0
    %2567 = vmatprep.subr.mxu0 0.0
    %2568 = vmatpush1.msra.mxu0 0.0
    %2569 = vmatprep.subr.mxu0 0.0
    %2570 = vmatpush1.msra.mxu0 0.0
    %2571 = vmatprep.subr.mxu0 0.0
    %2572 = vmatpush1.msra.mxu0 0.0
    %2573 = vmatprep.subr.mxu0 0.0
    %2574 = vmatpush1.msra.mxu0 0.0
    %2575 = vmatprep.subr.mxu0 0.0
    %2576 = vmatpush1.msra.mxu0 0.0
    %2577 = vmatprep.subr.mxu0 0.0
    %2578 = vmatpush1.msra.mxu0 0.0
    %2579 = vmatprep.subr.mxu0 0.0
    %2580 = vmatpush1.msra.mxu0 0.0
    %2581 = vmatprep.subr.mxu0 0.0
    %2582 = vmatpush1.msra.mxu0 0.0
    %2583 = vmatprep.subr.mxu0 0.0
    %2584 = vmatpush1.msra.mxu0 0.0
    %2585 = vmatprep.subr.mxu0 0.0
    %2586 = vmatpush1.msra.mxu0 0.0
    %2587 = vmatprep.subr.mxu0 0.0
    %2588 = vmatpush1.msra.mxu0 0.0
    %2589 = vmatprep.subr.mxu0 0.0
    %2590 = vmatpush1.msra.mxu0 0.0
    %2591 = vmatprep.subr.mxu0 0.0
    %2592 = vmatpush1.msra.mxu0 0.0
    %2593 = vmatprep.subr.mxu0 0.0
    %2594 = vmatpush1.msra.mxu0 0.0
    %2595 = vmatprep.subr.mxu0 0.0
    %2596 = vmatpush1.msra.mxu0 0.0
    %2597 = vmatprep.subr.mxu0 0.0
    %2598 = vmatpush1.msra.mxu0 0.0
    %2599 = vmatprep.subr.mxu0 0.0
    %2600 = vmatpush1.msra.mxu0 0.0
    %2601 = vmatprep.subr.mxu0 0.0
    %2602 = vmatpush1.msra.mxu0 0.0
    %2603 = vmatprep.subr.mxu0 0.0
    %2604 = vmatpush1.msra.mxu0 0.0
    %2605 = vmatprep.subr.mxu0 0.0
    %2606 = vmatpush1.msra.mxu0 0.0
    %2607 = vmatprep.subr.mxu0 0.0
    %2608 = vmatpush1.msra.mxu0 0.0
    %2609 = vmatprep.subr.mxu0 0.0
    %2610 = vmatpush1.msra.mxu0 0.0
    %2611 = vmatprep.mubr.f32.mxu0 0.0
    %2612 = vmatmul.mubr.f32.gmra.mrb[0].mxu0 %v2545
    %v2613 = vpop.f32.mrb[0].mxu0
    %v2614 = vadd.f32 0.0, %v2613
    %v2615 = vpop.f32.mrb[0].mxu0
    %2616 = vdwg.mxu0
    %v2618 = vrot.slane %v2614, 4
    %v2620 = vadd.f32 %v2332, %v2618
    %v2621 = vxor.u32 %v2620, 2147483648
    %v2622 = vmul.f32 %v2621, 1.442695
    %v2623 = vpow.pop %v2622
    %v2624 = vadd.f32 %v2623, 1.0
    %v2625 = vrcp.pop %v2624
    %v2626 = vmul.f32 1.0, %v2625
    %v2627 = vtanh.pop %v2620
    %v2629 = vrot.slane %v2534, 6
    %v2631 = vmul.f32 %v2626, %v2629
    %2633 = vrot.lane.b32.xlu0 %v2627, 64
    %v2634 = vpop.permute.xlu0 %2633
    %v2636 = vmul.f32 %v2626, %v2634
    %2638 = vrot.lane.b32.xlu0 %v2636, 32
    %v2639 = vpop.permute.xlu0 %2638
    %v2641 = vadd.f32 %v2631, %v2639
    %v2642 = vtanh.pop %v2641
    %2644 = vrot.lane.b32.xlu0 %v2642, 64
    %v2645 = vpop.permute.xlu0 %2644
    %v2647 = vmul.f32 %v2626, %v2645
    %v2649 = vrot.slane %v2647, 4
    %2650 = vrot.lane.b32.xlu0 %v2649, 32
    %v2651 = vpop.permute.xlu0 %2650
    %v2652 = vsel %vm339, %v2651, 0
    %2654 = vmatprep.subr.mxu0 0.0
    %2655 = vmatpush1.msra.mxu0 %v2241
    %2656 = vmatprep.subr.mxu0 0.0
    %2657 = vmatpush1.msra.mxu0 %v2242
    %2658 = vmatprep.subr.mxu0 0.0
    %2659 = vmatpush1.msra.mxu0 %v2243
    %2660 = vmatprep.subr.mxu0 0.0
    %2661 = vmatpush1.msra.mxu0 %v2244
    %2662 = vmatprep.subr.mxu0 0.0
    %2663 = vmatpush1.msra.mxu0 0.0
    %2664 = vmatprep.subr.mxu0 0.0
    %2665 = vmatpush1.msra.mxu0 0.0
    %2666 = vmatprep.subr.mxu0 0.0
    %2667 = vmatpush1.msra.mxu0 0.0
    %2668 = vmatprep.subr.mxu0 0.0
    %2669 = vmatpush1.msra.mxu0 0.0
    %2670 = vmatprep.subr.mxu0 0.0
    %2671 = vmatpush1.msra.mxu0 0.0
    %2672 = vmatprep.subr.mxu0 0.0
    %2673 = vmatpush1.msra.mxu0 0.0
    %2674 = vmatprep.subr.mxu0 0.0
    %2675 = vmatpush1.msra.mxu0 0.0
    %2676 = vmatprep.subr.mxu0 0.0
    %2677 = vmatpush1.msra.mxu0 0.0
    %2678 = vmatprep.subr.mxu0 0.0
    %2679 = vmatpush1.msra.mxu0 0.0
    %2680 = vmatprep.subr.mxu0 0.0
    %2681 = vmatpush1.msra.mxu0 0.0
    %2682 = vmatprep.subr.mxu0 0.0
    %2683 = vmatpush1.msra.mxu0 0.0
    %2684 = vmatprep.subr.mxu0 0.0
    %2685 = vmatpush1.msra.mxu0 0.0
    %2686 = vmatprep.subr.mxu0 0.0
    %2687 = vmatpush1.msra.mxu0 0.0
    %2688 = vmatprep.subr.mxu0 0.0
    %2689 = vmatpush1.msra.mxu0 0.0
    %2690 = vmatprep.subr.mxu0 0.0
    %2691 = vmatpush1.msra.mxu0 0.0
    %2692 = vmatprep.subr.mxu0 0.0
    %2693 = vmatpush1.msra.mxu0 0.0
    %2694 = vmatprep.subr.mxu0 0.0
    %2695 = vmatpush1.msra.mxu0 0.0
    %2696 = vmatprep.subr.mxu0 0.0
    %2697 = vmatpush1.msra.mxu0 0.0
    %2698 = vmatprep.subr.mxu0 0.0
    %2699 = vmatpush1.msra.mxu0 0.0
    %2700 = vmatprep.subr.mxu0 0.0
    %2701 = vmatpush1.msra.mxu0 0.0
    %2702 = vmatprep.subr.mxu0 0.0
    %2703 = vmatpush1.msra.mxu0 0.0
    %2704 = vmatprep.subr.mxu0 0.0
    %2705 = vmatpush1.msra.mxu0 0.0
    %2706 = vmatprep.subr.mxu0 0.0
    %2707 = vmatpush1.msra.mxu0 0.0
    %2708 = vmatprep.subr.mxu0 0.0
    %2709 = vmatpush1.msra.mxu0 0.0
    %2710 = vmatprep.subr.mxu0 0.0
    %2711 = vmatpush1.msra.mxu0 0.0
    %2712 = vmatprep.subr.mxu0 0.0
    %2713 = vmatpush1.msra.mxu0 0.0
    %2714 = vmatprep.subr.mxu0 0.0
    %2715 = vmatpush1.msra.mxu0 0.0
    %2716 = vmatprep.subr.mxu0 0.0
    %2717 = vmatpush1.msra.mxu0 0.0
    %2718 = vmatprep.mubr.f32.mxu0 0.0
    %2719 = vmatmul.mubr.f32.gmra.mrb[0].mxu0 %v2652
    %v2720 = vpop.f32.mrb[0].mxu0
    %v2721 = vadd.f32 0.0, %v2720
    %v2722 = vpop.f32.mrb[0].mxu0
    %2723 = vdwg.mxu0
    %v2725 = vrot.slane %v2721, 2
    %v2727 = vadd.f32 %v2332, %v2725
    %v2728 = vxor.u32 %v2727, 2147483648
    %v2729 = vmul.f32 %v2728, 1.442695
    %v2730 = vpow.pop %v2729
    %v2731 = vadd.f32 %v2730, 1.0
    %v2732 = vrcp.pop %v2731
    %v2733 = vmul.f32 1.0, %v2732
    %v2734 = vtanh.pop %v2727
    %v2736 = vrot.slane %v2641, 6
    %v2738 = vmul.f32 %v2733, %v2736
    %2740 = vrot.lane.b32.xlu0 %v2734, 64
    %v2741 = vpop.permute.xlu0 %2740
    %v2743 = vmul.f32 %v2733, %v2741
    %2745 = vrot.lane.b32.xlu0 %v2743, 32
    %v2746 = vpop.permute.xlu0 %2745
    %v2748 = vadd.f32 %v2738, %v2746
    %v2749 = vtanh.pop %v2748
    %2751 = vrot.lane.b32.xlu0 %v2749, 64
    %v2752 = vpop.permute.xlu0 %2751
    %v2754 = vmul.f32 %v2733, %v2752
    %v2756 = vrot.slane %v2754, 6
    %2757 = vrot.lane.b32.xlu0 %v2756, 32
    %v2758 = vpop.permute.xlu0 %2757
    %v2759 = vsel %vm339, %v2758, 0
    %2761 = vmatprep.subr.mxu0 0.0
    %2762 = vmatpush1.msra.mxu0 %v2241
    %2763 = vmatprep.subr.mxu0 0.0
    %2764 = vmatpush1.msra.mxu0 %v2242
    %2765 = vmatprep.subr.mxu0 0.0
    %2766 = vmatpush1.msra.mxu0 %v2243
    %2767 = vmatprep.subr.mxu0 0.0
    %2768 = vmatpush1.msra.mxu0 %v2244
    %2769 = vmatprep.subr.mxu0 0.0
    %2770 = vmatpush1.msra.mxu0 0.0
    %2771 = vmatprep.subr.mxu0 0.0
    %2772 = vmatpush1.msra.mxu0 0.0
    %2773 = vmatprep.subr.mxu0 0.0
    %2774 = vmatpush1.msra.mxu0 0.0
    %2775 = vmatprep.subr.mxu0 0.0
    %2776 = vmatpush1.msra.mxu0 0.0
    %2777 = vmatprep.subr.mxu0 0.0
    %2778 = vmatpush1.msra.mxu0 0.0
    %2779 = vmatprep.subr.mxu0 0.0
    %2780 = vmatpush1.msra.mxu0 0.0
    %2781 = vmatprep.subr.mxu0 0.0
    %2782 = vmatpush1.msra.mxu0 0.0
    %2783 = vmatprep.subr.mxu0 0.0
    %2784 = vmatpush1.msra.mxu0 0.0
    %2785 = vmatprep.subr.mxu0 0.0
    %2786 = vmatpush1.msra.mxu0 0.0
    %2787 = vmatprep.subr.mxu0 0.0
    %2788 = vmatpush1.msra.mxu0 0.0
    %2789 = vmatprep.subr.mxu0 0.0
    %2790 = vmatpush1.msra.mxu0 0.0
    %2791 = vmatprep.subr.mxu0 0.0
    %2792 = vmatpush1.msra.mxu0 0.0
    %2793 = vmatprep.subr.mxu0 0.0
    %2794 = vmatpush1.msra.mxu0 0.0
    %2795 = vmatprep.subr.mxu0 0.0
    %2796 = vmatpush1.msra.mxu0 0.0
    %2797 = vmatprep.subr.mxu0 0.0
    %2798 = vmatpush1.msra.mxu0 0.0
    %2799 = vmatprep.subr.mxu0 0.0
    %2800 = vmatpush1.msra.mxu0 0.0
    %2801 = vmatprep.subr.mxu0 0.0
    %2802 = vmatpush1.msra.mxu0 0.0
    %2803 = vmatprep.subr.mxu0 0.0
    %2804 = vmatpush1.msra.mxu0 0.0
    %2805 = vmatprep.subr.mxu0 0.0
    %2806 = vmatpush1.msra.mxu0 0.0
    %2807 = vmatprep.subr.mxu0 0.0
    %2808 = vmatpush1.msra.mxu0 0.0
    %2809 = vmatprep.subr.mxu0 0.0
    %2810 = vmatpush1.msra.mxu0 0.0
    %2811 = vmatprep.subr.mxu0 0.0
    %2812 = vmatpush1.msra.mxu0 0.0
    %2813 = vmatprep.subr.mxu0 0.0
    %2814 = vmatpush1.msra.mxu0 0.0
    %2815 = vmatprep.subr.mxu0 0.0
    %2816 = vmatpush1.msra.mxu0 0.0
    %2817 = vmatprep.subr.mxu0 0.0
    %2818 = vmatpush1.msra.mxu0 0.0
    %2819 = vmatprep.subr.mxu0 0.0
    %2820 = vmatpush1.msra.mxu0 0.0
    %2821 = vmatprep.subr.mxu0 0.0
    %2822 = vmatpush1.msra.mxu0 0.0
    %2823 = vmatprep.subr.mxu0 0.0
    %2824 = vmatpush1.msra.mxu0 0.0
    %2825 = vmatprep.mubr.f32.mxu0 0.0
    %2826 = vmatmul.mubr.f32.gmra.mrb[0].mxu0 %v2759
    %v2827 = vpop.f32.mrb[0].mxu0
    %v2828 = vadd.f32 0.0, %v2827
    %v2829 = vpop.f32.mrb[0].mxu0
    %2830 = vdwg.mxu0
    %v2831 = vadd.f32 %v2337, %v2828
    %v2832 = vxor.u32 %v2831, 2147483648
    %v2833 = vmul.f32 %v2832, 1.442695
    %v2834 = vpow.pop %v2833
    %v2835 = vadd.f32 %v2834, 1.0
    %v2836 = vrcp.pop %v2835
    %v2837 = vmul.f32 1.0, %v2836
    %v2838 = vtanh.pop %v2831
    %v2840 = vrot.slane %v2748, 6
    %v2842 = vmul.f32 %v2837, %v2840
    %2844 = vrot.lane.b32.xlu0 %v2838, 64
    %v2845 = vpop.permute.xlu0 %2844
    %v2847 = vmul.f32 %v2837, %v2845
    %2849 = vrot.lane.b32.xlu0 %v2847, 32
    %v2850 = vpop.permute.xlu0 %2849
    %v2852 = vadd.f32 %v2842, %v2850
    %v2853 = vtanh.pop %v2852
    %2855 = vrot.lane.b32.xlu0 %v2853, 64
    %v2856 = vpop.permute.xlu0 %2855
    %v2858 = vmul.f32 %v2837, %v2856
    %2860 = vrot.lane.b32.xlu0 %v2858, 32
    %v2861 = vpop.permute.xlu0 %2860
    %v2862 = vsel %vm339, %v2861, 0
    %2864 = vmatprep.subr.mxu0 0.0
    %2865 = vmatpush1.msra.mxu0 %v2241
    %2866 = vmatprep.subr.mxu0 0.0
    %2867 = vmatpush1.msra.mxu0 %v2242
    %2868 = vmatprep.subr.mxu0 0.0
    %2869 = vmatpush1.msra.mxu0 %v2243
    %2870 = vmatprep.subr.mxu0 0.0
    %2871 = vmatpush1.msra.mxu0 %v2244
    %2872 = vmatprep.subr.mxu0 0.0
    %2873 = vmatpush1.msra.mxu0 0.0
    %2874 = vmatprep.subr.mxu0 0.0
    %2875 = vmatpush1.msra.mxu0 0.0
    %2876 = vmatprep.subr.mxu0 0.0
    %2877 = vmatpush1.msra.mxu0 0.0
    %2878 = vmatprep.subr.mxu0 0.0
    %2879 = vmatpush1.msra.mxu0 0.0
    %2880 = vmatprep.subr.mxu0 0.0
    %2881 = vmatpush1.msra.mxu0 0.0
    %2882 = vmatprep.subr.mxu0 0.0
    %2883 = vmatpush1.msra.mxu0 0.0
    %2884 = vmatprep.subr.mxu0 0.0
    %2885 = vmatpush1.msra.mxu0 0.0
    %2886 = vmatprep.subr.mxu0 0.0
    %2887 = vmatpush1.msra.mxu0 0.0
    %2888 = vmatprep.subr.mxu0 0.0
    %2889 = vmatpush1.msra.mxu0 0.0
    %2890 = vmatprep.subr.mxu0 0.0
    %2891 = vmatpush1.msra.mxu0 0.0
    %2892 = vmatprep.subr.mxu0 0.0
    %2893 = vmatpush1.msra.mxu0 0.0
    %2894 = vmatprep.subr.mxu0 0.0
    %2895 = vmatpush1.msra.mxu0 0.0
    %2896 = vmatprep.subr.mxu0 0.0
    %2897 = vmatpush1.msra.mxu0 0.0
    %2898 = vmatprep.subr.mxu0 0.0
    %2899 = vmatpush1.msra.mxu0 0.0
    %2900 = vmatprep.subr.mxu0 0.0
    %2901 = vmatpush1.msra.mxu0 0.0
    %2902 = vmatprep.subr.mxu0 0.0
    %2903 = vmatpush1.msra.mxu0 0.0
    %2904 = vmatprep.subr.mxu0 0.0
    %2905 = vmatpush1.msra.mxu0 0.0
    %2906 = vmatprep.subr.mxu0 0.0
    %2907 = vmatpush1.msra.mxu0 0.0
    %2908 = vmatprep.subr.mxu0 0.0
    %2909 = vmatpush1.msra.mxu0 0.0
    %2910 = vmatprep.subr.mxu0 0.0
    %2911 = vmatpush1.msra.mxu0 0.0
    %2912 = vmatprep.subr.mxu0 0.0
    %2913 = vmatpush1.msra.mxu0 0.0
    %2914 = vmatprep.subr.mxu0 0.0
    %2915 = vmatpush1.msra.mxu0 0.0
    %2916 = vmatprep.subr.mxu0 0.0
    %2917 = vmatpush1.msra.mxu0 0.0
    %2918 = vmatprep.subr.mxu0 0.0
    %2919 = vmatpush1.msra.mxu0 0.0
    %2920 = vmatprep.subr.mxu0 0.0
    %2921 = vmatpush1.msra.mxu0 0.0
    %2922 = vmatprep.subr.mxu0 0.0
    %2923 = vmatpush1.msra.mxu0 0.0
    %2924 = vmatprep.subr.mxu0 0.0
    %2925 = vmatpush1.msra.mxu0 0.0
    %2926 = vmatprep.subr.mxu0 0.0
    %2927 = vmatpush1.msra.mxu0 0.0
    %2928 = vmatprep.mubr.f32.mxu0 0.0
    %2929 = vmatmul.mubr.f32.gmra.mrb[0].mxu0 %v2862
    %v2930 = vpop.f32.mrb[0].mxu0
    %v2931 = vadd.f32 0.0, %v2930
    %v2932 = vpop.f32.mrb[0].mxu0
    %2933 = vdwg.mxu0
    %v2935 = vrot.slane %v2931, 6
    %v2937 = vadd.f32 %v2337, %v2935
    %v2938 = vxor.u32 %v2937, 2147483648
    %v2939 = vmul.f32 %v2938, 1.442695
    %v2940 = vpow.pop %v2939
    %v2941 = vadd.f32 %v2940, 1.0
    %v2942 = vrcp.pop %v2941
    %v2943 = vmul.f32 1.0, %v2942
    %v2944 = vtanh.pop %v2937
    %v2946 = vrot.slane %v2852, 6
    %v2948 = vmul.f32 %v2943, %v2946
    %2950 = vrot.lane.b32.xlu0 %v2944, 64
    %v2951 = vpop.permute.xlu0 %2950
    %v2953 = vmul.f32 %v2943, %v2951
    %2955 = vrot.lane.b32.xlu0 %v2953, 32
    %v2956 = vpop.permute.xlu0 %2955
    %v2958 = vadd.f32 %v2948, %v2956
    %v2959 = vtanh.pop %v2958
    %2961 = vrot.lane.b32.xlu0 %v2959, 64
    %v2962 = vpop.permute.xlu0 %2961
    %v2964 = vmul.f32 %v2943, %v2962
    %v2966 = vrot.slane %v2964, 2
    %2967 = vrot.lane.b32.xlu0 %v2966, 32
    %v2968 = vpop.permute.xlu0 %2967
    %v2969 = vsel %vm339, %v2968, 0
    %2971 = vmatprep.subr.mxu0 0.0
    %2972 = vmatpush1.msra.mxu0 %v2241
    %2973 = vmatprep.subr.mxu0 0.0
    %2974 = vmatpush1.msra.mxu0 %v2242
    %2975 = vmatprep.subr.mxu0 0.0
    %2976 = vmatpush1.msra.mxu0 %v2243
    %2977 = vmatprep.subr.mxu0 0.0
    %2978 = vmatpush1.msra.mxu0 %v2244
    %2979 = vmatprep.subr.mxu0 0.0
    %2980 = vmatpush1.msra.mxu0 0.0
    %2981 = vmatprep.subr.mxu0 0.0
    %2982 = vmatpush1.msra.mxu0 0.0
    %2983 = vmatprep.subr.mxu0 0.0
    %2984 = vmatpush1.msra.mxu0 0.0
    %2985 = vmatprep.subr.mxu0 0.0
    %2986 = vmatpush1.msra.mxu0 0.0
    %2987 = vmatprep.subr.mxu0 0.0
    %2988 = vmatpush1.msra.mxu0 0.0
    %2989 = vmatprep.subr.mxu0 0.0
    %2990 = vmatpush1.msra.mxu0 0.0
    %2991 = vmatprep.subr.mxu0 0.0
    %2992 = vmatpush1.msra.mxu0 0.0
    %2993 = vmatprep.subr.mxu0 0.0
    %2994 = vmatpush1.msra.mxu0 0.0
    %2995 = vmatprep.subr.mxu0 0.0
    %2996 = vmatpush1.msra.mxu0 0.0
    %2997 = vmatprep.subr.mxu0 0.0
    %2998 = vmatpush1.msra.mxu0 0.0
    %2999 = vmatprep.subr.mxu0 0.0
    %3000 = vmatpush1.msra.mxu0 0.0
    %3001 = vmatprep.subr.mxu0 0.0
    %3002 = vmatpush1.msra.mxu0 0.0
    %3003 = vmatprep.subr.mxu0 0.0
    %3004 = vmatpush1.msra.mxu0 0.0
    %3005 = vmatprep.subr.mxu0 0.0
    %3006 = vmatpush1.msra.mxu0 0.0
    %3007 = vmatprep.subr.mxu0 0.0
    %3008 = vmatpush1.msra.mxu0 0.0
    %3009 = vmatprep.subr.mxu0 0.0
    %3010 = vmatpush1.msra.mxu0 0.0
    %3011 = vmatprep.subr.mxu0 0.0
    %3012 = vmatpush1.msra.mxu0 0.0
    %3013 = vmatprep.subr.mxu0 0.0
    %3014 = vmatpush1.msra.mxu0 0.0
    %3015 = vmatprep.subr.mxu0 0.0
    %3016 = vmatpush1.msra.mxu0 0.0
    %3017 = vmatprep.subr.mxu0 0.0
    %3018 = vmatpush1.msra.mxu0 0.0
    %3019 = vmatprep.subr.mxu0 0.0
    %3020 = vmatpush1.msra.mxu0 0.0
    %3021 = vmatprep.subr.mxu0 0.0
    %3022 = vmatpush1.msra.mxu0 0.0
    %3023 = vmatprep.subr.mxu0 0.0
    %3024 = vmatpush1.msra.mxu0 0.0
    %3025 = vmatprep.subr.mxu0 0.0
    %3026 = vmatpush1.msra.mxu0 0.0
    %3027 = vmatprep.subr.mxu0 0.0
    %3028 = vmatpush1.msra.mxu0 0.0
    %3029 = vmatprep.subr.mxu0 0.0
    %3030 = vmatpush1.msra.mxu0 0.0
    %3031 = vmatprep.subr.mxu0 0.0
    %3032 = vmatpush1.msra.mxu0 0.0
    %3033 = vmatprep.subr.mxu0 0.0
    %3034 = vmatpush1.msra.mxu0 0.0
    %3035 = vmatprep.mubr.f32.mxu0 0.0
    %3036 = vmatmul.mubr.f32.gmra.mrb[0].mxu0 %v2969
    %v3037 = vpop.f32.mrb[0].mxu0
    %v3038 = vadd.f32 0.0, %v3037
    %v3039 = vpop.f32.mrb[0].mxu0
    %3040 = vdwg.mxu0
    %v3042 = vrot.slane %v3038, 4
    %v3044 = vadd.f32 %v2337, %v3042
    %v3045 = vxor.u32 %v3044, 2147483648
    %v3046 = vmul.f32 %v3045, 1.442695
    %v3047 = vpow.pop %v3046
    %v3048 = vadd.f32 %v3047, 1.0
    %v3049 = vrcp.pop %v3048
    %v3050 = vmul.f32 1.0, %v3049
    %v3051 = vtanh.pop %v3044
    %v3053 = vrot.slane %v2958, 6
    %v3055 = vmul.f32 %v3050, %v3053
    %3057 = vrot.lane.b32.xlu0 %v3051, 64
    %v3058 = vpop.permute.xlu0 %3057
    %v3060 = vmul.f32 %v3050, %v3058
    %3062 = vrot.lane.b32.xlu0 %v3060, 32
    %v3063 = vpop.permute.xlu0 %3062
    %v3065 = vadd.f32 %v3055, %v3063
    %v3066 = vtanh.pop %v3065
    %3068 = vrot.lane.b32.xlu0 %v3066, 64
    %v3069 = vpop.permute.xlu0 %3068
    %v3071 = vmul.f32 %v3050, %v3069
    %v3073 = vrot.slane %v3071, 4
    %3074 = vrot.lane.b32.xlu0 %v3073, 32
    %v3075 = vpop.permute.xlu0 %3074
    %v3076 = vsel %vm339, %v3075, 0
    %3078 = vmatprep.subr.mxu0 0.0
    %3079 = vmatpush1.msra.mxu0 %v2241
    %3080 = vmatprep.subr.mxu0 0.0
    %3081 = vmatpush1.msra.mxu0 %v2242
    %3082 = vmatprep.subr.mxu0 0.0
    %3083 = vmatpush1.msra.mxu0 %v2243
    %3084 = vmatprep.subr.mxu0 0.0
    %3085 = vmatpush1.msra.mxu0 %v2244
    %3086 = vmatprep.subr.mxu0 0.0
    %3087 = vmatpush1.msra.mxu0 0.0
    %3088 = vmatprep.subr.mxu0 0.0
    %3089 = vmatpush1.msra.mxu0 0.0
    %3090 = vmatprep.subr.mxu0 0.0
    %3091 = vmatpush1.msra.mxu0 0.0
    %3092 = vmatprep.subr.mxu0 0.0
    %3093 = vmatpush1.msra.mxu0 0.0
    %3094 = vmatprep.subr.mxu0 0.0
    %3095 = vmatpush1.msra.mxu0 0.0
    %3096 = vmatprep.subr.mxu0 0.0
    %3097 = vmatpush1.msra.mxu0 0.0
    %3098 = vmatprep.subr.mxu0 0.0
    %3099 = vmatpush1.msra.mxu0 0.0
    %3100 = vmatprep.subr.mxu0 0.0
    %3101 = vmatpush1.msra.mxu0 0.0
    %3102 = vmatprep.subr.mxu0 0.0
    %3103 = vmatpush1.msra.mxu0 0.0
    %3104 = vmatprep.subr.mxu0 0.0
    %3105 = vmatpush1.msra.mxu0 0.0
    %3106 = vmatprep.subr.mxu0 0.0
    %3107 = vmatpush1.msra.mxu0 0.0
    %3108 = vmatprep.subr.mxu0 0.0
    %3109 = vmatpush1.msra.mxu0 0.0
    %3110 = vmatprep.subr.mxu0 0.0
    %3111 = vmatpush1.msra.mxu0 0.0
    %3112 = vmatprep.subr.mxu0 0.0
    %3113 = vmatpush1.msra.mxu0 0.0
    %3114 = vmatprep.subr.mxu0 0.0
    %3115 = vmatpush1.msra.mxu0 0.0
    %3116 = vmatprep.subr.mxu0 0.0
    %3117 = vmatpush1.msra.mxu0 0.0
    %3118 = vmatprep.subr.mxu0 0.0
    %3119 = vmatpush1.msra.mxu0 0.0
    %3120 = vmatprep.subr.mxu0 0.0
    %3121 = vmatpush1.msra.mxu0 0.0
    %3122 = vmatprep.subr.mxu0 0.0
    %3123 = vmatpush1.msra.mxu0 0.0
    %3124 = vmatprep.subr.mxu0 0.0
    %3125 = vmatpush1.msra.mxu0 0.0
    %3126 = vmatprep.subr.mxu0 0.0
    %3127 = vmatpush1.msra.mxu0 0.0
    %3128 = vmatprep.subr.mxu0 0.0
    %3129 = vmatpush1.msra.mxu0 0.0
    %3130 = vmatprep.subr.mxu0 0.0
    %3131 = vmatpush1.msra.mxu0 0.0
    %3132 = vmatprep.subr.mxu0 0.0
    %3133 = vmatpush1.msra.mxu0 0.0
    %3134 = vmatprep.subr.mxu0 0.0
    %3135 = vmatpush1.msra.mxu0 0.0
    %3136 = vmatprep.subr.mxu0 0.0
    %3137 = vmatpush1.msra.mxu0 0.0
    %3138 = vmatprep.subr.mxu0 0.0
    %3139 = vmatpush1.msra.mxu0 0.0
    %3140 = vmatprep.subr.mxu0 0.0
    %3141 = vmatpush1.msra.mxu0 0.0
    %3142 = vmatprep.mubr.f32.mxu0 0.0
    %3143 = vmatmul.mubr.f32.gmra.mrb[0].mxu0 %v3076
    %v3144 = vpop.f32.mrb[0].mxu0
    %v3145 = vadd.f32 0.0, %v3144
    %v3146 = vpop.f32.mrb[0].mxu0
    %3147 = vdwg.mxu0
    %v3149 = vrot.slane %v3145, 2
    %v3151 = vadd.f32 %v2337, %v3149
    %v3152 = vxor.u32 %v3151, 2147483648
    %v3153 = vmul.f32 %v3152, 1.442695
    %v3154 = vpow.pop %v3153
    %v3155 = vadd.f32 %v3154, 1.0
    %v3156 = vrcp.pop %v3155
    %v3157 = vmul.f32 1.0, %v3156
    %v3158 = vtanh.pop %v3151
    %v3160 = vrot.slane %v3065, 6
    %v3162 = vmul.f32 %v3157, %v3160
    %3164 = vrot.lane.b32.xlu0 %v3158, 64
    %v3165 = vpop.permute.xlu0 %3164
    %v3167 = vmul.f32 %v3157, %v3165
    %3169 = vrot.lane.b32.xlu0 %v3167, 32
    %v3170 = vpop.permute.xlu0 %3169
    %v3172 = vadd.f32 %v3162, %v3170
    %v3173 = vtanh.pop %v3172
    %3175 = vrot.lane.b32.xlu0 %v3173, 64
    %v3176 = vpop.permute.xlu0 %3175
    %v3178 = vmul.f32 %v3157, %v3176
    %v3179 = vsel %vm1263, %v2434, %v2540
    %v3180 = vsel %vm1265, %v3179, %v2647
    %v3181 = vsel %vm1267, %v3180, %v2754
    %v3182 = vsel %vm1263, %v2858, %v2964
    %v3183 = vsel %vm1265, %v3182, %v3071
    %v3184 = vsel %vm1267, %v3183, %v3178
    %3186 = vrot.lane.b32.xlu0 %v3178, 32
    %v3187 = vpop.permute.xlu0 %3186
    %s3189 = scalar_lea.vmem [#allocation18], 4
    %3190 = vst.msk [vmem:[%s3189 - $0x6] sm:$0xc0] %vm1276, %v3187
    %3192 = vrot.lane.b32.xlu0 %v3172, 96
    %v3193 = vpop.permute.xlu0 %3192
    %s3195 = scalar_lea.vmem [#allocation20], 4
    %3196 = vst.msk [vmem:[%s3195 - $0x6] sm:$0xc0] %vm1276, %v3193
    %v3197 = vld [vmem:[#allocation11] sm:$0xff]
    %v3198 = vld [vmem:[#allocation11 + $0x8] sm:$0xff]
    %v3199 = vld [vmem:[#allocation11 + $0x10] sm:$0xff]
    %v3200 = vld [vmem:[#allocation11 + $0x18] sm:$0xff]
    %v3201 = vld [vmem:[#allocation11 + $0x20] sm:$0xff]
    %v3202 = vld [vmem:[#allocation11 + $0x28] sm:$0xff]
    %v3203 = vld [vmem:[#allocation11 + $0x30] sm:$0xff]
    %v3204 = vld [vmem:[#allocation11 + $0x38] sm:$0xff]
    %v3205 = vld [vmem:[#allocation11 + $0x40] sm:$0xff]
    %v3206 = vld [vmem:[#allocation11 + $0x48] sm:$0xff]
    %v3207 = vld [vmem:[#allocation11 + $0x50] sm:$0xff]
    %v3208 = vld [vmem:[#allocation11 + $0x58] sm:$0xff]
    %v3209 = vld [vmem:[#allocation11 + $0x60] sm:$0xff]
    %v3210 = vld [vmem:[#allocation11 + $0x68] sm:$0xff]
    %v3211 = vld [vmem:[#allocation11 + $0x70] sm:$0xff]
    %v3212 = vld [vmem:[#allocation11 + $0x78] sm:$0xff]
    %v3213 = vld [vmem:[#allocation13] sm:$0xf]
    %v3215 = vlaneseq
    %v3216 = vshrl.u32 %v3215, 7
    %v3217 = vsub.s32 0, %v3216
    %v3218 = vrot.slane %v3213, %v3217
    %v3219 = vlaneseq
    %v3220 = vshrl.u32 %v3219, 7
    %v3221 = vsub.s32 1, %v3220
    %v3222 = vrot.slane %v3213, %v3221
    %v3223 = vlaneseq
    %v3224 = vshrl.u32 %v3223, 7
    %v3225 = vsub.s32 2, %v3224
    %v3226 = vrot.slane %v3213, %v3225
    %v3227 = vlaneseq
    %v3228 = vshrl.u32 %v3227, 7
    %v3229 = vsub.s32 3, %v3228
    %v3230 = vrot.slane %v3213, %v3229
    %3237 = vrot.lane.b32.xlu0 %v3181, 32
    %v3238 = vpop.permute.xlu0 %3237
    %3239 = vrot.lane.b32.xlu0 %v3184, 32
    %v3240 = vpop.permute.xlu0 %3239
    %v3241 = vsel %vm339, %v3238, 0
    %v3243 = vsel %vm339, %v3240, 0
    %3245 = vmatprep.subr.mxu0 %v3198
    %3246 = vmatpush1.msra.mxu0 %v3197
    %3247 = vmatprep.subr.mxu0 %v3202
    %3248 = vmatpush1.msra.mxu0 %v3201
    %3249 = vmatprep.subr.mxu0 %v3206
    %3250 = vmatpush1.msra.mxu0 %v3205
    %3251 = vmatprep.subr.mxu0 %v3210
    %3252 = vmatpush1.msra.mxu0 %v3209
    %3253 = vmatprep.subr.mxu0 0.0
    %3254 = vmatpush1.msra.mxu0 0.0
    %3255 = vmatprep.subr.mxu0 0.0
    %3256 = vmatpush1.msra.mxu0 0.0
    %3257 = vmatprep.subr.mxu0 0.0
    %3258 = vmatpush1.msra.mxu0 0.0
    %3259 = vmatprep.subr.mxu0 0.0
    %3260 = vmatpush1.msra.mxu0 0.0
    %3261 = vmatprep.subr.mxu0 0.0
    %3262 = vmatpush1.msra.mxu0 0.0
    %3263 = vmatprep.subr.mxu0 0.0
    %3264 = vmatpush1.msra.mxu0 0.0
    %3265 = vmatprep.subr.mxu0 0.0
    %3266 = vmatpush1.msra.mxu0 0.0
    %3267 = vmatprep.subr.mxu0 0.0
    %3268 = vmatpush1.msra.mxu0 0.0
    %3269 = vmatprep.subr.mxu0 0.0
    %3270 = vmatpush1.msra.mxu0 0.0
    %3271 = vmatprep.subr.mxu0 0.0
    %3272 = vmatpush1.msra.mxu0 0.0
    %3273 = vmatprep.subr.mxu0 0.0
    %3274 = vmatpush1.msra.mxu0 0.0
    %3275 = vmatprep.subr.mxu0 0.0
    %3276 = vmatpush1.msra.mxu0 0.0
    %3277 = vmatprep.subr.mxu0 0.0
    %3278 = vmatpush1.msra.mxu0 0.0
    %3279 = vmatprep.subr.mxu0 0.0
    %3280 = vmatpush1.msra.mxu0 0.0
    %3281 = vmatprep.subr.mxu0 0.0
    %3282 = vmatpush1.msra.mxu0 0.0
    %3283 = vmatprep.subr.mxu0 0.0
    %3284 = vmatpush1.msra.mxu0 0.0
    %3285 = vmatprep.subr.mxu0 0.0
    %3286 = vmatpush1.msra.mxu0 0.0
    %3287 = vmatprep.subr.mxu0 0.0
    %3288 = vmatpush1.msra.mxu0 0.0
    %3289 = vmatprep.subr.mxu0 0.0
    %3290 = vmatpush1.msra.mxu0 0.0
    %3291 = vmatprep.subr.mxu0 0.0
    %3292 = vmatpush1.msra.mxu0 0.0
    %3293 = vmatprep.subr.mxu0 0.0
    %3294 = vmatpush1.msra.mxu0 0.0
    %3295 = vmatprep.subr.mxu0 0.0
    %3296 = vmatpush1.msra.mxu0 0.0
    %3297 = vmatprep.subr.mxu0 0.0
    %3298 = vmatpush1.msra.mxu0 0.0
    %3299 = vmatprep.subr.mxu0 0.0
    %3300 = vmatpush1.msra.mxu0 0.0
    %3301 = vmatprep.subr.mxu0 0.0
    %3302 = vmatpush1.msra.mxu0 0.0
    %3303 = vmatprep.subr.mxu0 0.0
    %3304 = vmatpush1.msra.mxu0 0.0
    %3305 = vmatprep.subr.mxu0 0.0
    %3306 = vmatpush1.msra.mxu0 0.0
    %3307 = vmatprep.subr.mxu0 0.0
    %3308 = vmatpush1.msra.mxu0 0.0
    %3309 = vmatprep.mubr.f32.mxu0 0.0
    %3310 = vmatmul.mubr.f32.gmra.mrb[0].mxu0 %v3241
    %v3311 = vpop.f32.mrb[0].mxu0
    %v3312 = vadd.f32 %v3218, %v3311
    %v3313 = vpop.f32.mrb[0].mxu0
    %v3314 = vadd.f32 %v3222, %v3313
    %3315 = vmatprep.mubr.f32.mxu0 0.0
    %3316 = vmatmul.mubr.f32.gmra.mrb[0].mxu0 %v3243
    %v3317 = vpop.f32.mrb[0].mxu0
    %v3318 = vadd.f32 %v3218, %v3317
    %v3319 = vpop.f32.mrb[0].mxu0
    %v3320 = vadd.f32 %v3222, %v3319
    %3321 = vdwg.mxu0
    %3322 = vmatprep.subr.mxu0 %v3200
    %3323 = vmatpush1.msra.mxu0 %v3199
    %3324 = vmatprep.subr.mxu0 %v3204
    %3325 = vmatpush1.msra.mxu0 %v3203
    %3326 = vmatprep.subr.mxu0 %v3208
    %3327 = vmatpush1.msra.mxu0 %v3207
    %3328 = vmatprep.subr.mxu0 %v3212
    %3329 = vmatpush1.msra.mxu0 %v3211
    %3330 = vmatprep.subr.mxu0 0.0
    %3331 = vmatpush1.msra.mxu0 0.0
    %3332 = vmatprep.subr.mxu0 0.0
    %3333 = vmatpush1.msra.mxu0 0.0
    %3334 = vmatprep.subr.mxu0 0.0
    %3335 = vmatpush1.msra.mxu0 0.0
    %3336 = vmatprep.subr.mxu0 0.0
    %3337 = vmatpush1.msra.mxu0 0.0
    %3338 = vmatprep.subr.mxu0 0.0
    %3339 = vmatpush1.msra.mxu0 0.0
    %3340 = vmatprep.subr.mxu0 0.0
    %3341 = vmatpush1.msra.mxu0 0.0
    %3342 = vmatprep.subr.mxu0 0.0
    %3343 = vmatpush1.msra.mxu0 0.0
    %3344 = vmatprep.subr.mxu0 0.0
    %3345 = vmatpush1.msra.mxu0 0.0
    %3346 = vmatprep.subr.mxu0 0.0
    %3347 = vmatpush1.msra.mxu0 0.0
    %3348 = vmatprep.subr.mxu0 0.0
    %3349 = vmatpush1.msra.mxu0 0.0
    %3350 = vmatprep.subr.mxu0 0.0
    %3351 = vmatpush1.msra.mxu0 0.0
    %3352 = vmatprep.subr.mxu0 0.0
    %3353 = vmatpush1.msra.mxu0 0.0
    %3354 = vmatprep.subr.mxu0 0.0
    %3355 = vmatpush1.msra.mxu0 0.0
    %3356 = vmatprep.subr.mxu0 0.0
    %3357 = vmatpush1.msra.mxu0 0.0
    %3358 = vmatprep.subr.mxu0 0.0
    %3359 = vmatpush1.msra.mxu0 0.0
    %3360 = vmatprep.subr.mxu0 0.0
    %3361 = vmatpush1.msra.mxu0 0.0
    %3362 = vmatprep.subr.mxu0 0.0
    %3363 = vmatpush1.msra.mxu0 0.0
    %3364 = vmatprep.subr.mxu0 0.0
    %3365 = vmatpush1.msra.mxu0 0.0
    %3366 = vmatprep.subr.mxu0 0.0
    %3367 = vmatpush1.msra.mxu0 0.0
    %3368 = vmatprep.subr.mxu0 0.0
    %3369 = vmatpush1.msra.mxu0 0.0
    %3370 = vmatprep.subr.mxu0 0.0
    %3371 = vmatpush1.msra.mxu0 0.0
    %3372 = vmatprep.subr.mxu0 0.0
    %3373 = vmatpush1.msra.mxu0 0.0
    %3374 = vmatprep.subr.mxu0 0.0
    %3375 = vmatpush1.msra.mxu0 0.0
    %3376 = vmatprep.subr.mxu0 0.0
    %3377 = vmatpush1.msra.mxu0 0.0
    %3378 = vmatprep.subr.mxu0 0.0
    %3379 = vmatpush1.msra.mxu0 0.0
    %3380 = vmatprep.subr.mxu0 0.0
    %3381 = vmatpush1.msra.mxu0 0.0
    %3382 = vmatprep.subr.mxu0 0.0
    %3383 = vmatpush1.msra.mxu0 0.0
    %3384 = vmatprep.subr.mxu0 0.0
    %3385 = vmatpush1.msra.mxu0 0.0
    %3386 = vmatprep.mubr.f32.mxu0 0.0
    %3387 = vmatmul.mubr.f32.gmra.mrb[0].mxu0 %v3241
    %v3388 = vpop.f32.mrb[0].mxu0
    %v3389 = vadd.f32 %v3226, %v3388
    %v3390 = vpop.f32.mrb[0].mxu0
    %v3391 = vadd.f32 %v3230, %v3390
    %3392 = vmatprep.mubr.f32.mxu0 0.0
    %3393 = vmatmul.mubr.f32.gmra.mrb[0].mxu0 %v3243
    %v3394 = vpop.f32.mrb[0].mxu0
    %v3395 = vadd.f32 %v3226, %v3394
    %v3396 = vpop.f32.mrb[0].mxu0
    %v3397 = vadd.f32 %v3230, %v3396
    %3398 = vdwg.mxu0
    %v3399 = vmax.f32 %v3312, 0.0
    %v3400 = vmax.f32 %v3314, 0.0
    %v3401 = vmax.f32 %v3389, 0.0
    %v3402 = vmax.f32 %v3391, 0.0
    %v3403 = vmax.f32 %v3318, 0.0
    %v3404 = vmax.f32 %v3320, 0.0
    %v3405 = vmax.f32 %v3395, 0.0
    %v3406 = vmax.f32 %v3397, 0.0
    %s3407 = smul.u32 4, 64
    %s3408 = smul.u32 %s3407, 16
    %s3409 = sshll.u32 %s3408, 4
    %3410 = dma.done [#allocation4], %s3409
    %v3411 = vpack.c.bf16 %v3403, %v3399
    %v3412 = vpack.c.bf16 %v3404, %v3400
    %v3413 = vpack.c.bf16 %v3405, %v3401
    %v3414 = vpack.c.bf16 %v3406, %v3402
    %v3415 = vld [vmem:[#allocation2] sm:$0xff]
    %v3416 = vld [vmem:[#allocation2 + $0x8] sm:$0xff]
    %v3417 = vld [vmem:[#allocation2 + $0x10] sm:$0xff]
    %v3418 = vld [vmem:[#allocation2 + $0x18] sm:$0xff]
    %v3419 = vld [vmem:[#allocation2 + $0x20] sm:$0xff]
    %v3420 = vld [vmem:[#allocation2 + $0x28] sm:$0xff]
    %v3421 = vld [vmem:[#allocation2 + $0x30] sm:$0xff]
    %v3422 = vld [vmem:[#allocation2 + $0x38] sm:$0xff]
    %v3423 = vld [vmem:[#allocation2 + $0x40] sm:$0xff]
    %v3424 = vld [vmem:[#allocation2 + $0x48] sm:$0xff]
    %v3425 = vld [vmem:[#allocation2 + $0x50] sm:$0xff]
    %v3426 = vld [vmem:[#allocation2 + $0x58] sm:$0xff]
    %v3427 = vld [vmem:[#allocation2 + $0x60] sm:$0xff]
    %v3428 = vld [vmem:[#allocation2 + $0x68] sm:$0xff]
    %v3429 = vld [vmem:[#allocation2 + $0x70] sm:$0xff]
    %v3430 = vld [vmem:[#allocation2 + $0x78] sm:$0xff]
    %v3431 = vld [vmem:[#allocation2 + $0x80] sm:$0xff]
    %v3432 = vld [vmem:[#allocation2 + $0x88] sm:$0xff]
    %v3433 = vld [vmem:[#allocation2 + $0x90] sm:$0xff]
    %v3434 = vld [vmem:[#allocation2 + $0x98] sm:$0xff]
    %v3435 = vld [vmem:[#allocation2 + $0xa0] sm:$0xff]
    %v3436 = vld [vmem:[#allocation2 + $0xa8] sm:$0xff]
    %v3437 = vld [vmem:[#allocation2 + $0xb0] sm:$0xff]
    %v3438 = vld [vmem:[#allocation2 + $0xb8] sm:$0xff]
    %v3439 = vld [vmem:[#allocation2 + $0xc0] sm:$0xff]
    %v3440 = vld [vmem:[#allocation2 + $0xc8] sm:$0xff]
    %v3441 = vld [vmem:[#allocation2 + $0xd0] sm:$0xff]
    %v3442 = vld [vmem:[#allocation2 + $0xd8] sm:$0xff]
    %v3443 = vld [vmem:[#allocation2 + $0xe0] sm:$0xff]
    %v3444 = vld [vmem:[#allocation2 + $0xe8] sm:$0xff]
    %v3445 = vld [vmem:[#allocation2 + $0xf0] sm:$0xff]
    %v3446 = vld [vmem:[#allocation2 + $0xf8] sm:$0xff]
    %v3447 = vld [vmem:[#allocation2 + $0x100] sm:$0xff]
    %v3448 = vld [vmem:[#allocation2 + $0x108] sm:$0xff]
    %v3449 = vld [vmem:[#allocation2 + $0x110] sm:$0xff]
    %v3450 = vld [vmem:[#allocation2 + $0x118] sm:$0xff]
    %v3451 = vld [vmem:[#allocation2 + $0x120] sm:$0xff]
    %v3452 = vld [vmem:[#allocation2 + $0x128] sm:$0xff]
    %v3453 = vld [vmem:[#allocation2 + $0x130] sm:$0xff]
    %v3454 = vld [vmem:[#allocation2 + $0x138] sm:$0xff]
    %v3455 = vld [vmem:[#allocation2 + $0x140] sm:$0xff]
    %v3456 = vld [vmem:[#allocation2 + $0x148] sm:$0xff]
    %v3457 = vld [vmem:[#allocation2 + $0x150] sm:$0xff]
    %v3458 = vld [vmem:[#allocation2 + $0x158] sm:$0xff]
    %v3459 = vld [vmem:[#allocation2 + $0x160] sm:$0xff]
    %v3460 = vld [vmem:[#allocation2 + $0x168] sm:$0xff]
    %v3461 = vld [vmem:[#allocation2 + $0x170] sm:$0xff]
    %v3462 = vld [vmem:[#allocation2 + $0x178] sm:$0xff]
    %v3463 = vld [vmem:[#allocation2 + $0x180] sm:$0xff]
    %v3464 = vld [vmem:[#allocation2 + $0x188] sm:$0xff]
    %v3465 = vld [vmem:[#allocation2 + $0x190] sm:$0xff]
    %v3466 = vld [vmem:[#allocation2 + $0x198] sm:$0xff]
    %v3467 = vld [vmem:[#allocation2 + $0x1a0] sm:$0xff]
    %v3468 = vld [vmem:[#allocation2 + $0x1a8] sm:$0xff]
    %v3469 = vld [vmem:[#allocation2 + $0x1b0] sm:$0xff]
    %v3470 = vld [vmem:[#allocation2 + $0x1b8] sm:$0xff]
    %v3471 = vld [vmem:[#allocation2 + $0x1c0] sm:$0xff]
    %v3472 = vld [vmem:[#allocation2 + $0x1c8] sm:$0xff]
    %v3473 = vld [vmem:[#allocation2 + $0x1d0] sm:$0xff]
    %v3474 = vld [vmem:[#allocation2 + $0x1d8] sm:$0xff]
    %v3475 = vld [vmem:[#allocation2 + $0x1e0] sm:$0xff]
    %v3476 = vld [vmem:[#allocation2 + $0x1e8] sm:$0xff]
    %v3477 = vld [vmem:[#allocation2 + $0x1f0] sm:$0xff]
    %v3478 = vld [vmem:[#allocation2 + $0x1f8] sm:$0xff]
    %v3479 = vld [vmem:[#allocation2 + $0x200] sm:$0xff]
    %v3480 = vld [vmem:[#allocation2 + $0x208] sm:$0xff]
    %v3481 = vld [vmem:[#allocation2 + $0x210] sm:$0xff]
    %v3482 = vld [vmem:[#allocation2 + $0x218] sm:$0xff]
    %v3483 = vld [vmem:[#allocation2 + $0x220] sm:$0xff]
    %v3484 = vld [vmem:[#allocation2 + $0x228] sm:$0xff]
    %v3485 = vld [vmem:[#allocation2 + $0x230] sm:$0xff]
    %v3486 = vld [vmem:[#allocation2 + $0x238] sm:$0xff]
    %v3487 = vld [vmem:[#allocation2 + $0x240] sm:$0xff]
    %v3488 = vld [vmem:[#allocation2 + $0x248] sm:$0xff]
    %v3489 = vld [vmem:[#allocation2 + $0x250] sm:$0xff]
    %v3490 = vld [vmem:[#allocation2 + $0x258] sm:$0xff]
    %v3491 = vld [vmem:[#allocation2 + $0x260] sm:$0xff]
    %v3492 = vld [vmem:[#allocation2 + $0x268] sm:$0xff]
    %v3493 = vld [vmem:[#allocation2 + $0x270] sm:$0xff]
    %v3494 = vld [vmem:[#allocation2 + $0x278] sm:$0xff]
    %v3495 = vld [vmem:[#allocation2 + $0x280] sm:$0xff]
    %v3496 = vld [vmem:[#allocation2 + $0x288] sm:$0xff]
    %v3497 = vld [vmem:[#allocation2 + $0x290] sm:$0xff]
    %v3498 = vld [vmem:[#allocation2 + $0x298] sm:$0xff]
    %v3499 = vld [vmem:[#allocation2 + $0x2a0] sm:$0xff]
    %v3500 = vld [vmem:[#allocation2 + $0x2a8] sm:$0xff]
    %v3501 = vld [vmem:[#allocation2 + $0x2b0] sm:$0xff]
    %v3502 = vld [vmem:[#allocation2 + $0x2b8] sm:$0xff]
    %v3503 = vld [vmem:[#allocation2 + $0x2c0] sm:$0xff]
    %v3504 = vld [vmem:[#allocation2 + $0x2c8] sm:$0xff]
    %v3505 = vld [vmem:[#allocation2 + $0x2d0] sm:$0xff]
    %v3506 = vld [vmem:[#allocation2 + $0x2d8] sm:$0xff]
    %v3507 = vld [vmem:[#allocation2 + $0x2e0] sm:$0xff]
    %v3508 = vld [vmem:[#allocation2 + $0x2e8] sm:$0xff]
    %v3509 = vld [vmem:[#allocation2 + $0x2f0] sm:$0xff]
    %v3510 = vld [vmem:[#allocation2 + $0x2f8] sm:$0xff]
    %v3511 = vld [vmem:[#allocation2 + $0x300] sm:$0xff]
    %v3512 = vld [vmem:[#allocation2 + $0x308] sm:$0xff]
    %v3513 = vld [vmem:[#allocation2 + $0x310] sm:$0xff]
    %v3514 = vld [vmem:[#allocation2 + $0x318] sm:$0xff]
    %v3515 = vld [vmem:[#allocation2 + $0x320] sm:$0xff]
    %v3516 = vld [vmem:[#allocation2 + $0x328] sm:$0xff]
    %v3517 = vld [vmem:[#allocation2 + $0x330] sm:$0xff]
    %v3518 = vld [vmem:[#allocation2 + $0x338] sm:$0xff]
    %v3519 = vld [vmem:[#allocation2 + $0x340] sm:$0xff]
    %v3520 = vld [vmem:[#allocation2 + $0x348] sm:$0xff]
    %v3521 = vld [vmem:[#allocation2 + $0x350] sm:$0xff]
    %v3522 = vld [vmem:[#allocation2 + $0x358] sm:$0xff]
    %v3523 = vld [vmem:[#allocation2 + $0x360] sm:$0xff]
    %v3524 = vld [vmem:[#allocation2 + $0x368] sm:$0xff]
    %v3525 = vld [vmem:[#allocation2 + $0x370] sm:$0xff]
    %v3526 = vld [vmem:[#allocation2 + $0x378] sm:$0xff]
    %v3527 = vld [vmem:[#allocation2 + $0x380] sm:$0xff]
    %v3528 = vld [vmem:[#allocation2 + $0x388] sm:$0xff]
    %v3529 = vld [vmem:[#allocation2 + $0x390] sm:$0xff]
    %v3530 = vld [vmem:[#allocation2 + $0x398] sm:$0xff]
    %v3531 = vld [vmem:[#allocation2 + $0x3a0] sm:$0xff]
    %v3532 = vld [vmem:[#allocation2 + $0x3a8] sm:$0xff]
    %v3533 = vld [vmem:[#allocation2 + $0x3b0] sm:$0xff]
    %v3534 = vld [vmem:[#allocation2 + $0x3b8] sm:$0xff]
    %v3535 = vld [vmem:[#allocation2 + $0x3c0] sm:$0xff]
    %v3536 = vld [vmem:[#allocation2 + $0x3c8] sm:$0xff]
    %v3537 = vld [vmem:[#allocation2 + $0x3d0] sm:$0xff]
    %v3538 = vld [vmem:[#allocation2 + $0x3d8] sm:$0xff]
    %v3539 = vld [vmem:[#allocation2 + $0x3e0] sm:$0xff]
    %v3540 = vld [vmem:[#allocation2 + $0x3e8] sm:$0xff]
    %v3541 = vld [vmem:[#allocation2 + $0x3f0] sm:$0xff]
    %v3542 = vld [vmem:[#allocation2 + $0x3f8] sm:$0xff]
    %v3543 = vld [vmem:[#allocation2 + $0x400] sm:$0xff]
    %v3544 = vld [vmem:[#allocation2 + $0x408] sm:$0xff]
    %v3545 = vld [vmem:[#allocation2 + $0x410] sm:$0xff]
    %v3546 = vld [vmem:[#allocation2 + $0x418] sm:$0xff]
    %v3547 = vld [vmem:[#allocation2 + $0x420] sm:$0xff]
    %v3548 = vld [vmem:[#allocation2 + $0x428] sm:$0xff]
    %v3549 = vld [vmem:[#allocation2 + $0x430] sm:$0xff]
    %v3550 = vld [vmem:[#allocation2 + $0x438] sm:$0xff]
    %v3551 = vld [vmem:[#allocation2 + $0x440] sm:$0xff]
    %v3552 = vld [vmem:[#allocation2 + $0x448] sm:$0xff]
    %v3553 = vld [vmem:[#allocation2 + $0x450] sm:$0xff]
    %v3554 = vld [vmem:[#allocation2 + $0x458] sm:$0xff]
    %v3555 = vld [vmem:[#allocation2 + $0x460] sm:$0xff]
    %v3556 = vld [vmem:[#allocation2 + $0x468] sm:$0xff]
    %v3557 = vld [vmem:[#allocation2 + $0x470] sm:$0xff]
    %v3558 = vld [vmem:[#allocation2 + $0x478] sm:$0xff]
    %v3559 = vld [vmem:[#allocation2 + $0x480] sm:$0xff]
    %v3560 = vld [vmem:[#allocation2 + $0x488] sm:$0xff]
    %v3561 = vld [vmem:[#allocation2 + $0x490] sm:$0xff]
    %v3562 = vld [vmem:[#allocation2 + $0x498] sm:$0xff]
    %v3563 = vld [vmem:[#allocation2 + $0x4a0] sm:$0xff]
    %v3564 = vld [vmem:[#allocation2 + $0x4a8] sm:$0xff]
    %v3565 = vld [vmem:[#allocation2 + $0x4b0] sm:$0xff]
    %v3566 = vld [vmem:[#allocation2 + $0x4b8] sm:$0xff]
    %v3567 = vld [vmem:[#allocation2 + $0x4c0] sm:$0xff]
    %v3568 = vld [vmem:[#allocation2 + $0x4c8] sm:$0xff]
    %v3569 = vld [vmem:[#allocation2 + $0x4d0] sm:$0xff]
    %v3570 = vld [vmem:[#allocation2 + $0x4d8] sm:$0xff]
    %v3571 = vld [vmem:[#allocation2 + $0x4e0] sm:$0xff]
    %v3572 = vld [vmem:[#allocation2 + $0x4e8] sm:$0xff]
    %v3573 = vld [vmem:[#allocation2 + $0x4f0] sm:$0xff]
    %v3574 = vld [vmem:[#allocation2 + $0x4f8] sm:$0xff]
    %v3575 = vld [vmem:[#allocation2 + $0x500] sm:$0xff]
    %v3576 = vld [vmem:[#allocation2 + $0x508] sm:$0xff]
    %v3577 = vld [vmem:[#allocation2 + $0x510] sm:$0xff]
    %v3578 = vld [vmem:[#allocation2 + $0x518] sm:$0xff]
    %v3579 = vld [vmem:[#allocation2 + $0x520] sm:$0xff]
    %v3580 = vld [vmem:[#allocation2 + $0x528] sm:$0xff]
    %v3581 = vld [vmem:[#allocation2 + $0x530] sm:$0xff]
    %v3582 = vld [vmem:[#allocation2 + $0x538] sm:$0xff]
    %v3583 = vld [vmem:[#allocation2 + $0x540] sm:$0xff]
    %v3584 = vld [vmem:[#allocation2 + $0x548] sm:$0xff]
    %v3585 = vld [vmem:[#allocation2 + $0x550] sm:$0xff]
    %v3586 = vld [vmem:[#allocation2 + $0x558] sm:$0xff]
    %v3587 = vld [vmem:[#allocation2 + $0x560] sm:$0xff]
    %v3588 = vld [vmem:[#allocation2 + $0x568] sm:$0xff]
    %v3589 = vld [vmem:[#allocation2 + $0x570] sm:$0xff]
    %v3590 = vld [vmem:[#allocation2 + $0x578] sm:$0xff]
    %v3591 = vld [vmem:[#allocation2 + $0x580] sm:$0xff]
    %v3592 = vld [vmem:[#allocation2 + $0x588] sm:$0xff]
    %v3593 = vld [vmem:[#allocation2 + $0x590] sm:$0xff]
    %v3594 = vld [vmem:[#allocation2 + $0x598] sm:$0xff]
    %v3595 = vld [vmem:[#allocation2 + $0x5a0] sm:$0xff]
    %v3596 = vld [vmem:[#allocation2 + $0x5a8] sm:$0xff]
    %v3597 = vld [vmem:[#allocation2 + $0x5b0] sm:$0xff]
    %v3598 = vld [vmem:[#allocation2 + $0x5b8] sm:$0xff]
    %v3599 = vld [vmem:[#allocation2 + $0x5c0] sm:$0xff]
    %v3600 = vld [vmem:[#allocation2 + $0x5c8] sm:$0xff]
    %v3601 = vld [vmem:[#allocation2 + $0x5d0] sm:$0xff]
    %v3602 = vld [vmem:[#allocation2 + $0x5d8] sm:$0xff]
    %v3603 = vld [vmem:[#allocation2 + $0x5e0] sm:$0xff]
    %v3604 = vld [vmem:[#allocation2 + $0x5e8] sm:$0xff]
    %v3605 = vld [vmem:[#allocation2 + $0x5f0] sm:$0xff]
    %v3606 = vld [vmem:[#allocation2 + $0x5f8] sm:$0xff]
    %v3607 = vld [vmem:[#allocation2 + $0x600] sm:$0xff]
    %v3608 = vld [vmem:[#allocation2 + $0x608] sm:$0xff]
    %v3609 = vld [vmem:[#allocation2 + $0x610] sm:$0xff]
    %v3610 = vld [vmem:[#allocation2 + $0x618] sm:$0xff]
    %v3611 = vld [vmem:[#allocation2 + $0x620] sm:$0xff]
    %v3612 = vld [vmem:[#allocation2 + $0x628] sm:$0xff]
    %v3613 = vld [vmem:[#allocation2 + $0x630] sm:$0xff]
    %v3614 = vld [vmem:[#allocation2 + $0x638] sm:$0xff]
    %v3615 = vld [vmem:[#allocation2 + $0x640] sm:$0xff]
    %v3616 = vld [vmem:[#allocation2 + $0x648] sm:$0xff]
    %v3617 = vld [vmem:[#allocation2 + $0x650] sm:$0xff]
    %v3618 = vld [vmem:[#allocation2 + $0x658] sm:$0xff]
    %v3619 = vld [vmem:[#allocation2 + $0x660] sm:$0xff]
    %v3620 = vld [vmem:[#allocation2 + $0x668] sm:$0xff]
    %v3621 = vld [vmem:[#allocation2 + $0x670] sm:$0xff]
    %v3622 = vld [vmem:[#allocation2 + $0x678] sm:$0xff]
    %v3623 = vld [vmem:[#allocation2 + $0x680] sm:$0xff]
    %v3624 = vld [vmem:[#allocation2 + $0x688] sm:$0xff]
    %v3625 = vld [vmem:[#allocation2 + $0x690] sm:$0xff]
    %v3626 = vld [vmem:[#allocation2 + $0x698] sm:$0xff]
    %v3627 = vld [vmem:[#allocation2 + $0x6a0] sm:$0xff]
    %v3628 = vld [vmem:[#allocation2 + $0x6a8] sm:$0xff]
    %v3629 = vld [vmem:[#allocation2 + $0x6b0] sm:$0xff]
    %v3630 = vld [vmem:[#allocation2 + $0x6b8] sm:$0xff]
    %v3631 = vld [vmem:[#allocation2 + $0x6c0] sm:$0xff]
    %v3632 = vld [vmem:[#allocation2 + $0x6c8] sm:$0xff]
    %v3633 = vld [vmem:[#allocation2 + $0x6d0] sm:$0xff]
    %v3634 = vld [vmem:[#allocation2 + $0x6d8] sm:$0xff]
    %v3635 = vld [vmem:[#allocation2 + $0x6e0] sm:$0xff]
    %v3636 = vld [vmem:[#allocation2 + $0x6e8] sm:$0xff]
    %v3637 = vld [vmem:[#allocation2 + $0x6f0] sm:$0xff]
    %v3638 = vld [vmem:[#allocation2 + $0x6f8] sm:$0xff]
    %v3639 = vld [vmem:[#allocation2 + $0x700] sm:$0xff]
    %v3640 = vld [vmem:[#allocation2 + $0x708] sm:$0xff]
    %v3641 = vld [vmem:[#allocation2 + $0x710] sm:$0xff]
    %v3642 = vld [vmem:[#allocation2 + $0x718] sm:$0xff]
    %v3643 = vld [vmem:[#allocation2 + $0x720] sm:$0xff]
    %v3644 = vld [vmem:[#allocation2 + $0x728] sm:$0xff]
    %v3645 = vld [vmem:[#allocation2 + $0x730] sm:$0xff]
    %v3646 = vld [vmem:[#allocation2 + $0x738] sm:$0xff]
    %v3647 = vld [vmem:[#allocation2 + $0x740] sm:$0xff]
    %v3648 = vld [vmem:[#allocation2 + $0x748] sm:$0xff]
    %v3649 = vld [vmem:[#allocation2 + $0x750] sm:$0xff]
    %v3650 = vld [vmem:[#allocation2 + $0x758] sm:$0xff]
    %v3651 = vld [vmem:[#allocation2 + $0x760] sm:$0xff]
    %v3652 = vld [vmem:[#allocation2 + $0x768] sm:$0xff]
    %v3653 = vld [vmem:[#allocation2 + $0x770] sm:$0xff]
    %v3654 = vld [vmem:[#allocation2 + $0x778] sm:$0xff]
    %v3655 = vld [vmem:[#allocation2 + $0x780] sm:$0xff]
    %v3656 = vld [vmem:[#allocation2 + $0x788] sm:$0xff]
    %v3657 = vld [vmem:[#allocation2 + $0x790] sm:$0xff]
    %v3658 = vld [vmem:[#allocation2 + $0x798] sm:$0xff]
    %v3659 = vld [vmem:[#allocation2 + $0x7a0] sm:$0xff]
    %v3660 = vld [vmem:[#allocation2 + $0x7a8] sm:$0xff]
    %v3661 = vld [vmem:[#allocation2 + $0x7b0] sm:$0xff]
    %v3662 = vld [vmem:[#allocation2 + $0x7b8] sm:$0xff]
    %v3663 = vld [vmem:[#allocation2 + $0x7c0] sm:$0xff]
    %v3664 = vld [vmem:[#allocation2 + $0x7c8] sm:$0xff]
    %v3665 = vld [vmem:[#allocation2 + $0x7d0] sm:$0xff]
    %v3666 = vld [vmem:[#allocation2 + $0x7d8] sm:$0xff]
    %v3667 = vld [vmem:[#allocation2 + $0x7e0] sm:$0xff]
    %v3668 = vld [vmem:[#allocation2 + $0x7e8] sm:$0xff]
    %v3669 = vld [vmem:[#allocation2 + $0x7f0] sm:$0xff]
    %v3670 = vld [vmem:[#allocation2 + $0x7f8] sm:$0xff]
    %v3671 = vld [vmem:[#allocation2 + $0x800] sm:$0xff]
    %v3672 = vld [vmem:[#allocation2 + $0x808] sm:$0xff]
    %v3673 = vld [vmem:[#allocation2 + $0x810] sm:$0xff]
    %v3674 = vld [vmem:[#allocation2 + $0x818] sm:$0xff]
    %v3675 = vld [vmem:[#allocation2 + $0x820] sm:$0xff]
    %v3676 = vld [vmem:[#allocation2 + $0x828] sm:$0xff]
    %v3677 = vld [vmem:[#allocation2 + $0x830] sm:$0xff]
    %v3678 = vld [vmem:[#allocation2 + $0x838] sm:$0xff]
    %v3679 = vld [vmem:[#allocation2 + $0x840] sm:$0xff]
    %v3680 = vld [vmem:[#allocation2 + $0x848] sm:$0xff]
    %v3681 = vld [vmem:[#allocation2 + $0x850] sm:$0xff]
    %v3682 = vld [vmem:[#allocation2 + $0x858] sm:$0xff]
    %v3683 = vld [vmem:[#allocation2 + $0x860] sm:$0xff]
    %v3684 = vld [vmem:[#allocation2 + $0x868] sm:$0xff]
    %v3685 = vld [vmem:[#allocation2 + $0x870] sm:$0xff]
    %v3686 = vld [vmem:[#allocation2 + $0x878] sm:$0xff]
    %v3687 = vld [vmem:[#allocation2 + $0x880] sm:$0xff]
    %v3688 = vld [vmem:[#allocation2 + $0x888] sm:$0xff]
    %v3689 = vld [vmem:[#allocation2 + $0x890] sm:$0xff]
    %v3690 = vld [vmem:[#allocation2 + $0x898] sm:$0xff]
    %v3691 = vld [vmem:[#allocation2 + $0x8a0] sm:$0xff]
    %v3692 = vld [vmem:[#allocation2 + $0x8a8] sm:$0xff]
    %v3693 = vld [vmem:[#allocation2 + $0x8b0] sm:$0xff]
    %v3694 = vld [vmem:[#allocation2 + $0x8b8] sm:$0xff]
    %v3695 = vld [vmem:[#allocation2 + $0x8c0] sm:$0xff]
    %v3696 = vld [vmem:[#allocation2 + $0x8c8] sm:$0xff]
    %v3697 = vld [vmem:[#allocation2 + $0x8d0] sm:$0xff]
    %v3698 = vld [vmem:[#allocation2 + $0x8d8] sm:$0xff]
    %v3699 = vld [vmem:[#allocation2 + $0x8e0] sm:$0xff]
    %v3700 = vld [vmem:[#allocation2 + $0x8e8] sm:$0xff]
    %v3701 = vld [vmem:[#allocation2 + $0x8f0] sm:$0xff]
    %v3702 = vld [vmem:[#allocation2 + $0x8f8] sm:$0xff]
    %v3703 = vld [vmem:[#allocation2 + $0x900] sm:$0xff]
    %v3704 = vld [vmem:[#allocation2 + $0x908] sm:$0xff]
    %v3705 = vld [vmem:[#allocation2 + $0x910] sm:$0xff]
    %v3706 = vld [vmem:[#allocation2 + $0x918] sm:$0xff]
    %v3707 = vld [vmem:[#allocation2 + $0x920] sm:$0xff]
    %v3708 = vld [vmem:[#allocation2 + $0x928] sm:$0xff]
    %v3709 = vld [vmem:[#allocation2 + $0x930] sm:$0xff]
    %v3710 = vld [vmem:[#allocation2 + $0x938] sm:$0xff]
    %v3711 = vld [vmem:[#allocation2 + $0x940] sm:$0xff]
    %v3712 = vld [vmem:[#allocation2 + $0x948] sm:$0xff]
    %v3713 = vld [vmem:[#allocation2 + $0x950] sm:$0xff]
    %v3714 = vld [vmem:[#allocation2 + $0x958] sm:$0xff]
    %v3715 = vld [vmem:[#allocation2 + $0x960] sm:$0xff]
    %v3716 = vld [vmem:[#allocation2 + $0x968] sm:$0xff]
    %v3717 = vld [vmem:[#allocation2 + $0x970] sm:$0xff]
    %v3718 = vld [vmem:[#allocation2 + $0x978] sm:$0xff]
    %v3719 = vld [vmem:[#allocation2 + $0x980] sm:$0xff]
    %v3720 = vld [vmem:[#allocation2 + $0x988] sm:$0xff]
    %v3721 = vld [vmem:[#allocation2 + $0x990] sm:$0xff]
    %v3722 = vld [vmem:[#allocation2 + $0x998] sm:$0xff]
    %v3723 = vld [vmem:[#allocation2 + $0x9a0] sm:$0xff]
    %v3724 = vld [vmem:[#allocation2 + $0x9a8] sm:$0xff]
    %v3725 = vld [vmem:[#allocation2 + $0x9b0] sm:$0xff]
    %v3726 = vld [vmem:[#allocation2 + $0x9b8] sm:$0xff]
    %v3727 = vld [vmem:[#allocation2 + $0x9c0] sm:$0xff]
    %v3728 = vld [vmem:[#allocation2 + $0x9c8] sm:$0xff]
    %v3729 = vld [vmem:[#allocation2 + $0x9d0] sm:$0xff]
    %v3730 = vld [vmem:[#allocation2 + $0x9d8] sm:$0xff]
    %v3731 = vld [vmem:[#allocation2 + $0x9e0] sm:$0xff]
    %v3732 = vld [vmem:[#allocation2 + $0x9e8] sm:$0xff]
    %v3733 = vld [vmem:[#allocation2 + $0x9f0] sm:$0xff]
    %v3734 = vld [vmem:[#allocation2 + $0x9f8] sm:$0xff]
    %v3735 = vld [vmem:[#allocation2 + $0xa00] sm:$0xff]
    %v3736 = vld [vmem:[#allocation2 + $0xa08] sm:$0xff]
    %v3737 = vld [vmem:[#allocation2 + $0xa10] sm:$0xff]
    %v3738 = vld [vmem:[#allocation2 + $0xa18] sm:$0xff]
    %v3739 = vld [vmem:[#allocation2 + $0xa20] sm:$0xff]
    %v3740 = vld [vmem:[#allocation2 + $0xa28] sm:$0xff]
    %v3741 = vld [vmem:[#allocation2 + $0xa30] sm:$0xff]
    %v3742 = vld [vmem:[#allocation2 + $0xa38] sm:$0xff]
    %v3743 = vld [vmem:[#allocation2 + $0xa40] sm:$0xff]
    %v3744 = vld [vmem:[#allocation2 + $0xa48] sm:$0xff]
    %v3745 = vld [vmem:[#allocation2 + $0xa50] sm:$0xff]
    %v3746 = vld [vmem:[#allocation2 + $0xa58] sm:$0xff]
    %v3747 = vld [vmem:[#allocation2 + $0xa60] sm:$0xff]
    %v3748 = vld [vmem:[#allocation2 + $0xa68] sm:$0xff]
    %v3749 = vld [vmem:[#allocation2 + $0xa70] sm:$0xff]
    %v3750 = vld [vmem:[#allocation2 + $0xa78] sm:$0xff]
    %v3751 = vld [vmem:[#allocation2 + $0xa80] sm:$0xff]
    %v3752 = vld [vmem:[#allocation2 + $0xa88] sm:$0xff]
    %v3753 = vld [vmem:[#allocation2 + $0xa90] sm:$0xff]
    %v3754 = vld [vmem:[#allocation2 + $0xa98] sm:$0xff]
    %v3755 = vld [vmem:[#allocation2 + $0xaa0] sm:$0xff]
    %v3756 = vld [vmem:[#allocation2 + $0xaa8] sm:$0xff]
    %v3757 = vld [vmem:[#allocation2 + $0xab0] sm:$0xff]
    %v3758 = vld [vmem:[#allocation2 + $0xab8] sm:$0xff]
    %v3759 = vld [vmem:[#allocation2 + $0xac0] sm:$0xff]
    %v3760 = vld [vmem:[#allocation2 + $0xac8] sm:$0xff]
    %v3761 = vld [vmem:[#allocation2 + $0xad0] sm:$0xff]
    %v3762 = vld [vmem:[#allocation2 + $0xad8] sm:$0xff]
    %v3763 = vld [vmem:[#allocation2 + $0xae0] sm:$0xff]
    %v3764 = vld [vmem:[#allocation2 + $0xae8] sm:$0xff]
    %v3765 = vld [vmem:[#allocation2 + $0xaf0] sm:$0xff]
    %v3766 = vld [vmem:[#allocation2 + $0xaf8] sm:$0xff]
    %v3767 = vld [vmem:[#allocation2 + $0xb00] sm:$0xff]
    %v3768 = vld [vmem:[#allocation2 + $0xb08] sm:$0xff]
    %v3769 = vld [vmem:[#allocation2 + $0xb10] sm:$0xff]
    %v3770 = vld [vmem:[#allocation2 + $0xb18] sm:$0xff]
    %v3771 = vld [vmem:[#allocation2 + $0xb20] sm:$0xff]
    %v3772 = vld [vmem:[#allocation2 + $0xb28] sm:$0xff]
    %v3773 = vld [vmem:[#allocation2 + $0xb30] sm:$0xff]
    %v3774 = vld [vmem:[#allocation2 + $0xb38] sm:$0xff]
    %v3775 = vld [vmem:[#allocation2 + $0xb40] sm:$0xff]
    %v3776 = vld [vmem:[#allocation2 + $0xb48] sm:$0xff]
    %v3777 = vld [vmem:[#allocation2 + $0xb50] sm:$0xff]
    %v3778 = vld [vmem:[#allocation2 + $0xb58] sm:$0xff]
    %v3779 = vld [vmem:[#allocation2 + $0xb60] sm:$0xff]
    %v3780 = vld [vmem:[#allocation2 + $0xb68] sm:$0xff]
    %v3781 = vld [vmem:[#allocation2 + $0xb70] sm:$0xff]
    %v3782 = vld [vmem:[#allocation2 + $0xb78] sm:$0xff]
    %v3783 = vld [vmem:[#allocation2 + $0xb80] sm:$0xff]
    %v3784 = vld [vmem:[#allocation2 + $0xb88] sm:$0xff]
    %v3785 = vld [vmem:[#allocation2 + $0xb90] sm:$0xff]
    %v3786 = vld [vmem:[#allocation2 + $0xb98] sm:$0xff]
    %v3787 = vld [vmem:[#allocation2 + $0xba0] sm:$0xff]
    %v3788 = vld [vmem:[#allocation2 + $0xba8] sm:$0xff]
    %v3789 = vld [vmem:[#allocation2 + $0xbb0] sm:$0xff]
    %v3790 = vld [vmem:[#allocation2 + $0xbb8] sm:$0xff]
    %v3791 = vld [vmem:[#allocation2 + $0xbc0] sm:$0xff]
    %v3792 = vld [vmem:[#allocation2 + $0xbc8] sm:$0xff]
    %v3793 = vld [vmem:[#allocation2 + $0xbd0] sm:$0xff]
    %v3794 = vld [vmem:[#allocation2 + $0xbd8] sm:$0xff]
    %v3795 = vld [vmem:[#allocation2 + $0xbe0] sm:$0xff]
    %v3796 = vld [vmem:[#allocation2 + $0xbe8] sm:$0xff]
    %v3797 = vld [vmem:[#allocation2 + $0xbf0] sm:$0xff]
    %v3798 = vld [vmem:[#allocation2 + $0xbf8] sm:$0xff]
    %v3799 = vld [vmem:[#allocation2 + $0xc00] sm:$0xff]
    %v3800 = vld [vmem:[#allocation2 + $0xc08] sm:$0xff]
    %v3801 = vld [vmem:[#allocation2 + $0xc10] sm:$0xff]
    %v3802 = vld [vmem:[#allocation2 + $0xc18] sm:$0xff]
    %v3803 = vld [vmem:[#allocation2 + $0xc20] sm:$0xff]
    %v3804 = vld [vmem:[#allocation2 + $0xc28] sm:$0xff]
    %v3805 = vld [vmem:[#allocation2 + $0xc30] sm:$0xff]
    %v3806 = vld [vmem:[#allocation2 + $0xc38] sm:$0xff]
    %v3807 = vld [vmem:[#allocation2 + $0xc40] sm:$0xff]
    %v3808 = vld [vmem:[#allocation2 + $0xc48] sm:$0xff]
    %v3809 = vld [vmem:[#allocation2 + $0xc50] sm:$0xff]
    %v3810 = vld [vmem:[#allocation2 + $0xc58] sm:$0xff]
    %v3811 = vld [vmem:[#allocation2 + $0xc60] sm:$0xff]
    %v3812 = vld [vmem:[#allocation2 + $0xc68] sm:$0xff]
    %v3813 = vld [vmem:[#allocation2 + $0xc70] sm:$0xff]
    %v3814 = vld [vmem:[#allocation2 + $0xc78] sm:$0xff]
    %v3815 = vld [vmem:[#allocation2 + $0xc80] sm:$0xff]
    %v3816 = vld [vmem:[#allocation2 + $0xc88] sm:$0xff]
    %v3817 = vld [vmem:[#allocation2 + $0xc90] sm:$0xff]
    %v3818 = vld [vmem:[#allocation2 + $0xc98] sm:$0xff]
    %v3819 = vld [vmem:[#allocation2 + $0xca0] sm:$0xff]
    %v3820 = vld [vmem:[#allocation2 + $0xca8] sm:$0xff]
    %v3821 = vld [vmem:[#allocation2 + $0xcb0] sm:$0xff]
    %v3822 = vld [vmem:[#allocation2 + $0xcb8] sm:$0xff]
    %v3823 = vld [vmem:[#allocation2 + $0xcc0] sm:$0xff]
    %v3824 = vld [vmem:[#allocation2 + $0xcc8] sm:$0xff]
    %v3825 = vld [vmem:[#allocation2 + $0xcd0] sm:$0xff]
    %v3826 = vld [vmem:[#allocation2 + $0xcd8] sm:$0xff]
    %v3827 = vld [vmem:[#allocation2 + $0xce0] sm:$0xff]
    %v3828 = vld [vmem:[#allocation2 + $0xce8] sm:$0xff]
    %v3829 = vld [vmem:[#allocation2 + $0xcf0] sm:$0xff]
    %v3830 = vld [vmem:[#allocation2 + $0xcf8] sm:$0xff]
    %v3831 = vld [vmem:[#allocation2 + $0xd00] sm:$0xff]
    %v3832 = vld [vmem:[#allocation2 + $0xd08] sm:$0xff]
    %v3833 = vld [vmem:[#allocation2 + $0xd10] sm:$0xff]
    %v3834 = vld [vmem:[#allocation2 + $0xd18] sm:$0xff]
    %v3835 = vld [vmem:[#allocation2 + $0xd20] sm:$0xff]
    %v3836 = vld [vmem:[#allocation2 + $0xd28] sm:$0xff]
    %v3837 = vld [vmem:[#allocation2 + $0xd30] sm:$0xff]
    %v3838 = vld [vmem:[#allocation2 + $0xd38] sm:$0xff]
    %v3839 = vld [vmem:[#allocation2 + $0xd40] sm:$0xff]
    %v3840 = vld [vmem:[#allocation2 + $0xd48] sm:$0xff]
    %v3841 = vld [vmem:[#allocation2 + $0xd50] sm:$0xff]
    %v3842 = vld [vmem:[#allocation2 + $0xd58] sm:$0xff]
    %v3843 = vld [vmem:[#allocation2 + $0xd60] sm:$0xff]
    %v3844 = vld [vmem:[#allocation2 + $0xd68] sm:$0xff]
    %v3845 = vld [vmem:[#allocation2 + $0xd70] sm:$0xff]
    %v3846 = vld [vmem:[#allocation2 + $0xd78] sm:$0xff]
    %v3847 = vld [vmem:[#allocation2 + $0xd80] sm:$0xff]
    %v3848 = vld [vmem:[#allocation2 + $0xd88] sm:$0xff]
    %v3849 = vld [vmem:[#allocation2 + $0xd90] sm:$0xff]
    %v3850 = vld [vmem:[#allocation2 + $0xd98] sm:$0xff]
    %v3851 = vld [vmem:[#allocation2 + $0xda0] sm:$0xff]
    %v3852 = vld [vmem:[#allocation2 + $0xda8] sm:$0xff]
    %v3853 = vld [vmem:[#allocation2 + $0xdb0] sm:$0xff]
    %v3854 = vld [vmem:[#allocation2 + $0xdb8] sm:$0xff]
    %v3855 = vld [vmem:[#allocation2 + $0xdc0] sm:$0xff]
    %v3856 = vld [vmem:[#allocation2 + $0xdc8] sm:$0xff]
    %v3857 = vld [vmem:[#allocation2 + $0xdd0] sm:$0xff]
    %v3858 = vld [vmem:[#allocation2 + $0xdd8] sm:$0xff]
    %v3859 = vld [vmem:[#allocation2 + $0xde0] sm:$0xff]
    %v3860 = vld [vmem:[#allocation2 + $0xde8] sm:$0xff]
    %v3861 = vld [vmem:[#allocation2 + $0xdf0] sm:$0xff]
    %v3862 = vld [vmem:[#allocation2 + $0xdf8] sm:$0xff]
    %v3863 = vld [vmem:[#allocation2 + $0xe00] sm:$0xff]
    %v3864 = vld [vmem:[#allocation2 + $0xe08] sm:$0xff]
    %v3865 = vld [vmem:[#allocation2 + $0xe10] sm:$0xff]
    %v3866 = vld [vmem:[#allocation2 + $0xe18] sm:$0xff]
    %v3867 = vld [vmem:[#allocation2 + $0xe20] sm:$0xff]
    %v3868 = vld [vmem:[#allocation2 + $0xe28] sm:$0xff]
    %v3869 = vld [vmem:[#allocation2 + $0xe30] sm:$0xff]
    %v3870 = vld [vmem:[#allocation2 + $0xe38] sm:$0xff]
    %v3871 = vld [vmem:[#allocation2 + $0xe40] sm:$0xff]
    %v3872 = vld [vmem:[#allocation2 + $0xe48] sm:$0xff]
    %v3873 = vld [vmem:[#allocation2 + $0xe50] sm:$0xff]
    %v3874 = vld [vmem:[#allocation2 + $0xe58] sm:$0xff]
    %v3875 = vld [vmem:[#allocation2 + $0xe60] sm:$0xff]
    %v3876 = vld [vmem:[#allocation2 + $0xe68] sm:$0xff]
    %v3877 = vld [vmem:[#allocation2 + $0xe70] sm:$0xff]
    %v3878 = vld [vmem:[#allocation2 + $0xe78] sm:$0xff]
    %v3879 = vld [vmem:[#allocation2 + $0xe80] sm:$0xff]
    %v3880 = vld [vmem:[#allocation2 + $0xe88] sm:$0xff]
    %v3881 = vld [vmem:[#allocation2 + $0xe90] sm:$0xff]
    %v3882 = vld [vmem:[#allocation2 + $0xe98] sm:$0xff]
    %v3883 = vld [vmem:[#allocation2 + $0xea0] sm:$0xff]
    %v3884 = vld [vmem:[#allocation2 + $0xea8] sm:$0xff]
    %v3885 = vld [vmem:[#allocation2 + $0xeb0] sm:$0xff]
    %v3886 = vld [vmem:[#allocation2 + $0xeb8] sm:$0xff]
    %v3887 = vld [vmem:[#allocation2 + $0xec0] sm:$0xff]
    %v3888 = vld [vmem:[#allocation2 + $0xec8] sm:$0xff]
    %v3889 = vld [vmem:[#allocation2 + $0xed0] sm:$0xff]
    %v3890 = vld [vmem:[#allocation2 + $0xed8] sm:$0xff]
    %v3891 = vld [vmem:[#allocation2 + $0xee0] sm:$0xff]
    %v3892 = vld [vmem:[#allocation2 + $0xee8] sm:$0xff]
    %v3893 = vld [vmem:[#allocation2 + $0xef0] sm:$0xff]
    %v3894 = vld [vmem:[#allocation2 + $0xef8] sm:$0xff]
    %v3895 = vld [vmem:[#allocation2 + $0xf00] sm:$0xff]
    %v3896 = vld [vmem:[#allocation2 + $0xf08] sm:$0xff]
    %v3897 = vld [vmem:[#allocation2 + $0xf10] sm:$0xff]
    %v3898 = vld [vmem:[#allocation2 + $0xf18] sm:$0xff]
    %v3899 = vld [vmem:[#allocation2 + $0xf20] sm:$0xff]
    %v3900 = vld [vmem:[#allocation2 + $0xf28] sm:$0xff]
    %v3901 = vld [vmem:[#allocation2 + $0xf30] sm:$0xff]
    %v3902 = vld [vmem:[#allocation2 + $0xf38] sm:$0xff]
    %v3903 = vld [vmem:[#allocation2 + $0xf40] sm:$0xff]
    %v3904 = vld [vmem:[#allocation2 + $0xf48] sm:$0xff]
    %v3905 = vld [vmem:[#allocation2 + $0xf50] sm:$0xff]
    %v3906 = vld [vmem:[#allocation2 + $0xf58] sm:$0xff]
    %v3907 = vld [vmem:[#allocation2 + $0xf60] sm:$0xff]
    %v3908 = vld [vmem:[#allocation2 + $0xf68] sm:$0xff]
    %v3909 = vld [vmem:[#allocation2 + $0xf70] sm:$0xff]
    %v3910 = vld [vmem:[#allocation2 + $0xf78] sm:$0xff]
    %v3911 = vld [vmem:[#allocation2 + $0xf80] sm:$0xff]
    %v3912 = vld [vmem:[#allocation2 + $0xf88] sm:$0xff]
    %v3913 = vld [vmem:[#allocation2 + $0xf90] sm:$0xff]
    %v3914 = vld [vmem:[#allocation2 + $0xf98] sm:$0xff]
    %v3915 = vld [vmem:[#allocation2 + $0xfa0] sm:$0xff]
    %v3916 = vld [vmem:[#allocation2 + $0xfa8] sm:$0xff]
    %v3917 = vld [vmem:[#allocation2 + $0xfb0] sm:$0xff]
    %v3918 = vld [vmem:[#allocation2 + $0xfb8] sm:$0xff]
    %v3919 = vld [vmem:[#allocation2 + $0xfc0] sm:$0xff]
    %v3920 = vld [vmem:[#allocation2 + $0xfc8] sm:$0xff]
    %v3921 = vld [vmem:[#allocation2 + $0xfd0] sm:$0xff]
    %v3922 = vld [vmem:[#allocation2 + $0xfd8] sm:$0xff]
    %v3923 = vld [vmem:[#allocation2 + $0xfe0] sm:$0xff]
    %v3924 = vld [vmem:[#allocation2 + $0xfe8] sm:$0xff]
    %v3925 = vld [vmem:[#allocation2 + $0xff0] sm:$0xff]
    %v3926 = vld [vmem:[#allocation2 + $0xff8] sm:$0xff]
    %v3927 = vld [vmem:[#allocation14] sm:$0xff]
    %v3928 = vld [vmem:[#allocation14 + $0x8] sm:$0xff]
    %v3931 = vlaneseq
    %v3932 = vshrl.u32 %v3931, 7
    %v3933 = vsub.s32 0, %v3932
    %v3934 = vrot.slane %v3927, %v3933
    %v3935 = vlaneseq
    %v3936 = vshrl.u32 %v3935, 7
    %v3937 = vsub.s32 1, %v3936
    %v3938 = vrot.slane %v3927, %v3937
    %v3939 = vlaneseq
    %v3940 = vshrl.u32 %v3939, 7
    %v3941 = vsub.s32 2, %v3940
    %v3942 = vrot.slane %v3927, %v3941
    %v3943 = vlaneseq
    %v3944 = vshrl.u32 %v3943, 7
    %v3945 = vsub.s32 3, %v3944
    %v3946 = vrot.slane %v3927, %v3945
    %v3947 = vlaneseq
    %v3948 = vshrl.u32 %v3947, 7
    %v3949 = vsub.s32 4, %v3948
    %v3950 = vrot.slane %v3927, %v3949
    %v3951 = vlaneseq
    %v3952 = vshrl.u32 %v3951, 7
    %v3953 = vsub.s32 5, %v3952
    %v3954 = vrot.slane %v3927, %v3953
    %v3955 = vlaneseq
    %v3956 = vshrl.u32 %v3955, 7
    %v3957 = vsub.s32 6, %v3956
    %v3958 = vrot.slane %v3927, %v3957
    %v3959 = vlaneseq
    %v3960 = vshrl.u32 %v3959, 7
    %v3961 = vsub.s32 7, %v3960
    %v3962 = vrot.slane %v3927, %v3961
    %v3963 = vlaneseq
    %v3964 = vshrl.u32 %v3963, 7
    %v3965 = vsub.s32 0, %v3964
    %v3966 = vrot.slane %v3928, %v3965
    %v3967 = vlaneseq
    %v3968 = vshrl.u32 %v3967, 7
    %v3969 = vsub.s32 1, %v3968
    %v3970 = vrot.slane %v3928, %v3969
    %v3971 = vlaneseq
    %v3972 = vshrl.u32 %v3971, 7
    %v3973 = vsub.s32 2, %v3972
    %v3974 = vrot.slane %v3928, %v3973
    %v3975 = vlaneseq
    %v3976 = vshrl.u32 %v3975, 7
    %v3977 = vsub.s32 3, %v3976
    %v3978 = vrot.slane %v3928, %v3977
    %v3979 = vlaneseq
    %v3980 = vshrl.u32 %v3979, 7
    %v3981 = vsub.s32 4, %v3980
    %v3982 = vrot.slane %v3928, %v3981
    %v3983 = vlaneseq
    %v3984 = vshrl.u32 %v3983, 7
    %v3985 = vsub.s32 5, %v3984
    %v3986 = vrot.slane %v3928, %v3985
    %v3987 = vlaneseq
    %v3988 = vshrl.u32 %v3987, 7
    %v3989 = vsub.s32 6, %v3988
    %v3990 = vrot.slane %v3928, %v3989
    %v3991 = vlaneseq
    %v3992 = vshrl.u32 %v3991, 7
    %v3993 = vsub.s32 7, %v3992
    %v3994 = vrot.slane %v3928, %v3993
    %4011 = vmatprep.subr.bf16.mxu0 %v3416
    %4012 = vmatpush1.bf16.msra.mxu0 %v3415
    %4013 = vmatprep.subr.bf16.mxu0 %v3432
    %4014 = vmatpush1.bf16.msra.mxu0 %v3431
    %4015 = vmatprep.subr.bf16.mxu0 %v3448
    %4016 = vmatpush1.bf16.msra.mxu0 %v3447
    %4017 = vmatprep.subr.bf16.mxu0 %v3464
    %4018 = vmatpush1.bf16.msra.mxu0 %v3463
    %4019 = vmatprep.subr.bf16.mxu0 %v3480
    %4020 = vmatpush1.bf16.msra.mxu0 %v3479
    %4021 = vmatprep.subr.bf16.mxu0 %v3496
    %4022 = vmatpush1.bf16.msra.mxu0 %v3495
    %4023 = vmatprep.subr.bf16.mxu0 %v3512
    %4024 = vmatpush1.bf16.msra.mxu0 %v3511
    %4025 = vmatprep.subr.bf16.mxu0 %v3528
    %4026 = vmatpush1.bf16.msra.mxu0 %v3527
    %4027 = vmatprep.subr.bf16.mxu0 %v3544
    %4028 = vmatpush1.bf16.msra.mxu0 %v3543
    %4029 = vmatprep.subr.bf16.mxu0 %v3560
    %4030 = vmatpush1.bf16.msra.mxu0 %v3559
    %4031 = vmatprep.subr.bf16.mxu0 %v3576
    %4032 = vmatpush1.bf16.msra.mxu0 %v3575
    %4033 = vmatprep.subr.bf16.mxu0 %v3592
    %4034 = vmatpush1.bf16.msra.mxu0 %v3591
    %4035 = vmatprep.subr.bf16.mxu0 %v3608
    %4036 = vmatpush1.bf16.msra.mxu0 %v3607
    %4037 = vmatprep.subr.bf16.mxu0 %v3624
    %4038 = vmatpush1.bf16.msra.mxu0 %v3623
    %4039 = vmatprep.subr.bf16.mxu0 %v3640
    %4040 = vmatpush1.bf16.msra.mxu0 %v3639
    %4041 = vmatprep.subr.bf16.mxu0 %v3656
    %4042 = vmatpush1.bf16.msra.mxu0 %v3655
    %4043 = vmatprep.mubr.bf16.mxu0 %v3412
    %4044 = vmatmul.mubr.bf16.gmra.mrb[0].mxu0 %v3411
    %v4045 = vpop.f32.mrb[0].mxu0
    %v4046 = vadd.f32 %v3934, %v4045
    %v4047 = vpop.f32.mrb[0].mxu0
    %v4048 = vadd.f32 %v3938, %v4047
    %v4049 = vpop.f32.mrb[0].mxu0
    %v4050 = vadd.f32 %v3934, %v4049
    %v4051 = vpop.f32.mrb[0].mxu0
    %v4052 = vadd.f32 %v3938, %v4051
    %4053 = vdwg.mxu0
    %4054 = vmatprep.subr.bf16.mxu0 %v3672
    %4055 = vmatpush1.bf16.msra.mxu0 %v3671
    %4056 = vmatprep.subr.bf16.mxu0 %v3688
    %4057 = vmatpush1.bf16.msra.mxu0 %v3687
    %4058 = vmatprep.subr.bf16.mxu0 %v3704
    %4059 = vmatpush1.bf16.msra.mxu0 %v3703
    %4060 = vmatprep.subr.bf16.mxu0 %v3720
    %4061 = vmatpush1.bf16.msra.mxu0 %v3719
    %4062 = vmatprep.subr.bf16.mxu0 %v3736
    %4063 = vmatpush1.bf16.msra.mxu0 %v3735
    %4064 = vmatprep.subr.bf16.mxu0 %v3752
    %4065 = vmatpush1.bf16.msra.mxu0 %v3751
    %4066 = vmatprep.subr.bf16.mxu0 %v3768
    %4067 = vmatpush1.bf16.msra.mxu0 %v3767
    %4068 = vmatprep.subr.bf16.mxu0 %v3784
    %4069 = vmatpush1.bf16.msra.mxu0 %v3783
    %4070 = vmatprep.subr.bf16.mxu0 %v3800
    %4071 = vmatpush1.bf16.msra.mxu0 %v3799
    %4072 = vmatprep.subr.bf16.mxu0 %v3816
    %4073 = vmatpush1.bf16.msra.mxu0 %v3815
    %4074 = vmatprep.subr.bf16.mxu0 %v3832
    %4075 = vmatpush1.bf16.msra.mxu0 %v3831
    %4076 = vmatprep.subr.bf16.mxu0 %v3848
    %4077 = vmatpush1.bf16.msra.mxu0 %v3847
    %4078 = vmatprep.subr.bf16.mxu0 %v3864
    %4079 = vmatpush1.bf16.msra.mxu0 %v3863
    %4080 = vmatprep.subr.bf16.mxu0 %v3880
    %4081 = vmatpush1.bf16.msra.mxu0 %v3879
    %4082 = vmatprep.subr.bf16.mxu0 %v3896
    %4083 = vmatpush1.bf16.msra.mxu0 %v3895
    %4084 = vmatprep.subr.bf16.mxu0 %v3912
    %4085 = vmatpush1.bf16.msra.mxu0 %v3911
    %4086 = vmatprep.mubr.bf16.mxu0 %v3414
    %4087 = vmatmul.mubr.bf16.gmra.mrb[0].mxu0 %v3413
    %v4088 = vpop.f32.mrb[0].mxu0
    %v4089 = vadd.f32 %v4046, %v4088
    %v4090 = vpop.f32.mrb[0].mxu0
    %v4091 = vadd.f32 %v4048, %v4090
    %v4092 = vpop.f32.mrb[0].mxu0
    %v4093 = vadd.f32 %v4050, %v4092
    %v4094 = vpop.f32.mrb[0].mxu0
    %v4095 = vadd.f32 %v4052, %v4094
    %4096 = vdwg.mxu0
    %4097 = vmatprep.subr.bf16.mxu0 %v3418
    %4098 = vmatpush1.bf16.msra.mxu0 %v3417
    %4099 = vmatprep.subr.bf16.mxu0 %v3434
    %4100 = vmatpush1.bf16.msra.mxu0 %v3433
    %4101 = vmatprep.subr.bf16.mxu0 %v3450
    %4102 = vmatpush1.bf16.msra.mxu0 %v3449
    %4103 = vmatprep.subr.bf16.mxu0 %v3466
    %4104 = vmatpush1.bf16.msra.mxu0 %v3465
    %4105 = vmatprep.subr.bf16.mxu0 %v3482
    %4106 = vmatpush1.bf16.msra.mxu0 %v3481
    %4107 = vmatprep.subr.bf16.mxu0 %v3498
    %4108 = vmatpush1.bf16.msra.mxu0 %v3497
    %4109 = vmatprep.subr.bf16.mxu0 %v3514
    %4110 = vmatpush1.bf16.msra.mxu0 %v3513
    %4111 = vmatprep.subr.bf16.mxu0 %v3530
    %4112 = vmatpush1.bf16.msra.mxu0 %v3529
    %4113 = vmatprep.subr.bf16.mxu0 %v3546
    %4114 = vmatpush1.bf16.msra.mxu0 %v3545
    %4115 = vmatprep.subr.bf16.mxu0 %v3562
    %4116 = vmatpush1.bf16.msra.mxu0 %v3561
    %4117 = vmatprep.subr.bf16.mxu0 %v3578
    %4118 = vmatpush1.bf16.msra.mxu0 %v3577
    %4119 = vmatprep.subr.bf16.mxu0 %v3594
    %4120 = vmatpush1.bf16.msra.mxu0 %v3593
    %4121 = vmatprep.subr.bf16.mxu0 %v3610
    %4122 = vmatpush1.bf16.msra.mxu0 %v3609
    %4123 = vmatprep.subr.bf16.mxu0 %v3626
    %4124 = vmatpush1.bf16.msra.mxu0 %v3625
    %4125 = vmatprep.subr.bf16.mxu0 %v3642
    %4126 = vmatpush1.bf16.msra.mxu0 %v3641
    %4127 = vmatprep.subr.bf16.mxu0 %v3658
    %4128 = vmatpush1.bf16.msra.mxu0 %v3657
    %4129 = vmatprep.mubr.bf16.mxu0 %v3412
    %4130 = vmatmul.mubr.bf16.gmra.mrb[0].mxu0 %v3411
    %v4131 = vpop.f32.mrb[0].mxu0
    %v4132 = vadd.f32 %v3942, %v4131
    %v4133 = vpop.f32.mrb[0].mxu0
    %v4134 = vadd.f32 %v3946, %v4133
    %v4135 = vpop.f32.mrb[0].mxu0
    %v4136 = vadd.f32 %v3942, %v4135
    %v4137 = vpop.f32.mrb[0].mxu0
    %v4138 = vadd.f32 %v3946, %v4137
    %4139 = vdwg.mxu0
    %4140 = vmatprep.subr.bf16.mxu0 %v3674
    %4141 = vmatpush1.bf16.msra.mxu0 %v3673
    %4142 = vmatprep.subr.bf16.mxu0 %v3690
    %4143 = vmatpush1.bf16.msra.mxu0 %v3689
    %4144 = vmatprep.subr.bf16.mxu0 %v3706
    %4145 = vmatpush1.bf16.msra.mxu0 %v3705
    %4146 = vmatprep.subr.bf16.mxu0 %v3722
    %4147 = vmatpush1.bf16.msra.mxu0 %v3721
    %4148 = vmatprep.subr.bf16.mxu0 %v3738
    %4149 = vmatpush1.bf16.msra.mxu0 %v3737
    %4150 = vmatprep.subr.bf16.mxu0 %v3754
    %4151 = vmatpush1.bf16.msra.mxu0 %v3753
    %4152 = vmatprep.subr.bf16.mxu0 %v3770
    %4153 = vmatpush1.bf16.msra.mxu0 %v3769
    %4154 = vmatprep.subr.bf16.mxu0 %v3786
    %4155 = vmatpush1.bf16.msra.mxu0 %v3785
    %4156 = vmatprep.subr.bf16.mxu0 %v3802
    %4157 = vmatpush1.bf16.msra.mxu0 %v3801
    %4158 = vmatprep.subr.bf16.mxu0 %v3818
    %4159 = vmatpush1.bf16.msra.mxu0 %v3817
    %4160 = vmatprep.subr.bf16.mxu0 %v3834
    %4161 = vmatpush1.bf16.msra.mxu0 %v3833
    %4162 = vmatprep.subr.bf16.mxu0 %v3850
    %4163 = vmatpush1.bf16.msra.mxu0 %v3849
    %4164 = vmatprep.subr.bf16.mxu0 %v3866
    %4165 = vmatpush1.bf16.msra.mxu0 %v3865
    %4166 = vmatprep.subr.bf16.mxu0 %v3882
    %4167 = vmatpush1.bf16.msra.mxu0 %v3881
    %4168 = vmatprep.subr.bf16.mxu0 %v3898
    %4169 = vmatpush1.bf16.msra.mxu0 %v3897
    %4170 = vmatprep.subr.bf16.mxu0 %v3914
    %4171 = vmatpush1.bf16.msra.mxu0 %v3913
    %4172 = vmatprep.mubr.bf16.mxu0 %v3414
    %4173 = vmatmul.mubr.bf16.gmra.mrb[0].mxu0 %v3413
    %v4174 = vpop.f32.mrb[0].mxu0
    %v4175 = vadd.f32 %v4132, %v4174
    %v4176 = vpop.f32.mrb[0].mxu0
    %v4177 = vadd.f32 %v4134, %v4176
    %v4178 = vpop.f32.mrb[0].mxu0
    %v4179 = vadd.f32 %v4136, %v4178
    %v4180 = vpop.f32.mrb[0].mxu0
    %v4181 = vadd.f32 %v4138, %v4180
    %4182 = vdwg.mxu0
    %4183 = vmatprep.subr.bf16.mxu0 %v3420
    %4184 = vmatpush1.bf16.msra.mxu0 %v3419
    %4185 = vmatprep.subr.bf16.mxu0 %v3436
    %4186 = vmatpush1.bf16.msra.mxu0 %v3435
    %4187 = vmatprep.subr.bf16.mxu0 %v3452
    %4188 = vmatpush1.bf16.msra.mxu0 %v3451
    %4189 = vmatprep.subr.bf16.mxu0 %v3468
    %4190 = vmatpush1.bf16.msra.mxu0 %v3467
    %4191 = vmatprep.subr.bf16.mxu0 %v3484
    %4192 = vmatpush1.bf16.msra.mxu0 %v3483
    %4193 = vmatprep.subr.bf16.mxu0 %v3500
    %4194 = vmatpush1.bf16.msra.mxu0 %v3499
    %4195 = vmatprep.subr.bf16.mxu0 %v3516
    %4196 = vmatpush1.bf16.msra.mxu0 %v3515
    %4197 = vmatprep.subr.bf16.mxu0 %v3532
    %4198 = vmatpush1.bf16.msra.mxu0 %v3531
    %4199 = vmatprep.subr.bf16.mxu0 %v3548
    %4200 = vmatpush1.bf16.msra.mxu0 %v3547
    %4201 = vmatprep.subr.bf16.mxu0 %v3564
    %4202 = vmatpush1.bf16.msra.mxu0 %v3563
    %4203 = vmatprep.subr.bf16.mxu0 %v3580
    %4204 = vmatpush1.bf16.msra.mxu0 %v3579
    %4205 = vmatprep.subr.bf16.mxu0 %v3596
    %4206 = vmatpush1.bf16.msra.mxu0 %v3595
    %4207 = vmatprep.subr.bf16.mxu0 %v3612
    %4208 = vmatpush1.bf16.msra.mxu0 %v3611
    %4209 = vmatprep.subr.bf16.mxu0 %v3628
    %4210 = vmatpush1.bf16.msra.mxu0 %v3627
    %4211 = vmatprep.subr.bf16.mxu0 %v3644
    %4212 = vmatpush1.bf16.msra.mxu0 %v3643
    %4213 = vmatprep.subr.bf16.mxu0 %v3660
    %4214 = vmatpush1.bf16.msra.mxu0 %v3659
    %4215 = vmatprep.mubr.bf16.mxu0 %v3412
    %4216 = vmatmul.mubr.bf16.gmra.mrb[0].mxu0 %v3411
    %v4217 = vpop.f32.mrb[0].mxu0
    %v4218 = vadd.f32 %v3950, %v4217
    %v4219 = vpop.f32.mrb[0].mxu0
    %v4220 = vadd.f32 %v3954, %v4219
    %v4221 = vpop.f32.mrb[0].mxu0
    %v4222 = vadd.f32 %v3950, %v4221
    %v4223 = vpop.f32.mrb[0].mxu0
    %v4224 = vadd.f32 %v3954, %v4223
    %4225 = vdwg.mxu0
    %4226 = vmatprep.subr.bf16.mxu0 %v3676
    %4227 = vmatpush1.bf16.msra.mxu0 %v3675
    %4228 = vmatprep.subr.bf16.mxu0 %v3692
    %4229 = vmatpush1.bf16.msra.mxu0 %v3691
    %4230 = vmatprep.subr.bf16.mxu0 %v3708
    %4231 = vmatpush1.bf16.msra.mxu0 %v3707
    %4232 = vmatprep.subr.bf16.mxu0 %v3724
    %4233 = vmatpush1.bf16.msra.mxu0 %v3723
    %4234 = vmatprep.subr.bf16.mxu0 %v3740
    %4235 = vmatpush1.bf16.msra.mxu0 %v3739
    %4236 = vmatprep.subr.bf16.mxu0 %v3756
    %4237 = vmatpush1.bf16.msra.mxu0 %v3755
    %4238 = vmatprep.subr.bf16.mxu0 %v3772
    %4239 = vmatpush1.bf16.msra.mxu0 %v3771
    %4240 = vmatprep.subr.bf16.mxu0 %v3788
    %4241 = vmatpush1.bf16.msra.mxu0 %v3787
    %4242 = vmatprep.subr.bf16.mxu0 %v3804
    %4243 = vmatpush1.bf16.msra.mxu0 %v3803
    %4244 = vmatprep.subr.bf16.mxu0 %v3820
    %4245 = vmatpush1.bf16.msra.mxu0 %v3819
    %4246 = vmatprep.subr.bf16.mxu0 %v3836
    %4247 = vmatpush1.bf16.msra.mxu0 %v3835
    %4248 = vmatprep.subr.bf16.mxu0 %v3852
    %4249 = vmatpush1.bf16.msra.mxu0 %v3851
    %4250 = vmatprep.subr.bf16.mxu0 %v3868
    %4251 = vmatpush1.bf16.msra.mxu0 %v3867
    %4252 = vmatprep.subr.bf16.mxu0 %v3884
    %4253 = vmatpush1.bf16.msra.mxu0 %v3883
    %4254 = vmatprep.subr.bf16.mxu0 %v3900
    %4255 = vmatpush1.bf16.msra.mxu0 %v3899
    %4256 = vmatprep.subr.bf16.mxu0 %v3916
    %4257 = vmatpush1.bf16.msra.mxu0 %v3915
    %4258 = vmatprep.mubr.bf16.mxu0 %v3414
    %4259 = vmatmul.mubr.bf16.gmra.mrb[0].mxu0 %v3413
    %v4260 = vpop.f32.mrb[0].mxu0
    %v4261 = vadd.f32 %v4218, %v4260
    %v4262 = vpop.f32.mrb[0].mxu0
    %v4263 = vadd.f32 %v4220, %v4262
    %v4264 = vpop.f32.mrb[0].mxu0
    %v4265 = vadd.f32 %v4222, %v4264
    %v4266 = vpop.f32.mrb[0].mxu0
    %v4267 = vadd.f32 %v4224, %v4266
    %4268 = vdwg.mxu0
    %4269 = vmatprep.subr.bf16.mxu0 %v3422
    %4270 = vmatpush1.bf16.msra.mxu0 %v3421
    %4271 = vmatprep.subr.bf16.mxu0 %v3438
    %4272 = vmatpush1.bf16.msra.mxu0 %v3437
    %4273 = vmatprep.subr.bf16.mxu0 %v3454
    %4274 = vmatpush1.bf16.msra.mxu0 %v3453
    %4275 = vmatprep.subr.bf16.mxu0 %v3470
    %4276 = vmatpush1.bf16.msra.mxu0 %v3469
    %4277 = vmatprep.subr.bf16.mxu0 %v3486
    %4278 = vmatpush1.bf16.msra.mxu0 %v3485
    %4279 = vmatprep.subr.bf16.mxu0 %v3502
    %4280 = vmatpush1.bf16.msra.mxu0 %v3501
    %4281 = vmatprep.subr.bf16.mxu0 %v3518
    %4282 = vmatpush1.bf16.msra.mxu0 %v3517
    %4283 = vmatprep.subr.bf16.mxu0 %v3534
    %4284 = vmatpush1.bf16.msra.mxu0 %v3533
    %4285 = vmatprep.subr.bf16.mxu0 %v3550
    %4286 = vmatpush1.bf16.msra.mxu0 %v3549
    %4287 = vmatprep.subr.bf16.mxu0 %v3566
    %4288 = vmatpush1.bf16.msra.mxu0 %v3565
    %4289 = vmatprep.subr.bf16.mxu0 %v3582
    %4290 = vmatpush1.bf16.msra.mxu0 %v3581
    %4291 = vmatprep.subr.bf16.mxu0 %v3598
    %4292 = vmatpush1.bf16.msra.mxu0 %v3597
    %4293 = vmatprep.subr.bf16.mxu0 %v3614
    %4294 = vmatpush1.bf16.msra.mxu0 %v3613
    %4295 = vmatprep.subr.bf16.mxu0 %v3630
    %4296 = vmatpush1.bf16.msra.mxu0 %v3629
    %4297 = vmatprep.subr.bf16.mxu0 %v3646
    %4298 = vmatpush1.bf16.msra.mxu0 %v3645
    %4299 = vmatprep.subr.bf16.mxu0 %v3662
    %4300 = vmatpush1.bf16.msra.mxu0 %v3661
    %4301 = vmatprep.mubr.bf16.mxu0 %v3412
    %4302 = vmatmul.mubr.bf16.gmra.mrb[0].mxu0 %v3411
    %v4303 = vpop.f32.mrb[0].mxu0
    %v4304 = vadd.f32 %v3958, %v4303
    %v4305 = vpop.f32.mrb[0].mxu0
    %v4306 = vadd.f32 %v3962, %v4305
    %v4307 = vpop.f32.mrb[0].mxu0
    %v4308 = vadd.f32 %v3958, %v4307
    %v4309 = vpop.f32.mrb[0].mxu0
    %v4310 = vadd.f32 %v3962, %v4309
    %4311 = vdwg.mxu0
    %4312 = vmatprep.subr.bf16.mxu0 %v3678
    %4313 = vmatpush1.bf16.msra.mxu0 %v3677
    %4314 = vmatprep.subr.bf16.mxu0 %v3694
    %4315 = vmatpush1.bf16.msra.mxu0 %v3693
    %4316 = vmatprep.subr.bf16.mxu0 %v3710
    %4317 = vmatpush1.bf16.msra.mxu0 %v3709
    %4318 = vmatprep.subr.bf16.mxu0 %v3726
    %4319 = vmatpush1.bf16.msra.mxu0 %v3725
    %4320 = vmatprep.subr.bf16.mxu0 %v3742
    %4321 = vmatpush1.bf16.msra.mxu0 %v3741
    %4322 = vmatprep.subr.bf16.mxu0 %v3758
    %4323 = vmatpush1.bf16.msra.mxu0 %v3757
    %4324 = vmatprep.subr.bf16.mxu0 %v3774
    %4325 = vmatpush1.bf16.msra.mxu0 %v3773
    %4326 = vmatprep.subr.bf16.mxu0 %v3790
    %4327 = vmatpush1.bf16.msra.mxu0 %v3789
    %4328 = vmatprep.subr.bf16.mxu0 %v3806
    %4329 = vmatpush1.bf16.msra.mxu0 %v3805
    %4330 = vmatprep.subr.bf16.mxu0 %v3822
    %4331 = vmatpush1.bf16.msra.mxu0 %v3821
    %4332 = vmatprep.subr.bf16.mxu0 %v3838
    %4333 = vmatpush1.bf16.msra.mxu0 %v3837
    %4334 = vmatprep.subr.bf16.mxu0 %v3854
    %4335 = vmatpush1.bf16.msra.mxu0 %v3853
    %4336 = vmatprep.subr.bf16.mxu0 %v3870
    %4337 = vmatpush1.bf16.msra.mxu0 %v3869
    %4338 = vmatprep.subr.bf16.mxu0 %v3886
    %4339 = vmatpush1.bf16.msra.mxu0 %v3885
    %4340 = vmatprep.subr.bf16.mxu0 %v3902
    %4341 = vmatpush1.bf16.msra.mxu0 %v3901
    %4342 = vmatprep.subr.bf16.mxu0 %v3918
    %4343 = vmatpush1.bf16.msra.mxu0 %v3917
    %4344 = vmatprep.mubr.bf16.mxu0 %v3414
    %4345 = vmatmul.mubr.bf16.gmra.mrb[0].mxu0 %v3413
    %v4346 = vpop.f32.mrb[0].mxu0
    %v4347 = vadd.f32 %v4304, %v4346
    %v4348 = vpop.f32.mrb[0].mxu0
    %v4349 = vadd.f32 %v4306, %v4348
    %v4350 = vpop.f32.mrb[0].mxu0
    %v4351 = vadd.f32 %v4308, %v4350
    %v4352 = vpop.f32.mrb[0].mxu0
    %v4353 = vadd.f32 %v4310, %v4352
    %4354 = vdwg.mxu0
    %4355 = vmatprep.subr.bf16.mxu0 %v3424
    %4356 = vmatpush1.bf16.msra.mxu0 %v3423
    %4357 = vmatprep.subr.bf16.mxu0 %v3440
    %4358 = vmatpush1.bf16.msra.mxu0 %v3439
    %4359 = vmatprep.subr.bf16.mxu0 %v3456
    %4360 = vmatpush1.bf16.msra.mxu0 %v3455
    %4361 = vmatprep.subr.bf16.mxu0 %v3472
    %4362 = vmatpush1.bf16.msra.mxu0 %v3471
    %4363 = vmatprep.subr.bf16.mxu0 %v3488
    %4364 = vmatpush1.bf16.msra.mxu0 %v3487
    %4365 = vmatprep.subr.bf16.mxu0 %v3504
    %4366 = vmatpush1.bf16.msra.mxu0 %v3503
    %4367 = vmatprep.subr.bf16.mxu0 %v3520
    %4368 = vmatpush1.bf16.msra.mxu0 %v3519
    %4369 = vmatprep.subr.bf16.mxu0 %v3536
    %4370 = vmatpush1.bf16.msra.mxu0 %v3535
    %4371 = vmatprep.subr.bf16.mxu0 %v3552
    %4372 = vmatpush1.bf16.msra.mxu0 %v3551
    %4373 = vmatprep.subr.bf16.mxu0 %v3568
    %4374 = vmatpush1.bf16.msra.mxu0 %v3567
    %4375 = vmatprep.subr.bf16.mxu0 %v3584
    %4376 = vmatpush1.bf16.msra.mxu0 %v3583
    %4377 = vmatprep.subr.bf16.mxu0 %v3600
    %4378 = vmatpush1.bf16.msra.mxu0 %v3599
    %4379 = vmatprep.subr.bf16.mxu0 %v3616
    %4380 = vmatpush1.bf16.msra.mxu0 %v3615
    %4381 = vmatprep.subr.bf16.mxu0 %v3632
    %4382 = vmatpush1.bf16.msra.mxu0 %v3631
    %4383 = vmatprep.subr.bf16.mxu0 %v3648
    %4384 = vmatpush1.bf16.msra.mxu0 %v3647
    %4385 = vmatprep.subr.bf16.mxu0 %v3664
    %4386 = vmatpush1.bf16.msra.mxu0 %v3663
    %4387 = vmatprep.mubr.bf16.mxu0 %v3412
    %4388 = vmatmul.mubr.bf16.gmra.mrb[0].mxu0 %v3411
    %v4389 = vpop.f32.mrb[0].mxu0
    %v4390 = vadd.f32 %v3966, %v4389
    %v4391 = vpop.f32.mrb[0].mxu0
    %v4392 = vadd.f32 %v3970, %v4391
    %v4393 = vpop.f32.mrb[0].mxu0
    %v4394 = vadd.f32 %v3966, %v4393
    %v4395 = vpop.f32.mrb[0].mxu0
    %v4396 = vadd.f32 %v3970, %v4395
    %4397 = vdwg.mxu0
    %4398 = vmatprep.subr.bf16.mxu0 %v3680
    %4399 = vmatpush1.bf16.msra.mxu0 %v3679
    %4400 = vmatprep.subr.bf16.mxu0 %v3696
    %4401 = vmatpush1.bf16.msra.mxu0 %v3695
    %4402 = vmatprep.subr.bf16.mxu0 %v3712
    %4403 = vmatpush1.bf16.msra.mxu0 %v3711
    %4404 = vmatprep.subr.bf16.mxu0 %v3728
    %4405 = vmatpush1.bf16.msra.mxu0 %v3727
    %4406 = vmatprep.subr.bf16.mxu0 %v3744
    %4407 = vmatpush1.bf16.msra.mxu0 %v3743
    %4408 = vmatprep.subr.bf16.mxu0 %v3760
    %4409 = vmatpush1.bf16.msra.mxu0 %v3759
    %4410 = vmatprep.subr.bf16.mxu0 %v3776
    %4411 = vmatpush1.bf16.msra.mxu0 %v3775
    %4412 = vmatprep.subr.bf16.mxu0 %v3792
    %4413 = vmatpush1.bf16.msra.mxu0 %v3791
    %4414 = vmatprep.subr.bf16.mxu0 %v3808
    %4415 = vmatpush1.bf16.msra.mxu0 %v3807
    %4416 = vmatprep.subr.bf16.mxu0 %v3824
    %4417 = vmatpush1.bf16.msra.mxu0 %v3823
    %4418 = vmatprep.subr.bf16.mxu0 %v3840
    %4419 = vmatpush1.bf16.msra.mxu0 %v3839
    %4420 = vmatprep.subr.bf16.mxu0 %v3856
    %4421 = vmatpush1.bf16.msra.mxu0 %v3855
    %4422 = vmatprep.subr.bf16.mxu0 %v3872
    %4423 = vmatpush1.bf16.msra.mxu0 %v3871
    %4424 = vmatprep.subr.bf16.mxu0 %v3888
    %4425 = vmatpush1.bf16.msra.mxu0 %v3887
    %4426 = vmatprep.subr.bf16.mxu0 %v3904
    %4427 = vmatpush1.bf16.msra.mxu0 %v3903
    %4428 = vmatprep.subr.bf16.mxu0 %v3920
    %4429 = vmatpush1.bf16.msra.mxu0 %v3919
    %4430 = vmatprep.mubr.bf16.mxu0 %v3414
    %4431 = vmatmul.mubr.bf16.gmra.mrb[0].mxu0 %v3413
    %v4432 = vpop.f32.mrb[0].mxu0
    %v4433 = vadd.f32 %v4390, %v4432
    %v4434 = vpop.f32.mrb[0].mxu0
    %v4435 = vadd.f32 %v4392, %v4434
    %v4436 = vpop.f32.mrb[0].mxu0
    %v4437 = vadd.f32 %v4394, %v4436
    %v4438 = vpop.f32.mrb[0].mxu0
    %v4439 = vadd.f32 %v4396, %v4438
    %4440 = vdwg.mxu0
    %4441 = vmatprep.subr.bf16.mxu0 %v3426
    %4442 = vmatpush1.bf16.msra.mxu0 %v3425
    %4443 = vmatprep.subr.bf16.mxu0 %v3442
    %4444 = vmatpush1.bf16.msra.mxu0 %v3441
    %4445 = vmatprep.subr.bf16.mxu0 %v3458
    %4446 = vmatpush1.bf16.msra.mxu0 %v3457
    %4447 = vmatprep.subr.bf16.mxu0 %v3474
    %4448 = vmatpush1.bf16.msra.mxu0 %v3473
    %4449 = vmatprep.subr.bf16.mxu0 %v3490
    %4450 = vmatpush1.bf16.msra.mxu0 %v3489
    %4451 = vmatprep.subr.bf16.mxu0 %v3506
    %4452 = vmatpush1.bf16.msra.mxu0 %v3505
    %4453 = vmatprep.subr.bf16.mxu0 %v3522
    %4454 = vmatpush1.bf16.msra.mxu0 %v3521
    %4455 = vmatprep.subr.bf16.mxu0 %v3538
    %4456 = vmatpush1.bf16.msra.mxu0 %v3537
    %4457 = vmatprep.subr.bf16.mxu0 %v3554
    %4458 = vmatpush1.bf16.msra.mxu0 %v3553
    %4459 = vmatprep.subr.bf16.mxu0 %v3570
    %4460 = vmatpush1.bf16.msra.mxu0 %v3569
    %4461 = vmatprep.subr.bf16.mxu0 %v3586
    %4462 = vmatpush1.bf16.msra.mxu0 %v3585
    %4463 = vmatprep.subr.bf16.mxu0 %v3602
    %4464 = vmatpush1.bf16.msra.mxu0 %v3601
    %4465 = vmatprep.subr.bf16.mxu0 %v3618
    %4466 = vmatpush1.bf16.msra.mxu0 %v3617
    %4467 = vmatprep.subr.bf16.mxu0 %v3634
    %4468 = vmatpush1.bf16.msra.mxu0 %v3633
    %4469 = vmatprep.subr.bf16.mxu0 %v3650
    %4470 = vmatpush1.bf16.msra.mxu0 %v3649
    %4471 = vmatprep.subr.bf16.mxu0 %v3666
    %4472 = vmatpush1.bf16.msra.mxu0 %v3665
    %4473 = vmatprep.mubr.bf16.mxu0 %v3412
    %4474 = vmatmul.mubr.bf16.gmra.mrb[0].mxu0 %v3411
    %v4475 = vpop.f32.mrb[0].mxu0
    %v4476 = vadd.f32 %v3974, %v4475
    %v4477 = vpop.f32.mrb[0].mxu0
    %v4478 = vadd.f32 %v3978, %v4477
    %v4479 = vpop.f32.mrb[0].mxu0
    %v4480 = vadd.f32 %v3974, %v4479
    %v4481 = vpop.f32.mrb[0].mxu0
    %v4482 = vadd.f32 %v3978, %v4481
    %4483 = vdwg.mxu0
    %4484 = vmatprep.subr.bf16.mxu0 %v3682
    %4485 = vmatpush1.bf16.msra.mxu0 %v3681
    %4486 = vmatprep.subr.bf16.mxu0 %v3698
    %4487 = vmatpush1.bf16.msra.mxu0 %v3697
    %4488 = vmatprep.subr.bf16.mxu0 %v3714
    %4489 = vmatpush1.bf16.msra.mxu0 %v3713
    %4490 = vmatprep.subr.bf16.mxu0 %v3730
    %4491 = vmatpush1.bf16.msra.mxu0 %v3729
    %4492 = vmatprep.subr.bf16.mxu0 %v3746
    %4493 = vmatpush1.bf16.msra.mxu0 %v3745
    %4494 = vmatprep.subr.bf16.mxu0 %v3762
    %4495 = vmatpush1.bf16.msra.mxu0 %v3761
    %4496 = vmatprep.subr.bf16.mxu0 %v3778
    %4497 = vmatpush1.bf16.msra.mxu0 %v3777
    %4498 = vmatprep.subr.bf16.mxu0 %v3794
    %4499 = vmatpush1.bf16.msra.mxu0 %v3793
    %4500 = vmatprep.subr.bf16.mxu0 %v3810
    %4501 = vmatpush1.bf16.msra.mxu0 %v3809
    %4502 = vmatprep.subr.bf16.mxu0 %v3826
    %4503 = vmatpush1.bf16.msra.mxu0 %v3825
    %4504 = vmatprep.subr.bf16.mxu0 %v3842
    %4505 = vmatpush1.bf16.msra.mxu0 %v3841
    %4506 = vmatprep.subr.bf16.mxu0 %v3858
    %4507 = vmatpush1.bf16.msra.mxu0 %v3857
    %4508 = vmatprep.subr.bf16.mxu0 %v3874
    %4509 = vmatpush1.bf16.msra.mxu0 %v3873
    %4510 = vmatprep.subr.bf16.mxu0 %v3890
    %4511 = vmatpush1.bf16.msra.mxu0 %v3889
    %4512 = vmatprep.subr.bf16.mxu0 %v3906
    %4513 = vmatpush1.bf16.msra.mxu0 %v3905
    %4514 = vmatprep.subr.bf16.mxu0 %v3922
    %4515 = vmatpush1.bf16.msra.mxu0 %v3921
    %4516 = vmatprep.mubr.bf16.mxu0 %v3414
    %4517 = vmatmul.mubr.bf16.gmra.mrb[0].mxu0 %v3413
    %v4518 = vpop.f32.mrb[0].mxu0
    %v4519 = vadd.f32 %v4476, %v4518
    %v4520 = vpop.f32.mrb[0].mxu0
    %v4521 = vadd.f32 %v4478, %v4520
    %v4522 = vpop.f32.mrb[0].mxu0
    %v4523 = vadd.f32 %v4480, %v4522
    %v4524 = vpop.f32.mrb[0].mxu0
    %v4525 = vadd.f32 %v4482, %v4524
    %4526 = vdwg.mxu0
    %4527 = vmatprep.subr.bf16.mxu0 %v3428
    %4528 = vmatpush1.bf16.msra.mxu0 %v3427
    %4529 = vmatprep.subr.bf16.mxu0 %v3444
    %4530 = vmatpush1.bf16.msra.mxu0 %v3443
    %4531 = vmatprep.subr.bf16.mxu0 %v3460
    %4532 = vmatpush1.bf16.msra.mxu0 %v3459
    %4533 = vmatprep.subr.bf16.mxu0 %v3476
    %4534 = vmatpush1.bf16.msra.mxu0 %v3475
    %4535 = vmatprep.subr.bf16.mxu0 %v3492
    %4536 = vmatpush1.bf16.msra.mxu0 %v3491
    %4537 = vmatprep.subr.bf16.mxu0 %v3508
    %4538 = vmatpush1.bf16.msra.mxu0 %v3507
    %4539 = vmatprep.subr.bf16.mxu0 %v3524
    %4540 = vmatpush1.bf16.msra.mxu0 %v3523
    %4541 = vmatprep.subr.bf16.mxu0 %v3540
    %4542 = vmatpush1.bf16.msra.mxu0 %v3539
    %4543 = vmatprep.subr.bf16.mxu0 %v3556
    %4544 = vmatpush1.bf16.msra.mxu0 %v3555
    %4545 = vmatprep.subr.bf16.mxu0 %v3572
    %4546 = vmatpush1.bf16.msra.mxu0 %v3571
    %4547 = vmatprep.subr.bf16.mxu0 %v3588
    %4548 = vmatpush1.bf16.msra.mxu0 %v3587
    %4549 = vmatprep.subr.bf16.mxu0 %v3604
    %4550 = vmatpush1.bf16.msra.mxu0 %v3603
    %4551 = vmatprep.subr.bf16.mxu0 %v3620
    %4552 = vmatpush1.bf16.msra.mxu0 %v3619
    %4553 = vmatprep.subr.bf16.mxu0 %v3636
    %4554 = vmatpush1.bf16.msra.mxu0 %v3635
    %4555 = vmatprep.subr.bf16.mxu0 %v3652
    %4556 = vmatpush1.bf16.msra.mxu0 %v3651
    %4557 = vmatprep.subr.bf16.mxu0 %v3668
    %4558 = vmatpush1.bf16.msra.mxu0 %v3667
    %4559 = vmatprep.mubr.bf16.mxu0 %v3412
    %4560 = vmatmul.mubr.bf16.gmra.mrb[0].mxu0 %v3411
    %v4561 = vpop.f32.mrb[0].mxu0
    %v4562 = vadd.f32 %v3982, %v4561
    %v4563 = vpop.f32.mrb[0].mxu0
    %v4564 = vadd.f32 %v3986, %v4563
    %v4565 = vpop.f32.mrb[0].mxu0
    %v4566 = vadd.f32 %v3982, %v4565
    %v4567 = vpop.f32.mrb[0].mxu0
    %v4568 = vadd.f32 %v3986, %v4567
    %4569 = vdwg.mxu0
    %4570 = vmatprep.subr.bf16.mxu0 %v3684
    %4571 = vmatpush1.bf16.msra.mxu0 %v3683
    %4572 = vmatprep.subr.bf16.mxu0 %v3700
    %4573 = vmatpush1.bf16.msra.mxu0 %v3699
    %4574 = vmatprep.subr.bf16.mxu0 %v3716
    %4575 = vmatpush1.bf16.msra.mxu0 %v3715
    %4576 = vmatprep.subr.bf16.mxu0 %v3732
    %4577 = vmatpush1.bf16.msra.mxu0 %v3731
    %4578 = vmatprep.subr.bf16.mxu0 %v3748
    %4579 = vmatpush1.bf16.msra.mxu0 %v3747
    %4580 = vmatprep.subr.bf16.mxu0 %v3764
    %4581 = vmatpush1.bf16.msra.mxu0 %v3763
    %4582 = vmatprep.subr.bf16.mxu0 %v3780
    %4583 = vmatpush1.bf16.msra.mxu0 %v3779
    %4584 = vmatprep.subr.bf16.mxu0 %v3796
    %4585 = vmatpush1.bf16.msra.mxu0 %v3795
    %4586 = vmatprep.subr.bf16.mxu0 %v3812
    %4587 = vmatpush1.bf16.msra.mxu0 %v3811
    %4588 = vmatprep.subr.bf16.mxu0 %v3828
    %4589 = vmatpush1.bf16.msra.mxu0 %v3827
    %4590 = vmatprep.subr.bf16.mxu0 %v3844
    %4591 = vmatpush1.bf16.msra.mxu0 %v3843
    %4592 = vmatprep.subr.bf16.mxu0 %v3860
    %4593 = vmatpush1.bf16.msra.mxu0 %v3859
    %4594 = vmatprep.subr.bf16.mxu0 %v3876
    %4595 = vmatpush1.bf16.msra.mxu0 %v3875
    %4596 = vmatprep.subr.bf16.mxu0 %v3892
    %4597 = vmatpush1.bf16.msra.mxu0 %v3891
    %4598 = vmatprep.subr.bf16.mxu0 %v3908
    %4599 = vmatpush1.bf16.msra.mxu0 %v3907
    %4600 = vmatprep.subr.bf16.mxu0 %v3924
    %4601 = vmatpush1.bf16.msra.mxu0 %v3923
    %4602 = vmatprep.mubr.bf16.mxu0 %v3414
    %4603 = vmatmul.mubr.bf16.gmra.mrb[0].mxu0 %v3413
    %v4604 = vpop.f32.mrb[0].mxu0
    %v4605 = vadd.f32 %v4562, %v4604
    %v4606 = vpop.f32.mrb[0].mxu0
    %v4607 = vadd.f32 %v4564, %v4606
    %v4608 = vpop.f32.mrb[0].mxu0
    %v4609 = vadd.f32 %v4566, %v4608
    %v4610 = vpop.f32.mrb[0].mxu0
    %v4611 = vadd.f32 %v4568, %v4610
    %4612 = vdwg.mxu0
    %4613 = vmatprep.subr.bf16.mxu0 %v3430
    %4614 = vmatpush1.bf16.msra.mxu0 %v3429
    %4615 = vmatprep.subr.bf16.mxu0 %v3446
    %4616 = vmatpush1.bf16.msra.mxu0 %v3445
    %4617 = vmatprep.subr.bf16.mxu0 %v3462
    %4618 = vmatpush1.bf16.msra.mxu0 %v3461
    %4619 = vmatprep.subr.bf16.mxu0 %v3478
    %4620 = vmatpush1.bf16.msra.mxu0 %v3477
    %4621 = vmatprep.subr.bf16.mxu0 %v3494
    %4622 = vmatpush1.bf16.msra.mxu0 %v3493
    %4623 = vmatprep.subr.bf16.mxu0 %v3510
    %4624 = vmatpush1.bf16.msra.mxu0 %v3509
    %4625 = vmatprep.subr.bf16.mxu0 %v3526
    %4626 = vmatpush1.bf16.msra.mxu0 %v3525
    %4627 = vmatprep.subr.bf16.mxu0 %v3542
    %4628 = vmatpush1.bf16.msra.mxu0 %v3541
    %4629 = vmatprep.subr.bf16.mxu0 %v3558
    %4630 = vmatpush1.bf16.msra.mxu0 %v3557
    %4631 = vmatprep.subr.bf16.mxu0 %v3574
    %4632 = vmatpush1.bf16.msra.mxu0 %v3573
    %4633 = vmatprep.subr.bf16.mxu0 %v3590
    %4634 = vmatpush1.bf16.msra.mxu0 %v3589
    %4635 = vmatprep.subr.bf16.mxu0 %v3606
    %4636 = vmatpush1.bf16.msra.mxu0 %v3605
    %4637 = vmatprep.subr.bf16.mxu0 %v3622
    %4638 = vmatpush1.bf16.msra.mxu0 %v3621
    %4639 = vmatprep.subr.bf16.mxu0 %v3638
    %4640 = vmatpush1.bf16.msra.mxu0 %v3637
    %4641 = vmatprep.subr.bf16.mxu0 %v3654
    %4642 = vmatpush1.bf16.msra.mxu0 %v3653
    %4643 = vmatprep.subr.bf16.mxu0 %v3670
    %4644 = vmatpush1.bf16.msra.mxu0 %v3669
    %4645 = vmatprep.mubr.bf16.mxu0 %v3412
    %4646 = vmatmul.mubr.bf16.gmra.mrb[0].mxu0 %v3411
    %v4647 = vpop.f32.mrb[0].mxu0
    %v4648 = vadd.f32 %v3990, %v4647
    %v4649 = vpop.f32.mrb[0].mxu0
    %v4650 = vadd.f32 %v3994, %v4649
    %v4651 = vpop.f32.mrb[0].mxu0
    %v4652 = vadd.f32 %v3990, %v4651
    %v4653 = vpop.f32.mrb[0].mxu0
    %v4654 = vadd.f32 %v3994, %v4653
    %4655 = vdwg.mxu0
    %4656 = vmatprep.subr.bf16.mxu0 %v3686
    %4657 = vmatpush1.bf16.msra.mxu0 %v3685
    %4658 = vmatprep.subr.bf16.mxu0 %v3702
    %4659 = vmatpush1.bf16.msra.mxu0 %v3701
    %4660 = vmatprep.subr.bf16.mxu0 %v3718
    %4661 = vmatpush1.bf16.msra.mxu0 %v3717
    %4662 = vmatprep.subr.bf16.mxu0 %v3734
    %4663 = vmatpush1.bf16.msra.mxu0 %v3733
    %4664 = vmatprep.subr.bf16.mxu0 %v3750
    %4665 = vmatpush1.bf16.msra.mxu0 %v3749
    %4666 = vmatprep.subr.bf16.mxu0 %v3766
    %4667 = vmatpush1.bf16.msra.mxu0 %v3765
    %4668 = vmatprep.subr.bf16.mxu0 %v3782
    %4669 = vmatpush1.bf16.msra.mxu0 %v3781
    %4670 = vmatprep.subr.bf16.mxu0 %v3798
    %4671 = vmatpush1.bf16.msra.mxu0 %v3797
    %4672 = vmatprep.subr.bf16.mxu0 %v3814
    %4673 = vmatpush1.bf16.msra.mxu0 %v3813
    %4674 = vmatprep.subr.bf16.mxu0 %v3830
    %4675 = vmatpush1.bf16.msra.mxu0 %v3829
    %4676 = vmatprep.subr.bf16.mxu0 %v3846
    %4677 = vmatpush1.bf16.msra.mxu0 %v3845
    %4678 = vmatprep.subr.bf16.mxu0 %v3862
    %4679 = vmatpush1.bf16.msra.mxu0 %v3861
    %4680 = vmatprep.subr.bf16.mxu0 %v3878
    %4681 = vmatpush1.bf16.msra.mxu0 %v3877
    %4682 = vmatprep.subr.bf16.mxu0 %v3894
    %4683 = vmatpush1.bf16.msra.mxu0 %v3893
    %4684 = vmatprep.subr.bf16.mxu0 %v3910
    %4685 = vmatpush1.bf16.msra.mxu0 %v3909
    %4686 = vmatprep.subr.bf16.mxu0 %v3926
    %4687 = vmatpush1.bf16.msra.mxu0 %v3925
    %4688 = vmatprep.mubr.bf16.mxu0 %v3414
    %4689 = vmatmul.mubr.bf16.gmra.mrb[0].mxu0 %v3413
    %v4690 = vpop.f32.mrb[0].mxu0
    %v4691 = vadd.f32 %v4648, %v4690
    %v4692 = vpop.f32.mrb[0].mxu0
    %v4693 = vadd.f32 %v4650, %v4692
    %v4694 = vpop.f32.mrb[0].mxu0
    %v4695 = vadd.f32 %v4652, %v4694
    %v4696 = vpop.f32.mrb[0].mxu0
    %v4697 = vadd.f32 %v4654, %v4696
    %4698 = vdwg.mxu0
    %v4699 = vmax.f32 %v4089, 0.0
    %v4700 = vmax.f32 %v4091, 0.0
    %v4701 = vmax.f32 %v4175, 0.0
    %v4702 = vmax.f32 %v4177, 0.0
    %v4703 = vmax.f32 %v4261, 0.0
    %v4704 = vmax.f32 %v4263, 0.0
    %v4705 = vmax.f32 %v4347, 0.0
    %v4706 = vmax.f32 %v4349, 0.0
    %v4707 = vmax.f32 %v4433, 0.0
    %v4708 = vmax.f32 %v4435, 0.0
    %v4709 = vmax.f32 %v4519, 0.0
    %v4710 = vmax.f32 %v4521, 0.0
    %v4711 = vmax.f32 %v4605, 0.0
    %v4712 = vmax.f32 %v4607, 0.0
    %v4713 = vmax.f32 %v4691, 0.0
    %v4714 = vmax.f32 %v4693, 0.0
    %v4715 = vmax.f32 %v4093, 0.0
    %v4716 = vmax.f32 %v4095, 0.0
    %v4717 = vmax.f32 %v4179, 0.0
    %v4718 = vmax.f32 %v4181, 0.0
    %v4719 = vmax.f32 %v4265, 0.0
    %v4720 = vmax.f32 %v4267, 0.0
    %v4721 = vmax.f32 %v4351, 0.0
    %v4722 = vmax.f32 %v4353, 0.0
    %v4723 = vmax.f32 %v4437, 0.0
    %v4724 = vmax.f32 %v4439, 0.0
    %v4725 = vmax.f32 %v4523, 0.0
    %v4726 = vmax.f32 %v4525, 0.0
    %v4727 = vmax.f32 %v4609, 0.0
    %v4728 = vmax.f32 %v4611, 0.0
    %v4729 = vmax.f32 %v4695, 0.0
    %v4730 = vmax.f32 %v4697, 0.0
    %s4731 = smul.u32 4, 256
    %s4732 = smul.u32 %s4731, 2
    %s4733 = sshll.u32 %s4732, 4
    %4734 = dma.done %s161, %s4733
    %v4735 = vpack.c.bf16 %v4715, %v4699
    %v4736 = vpack.c.bf16 %v4716, %v4700
    %v4737 = vpack.c.bf16 %v4717, %v4701
    %v4738 = vpack.c.bf16 %v4718, %v4702
    %v4739 = vpack.c.bf16 %v4719, %v4703
    %v4740 = vpack.c.bf16 %v4720, %v4704
    %v4741 = vpack.c.bf16 %v4721, %v4705
    %v4742 = vpack.c.bf16 %v4722, %v4706
    %v4743 = vpack.c.bf16 %v4723, %v4707
    %v4744 = vpack.c.bf16 %v4724, %v4708
    %v4745 = vpack.c.bf16 %v4725, %v4709
    %v4746 = vpack.c.bf16 %v4726, %v4710
    %v4747 = vpack.c.bf16 %v4727, %v4711
    %v4748 = vpack.c.bf16 %v4728, %v4712
    %v4749 = vpack.c.bf16 %v4729, %v4713
    %v4750 = vpack.c.bf16 %v4730, %v4714
    %v4751 = vld [vmem:[#allocation3] sm:$0xff]
    %v4752 = vld [vmem:[#allocation3 + $0x8] sm:$0xff]
    %v4753 = vld [vmem:[#allocation3 + $0x10] sm:$0xff]
    %v4754 = vld [vmem:[#allocation3 + $0x18] sm:$0xff]
    %v4755 = vld [vmem:[#allocation3 + $0x20] sm:$0xff]
    %v4756 = vld [vmem:[#allocation3 + $0x28] sm:$0xff]
    %v4757 = vld [vmem:[#allocation3 + $0x30] sm:$0xff]
    %v4758 = vld [vmem:[#allocation3 + $0x38] sm:$0xff]
    %v4759 = vld [vmem:[#allocation3 + $0x40] sm:$0xff]
    %v4760 = vld [vmem:[#allocation3 + $0x48] sm:$0xff]
    %v4761 = vld [vmem:[#allocation3 + $0x50] sm:$0xff]
    %v4762 = vld [vmem:[#allocation3 + $0x58] sm:$0xff]
    %v4763 = vld [vmem:[#allocation3 + $0x60] sm:$0xff]
    %v4764 = vld [vmem:[#allocation3 + $0x68] sm:$0xff]
    %v4765 = vld [vmem:[#allocation3 + $0x70] sm:$0xff]
    %v4766 = vld [vmem:[#allocation3 + $0x78] sm:$0xff]
    %v4767 = vld [vmem:[#allocation3 + $0x80] sm:$0xff]
    %v4768 = vld [vmem:[#allocation3 + $0x88] sm:$0xff]
    %v4769 = vld [vmem:[#allocation3 + $0x90] sm:$0xff]
    %v4770 = vld [vmem:[#allocation3 + $0x98] sm:$0xff]
    %v4771 = vld [vmem:[#allocation3 + $0xa0] sm:$0xff]
    %v4772 = vld [vmem:[#allocation3 + $0xa8] sm:$0xff]
    %v4773 = vld [vmem:[#allocation3 + $0xb0] sm:$0xff]
    %v4774 = vld [vmem:[#allocation3 + $0xb8] sm:$0xff]
    %v4775 = vld [vmem:[#allocation3 + $0xc0] sm:$0xff]
    %v4776 = vld [vmem:[#allocation3 + $0xc8] sm:$0xff]
    %v4777 = vld [vmem:[#allocation3 + $0xd0] sm:$0xff]
    %v4778 = vld [vmem:[#allocation3 + $0xd8] sm:$0xff]
    %v4779 = vld [vmem:[#allocation3 + $0xe0] sm:$0xff]
    %v4780 = vld [vmem:[#allocation3 + $0xe8] sm:$0xff]
    %v4781 = vld [vmem:[#allocation3 + $0xf0] sm:$0xff]
    %v4782 = vld [vmem:[#allocation3 + $0xf8] sm:$0xff]
    %v4783 = vld [vmem:[#allocation3 + $0x100] sm:$0xff]
    %v4784 = vld [vmem:[#allocation3 + $0x108] sm:$0xff]
    %v4785 = vld [vmem:[#allocation3 + $0x110] sm:$0xff]
    %v4786 = vld [vmem:[#allocation3 + $0x118] sm:$0xff]
    %v4787 = vld [vmem:[#allocation3 + $0x120] sm:$0xff]
    %v4788 = vld [vmem:[#allocation3 + $0x128] sm:$0xff]
    %v4789 = vld [vmem:[#allocation3 + $0x130] sm:$0xff]
    %v4790 = vld [vmem:[#allocation3 + $0x138] sm:$0xff]
    %v4791 = vld [vmem:[#allocation3 + $0x140] sm:$0xff]
    %v4792 = vld [vmem:[#allocation3 + $0x148] sm:$0xff]
    %v4793 = vld [vmem:[#allocation3 + $0x150] sm:$0xff]
    %v4794 = vld [vmem:[#allocation3 + $0x158] sm:$0xff]
    %v4795 = vld [vmem:[#allocation3 + $0x160] sm:$0xff]
    %v4796 = vld [vmem:[#allocation3 + $0x168] sm:$0xff]
    %v4797 = vld [vmem:[#allocation3 + $0x170] sm:$0xff]
    %v4798 = vld [vmem:[#allocation3 + $0x178] sm:$0xff]
    %v4799 = vld [vmem:[#allocation3 + $0x180] sm:$0xff]
    %v4800 = vld [vmem:[#allocation3 + $0x188] sm:$0xff]
    %v4801 = vld [vmem:[#allocation3 + $0x190] sm:$0xff]
    %v4802 = vld [vmem:[#allocation3 + $0x198] sm:$0xff]
    %v4803 = vld [vmem:[#allocation3 + $0x1a0] sm:$0xff]
    %v4804 = vld [vmem:[#allocation3 + $0x1a8] sm:$0xff]
    %v4805 = vld [vmem:[#allocation3 + $0x1b0] sm:$0xff]
    %v4806 = vld [vmem:[#allocation3 + $0x1b8] sm:$0xff]
    %v4807 = vld [vmem:[#allocation3 + $0x1c0] sm:$0xff]
    %v4808 = vld [vmem:[#allocation3 + $0x1c8] sm:$0xff]
    %v4809 = vld [vmem:[#allocation3 + $0x1d0] sm:$0xff]
    %v4810 = vld [vmem:[#allocation3 + $0x1d8] sm:$0xff]
    %v4811 = vld [vmem:[#allocation3 + $0x1e0] sm:$0xff]
    %v4812 = vld [vmem:[#allocation3 + $0x1e8] sm:$0xff]
    %v4813 = vld [vmem:[#allocation3 + $0x1f0] sm:$0xff]
    %v4814 = vld [vmem:[#allocation3 + $0x1f8] sm:$0xff]
    %v4815 = vld [vmem:[#allocation3 + $0x200] sm:$0xff]
    %v4816 = vld [vmem:[#allocation3 + $0x208] sm:$0xff]
    %v4817 = vld [vmem:[#allocation3 + $0x210] sm:$0xff]
    %v4818 = vld [vmem:[#allocation3 + $0x218] sm:$0xff]
    %v4819 = vld [vmem:[#allocation3 + $0x220] sm:$0xff]
    %v4820 = vld [vmem:[#allocation3 + $0x228] sm:$0xff]
    %v4821 = vld [vmem:[#allocation3 + $0x230] sm:$0xff]
    %v4822 = vld [vmem:[#allocation3 + $0x238] sm:$0xff]
    %v4823 = vld [vmem:[#allocation3 + $0x240] sm:$0xff]
    %v4824 = vld [vmem:[#allocation3 + $0x248] sm:$0xff]
    %v4825 = vld [vmem:[#allocation3 + $0x250] sm:$0xff]
    %v4826 = vld [vmem:[#allocation3 + $0x258] sm:$0xff]
    %v4827 = vld [vmem:[#allocation3 + $0x260] sm:$0xff]
    %v4828 = vld [vmem:[#allocation3 + $0x268] sm:$0xff]
    %v4829 = vld [vmem:[#allocation3 + $0x270] sm:$0xff]
    %v4830 = vld [vmem:[#allocation3 + $0x278] sm:$0xff]
    %v4831 = vld [vmem:[#allocation3 + $0x280] sm:$0xff]
    %v4832 = vld [vmem:[#allocation3 + $0x288] sm:$0xff]
    %v4833 = vld [vmem:[#allocation3 + $0x290] sm:$0xff]
    %v4834 = vld [vmem:[#allocation3 + $0x298] sm:$0xff]
    %v4835 = vld [vmem:[#allocation3 + $0x2a0] sm:$0xff]
    %v4836 = vld [vmem:[#allocation3 + $0x2a8] sm:$0xff]
    %v4837 = vld [vmem:[#allocation3 + $0x2b0] sm:$0xff]
    %v4838 = vld [vmem:[#allocation3 + $0x2b8] sm:$0xff]
    %v4839 = vld [vmem:[#allocation3 + $0x2c0] sm:$0xff]
    %v4840 = vld [vmem:[#allocation3 + $0x2c8] sm:$0xff]
    %v4841 = vld [vmem:[#allocation3 + $0x2d0] sm:$0xff]
    %v4842 = vld [vmem:[#allocation3 + $0x2d8] sm:$0xff]
    %v4843 = vld [vmem:[#allocation3 + $0x2e0] sm:$0xff]
    %v4844 = vld [vmem:[#allocation3 + $0x2e8] sm:$0xff]
    %v4845 = vld [vmem:[#allocation3 + $0x2f0] sm:$0xff]
    %v4846 = vld [vmem:[#allocation3 + $0x2f8] sm:$0xff]
    %v4847 = vld [vmem:[#allocation3 + $0x300] sm:$0xff]
    %v4848 = vld [vmem:[#allocation3 + $0x308] sm:$0xff]
    %v4849 = vld [vmem:[#allocation3 + $0x310] sm:$0xff]
    %v4850 = vld [vmem:[#allocation3 + $0x318] sm:$0xff]
    %v4851 = vld [vmem:[#allocation3 + $0x320] sm:$0xff]
    %v4852 = vld [vmem:[#allocation3 + $0x328] sm:$0xff]
    %v4853 = vld [vmem:[#allocation3 + $0x330] sm:$0xff]
    %v4854 = vld [vmem:[#allocation3 + $0x338] sm:$0xff]
    %v4855 = vld [vmem:[#allocation3 + $0x340] sm:$0xff]
    %v4856 = vld [vmem:[#allocation3 + $0x348] sm:$0xff]
    %v4857 = vld [vmem:[#allocation3 + $0x350] sm:$0xff]
    %v4858 = vld [vmem:[#allocation3 + $0x358] sm:$0xff]
    %v4859 = vld [vmem:[#allocation3 + $0x360] sm:$0xff]
    %v4860 = vld [vmem:[#allocation3 + $0x368] sm:$0xff]
    %v4861 = vld [vmem:[#allocation3 + $0x370] sm:$0xff]
    %v4862 = vld [vmem:[#allocation3 + $0x378] sm:$0xff]
    %v4863 = vld [vmem:[#allocation3 + $0x380] sm:$0xff]
    %v4864 = vld [vmem:[#allocation3 + $0x388] sm:$0xff]
    %v4865 = vld [vmem:[#allocation3 + $0x390] sm:$0xff]
    %v4866 = vld [vmem:[#allocation3 + $0x398] sm:$0xff]
    %v4867 = vld [vmem:[#allocation3 + $0x3a0] sm:$0xff]
    %v4868 = vld [vmem:[#allocation3 + $0x3a8] sm:$0xff]
    %v4869 = vld [vmem:[#allocation3 + $0x3b0] sm:$0xff]
    %v4870 = vld [vmem:[#allocation3 + $0x3b8] sm:$0xff]
    %v4871 = vld [vmem:[#allocation3 + $0x3c0] sm:$0xff]
    %v4872 = vld [vmem:[#allocation3 + $0x3c8] sm:$0xff]
    %v4873 = vld [vmem:[#allocation3 + $0x3d0] sm:$0xff]
    %v4874 = vld [vmem:[#allocation3 + $0x3d8] sm:$0xff]
    %v4875 = vld [vmem:[#allocation3 + $0x3e0] sm:$0xff]
    %v4876 = vld [vmem:[#allocation3 + $0x3e8] sm:$0xff]
    %v4877 = vld [vmem:[#allocation3 + $0x3f0] sm:$0xff]
    %v4878 = vld [vmem:[#allocation3 + $0x3f8] sm:$0xff]
    %v4879 = vld [vmem:[#allocation3 + $0x400] sm:$0xff]
    %v4880 = vld [vmem:[#allocation3 + $0x408] sm:$0xff]
    %v4881 = vld [vmem:[#allocation3 + $0x410] sm:$0xff]
    %v4882 = vld [vmem:[#allocation3 + $0x418] sm:$0xff]
    %v4883 = vld [vmem:[#allocation3 + $0x420] sm:$0xff]
    %v4884 = vld [vmem:[#allocation3 + $0x428] sm:$0xff]
    %v4885 = vld [vmem:[#allocation3 + $0x430] sm:$0xff]
    %v4886 = vld [vmem:[#allocation3 + $0x438] sm:$0xff]
    %v4887 = vld [vmem:[#allocation3 + $0x440] sm:$0xff]
    %v4888 = vld [vmem:[#allocation3 + $0x448] sm:$0xff]
    %v4889 = vld [vmem:[#allocation3 + $0x450] sm:$0xff]
    %v4890 = vld [vmem:[#allocation3 + $0x458] sm:$0xff]
    %v4891 = vld [vmem:[#allocation3 + $0x460] sm:$0xff]
    %v4892 = vld [vmem:[#allocation3 + $0x468] sm:$0xff]
    %v4893 = vld [vmem:[#allocation3 + $0x470] sm:$0xff]
    %v4894 = vld [vmem:[#allocation3 + $0x478] sm:$0xff]
    %v4895 = vld [vmem:[#allocation3 + $0x480] sm:$0xff]
    %v4896 = vld [vmem:[#allocation3 + $0x488] sm:$0xff]
    %v4897 = vld [vmem:[#allocation3 + $0x490] sm:$0xff]
    %v4898 = vld [vmem:[#allocation3 + $0x498] sm:$0xff]
    %v4899 = vld [vmem:[#allocation3 + $0x4a0] sm:$0xff]
    %v4900 = vld [vmem:[#allocation3 + $0x4a8] sm:$0xff]
    %v4901 = vld [vmem:[#allocation3 + $0x4b0] sm:$0xff]
    %v4902 = vld [vmem:[#allocation3 + $0x4b8] sm:$0xff]
    %v4903 = vld [vmem:[#allocation3 + $0x4c0] sm:$0xff]
    %v4904 = vld [vmem:[#allocation3 + $0x4c8] sm:$0xff]
    %v4905 = vld [vmem:[#allocation3 + $0x4d0] sm:$0xff]
    %v4906 = vld [vmem:[#allocation3 + $0x4d8] sm:$0xff]
    %v4907 = vld [vmem:[#allocation3 + $0x4e0] sm:$0xff]
    %v4908 = vld [vmem:[#allocation3 + $0x4e8] sm:$0xff]
    %v4909 = vld [vmem:[#allocation3 + $0x4f0] sm:$0xff]
    %v4910 = vld [vmem:[#allocation3 + $0x4f8] sm:$0xff]
    %v4911 = vld [vmem:[#allocation3 + $0x500] sm:$0xff]
    %v4912 = vld [vmem:[#allocation3 + $0x508] sm:$0xff]
    %v4913 = vld [vmem:[#allocation3 + $0x510] sm:$0xff]
    %v4914 = vld [vmem:[#allocation3 + $0x518] sm:$0xff]
    %v4915 = vld [vmem:[#allocation3 + $0x520] sm:$0xff]
    %v4916 = vld [vmem:[#allocation3 + $0x528] sm:$0xff]
    %v4917 = vld [vmem:[#allocation3 + $0x530] sm:$0xff]
    %v4918 = vld [vmem:[#allocation3 + $0x538] sm:$0xff]
    %v4919 = vld [vmem:[#allocation3 + $0x540] sm:$0xff]
    %v4920 = vld [vmem:[#allocation3 + $0x548] sm:$0xff]
    %v4921 = vld [vmem:[#allocation3 + $0x550] sm:$0xff]
    %v4922 = vld [vmem:[#allocation3 + $0x558] sm:$0xff]
    %v4923 = vld [vmem:[#allocation3 + $0x560] sm:$0xff]
    %v4924 = vld [vmem:[#allocation3 + $0x568] sm:$0xff]
    %v4925 = vld [vmem:[#allocation3 + $0x570] sm:$0xff]
    %v4926 = vld [vmem:[#allocation3 + $0x578] sm:$0xff]
    %v4927 = vld [vmem:[#allocation3 + $0x580] sm:$0xff]
    %v4928 = vld [vmem:[#allocation3 + $0x588] sm:$0xff]
    %v4929 = vld [vmem:[#allocation3 + $0x590] sm:$0xff]
    %v4930 = vld [vmem:[#allocation3 + $0x598] sm:$0xff]
    %v4931 = vld [vmem:[#allocation3 + $0x5a0] sm:$0xff]
    %v4932 = vld [vmem:[#allocation3 + $0x5a8] sm:$0xff]
    %v4933 = vld [vmem:[#allocation3 + $0x5b0] sm:$0xff]
    %v4934 = vld [vmem:[#allocation3 + $0x5b8] sm:$0xff]
    %v4935 = vld [vmem:[#allocation3 + $0x5c0] sm:$0xff]
    %v4936 = vld [vmem:[#allocation3 + $0x5c8] sm:$0xff]
    %v4937 = vld [vmem:[#allocation3 + $0x5d0] sm:$0xff]
    %v4938 = vld [vmem:[#allocation3 + $0x5d8] sm:$0xff]
    %v4939 = vld [vmem:[#allocation3 + $0x5e0] sm:$0xff]
    %v4940 = vld [vmem:[#allocation3 + $0x5e8] sm:$0xff]
    %v4941 = vld [vmem:[#allocation3 + $0x5f0] sm:$0xff]
    %v4942 = vld [vmem:[#allocation3 + $0x5f8] sm:$0xff]
    %v4943 = vld [vmem:[#allocation3 + $0x600] sm:$0xff]
    %v4944 = vld [vmem:[#allocation3 + $0x608] sm:$0xff]
    %v4945 = vld [vmem:[#allocation3 + $0x610] sm:$0xff]
    %v4946 = vld [vmem:[#allocation3 + $0x618] sm:$0xff]
    %v4947 = vld [vmem:[#allocation3 + $0x620] sm:$0xff]
    %v4948 = vld [vmem:[#allocation3 + $0x628] sm:$0xff]
    %v4949 = vld [vmem:[#allocation3 + $0x630] sm:$0xff]
    %v4950 = vld [vmem:[#allocation3 + $0x638] sm:$0xff]
    %v4951 = vld [vmem:[#allocation3 + $0x640] sm:$0xff]
    %v4952 = vld [vmem:[#allocation3 + $0x648] sm:$0xff]
    %v4953 = vld [vmem:[#allocation3 + $0x650] sm:$0xff]
    %v4954 = vld [vmem:[#allocation3 + $0x658] sm:$0xff]
    %v4955 = vld [vmem:[#allocation3 + $0x660] sm:$0xff]
    %v4956 = vld [vmem:[#allocation3 + $0x668] sm:$0xff]
    %v4957 = vld [vmem:[#allocation3 + $0x670] sm:$0xff]
    %v4958 = vld [vmem:[#allocation3 + $0x678] sm:$0xff]
    %v4959 = vld [vmem:[#allocation3 + $0x680] sm:$0xff]
    %v4960 = vld [vmem:[#allocation3 + $0x688] sm:$0xff]
    %v4961 = vld [vmem:[#allocation3 + $0x690] sm:$0xff]
    %v4962 = vld [vmem:[#allocation3 + $0x698] sm:$0xff]
    %v4963 = vld [vmem:[#allocation3 + $0x6a0] sm:$0xff]
    %v4964 = vld [vmem:[#allocation3 + $0x6a8] sm:$0xff]
    %v4965 = vld [vmem:[#allocation3 + $0x6b0] sm:$0xff]
    %v4966 = vld [vmem:[#allocation3 + $0x6b8] sm:$0xff]
    %v4967 = vld [vmem:[#allocation3 + $0x6c0] sm:$0xff]
    %v4968 = vld [vmem:[#allocation3 + $0x6c8] sm:$0xff]
    %v4969 = vld [vmem:[#allocation3 + $0x6d0] sm:$0xff]
    %v4970 = vld [vmem:[#allocation3 + $0x6d8] sm:$0xff]
    %v4971 = vld [vmem:[#allocation3 + $0x6e0] sm:$0xff]
    %v4972 = vld [vmem:[#allocation3 + $0x6e8] sm:$0xff]
    %v4973 = vld [vmem:[#allocation3 + $0x6f0] sm:$0xff]
    %v4974 = vld [vmem:[#allocation3 + $0x6f8] sm:$0xff]
    %v4975 = vld [vmem:[#allocation3 + $0x700] sm:$0xff]
    %v4976 = vld [vmem:[#allocation3 + $0x708] sm:$0xff]
    %v4977 = vld [vmem:[#allocation3 + $0x710] sm:$0xff]
    %v4978 = vld [vmem:[#allocation3 + $0x718] sm:$0xff]
    %v4979 = vld [vmem:[#allocation3 + $0x720] sm:$0xff]
    %v4980 = vld [vmem:[#allocation3 + $0x728] sm:$0xff]
    %v4981 = vld [vmem:[#allocation3 + $0x730] sm:$0xff]
    %v4982 = vld [vmem:[#allocation3 + $0x738] sm:$0xff]
    %v4983 = vld [vmem:[#allocation3 + $0x740] sm:$0xff]
    %v4984 = vld [vmem:[#allocation3 + $0x748] sm:$0xff]
    %v4985 = vld [vmem:[#allocation3 + $0x750] sm:$0xff]
    %v4986 = vld [vmem:[#allocation3 + $0x758] sm:$0xff]
    %v4987 = vld [vmem:[#allocation3 + $0x760] sm:$0xff]
    %v4988 = vld [vmem:[#allocation3 + $0x768] sm:$0xff]
    %v4989 = vld [vmem:[#allocation3 + $0x770] sm:$0xff]
    %v4990 = vld [vmem:[#allocation3 + $0x778] sm:$0xff]
    %v4991 = vld [vmem:[#allocation3 + $0x780] sm:$0xff]
    %v4992 = vld [vmem:[#allocation3 + $0x788] sm:$0xff]
    %v4993 = vld [vmem:[#allocation3 + $0x790] sm:$0xff]
    %v4994 = vld [vmem:[#allocation3 + $0x798] sm:$0xff]
    %v4995 = vld [vmem:[#allocation3 + $0x7a0] sm:$0xff]
    %v4996 = vld [vmem:[#allocation3 + $0x7a8] sm:$0xff]
    %v4997 = vld [vmem:[#allocation3 + $0x7b0] sm:$0xff]
    %v4998 = vld [vmem:[#allocation3 + $0x7b8] sm:$0xff]
    %v4999 = vld [vmem:[#allocation3 + $0x7c0] sm:$0xff]
    %v5000 = vld [vmem:[#allocation3 + $0x7c8] sm:$0xff]
    %v5001 = vld [vmem:[#allocation3 + $0x7d0] sm:$0xff]
    %v5002 = vld [vmem:[#allocation3 + $0x7d8] sm:$0xff]
    %v5003 = vld [vmem:[#allocation3 + $0x7e0] sm:$0xff]
    %v5004 = vld [vmem:[#allocation3 + $0x7e8] sm:$0xff]
    %v5005 = vld [vmem:[#allocation3 + $0x7f0] sm:$0xff]
    %v5006 = vld [vmem:[#allocation3 + $0x7f8] sm:$0xff]
    %v5007 = vld [vmem:[#allocation16] sm:$0x3]
    %v5009 = vlaneseq
    %v5010 = vshrl.u32 %v5009, 7
    %v5011 = vsub.s32 0, %v5010
    %v5012 = vrot.slane %v5007, %v5011
    %v5013 = vlaneseq
    %v5014 = vshrl.u32 %v5013, 7
    %v5015 = vsub.s32 1, %v5014
    %v5016 = vrot.slane %v5007, %v5015
    %5019 = vmatprep.subr.bf16.mxu0 %v4752
    %5020 = vmatpush1.bf16.msra.mxu0 %v4751
    %5021 = vmatprep.subr.bf16.mxu0 %v4754
    %5022 = vmatpush1.bf16.msra.mxu0 %v4753
    %5023 = vmatprep.subr.bf16.mxu0 %v4756
    %5024 = vmatpush1.bf16.msra.mxu0 %v4755
    %5025 = vmatprep.subr.bf16.mxu0 %v4758
    %5026 = vmatpush1.bf16.msra.mxu0 %v4757
    %5027 = vmatprep.subr.bf16.mxu0 %v4760
    %5028 = vmatpush1.bf16.msra.mxu0 %v4759
    %5029 = vmatprep.subr.bf16.mxu0 %v4762
    %5030 = vmatpush1.bf16.msra.mxu0 %v4761
    %5031 = vmatprep.subr.bf16.mxu0 %v4764
    %5032 = vmatpush1.bf16.msra.mxu0 %v4763
    %5033 = vmatprep.subr.bf16.mxu0 %v4766
    %5034 = vmatpush1.bf16.msra.mxu0 %v4765
    %5035 = vmatprep.subr.bf16.mxu0 %v4768
    %5036 = vmatpush1.bf16.msra.mxu0 %v4767
    %5037 = vmatprep.subr.bf16.mxu0 %v4770
    %5038 = vmatpush1.bf16.msra.mxu0 %v4769
    %5039 = vmatprep.subr.bf16.mxu0 %v4772
    %5040 = vmatpush1.bf16.msra.mxu0 %v4771
    %5041 = vmatprep.subr.bf16.mxu0 %v4774
    %5042 = vmatpush1.bf16.msra.mxu0 %v4773
    %5043 = vmatprep.subr.bf16.mxu0 %v4776
    %5044 = vmatpush1.bf16.msra.mxu0 %v4775
    %5045 = vmatprep.subr.bf16.mxu0 %v4778
    %5046 = vmatpush1.bf16.msra.mxu0 %v4777
    %5047 = vmatprep.subr.bf16.mxu0 %v4780
    %5048 = vmatpush1.bf16.msra.mxu0 %v4779
    %5049 = vmatprep.subr.bf16.mxu0 %v4782
    %5050 = vmatpush1.bf16.msra.mxu0 %v4781
    %5051 = vmatprep.mubr.bf16.mxu0 %v4736
    %5052 = vmatmul.mubr.bf16.gmra.mrb[0].mxu0 %v4735
    %v5053 = vpop.f32.mrb[0].mxu0
    %v5054 = vadd.f32 %v5012, %v5053
    %v5055 = vpop.f32.mrb[0].mxu0
    %v5056 = vadd.f32 %v5016, %v5055
    %v5057 = vpop.f32.mrb[0].mxu0
    %v5058 = vadd.f32 %v5012, %v5057
    %v5059 = vpop.f32.mrb[0].mxu0
    %v5060 = vadd.f32 %v5016, %v5059
    %5061 = vdwg.mxu0
    %5062 = vmatprep.subr.bf16.mxu0 %v4784
    %5063 = vmatpush1.bf16.msra.mxu0 %v4783
    %5064 = vmatprep.subr.bf16.mxu0 %v4786
    %5065 = vmatpush1.bf16.msra.mxu0 %v4785
    %5066 = vmatprep.subr.bf16.mxu0 %v4788
    %5067 = vmatpush1.bf16.msra.mxu0 %v4787
    %5068 = vmatprep.subr.bf16.mxu0 %v4790
    %5069 = vmatpush1.bf16.msra.mxu0 %v4789
    %5070 = vmatprep.subr.bf16.mxu0 %v4792
    %5071 = vmatpush1.bf16.msra.mxu0 %v4791
    %5072 = vmatprep.subr.bf16.mxu0 %v4794
    %5073 = vmatpush1.bf16.msra.mxu0 %v4793
    %5074 = vmatprep.subr.bf16.mxu0 %v4796
    %5075 = vmatpush1.bf16.msra.mxu0 %v4795
    %5076 = vmatprep.subr.bf16.mxu0 %v4798
    %5077 = vmatpush1.bf16.msra.mxu0 %v4797
    %5078 = vmatprep.subr.bf16.mxu0 %v4800
    %5079 = vmatpush1.bf16.msra.mxu0 %v4799
    %5080 = vmatprep.subr.bf16.mxu0 %v4802
    %5081 = vmatpush1.bf16.msra.mxu0 %v4801
    %5082 = vmatprep.subr.bf16.mxu0 %v4804
    %5083 = vmatpush1.bf16.msra.mxu0 %v4803
    %5084 = vmatprep.subr.bf16.mxu0 %v4806
    %5085 = vmatpush1.bf16.msra.mxu0 %v4805
    %5086 = vmatprep.subr.bf16.mxu0 %v4808
    %5087 = vmatpush1.bf16.msra.mxu0 %v4807
    %5088 = vmatprep.subr.bf16.mxu0 %v4810
    %5089 = vmatpush1.bf16.msra.mxu0 %v4809
    %5090 = vmatprep.subr.bf16.mxu0 %v4812
    %5091 = vmatpush1.bf16.msra.mxu0 %v4811
    %5092 = vmatprep.subr.bf16.mxu0 %v4814
    %5093 = vmatpush1.bf16.msra.mxu0 %v4813
    %5094 = vmatprep.mubr.bf16.mxu0 %v4738
    %5095 = vmatmul.mubr.bf16.gmra.mrb[0].mxu0 %v4737
    %v5096 = vpop.f32.mrb[0].mxu0
    %v5097 = vadd.f32 %v5054, %v5096
    %v5098 = vpop.f32.mrb[0].mxu0
    %v5099 = vadd.f32 %v5056, %v5098
    %v5100 = vpop.f32.mrb[0].mxu0
    %v5101 = vadd.f32 %v5058, %v5100
    %v5102 = vpop.f32.mrb[0].mxu0
    %v5103 = vadd.f32 %v5060, %v5102
    %5104 = vdwg.mxu0
    %5105 = vmatprep.subr.bf16.mxu0 %v4816
    %5106 = vmatpush1.bf16.msra.mxu0 %v4815
    %5107 = vmatprep.subr.bf16.mxu0 %v4818
    %5108 = vmatpush1.bf16.msra.mxu0 %v4817
    %5109 = vmatprep.subr.bf16.mxu0 %v4820
    %5110 = vmatpush1.bf16.msra.mxu0 %v4819
    %5111 = vmatprep.subr.bf16.mxu0 %v4822
    %5112 = vmatpush1.bf16.msra.mxu0 %v4821
    %5113 = vmatprep.subr.bf16.mxu0 %v4824
    %5114 = vmatpush1.bf16.msra.mxu0 %v4823
    %5115 = vmatprep.subr.bf16.mxu0 %v4826
    %5116 = vmatpush1.bf16.msra.mxu0 %v4825
    %5117 = vmatprep.subr.bf16.mxu0 %v4828
    %5118 = vmatpush1.bf16.msra.mxu0 %v4827
    %5119 = vmatprep.subr.bf16.mxu0 %v4830
    %5120 = vmatpush1.bf16.msra.mxu0 %v4829
    %5121 = vmatprep.subr.bf16.mxu0 %v4832
    %5122 = vmatpush1.bf16.msra.mxu0 %v4831
    %5123 = vmatprep.subr.bf16.mxu0 %v4834
    %5124 = vmatpush1.bf16.msra.mxu0 %v4833
    %5125 = vmatprep.subr.bf16.mxu0 %v4836
    %5126 = vmatpush1.bf16.msra.mxu0 %v4835
    %5127 = vmatprep.subr.bf16.mxu0 %v4838
    %5128 = vmatpush1.bf16.msra.mxu0 %v4837
    %5129 = vmatprep.subr.bf16.mxu0 %v4840
    %5130 = vmatpush1.bf16.msra.mxu0 %v4839
    %5131 = vmatprep.subr.bf16.mxu0 %v4842
    %5132 = vmatpush1.bf16.msra.mxu0 %v4841
    %5133 = vmatprep.subr.bf16.mxu0 %v4844
    %5134 = vmatpush1.bf16.msra.mxu0 %v4843
    %5135 = vmatprep.subr.bf16.mxu0 %v4846
    %5136 = vmatpush1.bf16.msra.mxu0 %v4845
    %5137 = vmatprep.mubr.bf16.mxu0 %v4740
    %5138 = vmatmul.mubr.bf16.gmra.mrb[0].mxu0 %v4739
    %v5139 = vpop.f32.mrb[0].mxu0
    %v5140 = vadd.f32 %v5097, %v5139
    %v5141 = vpop.f32.mrb[0].mxu0
    %v5142 = vadd.f32 %v5099, %v5141
    %v5143 = vpop.f32.mrb[0].mxu0
    %v5144 = vadd.f32 %v5101, %v5143
    %v5145 = vpop.f32.mrb[0].mxu0
    %v5146 = vadd.f32 %v5103, %v5145
    %5147 = vdwg.mxu0
    %5148 = vmatprep.subr.bf16.mxu0 %v4848
    %5149 = vmatpush1.bf16.msra.mxu0 %v4847
    %5150 = vmatprep.subr.bf16.mxu0 %v4850
    %5151 = vmatpush1.bf16.msra.mxu0 %v4849
    %5152 = vmatprep.subr.bf16.mxu0 %v4852
    %5153 = vmatpush1.bf16.msra.mxu0 %v4851
    %5154 = vmatprep.subr.bf16.mxu0 %v4854
    %5155 = vmatpush1.bf16.msra.mxu0 %v4853
    %5156 = vmatprep.subr.bf16.mxu0 %v4856
    %5157 = vmatpush1.bf16.msra.mxu0 %v4855
    %5158 = vmatprep.subr.bf16.mxu0 %v4858
    %5159 = vmatpush1.bf16.msra.mxu0 %v4857
    %5160 = vmatprep.subr.bf16.mxu0 %v4860
    %5161 = vmatpush1.bf16.msra.mxu0 %v4859
    %5162 = vmatprep.subr.bf16.mxu0 %v4862
    %5163 = vmatpush1.bf16.msra.mxu0 %v4861
    %5164 = vmatprep.subr.bf16.mxu0 %v4864
    %5165 = vmatpush1.bf16.msra.mxu0 %v4863
    %5166 = vmatprep.subr.bf16.mxu0 %v4866
    %5167 = vmatpush1.bf16.msra.mxu0 %v4865
    %5168 = vmatprep.subr.bf16.mxu0 %v4868
    %5169 = vmatpush1.bf16.msra.mxu0 %v4867
    %5170 = vmatprep.subr.bf16.mxu0 %v4870
    %5171 = vmatpush1.bf16.msra.mxu0 %v4869
    %5172 = vmatprep.subr.bf16.mxu0 %v4872
    %5173 = vmatpush1.bf16.msra.mxu0 %v4871
    %5174 = vmatprep.subr.bf16.mxu0 %v4874
    %5175 = vmatpush1.bf16.msra.mxu0 %v4873
    %5176 = vmatprep.subr.bf16.mxu0 %v4876
    %5177 = vmatpush1.bf16.msra.mxu0 %v4875
    %5178 = vmatprep.subr.bf16.mxu0 %v4878
    %5179 = vmatpush1.bf16.msra.mxu0 %v4877
    %5180 = vmatprep.mubr.bf16.mxu0 %v4742
    %5181 = vmatmul.mubr.bf16.gmra.mrb[0].mxu0 %v4741
    %v5182 = vpop.f32.mrb[0].mxu0
    %v5183 = vadd.f32 %v5140, %v5182
    %v5184 = vpop.f32.mrb[0].mxu0
    %v5185 = vadd.f32 %v5142, %v5184
    %v5186 = vpop.f32.mrb[0].mxu0
    %v5187 = vadd.f32 %v5144, %v5186
    %v5188 = vpop.f32.mrb[0].mxu0
    %v5189 = vadd.f32 %v5146, %v5188
    %5190 = vdwg.mxu0
    %5191 = vmatprep.subr.bf16.mxu0 %v4880
    %5192 = vmatpush1.bf16.msra.mxu0 %v4879
    %5193 = vmatprep.subr.bf16.mxu0 %v4882
    %5194 = vmatpush1.bf16.msra.mxu0 %v4881
    %5195 = vmatprep.subr.bf16.mxu0 %v4884
    %5196 = vmatpush1.bf16.msra.mxu0 %v4883
    %5197 = vmatprep.subr.bf16.mxu0 %v4886
    %5198 = vmatpush1.bf16.msra.mxu0 %v4885
    %5199 = vmatprep.subr.bf16.mxu0 %v4888
    %5200 = vmatpush1.bf16.msra.mxu0 %v4887
    %5201 = vmatprep.subr.bf16.mxu0 %v4890
    %5202 = vmatpush1.bf16.msra.mxu0 %v4889
    %5203 = vmatprep.subr.bf16.mxu0 %v4892
    %5204 = vmatpush1.bf16.msra.mxu0 %v4891
    %5205 = vmatprep.subr.bf16.mxu0 %v4894
    %5206 = vmatpush1.bf16.msra.mxu0 %v4893
    %5207 = vmatprep.subr.bf16.mxu0 %v4896
    %5208 = vmatpush1.bf16.msra.mxu0 %v4895
    %5209 = vmatprep.subr.bf16.mxu0 %v4898
    %5210 = vmatpush1.bf16.msra.mxu0 %v4897
    %5211 = vmatprep.subr.bf16.mxu0 %v4900
    %5212 = vmatpush1.bf16.msra.mxu0 %v4899
    %5213 = vmatprep.subr.bf16.mxu0 %v4902
    %5214 = vmatpush1.bf16.msra.mxu0 %v4901
    %5215 = vmatprep.subr.bf16.mxu0 %v4904
    %5216 = vmatpush1.bf16.msra.mxu0 %v4903
    %5217 = vmatprep.subr.bf16.mxu0 %v4906
    %5218 = vmatpush1.bf16.msra.mxu0 %v4905
    %5219 = vmatprep.subr.bf16.mxu0 %v4908
    %5220 = vmatpush1.bf16.msra.mxu0 %v4907
    %5221 = vmatprep.subr.bf16.mxu0 %v4910
    %5222 = vmatpush1.bf16.msra.mxu0 %v4909
    %5223 = vmatprep.mubr.bf16.mxu0 %v4744
    %5224 = vmatmul.mubr.bf16.gmra.mrb[0].mxu0 %v4743
    %v5225 = vpop.f32.mrb[0].mxu0
    %v5226 = vadd.f32 %v5183, %v5225
    %v5227 = vpop.f32.mrb[0].mxu0
    %v5228 = vadd.f32 %v5185, %v5227
    %v5229 = vpop.f32.mrb[0].mxu0
    %v5230 = vadd.f32 %v5187, %v5229
    %v5231 = vpop.f32.mrb[0].mxu0
    %v5232 = vadd.f32 %v5189, %v5231
    %5233 = vdwg.mxu0
    %5234 = vmatprep.subr.bf16.mxu0 %v4912
    %5235 = vmatpush1.bf16.msra.mxu0 %v4911
    %5236 = vmatprep.subr.bf16.mxu0 %v4914
    %5237 = vmatpush1.bf16.msra.mxu0 %v4913
    %5238 = vmatprep.subr.bf16.mxu0 %v4916
    %5239 = vmatpush1.bf16.msra.mxu0 %v4915
    %5240 = vmatprep.subr.bf16.mxu0 %v4918
    %5241 = vmatpush1.bf16.msra.mxu0 %v4917
    %5242 = vmatprep.subr.bf16.mxu0 %v4920
    %5243 = vmatpush1.bf16.msra.mxu0 %v4919
    %5244 = vmatprep.subr.bf16.mxu0 %v4922
    %5245 = vmatpush1.bf16.msra.mxu0 %v4921
    %5246 = vmatprep.subr.bf16.mxu0 %v4924
    %5247 = vmatpush1.bf16.msra.mxu0 %v4923
    %5248 = vmatprep.subr.bf16.mxu0 %v4926
    %5249 = vmatpush1.bf16.msra.mxu0 %v4925
    %5250 = vmatprep.subr.bf16.mxu0 %v4928
    %5251 = vmatpush1.bf16.msra.mxu0 %v4927
    %5252 = vmatprep.subr.bf16.mxu0 %v4930
    %5253 = vmatpush1.bf16.msra.mxu0 %v4929
    %5254 = vmatprep.subr.bf16.mxu0 %v4932
    %5255 = vmatpush1.bf16.msra.mxu0 %v4931
    %5256 = vmatprep.subr.bf16.mxu0 %v4934
    %5257 = vmatpush1.bf16.msra.mxu0 %v4933
    %5258 = vmatprep.subr.bf16.mxu0 %v4936
    %5259 = vmatpush1.bf16.msra.mxu0 %v4935
    %5260 = vmatprep.subr.bf16.mxu0 %v4938
    %5261 = vmatpush1.bf16.msra.mxu0 %v4937
    %5262 = vmatprep.subr.bf16.mxu0 %v4940
    %5263 = vmatpush1.bf16.msra.mxu0 %v4939
    %5264 = vmatprep.subr.bf16.mxu0 %v4942
    %5265 = vmatpush1.bf16.msra.mxu0 %v4941
    %5266 = vmatprep.mubr.bf16.mxu0 %v4746
    %5267 = vmatmul.mubr.bf16.gmra.mrb[0].mxu0 %v4745
    %v5268 = vpop.f32.mrb[0].mxu0
    %v5269 = vadd.f32 %v5226, %v5268
    %v5270 = vpop.f32.mrb[0].mxu0
    %v5271 = vadd.f32 %v5228, %v5270
    %v5272 = vpop.f32.mrb[0].mxu0
    %v5273 = vadd.f32 %v5230, %v5272
    %v5274 = vpop.f32.mrb[0].mxu0
    %v5275 = vadd.f32 %v5232, %v5274
    %5276 = vdwg.mxu0
    %5277 = vmatprep.subr.bf16.mxu0 %v4944
    %5278 = vmatpush1.bf16.msra.mxu0 %v4943
    %5279 = vmatprep.subr.bf16.mxu0 %v4946
    %5280 = vmatpush1.bf16.msra.mxu0 %v4945
    %5281 = vmatprep.subr.bf16.mxu0 %v4948
    %5282 = vmatpush1.bf16.msra.mxu0 %v4947
    %5283 = vmatprep.subr.bf16.mxu0 %v4950
    %5284 = vmatpush1.bf16.msra.mxu0 %v4949
    %5285 = vmatprep.subr.bf16.mxu0 %v4952
    %5286 = vmatpush1.bf16.msra.mxu0 %v4951
    %5287 = vmatprep.subr.bf16.mxu0 %v4954
    %5288 = vmatpush1.bf16.msra.mxu0 %v4953
    %5289 = vmatprep.subr.bf16.mxu0 %v4956
    %5290 = vmatpush1.bf16.msra.mxu0 %v4955
    %5291 = vmatprep.subr.bf16.mxu0 %v4958
    %5292 = vmatpush1.bf16.msra.mxu0 %v4957
    %5293 = vmatprep.subr.bf16.mxu0 %v4960
    %5294 = vmatpush1.bf16.msra.mxu0 %v4959
    %5295 = vmatprep.subr.bf16.mxu0 %v4962
    %5296 = vmatpush1.bf16.msra.mxu0 %v4961
    %5297 = vmatprep.subr.bf16.mxu0 %v4964
    %5298 = vmatpush1.bf16.msra.mxu0 %v4963
    %5299 = vmatprep.subr.bf16.mxu0 %v4966
    %5300 = vmatpush1.bf16.msra.mxu0 %v4965
    %5301 = vmatprep.subr.bf16.mxu0 %v4968
    %5302 = vmatpush1.bf16.msra.mxu0 %v4967
    %5303 = vmatprep.subr.bf16.mxu0 %v4970
    %5304 = vmatpush1.bf16.msra.mxu0 %v4969
    %5305 = vmatprep.subr.bf16.mxu0 %v4972
    %5306 = vmatpush1.bf16.msra.mxu0 %v4971
    %5307 = vmatprep.subr.bf16.mxu0 %v4974
    %5308 = vmatpush1.bf16.msra.mxu0 %v4973
    %5309 = vmatprep.mubr.bf16.mxu0 %v4748
    %5310 = vmatmul.mubr.bf16.gmra.mrb[0].mxu0 %v4747
    %v5311 = vpop.f32.mrb[0].mxu0
    %v5312 = vadd.f32 %v5269, %v5311
    %v5313 = vpop.f32.mrb[0].mxu0
    %v5314 = vadd.f32 %v5271, %v5313
    %v5315 = vpop.f32.mrb[0].mxu0
    %v5316 = vadd.f32 %v5273, %v5315
    %v5317 = vpop.f32.mrb[0].mxu0
    %v5318 = vadd.f32 %v5275, %v5317
    %5319 = vdwg.mxu0
    %5320 = vmatprep.subr.bf16.mxu0 %v4976
    %5321 = vmatpush1.bf16.msra.mxu0 %v4975
    %5322 = vmatprep.subr.bf16.mxu0 %v4978
    %5323 = vmatpush1.bf16.msra.mxu0 %v4977
    %5324 = vmatprep.subr.bf16.mxu0 %v4980
    %5325 = vmatpush1.bf16.msra.mxu0 %v4979
    %5326 = vmatprep.subr.bf16.mxu0 %v4982
    %5327 = vmatpush1.bf16.msra.mxu0 %v4981
    %5328 = vmatprep.subr.bf16.mxu0 %v4984
    %5329 = vmatpush1.bf16.msra.mxu0 %v4983
    %5330 = vmatprep.subr.bf16.mxu0 %v4986
    %5331 = vmatpush1.bf16.msra.mxu0 %v4985
    %5332 = vmatprep.subr.bf16.mxu0 %v4988
    %5333 = vmatpush1.bf16.msra.mxu0 %v4987
    %5334 = vmatprep.subr.bf16.mxu0 %v4990
    %5335 = vmatpush1.bf16.msra.mxu0 %v4989
    %5336 = vmatprep.subr.bf16.mxu0 %v4992
    %5337 = vmatpush1.bf16.msra.mxu0 %v4991
    %5338 = vmatprep.subr.bf16.mxu0 %v4994
    %5339 = vmatpush1.bf16.msra.mxu0 %v4993
    %5340 = vmatprep.subr.bf16.mxu0 %v4996
    %5341 = vmatpush1.bf16.msra.mxu0 %v4995
    %5342 = vmatprep.subr.bf16.mxu0 %v4998
    %5343 = vmatpush1.bf16.msra.mxu0 %v4997
    %5344 = vmatprep.subr.bf16.mxu0 %v5000
    %5345 = vmatpush1.bf16.msra.mxu0 %v4999
    %5346 = vmatprep.subr.bf16.mxu0 %v5002
    %5347 = vmatpush1.bf16.msra.mxu0 %v5001
    %5348 = vmatprep.subr.bf16.mxu0 %v5004
    %5349 = vmatpush1.bf16.msra.mxu0 %v5003
    %5350 = vmatprep.subr.bf16.mxu0 %v5006
    %5351 = vmatpush1.bf16.msra.mxu0 %v5005
    %5352 = vmatprep.mubr.bf16.mxu0 %v4750
    %5353 = vmatmul.mubr.bf16.gmra.mrb[0].mxu0 %v4749
    %v5354 = vpop.f32.mrb[0].mxu0
    %v5355 = vadd.f32 %v5312, %v5354
    %v5356 = vpop.f32.mrb[0].mxu0
    %v5357 = vadd.f32 %v5314, %v5356
    %v5358 = vpop.f32.mrb[0].mxu0
    %v5359 = vadd.f32 %v5316, %v5358
    %v5360 = vpop.f32.mrb[0].mxu0
    %v5361 = vadd.f32 %v5318, %v5360
    %5362 = vdwg.mxu0
    %5363 = vst [vmem:[#allocation17] sm:$0xff] %v5355
    %5364 = vst [vmem:[#allocation17 + $0x8] sm:$0xff] %v5357
    %5365 = vst [vmem:[#allocation17 + $0x10] sm:$0xff] %v5359
    %5366 = vst [vmem:[#allocation17 + $0x18] sm:$0xff] %v5361
    // Predicated region
    $region66: #{poetry_forward.1} parent=1 // pred_check
      _
    $region67: #{poetry_forward.1} parent=1 // pred_check_branch
      %5368 = sbr.rel (0) target = $region69
    $region68: #{poetry_forward.1} parent=1 // pred_region
      %s5370 = ssub.s32 512, 512
      %5371 = vsyncadd [#allocation7], %s5370
      %s5372 = sshll.u32 [#allocation17], 4
      %s5373 = int_to_ptr.vmem [resolvable:$true] %s5372
      %5378 = dma.vmem_to_hbm [thread:$0]  %s5373, 512, %s11, [#allocation7], 256, 256, 16
    $region69: #{poetry_forward.1} parent=1 // pred_fallthru
      _
    // Predicated region
    $region70: #{poetry_forward.1} parent=1 // pred_check
      _
    $region71: #{poetry_forward.1} parent=1 // pred_check_branch
      %5380 = sbr.rel (0) target = $region73
    $region72: #{poetry_forward.1} parent=1 // pred_region
      %s5382 = ssub.s32 96, 96
      %5383 = vsyncadd [#allocation19], %s5382
      %s5384 = sshll.u32 [#allocation18], 4
      %s5385 = int_to_ptr.vmem [resolvable:$true] %s5384
      %5390 = dma.vmem_to_hbm [thread:$0]  %s5385, 96, %s12, [#allocation19], 32, 32, 2
    $region73: #{poetry_forward.1} parent=1 // pred_fallthru
      _
    // Predicated region
    $region74: #{poetry_forward.1} parent=1 // pred_check
      _
    $region75: #{poetry_forward.1} parent=1 // pred_check_branch
      %5392 = sbr.rel (0) target = $region77
    $region76: #{poetry_forward.1} parent=1 // pred_region
      %s5394 = ssub.s32 96, 96
      %5395 = vsyncadd [#allocation19], %s5394
      %s5396 = sshll.u32 [#allocation20], 4
      %s5397 = int_to_ptr.vmem [resolvable:$true] %s5396
      %5402 = dma.vmem_to_hbm [thread:$0]  %s5397, 96, %s13, [#allocation19], 32, 32, 2
    $region77: #{poetry_forward.1} parent=1 // pred_fallthru
      _
    // Predicated region
    $region78: #{poetry_forward.1} parent=1 // pred_check
      _
    $region79: #{poetry_forward.1} parent=1 // pred_check_branch
      %5404 = sbr.rel (0) target = $region81
    $region80: #{poetry_forward.1} parent=1 // pred_region
      %5405 = dma.done [#allocation7], 512
    $region81: #{poetry_forward.1} parent=1 // pred_fallthru
      _
    // Predicated region
    $region82: #{poetry_forward.1} parent=1 // pred_check
      _
    $region83: #{poetry_forward.1} parent=1 // pred_check_branch
      %5407 = sbr.rel (0) target = $region85
    $region84: #{poetry_forward.1} parent=1 // pred_region
      %5408 = dma.done [#allocation19], 96
    $region85: #{poetry_forward.1} parent=1 // pred_fallthru
      _
    // Predicated region
    $region86: #{poetry_forward.1} parent=1 // pred_check
      _
    $region87: #{poetry_forward.1} parent=1 // pred_check_branch
      %5410 = sbr.rel (0) target = $region89
    $region88: #{poetry_forward.1} parent=1 // pred_region
      %5411 = dma.done [#allocation19], 96
    $region89: #{poetry_forward.1} parent=1 // pred_fallthru
      _
    %5412 = vsyncpa [#allocation6], 1
    %5413 = vsyncpa [#allocation9], 1
    %5414 = vsyncpa [#allocation12], 1
    %5415 = vsyncpa [#allocation15], 1
    %5416 = vsyncpa [#allocation7], 1
    %5417 = vsyncpa [#allocation19], 1
  %5418 = vsyncmov [#allocation4]
  %s5419 = vpop.sfrf %5418
  %p5420 = scmp.eq.s32.totalorder %s5419, 0
  %p5421 = pneg %p5420
  %5423 = shalt.err (%p5421)
  %s5424 = scalar_lea.sflag [#allocation4], 1
  %5425 = vsyncmov %s5424
  %s5426 = vpop.sfrf %5425
  %p5427 = scmp.eq.s32.totalorder %s5426, 0
  %p5428 = pneg %p5427
  %5430 = shalt.err (%p5428)

</llo_original>
